<compile_context>
chip_gen: v6e
topology: v6e:2x2x1
jax: 0.10.0
libtpu: 0.0.40
codegen_flags: <defaults>
</compile_context>

<pallas_src>
import math

import numpy as np
import jax
import jax.numpy as jnp
from jax import lax
from jax.experimental import pallas as pl
from jax.experimental.pallas import tpu as pltpu

EPS = 1e-5
NEG_BIG = 10000000000.0   # matches the PyTorch constant


# ----------------------------------------------------------------------------
# Fused kernel.  One grid step processes Bb bags, concatenated on the lane axis
# (each bag owns a contiguous F-lane segment of the L = Bb*F lane axis).
# ----------------------------------------------------------------------------
def _mil_conv_kernel(x_ref, ap_ref, eb_ref, amat_ref, bmask_ref,
                     w1_ref, w2_ref, w3_ref, bn_ref,
                     fc1wt_ref, fc2wt_ref, head_ref, out_ref):
    N, L = x_ref.shape
    Bb = eb_ref.shape[0]
    H = fc1wt_ref.shape[0]
    Cp = fc2wt_ref.shape[1]
    F = L // Bb

    def dot_t(a, b):
        # contract the last (lane) dim of both operands: [M, K] x [P, K] -> [M, P]
        return lax.dot_general(a, b, (((1,), (1,)), ((), ())),
                               preferred_element_type=jnp.float32)

    x = x_ref[...]                         # [N, L]
    eb = eb_ref[...]                       # [Bb, L]  0/1 bag-segment indicator
    w_row = ap_ref[0:1, :]                 # [1, L]   Conv1d(1,1,k=F) weight, tiled per bag
    bias = ap_ref[1:2, 0:1]                # [1, 1]

    # ---- patch attention: Conv1d(1,1,k=F) score -> mask -> softmax over patches ----
    scores = dot_t(x * w_row, eb) + bias   # [N, Bb]  per-bag segmented reduce on the MXU
    abssum = dot_t(jnp.abs(x), eb)         # [N, Bb]
    scores = jnp.where(abssum > 0.0, scores, -NEG_BIG)
    m = jnp.max(scores, axis=0, keepdims=True)
    e = jnp.exp(scores - m)
    attn = e * pl.reciprocal(jnp.sum(e, axis=0, keepdims=True), approx=True)   # [N, Bb]

    # ---- weighting + group aggregation: two lane-dense matmuls ----
    attn_exp = jnp.dot(attn, eb, preferred_element_type=jnp.float32)           # [N, L]
    h = jnp.dot(amat_ref[...], x * attn_exp,
                preferred_element_type=jnp.float32)                            # [G_pad, L]

    # ---- conv tower: 3x [Conv1d(k=3, pad=1) -> BN(eval) -> ReLU] ----
    mask_m1 = bmask_ref[0:1, :]            # zero at each bag's first lane
    mask_p1 = bmask_ref[1:2, :]            # zero at each bag's last lane
    bn = bn_ref[...]                       # [4H, 2] (scale, shift with conv bias folded)

    def conv_bn_relu(h, wf, c0, c1):
        # h: [Cin, L]; wf: [Cout, 3*Cin] fused tap weights (tap order: l-1, l, l+1)
        h_m1 = pltpu.roll(h, 1, axis=1) * mask_m1       # h[:, l-1], zero-padded per bag
        h_p1 = pltpu.roll(h, L - 1, axis=1) * mask_p1   # h[:, l+1], zero-padded per bag
        hs = jnp.concatenate([h_m1, h, h_p1], axis=0)   # [3*Cin, L]
        y = jnp.dot(wf, hs, preferred_element_type=jnp.float32)   # [Cout, L]
        return jnp.maximum(y * bn[c0:c1, 0:1] + bn[c0:c1, 1:2], 0.0)  # Dropout = identity

    h = conv_bn_relu(h, w1_ref[...], 0, H)              # [H,  L]
    h = conv_bn_relu(h, w2_ref[...], H, 3 * H)          # [2H, L]
    h = conv_bn_relu(h, w3_ref[...], 3 * H, 4 * H)      # [H,  L]

    # ---- global average pool over each bag's F lanes (stays in registers) ----
    pooled = dot_t(eb, h) * (1.0 / F)                   # [Bb, H]

    # ---- classifier head: Linear -> LayerNorm -> ReLU -> Linear (lane-dense) ----
    head = head_ref[...]                                # [4, W]
    z = jnp.dot(pooled, fc1wt_ref[...], preferred_element_type=jnp.float32) + head[0:1, :H]
    mu = jnp.mean(z, axis=1, keepdims=True)
    var = jnp.mean((z - mu) ** 2, axis=1, keepdims=True)
    z = (z - mu) * lax.rsqrt(var + EPS) * head[1:2, :H] + head[2:3, :H]
    z = jnp.maximum(z, 0.0)
    out_ref[...] = (jnp.dot(z, fc2wt_ref[...], preferred_element_type=jnp.float32)
                    + head[3:4, :Cp])                   # full [Bb, Cp] dense store


# ----------------------------------------------------------------------------
# Host-side helpers
# ----------------------------------------------------------------------------
def _const_spec(arr):
    nd = arr.ndim
    return pl.BlockSpec(arr.shape, lambda i, nd=nd: (0,) * nd)


def build_group_matrix(n_patches, num_groups):
    ppg = -(-n_patches // num_groups)
    amat = np.zeros((num_groups, n_patches), np.float32)
    idx = np.arange(n_patches)
    amat[idx // ppg, idx] = 1.0
    return jnp.asarray(amat)


def _pick_block_batch(F, target):
    lane_unit = 128 // math.gcd(F, 128)               # makes Bb*F a multiple of 128
    unit = 8 * lane_unit // math.gcd(8, lane_unit)    # lcm(8, lane_unit); Bb % 8 == 0
    return unit * max(1, target // unit)


def mil_conv_forward(x, params, num_groups, hidden_dim, num_classes, block_batch=8):
    B, N, F = x.shape
    G, H, C = num_groups, hidden_dim, num_classes
    assert H % 8 == 0, "hidden_dim must be a multiple of 8"

    Bb = _pick_block_batch(F, block_batch)
    # TODO(synk): for production sizes sweep Bb against the per-generation VMEM budget
    #             (v7x: 64 MiB): 2 * N*Bb*F*4 bytes (double-buffered x block) plus
    #             constants/intermediates must fit.
    n_blocks = -(-B // Bb)
    B_pad = n_blocks * Bb
    L = Bb * F
    Cp = ((C + 127) // 128) * 128
    W = max(H, Cp)
    G_pad = ((G + 7) // 8) * 8

    # ---- host-side layout plumbing: bags on the lane axis ----
    x_p = jnp.pad(x, ((0, B_pad - B), (0, 0), (0, 0))) if B_pad > B else x
    x_t = jnp.transpose(x_p, (1, 0, 2)).reshape(N, B_pad * F)           # [N, B_pad*F]

    # attention params: row0 = Conv1d(1,1,k=F) weight tiled per bag, row1 = bias
    ap = jnp.stack([jnp.tile(params['attn_w'], Bb),
                    jnp.broadcast_to(params['attn_b'], (L,))], axis=0)  # [2, L]

    # 0/1 bag-segment indicator [Bb, L] (segmented reduce / broadcast / pool matrix)
    eb_np = np.zeros((Bb, L), np.float32)
    for b in range(Bb):
        eb_np[b, b * F:(b + 1) * F] = 1.0
    eb = jnp.asarray(eb_np)

    # padded group-assignment matrix [G_pad, N] (padded rows are zero -> harmless)
    amat_k = jnp.zeros((G_pad, N), jnp.float32).at[:G].set(build_group_matrix(N, G))

    # per-bag boundary masks for the rolled +/-1 shifts
    lane = np.arange(L)
    bmask = jnp.asarray(np.stack([(lane % F != 0),
                                  (lane % F != F - 1)]).astype(np.float32))   # [2, L]

    # fused conv weights [Cout, 3*Cin_pad] (tap order l-1, l, l+1); BN(eval) fold
    def fuse_conv(w, cin_pad):
        cout, cin, _ = w.shape
        w = jnp.pad(w, ((0, 0), (0, cin_pad - cin), (0, 0)))
        return jnp.concatenate([w[:, :, 0], w[:, :, 1], w[:, :, 2]], axis=1)

    conv_w = [fuse_conv(params['conv1_w'], G_pad),
              fuse_conv(params['conv2_w'], H),
              fuse_conv(params['conv3_w'], 2 * H)]
    bn_rows = []
    for i in (1, 2, 3):
        scale = params[f'bn{i}_gamma'] * lax.rsqrt(params[f'bn{i}_var'] + EPS)
        shift = params[f'bn{i}_beta'] - params[f'bn{i}_mean'] * scale
        t = params[f'conv{i}_b'] * scale + shift         # conv bias folded into BN shift
        bn_rows.append(jnp.stack([scale, t], axis=1))
    bn_packed = jnp.concatenate(bn_rows, axis=0)         # [4H, 2]

    fc1wt = params['fc1_w'].T                                               # [H, H]
    fc2wt = jnp.zeros((H, Cp), jnp.float32).at[:, :C].set(params['fc2_w'].T)

    def pad_row(v, width):
        return jnp.zeros((width,), jnp.float32).at[:v.shape[0]].set(v)

    head = jnp.stack([pad_row(params['fc1_b'], W), pad_row(params['ln_gamma'], W),
                      pad_row(params['ln_beta'], W), pad_row(params['fc2_b'], W)], axis=0)

    const_args = [ap, eb, amat_k, bmask, conv_w[0], conv_w[1], conv_w[2],
                  bn_packed, fc1wt, fc2wt, head]
    in_specs = ([pl.BlockSpec((N, L), lambda i: (0, i))]
                + [_const_spec(a) for a in const_args])

    # VMEM budget: double-buffered x/out blocks + constants + rough intermediates
    def nbytes(shape):
        return int(np.prod(shape)) * 4
    est = 2 * (nbytes((N, L)) + nbytes((Bb, Cp)))
    est += 2 * sum(nbytes(a.shape) for a in const_args)
    est += 8 * nbytes((2 * H, L)) + 4 * nbytes((N, L)) + (4 << 20)
    vmem_limit = int(max(est, 32 << 20))

    logits = pl.pallas_call(
        _mil_conv_kernel,
        out_shape=jax.ShapeDtypeStruct((B_pad, Cp), jnp.float32),
        grid=(n_blocks,),
        in_specs=in_specs,
        out_specs=pl.BlockSpec((Bb, Cp), lambda i: (i, 0)),
        compiler_params=pltpu.CompilerParams(
            dimension_semantics=("parallel",),
            vmem_limit_bytes=vmem_limit),
    )(x_t, *const_args)
    return logits[:B, :C]


# ----------------------------------------------------------------------------
# Parameter init (deterministic, PyTorch-like uniform(-1/sqrt(fan_in), ...))
# ----------------------------------------------------------------------------
def init_params(key, F, H, G, C):
    keys = jax.random.split(key, 12)

    def u(k, shape, fan_in):
        bound = 1.0 / np.sqrt(fan_in)
        return jax.random.uniform(k, shape, jnp.float32, -bound, bound)

    p = {
        'attn_w': u(keys[0], (F,), F),
        'attn_b': u(keys[1], (1,), F),
        'conv1_w': u(keys[2], (H, G, 3), G * 3),
        'conv1_b': u(keys[3], (H,), G * 3),
        'conv2_w': u(keys[4], (2 * H, H, 3), H * 3),
        'conv2_b': u(keys[5], (2 * H,), H * 3),
        'conv3_w': u(keys[6], (H, 2 * H, 3), 2 * H * 3),
        'conv3_b': u(keys[7], (H,), 2 * H * 3),
        'fc1_w': u(keys[8], (H, H), H),
        'fc1_b': u(keys[9], (H,), H),
        'fc2_w': u(keys[10], (C, H), H),
        'fc2_b': u(keys[11], (C,), H),
        'ln_gamma': jnp.ones((H,), jnp.float32),
        'ln_beta': jnp.zeros((H,), jnp.float32),
    }
    for i, c in [(1, H), (2, 2 * H), (3, H)]:
        p[f'bn{i}_gamma'] = jnp.ones((c,), jnp.float32)
        p[f'bn{i}_beta'] = jnp.zeros((c,), jnp.float32)
        p[f'bn{i}_mean'] = jnp.zeros((c,), jnp.float32)
        p[f'bn{i}_var'] = jnp.ones((c,), jnp.float32)
    return p


# ----------------------------------------------------------------------------
# Pure-JAX reference for validation
# ----------------------------------------------------------------------------
def ref_forward(x, params, amat):
    scores = jnp.einsum('bnf,f->bn', x, params['attn_w']) + params['attn_b'][0]
    mask = (jnp.sum(jnp.abs(x), axis=2) > 0).astype(jnp.float32)
    scores = scores * mask - NEG_BIG * (1.0 - mask)
    attn = jax.nn.softmax(scores, axis=1)[:, :, None]
    weighted = x * attn
    h = jnp.einsum('gn,bnf->bgf', amat, weighted)

    L = x.shape[2]

    def conv1d(h, w, b):  # w in torch layout [Cout, Cin, 3], pad=1
        hp = jnp.pad(h, ((0, 0), (0, 0), (1, 1)))
        y = sum(jnp.einsum('oc,bcl->bol', w[:, :, k], hp[:, :, k:k + L])
                for k in range(3))
        return y + b[None, :, None]

    for i in (1, 2, 3):
        h = conv1d(h, params[f'conv{i}_w'], params[f'conv{i}_b'])
        g, bt = params[f'bn{i}_gamma'], params[f'bn{i}_beta']
        m, v = params[f'bn{i}_mean'], params[f'bn{i}_var']
        h = (h - m[None, :, None]) * lax.rsqrt(v + EPS)[None, :, None] \
            * g[None, :, None] + bt[None, :, None]
        h = jnp.maximum(h, 0.0)

    pooled = jnp.mean(h, axis=2)
    z = pooled @ params['fc1_w'].T + params['fc1_b']
    mu = jnp.mean(z, axis=1, keepdims=True)
    var = jnp.mean((z - mu) ** 2, axis=1, keepdims=True)
    z = (z - mu) * lax.rsqrt(var + EPS) * params['ln_gamma'] + params['ln_beta']
    z = jnp.maximum(z, 0.0)
    return z @ params['fc2_w'].T + params['fc2_b']


if __name__ == "__main__":
    jax.config.update("jax_default_matmul_precision", "highest")

    # small shapes consistent with the module's forward
    B, N, F = 10, 8, 32         # batch (padded to 16 -> 2 grid steps), n_patches, feature_dim
    H, G, C = 16, 4, 2          # hidden_dim, num_groups, num_classes

    key = jax.random.PRNGKey(0)
    kx, kp = jax.random.split(key)
    x = jax.random.normal(kx, (B, N, F), jnp.float32)
    params = init_params(kp, F, H, G, C)

    logits = mil_conv_forward(x, params, G, H, C, block_batch=8)
    logits = jax.block_until_ready(logits)

    amat = build_group_matrix(N, G)
    ref = ref_forward(x, params, amat)
    np.testing.assert_allclose(np.asarray(logits), np.asarray(ref),
                               rtol=5e-3, atol=5e-3)
    print("KERNEL_OK")
</pallas_src>

<mosaic_0001>
module attributes {stable_mosaic.version = 11 : i64} {
  func.func @_mil_conv_kernel(%arg0: i32, %arg1: memref<8x256xf32, #tpu.memory_space<vmem>>, %arg2: memref<2x256xf32, #tpu.memory_space<vmem>>, %arg3: memref<8x256xf32, #tpu.memory_space<vmem>>, %arg4: memref<8x8xf32, #tpu.memory_space<vmem>>, %arg5: memref<2x256xf32, #tpu.memory_space<vmem>>, %arg6: memref<16x24xf32, #tpu.memory_space<vmem>>, %arg7: memref<32x48xf32, #tpu.memory_space<vmem>>, %arg8: memref<16x96xf32, #tpu.memory_space<vmem>>, %arg9: memref<64x2xf32, #tpu.memory_space<vmem>>, %arg10: memref<16x16xf32, #tpu.memory_space<vmem>>, %arg11: memref<16x128xf32, #tpu.memory_space<vmem>>, %arg12: memref<4x128xf32, #tpu.memory_space<vmem>>, %arg13: memref<8x128xf32, #tpu.memory_space<vmem>>) attributes {dimension_semantics = [#tpu.dimension_semantics<parallel>], iteration_bounds = array<i64: 2>, scalar_prefetch = 0 : i64, scratch_operands = 0 : i64, tpu.core_type = #tpu.core_type<tc>, window_params = [{transform_indices = @transform_0, window_bounds = array<i64: 8, 256>}, {pipeline_mode = #tpu.pipeline_mode<synchronous>, transform_indices = @transform_1, window_bounds = array<i64: 2, 256>}, {pipeline_mode = #tpu.pipeline_mode<synchronous>, transform_indices = @transform_2, window_bounds = array<i64: 8, 256>}, {pipeline_mode = #tpu.pipeline_mode<synchronous>, transform_indices = @transform_3, window_bounds = array<i64: 8, 8>}, {pipeline_mode = #tpu.pipeline_mode<synchronous>, transform_indices = @transform_4, window_bounds = array<i64: 2, 256>}, {pipeline_mode = #tpu.pipeline_mode<synchronous>, transform_indices = @transform_5, window_bounds = array<i64: 16, 24>}, {pipeline_mode = #tpu.pipeline_mode<synchronous>, transform_indices = @transform_6, window_bounds = array<i64: 32, 48>}, {pipeline_mode = #tpu.pipeline_mode<synchronous>, transform_indices = @transform_7, window_bounds = array<i64: 16, 96>}, {pipeline_mode = #tpu.pipeline_mode<synchronous>, transform_indices = @transform_8, window_bounds = array<i64: 64, 2>}, {pipeline_mode = #tpu.pipeline_mode<synchronous>, transform_indices = @transform_9, window_bounds = array<i64: 16, 16>}, {pipeline_mode = #tpu.pipeline_mode<synchronous>, transform_indices = @transform_10, window_bounds = array<i64: 16, 128>}, {pipeline_mode = #tpu.pipeline_mode<synchronous>, transform_indices = @transform_11, window_bounds = array<i64: 4, 128>}, {transform_indices = @transform_12, window_bounds = array<i64: 8, 128>}]} {
    %c0 = arith.constant 0 : index
    %c0_0 = arith.constant 0 : index
    %0 = vector.load %arg1[%c0, %c0_0] : memref<8x256xf32, #tpu.memory_space<vmem>>, vector<8x256xf32>
    %c0_1 = arith.constant 0 : index
    %c0_2 = arith.constant 0 : index
    %1 = vector.load %arg3[%c0_1, %c0_2] : memref<8x256xf32, #tpu.memory_space<vmem>>, vector<8x256xf32>
    %c0_3 = arith.constant 0 : index
    %c0_4 = arith.constant 0 : index
    %2 = vector.load %arg2[%c0_3, %c0_4] : memref<2x256xf32, #tpu.memory_space<vmem>>, vector<1x256xf32>
    %c1 = arith.constant 1 : index
    %c0_5 = arith.constant 0 : index
    %3 = vector.load %arg2[%c1, %c0_5] : memref<2x256xf32, #tpu.memory_space<vmem>>, vector<1x1xf32>
    %4 = vector.broadcast %2 : vector<1x256xf32> to vector<8x256xf32>
    %5 = arith.mulf %0, %4 : vector<8x256xf32>
    %cst = arith.constant dense<0.000000e+00> : vector<8x8xf32>
    %6 = tpu.matmul %5, %1, %cst {dimension_numbers = #tpu.dot_dimension_numbers<[1], [1], [0], [0], [0, 0, 1, 0], [], []>, precision = #tpu.contract_precision<fp32>} : vector<8x256xf32>, vector<8x256xf32>, vector<8x8xf32> -> vector<8x8xf32>
    %7 = vector.broadcast %3 : vector<1x1xf32> to vector<8x8xf32>
    %8 = arith.addf %6, %7 : vector<8x8xf32>
    %9 = math.absf %0 : vector<8x256xf32>
    %cst_6 = arith.constant dense<0.000000e+00> : vector<8x8xf32>
    %10 = tpu.matmul %9, %1, %cst_6 {dimension_numbers = #tpu.dot_dimension_numbers<[1], [1], [0], [0], [0, 0, 1, 0], [], []>, precision = #tpu.contract_precision<fp32>} : vector<8x256xf32>, vector<8x256xf32>, vector<8x8xf32> -> vector<8x8xf32>
    %cst_7 = arith.constant 0.000000e+00 : f32
    %11 = vector.broadcast %cst_7 : f32 to vector<8x8xf32>
    %12 = arith.cmpf ogt, %10, %11 : vector<8x8xf32>
    %cst_8 = arith.constant -1.000000e+10 : f32
    %13 = vector.broadcast %cst_8 : f32 to vector<8x8xf32>
    %14 = arith.select %12, %8, %13 : vector<8x8xi1>, vector<8x8xf32>
    %cst_9 = arith.constant dense<0xFF800000> : vector<8xf32>
    %15 = vector.multi_reduction <maximumf>, %14, %cst_9 [0] : vector<8x8xf32> to vector<8xf32>
    %16 = vector.shape_cast %15 : vector<8xf32> to vector<1x8xf32>
    %17 = vector.broadcast %16 : vector<1x8xf32> to vector<8x8xf32>
    %18 = arith.subf %14, %17 : vector<8x8xf32>
    %19 = math.exp %18 : vector<8x8xf32>
    %cst_10 = arith.constant dense<0.000000e+00> : vector<8xf32>
    %20 = vector.multi_reduction <add>, %19, %cst_10 [0] : vector<8x8xf32> to vector<8xf32>
    %21 = vector.shape_cast %20 : vector<8xf32> to vector<1x8xf32>
    %22 = tpu.reciprocal %21 {approx = true} : vector<1x8xf32> -> vector<1x8xf32>
    %23 = vector.broadcast %22 : vector<1x8xf32> to vector<8x8xf32>
    %24 = arith.mulf %19, %23 : vector<8x8xf32>
    %cst_11 = arith.constant dense<0.000000e+00> : vector<8x256xf32>
    %25 = tpu.matmul %24, %1, %cst_11 {dimension_numbers = #tpu.dot_dimension_numbers<[1], [0], [0], [1], [0, 0, 1, 1], [], []>, precision = #tpu.contract_precision<fp32>} : vector<8x8xf32>, vector<8x256xf32>, vector<8x256xf32> -> vector<8x256xf32>
    %c0_12 = arith.constant 0 : index
    %c0_13 = arith.constant 0 : index
    %26 = vector.load %arg4[%c0_12, %c0_13] : memref<8x8xf32, #tpu.memory_space<vmem>>, vector<8x8xf32>
    %27 = arith.mulf %0, %25 : vector<8x256xf32>
    %cst_14 = arith.constant dense<0.000000e+00> : vector<8x256xf32>
    %28 = tpu.matmul %26, %27, %cst_14 {dimension_numbers = #tpu.dot_dimension_numbers<[1], [0], [0], [1], [0, 0, 1, 1], [], []>, precision = #tpu.contract_precision<fp32>} : vector<8x8xf32>, vector<8x256xf32>, vector<8x256xf32> -> vector<8x256xf32>
    %c0_15 = arith.constant 0 : index
    %c0_16 = arith.constant 0 : index
    %29 = vector.load %arg5[%c0_15, %c0_16] : memref<2x256xf32, #tpu.memory_space<vmem>>, vector<1x256xf32>
    %c1_17 = arith.constant 1 : index
    %c0_18 = arith.constant 0 : index
    %30 = vector.load %arg5[%c1_17, %c0_18] : memref<2x256xf32, #tpu.memory_space<vmem>>, vector<1x256xf32>
    %c0_19 = arith.constant 0 : index
    %c0_20 = arith.constant 0 : index
    %31 = vector.load %arg9[%c0_19, %c0_20] : memref<64x2xf32, #tpu.memory_space<vmem>>, vector<64x2xf32>
    %c0_21 = arith.constant 0 : index
    %c0_22 = arith.constant 0 : index
    %32 = vector.load %arg6[%c0_21, %c0_22] : memref<16x24xf32, #tpu.memory_space<vmem>>, vector<16x24xf32>
    %c1_i32 = arith.constant 1 : i32
    %33 = tpu.dynamic_rotate %28 by %c1_i32 dim 1 : vector<8x256xf32>, i32 -> vector<8x256xf32>
    %34 = vector.broadcast %29 : vector<1x256xf32> to vector<8x256xf32>
    %35 = arith.mulf %33, %34 : vector<8x256xf32>
    %c255_i32 = arith.constant 255 : i32
    %36 = tpu.dynamic_rotate %28 by %c255_i32 dim 1 : vector<8x256xf32>, i32 -> vector<8x256xf32>
    %37 = vector.broadcast %30 : vector<1x256xf32> to vector<8x256xf32>
    %38 = arith.mulf %36, %37 : vector<8x256xf32>
    %39 = tpu.concatenate %35, %28, %38 in 0 : vector<8x256xf32>, vector<8x256xf32>, vector<8x256xf32> -> vector<24x256xf32>
    %cst_23 = arith.constant dense<0.000000e+00> : vector<16x256xf32>
    %40 = tpu.matmul %32, %39, %cst_23 {dimension_numbers = #tpu.dot_dimension_numbers<[1], [0], [0], [1], [0, 0, 1, 1], [], []>, precision = #tpu.contract_precision<fp32>} : vector<16x24xf32>, vector<24x256xf32>, vector<16x256xf32> -> vector<16x256xf32>
    %41 = vector.extract_strided_slice %31 {offsets = [0, 0], sizes = [16, 1], strides = [1, 1]} : vector<64x2xf32> to vector<16x1xf32>
    %42 = vector.broadcast %41 : vector<16x1xf32> to vector<16x256xf32>
    %43 = arith.mulf %40, %42 : vector<16x256xf32>
    %44 = vector.extract_strided_slice %31 {offsets = [0, 1], sizes = [16, 1], strides = [1, 1]} : vector<64x2xf32> to vector<16x1xf32>
    %45 = vector.broadcast %44 : vector<16x1xf32> to vector<16x256xf32>
    %46 = arith.addf %43, %45 : vector<16x256xf32>
    %cst_24 = arith.constant 0.000000e+00 : f32
    %47 = vector.broadcast %cst_24 : f32 to vector<16x256xf32>
    %48 = arith.maximumf %46, %47 : vector<16x256xf32>
    %c0_25 = arith.constant 0 : index
    %c0_26 = arith.constant 0 : index
    %49 = vector.load %arg7[%c0_25, %c0_26] : memref<32x48xf32, #tpu.memory_space<vmem>>, vector<32x48xf32>
    %c1_i32_27 = arith.constant 1 : i32
    %50 = tpu.dynamic_rotate %48 by %c1_i32_27 dim 1 : vector<16x256xf32>, i32 -> vector<16x256xf32>
    %51 = vector.broadcast %29 : vector<1x256xf32> to vector<16x256xf32>
    %52 = arith.mulf %50, %51 : vector<16x256xf32>
    %c255_i32_28 = arith.constant 255 : i32
    %53 = tpu.dynamic_rotate %48 by %c255_i32_28 dim 1 : vector<16x256xf32>, i32 -> vector<16x256xf32>
    %54 = vector.broadcast %30 : vector<1x256xf32> to vector<16x256xf32>
    %55 = arith.mulf %53, %54 : vector<16x256xf32>
    %56 = tpu.concatenate %52, %48, %55 in 0 : vector<16x256xf32>, vector<16x256xf32>, vector<16x256xf32> -> vector<48x256xf32>
    %cst_29 = arith.constant dense<0.000000e+00> : vector<32x256xf32>
    %57 = tpu.matmul %49, %56, %cst_29 {dimension_numbers = #tpu.dot_dimension_numbers<[1], [0], [0], [1], [0, 0, 1, 1], [], []>, precision = #tpu.contract_precision<fp32>} : vector<32x48xf32>, vector<48x256xf32>, vector<32x256xf32> -> vector<32x256xf32>
    %58 = vector.extract_strided_slice %31 {offsets = [16, 0], sizes = [32, 1], strides = [1, 1]} : vector<64x2xf32> to vector<32x1xf32>
    %59 = vector.broadcast %58 : vector<32x1xf32> to vector<32x256xf32>
    %60 = arith.mulf %57, %59 : vector<32x256xf32>
    %61 = vector.extract_strided_slice %31 {offsets = [16, 1], sizes = [32, 1], strides = [1, 1]} : vector<64x2xf32> to vector<32x1xf32>
    %62 = vector.broadcast %61 : vector<32x1xf32> to vector<32x256xf32>
    %63 = arith.addf %60, %62 : vector<32x256xf32>
    %cst_30 = arith.constant 0.000000e+00 : f32
    %64 = vector.broadcast %cst_30 : f32 to vector<32x256xf32>
    %65 = arith.maximumf %63, %64 : vector<32x256xf32>
    %c0_31 = arith.constant 0 : index
    %c0_32 = arith.constant 0 : index
    %66 = vector.load %arg8[%c0_31, %c0_32] : memref<16x96xf32, #tpu.memory_space<vmem>>, vector<16x96xf32>
    %c1_i32_33 = arith.constant 1 : i32
    %67 = tpu.dynamic_rotate %65 by %c1_i32_33 dim 1 : vector<32x256xf32>, i32 -> vector<32x256xf32>
    %68 = vector.broadcast %29 : vector<1x256xf32> to vector<32x256xf32>
    %69 = arith.mulf %67, %68 : vector<32x256xf32>
    %c255_i32_34 = arith.constant 255 : i32
    %70 = tpu.dynamic_rotate %65 by %c255_i32_34 dim 1 : vector<32x256xf32>, i32 -> vector<32x256xf32>
    %71 = vector.broadcast %30 : vector<1x256xf32> to vector<32x256xf32>
    %72 = arith.mulf %70, %71 : vector<32x256xf32>
    %73 = tpu.concatenate %69, %65, %72 in 0 : vector<32x256xf32>, vector<32x256xf32>, vector<32x256xf32> -> vector<96x256xf32>
    %cst_35 = arith.constant dense<0.000000e+00> : vector<16x256xf32>
    %74 = tpu.matmul %66, %73, %cst_35 {dimension_numbers = #tpu.dot_dimension_numbers<[1], [0], [0], [1], [0, 0, 1, 1], [], []>, precision = #tpu.contract_precision<fp32>} : vector<16x96xf32>, vector<96x256xf32>, vector<16x256xf32> -> vector<16x256xf32>
    %75 = vector.extract_strided_slice %31 {offsets = [48, 0], sizes = [16, 1], strides = [1, 1]} : vector<64x2xf32> to vector<16x1xf32>
    %76 = vector.broadcast %75 : vector<16x1xf32> to vector<16x256xf32>
    %77 = arith.mulf %74, %76 : vector<16x256xf32>
    %78 = vector.extract_strided_slice %31 {offsets = [48, 1], sizes = [16, 1], strides = [1, 1]} : vector<64x2xf32> to vector<16x1xf32>
    %79 = vector.broadcast %78 : vector<16x1xf32> to vector<16x256xf32>
    %80 = arith.addf %77, %79 : vector<16x256xf32>
    %cst_36 = arith.constant 0.000000e+00 : f32
    %81 = vector.broadcast %cst_36 : f32 to vector<16x256xf32>
    %82 = arith.maximumf %80, %81 : vector<16x256xf32>
    %cst_37 = arith.constant dense<0.000000e+00> : vector<8x16xf32>
    %83 = tpu.matmul %1, %82, %cst_37 {dimension_numbers = #tpu.dot_dimension_numbers<[1], [1], [0], [0], [0, 0, 1, 0], [], []>, precision = #tpu.contract_precision<fp32>} : vector<8x256xf32>, vector<16x256xf32>, vector<8x16xf32> -> vector<8x16xf32>
    %cst_38 = arith.constant 3.125000e-02 : f32
    %84 = vector.broadcast %cst_38 : f32 to vector<8x16xf32>
    %85 = arith.mulf %83, %84 : vector<8x16xf32>
    %c0_39 = arith.constant 0 : index
    %c0_40 = arith.constant 0 : index
    %86 = vector.load %arg12[%c0_39, %c0_40] : memref<4x128xf32, #tpu.memory_space<vmem>>, vector<4x128xf32>
    %c0_41 = arith.constant 0 : index
    %c0_42 = arith.constant 0 : index
    %87 = vector.load %arg10[%c0_41, %c0_42] : memref<16x16xf32, #tpu.memory_space<vmem>>, vector<16x16xf32>
    %cst_43 = arith.constant dense<0.000000e+00> : vector<8x16xf32>
    %88 = tpu.matmul %85, %87, %cst_43 {dimension_numbers = #tpu.dot_dimension_numbers<[1], [0], [0], [1], [0, 0, 1, 1], [], []>, precision = #tpu.contract_precision<fp32>} : vector<8x16xf32>, vector<16x16xf32>, vector<8x16xf32> -> vector<8x16xf32>
    %89 = vector.extract_strided_slice %86 {offsets = [0, 0], sizes = [1, 16], strides = [1, 1]} : vector<4x128xf32> to vector<1x16xf32>
    %90 = vector.broadcast %89 : vector<1x16xf32> to vector<8x16xf32>
    %91 = arith.addf %88, %90 : vector<8x16xf32>
    %cst_44 = arith.constant dense<0.000000e+00> : vector<8xf32>
    %92 = vector.multi_reduction <add>, %91, %cst_44 [1] : vector<8x16xf32> to vector<8xf32>
    %93 = vector.shape_cast %92 : vector<8xf32> to vector<8x1xf32>
    %cst_45 = arith.constant 1.600000e+01 : f32
    %94 = vector.broadcast %cst_45 : f32 to vector<8x1xf32>
    %95 = arith.divf %93, %94 : vector<8x1xf32>
    %96 = vector.broadcast %95 : vector<8x1xf32> to vector<8x16xf32>
    %97 = arith.subf %91, %96 : vector<8x16xf32>
    %98 = arith.mulf %97, %97 : vector<8x16xf32>
    %cst_46 = arith.constant dense<0.000000e+00> : vector<8xf32>
    %99 = vector.multi_reduction <add>, %98, %cst_46 [1] : vector<8x16xf32> to vector<8xf32>
    %100 = vector.shape_cast %99 : vector<8xf32> to vector<8x1xf32>
    %cst_47 = arith.constant 1.600000e+01 : f32
    %101 = vector.broadcast %cst_47 : f32 to vector<8x1xf32>
    %102 = arith.divf %100, %101 : vector<8x1xf32>
    %103 = vector.broadcast %95 : vector<8x1xf32> to vector<8x16xf32>
    %104 = arith.subf %91, %103 : vector<8x16xf32>
    %cst_48 = arith.constant 9.99999974E-6 : f32
    %105 = vector.broadcast %cst_48 : f32 to vector<8x1xf32>
    %106 = arith.addf %102, %105 : vector<8x1xf32>
    %107 = math.rsqrt %106 : vector<8x1xf32>
    %108 = vector.broadcast %107 : vector<8x1xf32> to vector<8x16xf32>
    %109 = arith.mulf %104, %108 : vector<8x16xf32>
    %110 = vector.extract_strided_slice %86 {offsets = [1, 0], sizes = [1, 16], strides = [1, 1]} : vector<4x128xf32> to vector<1x16xf32>
    %111 = vector.broadcast %110 : vector<1x16xf32> to vector<8x16xf32>
    %112 = arith.mulf %109, %111 : vector<8x16xf32>
    %113 = vector.extract_strided_slice %86 {offsets = [2, 0], sizes = [1, 16], strides = [1, 1]} : vector<4x128xf32> to vector<1x16xf32>
    %114 = vector.broadcast %113 : vector<1x16xf32> to vector<8x16xf32>
    %115 = arith.addf %112, %114 : vector<8x16xf32>
    %cst_49 = arith.constant 0.000000e+00 : f32
    %116 = vector.broadcast %cst_49 : f32 to vector<8x16xf32>
    %117 = arith.maximumf %115, %116 : vector<8x16xf32>
    %c0_50 = arith.constant 0 : index
    %c0_51 = arith.constant 0 : index
    %118 = vector.load %arg11[%c0_50, %c0_51] : memref<16x128xf32, #tpu.memory_space<vmem>>, vector<16x128xf32>
    %cst_52 = arith.constant dense<0.000000e+00> : vector<8x128xf32>
    %119 = tpu.matmul %117, %118, %cst_52 {dimension_numbers = #tpu.dot_dimension_numbers<[1], [0], [0], [1], [0, 0, 1, 1], [], []>, precision = #tpu.contract_precision<fp32>} : vector<8x16xf32>, vector<16x128xf32>, vector<8x128xf32> -> vector<8x128xf32>
    %120 = vector.extract_strided_slice %86 {offsets = [3, 0], sizes = [1, 128], strides = [1, 1]} : vector<4x128xf32> to vector<1x128xf32>
    %121 = vector.broadcast %120 : vector<1x128xf32> to vector<8x128xf32>
    %122 = arith.addf %119, %121 : vector<8x128xf32>
    %c0_53 = arith.constant 0 : index
    %c0_54 = arith.constant 0 : index
    %123 = vector.load %arg13[%c0_53, %c0_54] : memref<8x128xf32, #tpu.memory_space<vmem>>, vector<8x128xf32>
    tpu.vector_store %arg13[%c0_53, %c0_54], %122 {strides = array<i32>} : memref<8x128xf32, #tpu.memory_space<vmem>>, vector<8x128xf32>,
    return
  }
  func.func @transform_0(%arg0: i32) -> (i32, i32) {
    %c0_i32 = arith.constant 0 : i32
    %c0_i32_0 = arith.constant 0 : i32
    return %c0_i32, %arg0 : i32, i32
  }
  func.func @transform_1(%arg0: i32) -> (i32, i32) {
    %c0_i32 = arith.constant 0 : i32
    %c0_i32_0 = arith.constant 0 : i32
    %c0_i32_1 = arith.constant 0 : i32
    return %c0_i32, %c0_i32_0 : i32, i32
  }
  func.func @transform_2(%arg0: i32) -> (i32, i32) {
    %c0_i32 = arith.constant 0 : i32
    %c0_i32_0 = arith.constant 0 : i32
    %c0_i32_1 = arith.constant 0 : i32
    return %c0_i32, %c0_i32_0 : i32, i32
  }
  func.func @transform_3(%arg0: i32) -> (i32, i32) {
    %c0_i32 = arith.constant 0 : i32
    %c0_i32_0 = arith.constant 0 : i32
    %c0_i32_1 = arith.constant 0 : i32
    return %c0_i32, %c0_i32_0 : i32, i32
  }
  func.func @transform_4(%arg0: i32) -> (i32, i32) {
    %c0_i32 = arith.constant 0 : i32
    %c0_i32_0 = arith.constant 0 : i32
    %c0_i32_1 = arith.constant 0 : i32
    return %c0_i32, %c0_i32_0 : i32, i32
  }
  func.func @transform_5(%arg0: i32) -> (i32, i32) {
    %c0_i32 = arith.constant 0 : i32
    %c0_i32_0 = arith.constant 0 : i32
    %c0_i32_1 = arith.constant 0 : i32
    return %c0_i32, %c0_i32_0 : i32, i32
  }
  func.func @transform_6(%arg0: i32) -> (i32, i32) {
    %c0_i32 = arith.constant 0 : i32
    %c0_i32_0 = arith.constant 0 : i32
    %c0_i32_1 = arith.constant 0 : i32
    return %c0_i32, %c0_i32_0 : i32, i32
  }
  func.func @transform_7(%arg0: i32) -> (i32, i32) {
    %c0_i32 = arith.constant 0 : i32
    %c0_i32_0 = arith.constant 0 : i32
    %c0_i32_1 = arith.constant 0 : i32
    return %c0_i32, %c0_i32_0 : i32, i32
  }
  func.func @transform_8(%arg0: i32) -> (i32, i32) {
    %c0_i32 = arith.constant 0 : i32
    %c0_i32_0 = arith.constant 0 : i32
    %c0_i32_1 = arith.constant 0 : i32
    return %c0_i32, %c0_i32_0 : i32, i32
  }
  func.func @transform_9(%arg0: i32) -> (i32, i32) {
    %c0_i32 = arith.constant 0 : i32
    %c0_i32_0 = arith.constant 0 : i32
    %c0_i32_1 = arith.constant 0 : i32
    return %c0_i32, %c0_i32_0 : i32, i32
  }
  func.func @transform_10(%arg0: i32) -> (i32, i32) {
    %c0_i32 = arith.constant 0 : i32
    %c0_i32_0 = arith.constant 0 : i32
    %c0_i32_1 = arith.constant 0 : i32
    return %c0_i32, %c0_i32_0 : i32, i32
  }
  func.func @transform_11(%arg0: i32) -> (i32, i32) {
    %c0_i32 = arith.constant 0 : i32
    %c0_i32_0 = arith.constant 0 : i32
    %c0_i32_1 = arith.constant 0 : i32
    return %c0_i32, %c0_i32_0 : i32, i32
  }
  func.func @transform_12(%arg0: i32) -> (i32, i32) {
    %c0_i32 = arith.constant 0 : i32
    %c0_i32_0 = arith.constant 0 : i32
    return %arg0, %c0_i32 : i32, i32
  }
}

</mosaic_0001>

<llo_original>
// kernel: tpu_custom_call.1
$region0: #{tpu_custom_call.1}
  #allocation0 [shape = 'u32[]', space=smem, size = 0x4, offset = 0x4, fixed_abs, tag = 'smem constant byte address 0x4 - core index']
  #allocation1 [shape = 'u32[144,128]{1,0:T(1,128)}', space=vmem, size = 0x12000, scoped, tag = 'internal scratch']
  %s0 = inlined_call_operand.vmem [shape: f32[8,512], index: 0, kind: input, shape index: {}]
  %s1 = inlined_call_operand.hbm [shape: f32[2,256], index: 1, kind: input, shape index: {}]
  %s2 = inlined_call_operand.hbm [shape: f32[8,256], index: 2, kind: input, shape index: {}]
  %s3 = inlined_call_operand.hbm [shape: f32[8,8], index: 3, kind: input, shape index: {}]
  %s4 = inlined_call_operand.hbm [shape: f32[2,256], index: 4, kind: input, shape index: {}]
  %s5 = inlined_call_operand.hbm [shape: f32[16,24], index: 5, kind: input, shape index: {}]
  %s6 = inlined_call_operand.vmem [shape: f32[32,48], index: 6, kind: input, shape index: {}]
  %s7 = inlined_call_operand.hbm [shape: f32[16,96], index: 7, kind: input, shape index: {}]
  %s8 = inlined_call_operand.vmem [shape: f32[64,2], index: 8, kind: input, shape index: {}]
  %s9 = inlined_call_operand.vmem [shape: f32[16,16], index: 9, kind: input, shape index: {}]
  %s10 = inlined_call_operand.hbm [shape: f32[16,128], index: 10, kind: input, shape index: {}]
  %s11 = inlined_call_operand.vmem [shape: f32[4,128], index: 11, kind: input, shape index: {}]
  %s12 = inlined_call_operand.hbm [shape: f32[16,128], index: 12, kind: output, shape index: {}]
  %s13 = sld [smem:[#allocation0]]
  $region109: #{tpu_custom_call.1} parent=0
    _
  %s15 = ssub.s32 1, %s13
  %s16 = scalar_select 0, %s15, %s13
  $region1: #{tpu_custom_call.1} parent=0
    #allocation2 [shape = 'u8[2048]{0}', space=vmem, size = 0x800, scoped, tag = 'input window, operand 1, single buffered']
    #allocation3 [shape = 's32[2]{0}', space=sflag, size = 0x8, scoped, tag = 'scoped memory for tpu_custom_call.1']
    #allocation4 [shape = 's32[2]{0}', space=sflag, size = 0x8, scoped, tag = 'scoped memory for tpu_custom_call.1']
    #allocation5 [shape = 'u8[8192]{0}', space=vmem, size = 0x2000, scoped, tag = 'input window, operand 2, single buffered']
    #allocation6 [shape = 's32[1]{0}', space=sflag, size = 0x4, scoped, tag = 'scoped memory for tpu_custom_call.1']
    #allocation7 [shape = 'u8[4096]{0}', space=vmem, size = 0x1000, scoped, tag = 'input window, operand 3, single buffered']
    #allocation8 [shape = 'u8[2048]{0}', space=vmem, size = 0x800, scoped, tag = 'input window, operand 4, single buffered']
    #allocation9 [shape = 's32[1]{0}', space=sflag, size = 0x4, scoped, tag = 'scoped memory for tpu_custom_call.1']
    #allocation10 [shape = 'u8[8192]{0}', space=vmem, size = 0x2000, scoped, tag = 'input window, operand 5, single buffered']
    #allocation11 [shape = 'u8[8192]{0}', space=vmem, size = 0x2000, scoped, tag = 'input window, operand 7, single buffered']
    #allocation12 [shape = 's32[1]{0}', space=sflag, size = 0x4, scoped, tag = 'scoped memory for tpu_custom_call.1']
    #allocation13 [shape = 'u8[8192]{0}', space=vmem, size = 0x2000, scoped, tag = 'input window, operand 10, single buffered']
    #allocation14 [shape = 'u8[8192]{0}', space=vmem, size = 0x2000, scoped, tag = 'output window, operand 0']
    %17 = vsyncpa [#allocation3], 0
    %18 = vsyncpa [#allocation6], 0
    %19 = vsyncpa [#allocation9], 0
    %20 = vsyncpa [#allocation12], 0
    %21 = vsyncpa [#allocation4], 0
    %s22 = scalar_lea.sflag [#allocation4], 1
    %23 = vsyncpa %s22, 0
    loop: start=0, step=1, limit=4
    $region2: #{tpu_custom_call.1} parent=1 // loop_pre_header
      _
    $region3: #{tpu_custom_call.1} parent=1 // loop_header
      %s25 = sphi 0, %s29
      %p26 = scmp.ge.s32.totalorder %s25, 4
      %s35 = sphi 0, %s37
      %s38 = sphi 0, %s35
      %s39 = sphi 0, %s38
      %s55 = sphi 0, %s39
      %s59 = sphi 0, %s59
      %s61 = sphi 0, %s59
      %s62 = sphi 0, %s61
      %s76 = sphi 0, %s62
      %s80 = sphi 0, %s80
      %s82 = sphi 0, %s80
      %s83 = sphi 0, %s82
      %s97 = sphi 0, %s83
      %s101 = sphi 0, %s101
      %s103 = sphi 0, %s101
      %s104 = sphi 0, %s103
      %s118 = sphi 0, %s104
      %s122 = sphi 0, %s122
      %s124 = sphi 0, %s122
      %s125 = sphi 0, %s124
      %s139 = sphi 0, %s125
      %s143 = sphi 0, %s143
      %s145 = sphi 0, %s143
      %s146 = sphi 0, %s145
      %s160 = sphi 0, %s146
      %s164 = sphi 0, %s164
      %s166 = sphi 0, %s164
      %s167 = sphi 0, %s166
      %s181 = sphi 0, %s167
      %s185 = sphi 0, %s185
      %s187 = sphi 0, %s185
      %s188 = sphi 0, %s187
      %s202 = sphi 0, %s188
      %s206 = sphi 0, %s206
      %s208 = sphi 0, %s206
      %s209 = sphi 0, %s208
      %s223 = sphi 0, %s209
      %s227 = sphi 0, %s227
      %s229 = sphi 0, %s227
      %s230 = sphi 0, %s229
      %s244 = sphi 0, %s230
      %s248 = sphi 0, %s248
      %s250 = sphi 0, %s248
      %s251 = sphi 0, %s250
      %s265 = sphi 0, %s251
      %s269 = sphi 0, %s269
      %s271 = sphi 0, %s269
      %s272 = sphi 0, %s271
      %s286 = sphi 0, %s272
      %s292 = sphi 0, %s294
      %s295 = sphi 0, %s292
      %s296 = sphi 0, %s295
      %s312 = sphi 0, %s296
    $region4: #{tpu_custom_call.1} parent=1 // loop_header_branch
      %28 = sbr.rel (%p26) target = $region8
    $region5: #{tpu_custom_call.1} parent=1 // loop_body
      %s30 = ssub.s32 %s25, 1
      %s31 = ssub.s32 %s25, 2
      %s32 = sadd.s32 %s25, 1
      %s33 = ssub.s32 %s25, %s32
      %p34 = scmp.eq.s32.totalorder %s33, 0
      %s36 = sadd.s32 %s35, 1
      %s37 = scalar_select %p34, %s35, %s36
      %p40 = pneg %p34
      %p41 = scmp.eq.s32.totalorder %s25, 1
      %p42 = por %p40, %p41
      %p43 = scmp.ne.s32.totalorder %s35, %s38
      %p44 = scmp.eq.s32.totalorder %s25, 0
      %p45 = por %p43, %p44
      %p46 = scmp.ne.s32.totalorder %s35, %s38
      %p47 = scmp.eq.s32.totalorder %s30, 1
      %p48 = por %p46, %p47
      %p49 = scmp.ne.s32.totalorder %s38, %s39
      %p50 = scmp.eq.s32.totalorder %s30, 0
      %p51 = por %p49, %p50
      %p52 = scmp.ne.s32.totalorder %s38, %s39
      %p53 = scmp.eq.s32.totalorder %s31, 1
      %p54 = por %p52, %p53
      %p56 = scmp.ne.s32.totalorder %s39, %s55
      %p57 = scmp.eq.s32.totalorder %s31, 0
      %p58 = por %p56, %p57
      %s60 = sadd.s32 %s59, 1
      %p63 = scmp.eq.s32.totalorder %s25, 1
      %p64 = scmp.ne.s32.totalorder %s59, %s61
      %p65 = scmp.eq.s32.totalorder %s25, 0
      %p66 = por %p64, %p65
      %p67 = scmp.ne.s32.totalorder %s59, %s61
      %p68 = scmp.eq.s32.totalorder %s30, 1
      %p69 = por %p67, %p68
      %p70 = scmp.ne.s32.totalorder %s61, %s62
      %p71 = scmp.eq.s32.totalorder %s30, 0
      %p72 = por %p70, %p71
      %p73 = scmp.ne.s32.totalorder %s61, %s62
      %p74 = scmp.eq.s32.totalorder %s31, 1
      %p75 = por %p73, %p74
      %p77 = scmp.ne.s32.totalorder %s62, %s76
      %p78 = scmp.eq.s32.totalorder %s31, 0
      %p79 = por %p77, %p78
      %s81 = sadd.s32 %s80, 1
      %p84 = scmp.eq.s32.totalorder %s25, 1
      %p85 = scmp.ne.s32.totalorder %s80, %s82
      %p86 = scmp.eq.s32.totalorder %s25, 0
      %p87 = por %p85, %p86
      %p88 = scmp.ne.s32.totalorder %s80, %s82
      %p89 = scmp.eq.s32.totalorder %s30, 1
      %p90 = por %p88, %p89
      %p91 = scmp.ne.s32.totalorder %s82, %s83
      %p92 = scmp.eq.s32.totalorder %s30, 0
      %p93 = por %p91, %p92
      %p94 = scmp.ne.s32.totalorder %s82, %s83
      %p95 = scmp.eq.s32.totalorder %s31, 1
      %p96 = por %p94, %p95
      %p98 = scmp.ne.s32.totalorder %s83, %s97
      %p99 = scmp.eq.s32.totalorder %s31, 0
      %p100 = por %p98, %p99
      %s102 = sadd.s32 %s101, 1
      %p105 = scmp.eq.s32.totalorder %s25, 1
      %p106 = scmp.ne.s32.totalorder %s101, %s103
      %p107 = scmp.eq.s32.totalorder %s25, 0
      %p108 = por %p106, %p107
      %p109 = scmp.ne.s32.totalorder %s101, %s103
      %p110 = scmp.eq.s32.totalorder %s30, 1
      %p111 = por %p109, %p110
      %p112 = scmp.ne.s32.totalorder %s103, %s104
      %p113 = scmp.eq.s32.totalorder %s30, 0
      %p114 = por %p112, %p113
      %p115 = scmp.ne.s32.totalorder %s103, %s104
      %p116 = scmp.eq.s32.totalorder %s31, 1
      %p117 = por %p115, %p116
      %p119 = scmp.ne.s32.totalorder %s104, %s118
      %p120 = scmp.eq.s32.totalorder %s31, 0
      %p121 = por %p119, %p120
      %s123 = sadd.s32 %s122, 1
      %p126 = scmp.eq.s32.totalorder %s25, 1
      %p127 = scmp.ne.s32.totalorder %s122, %s124
      %p128 = scmp.eq.s32.totalorder %s25, 0
      %p129 = por %p127, %p128
      %p130 = scmp.ne.s32.totalorder %s122, %s124
      %p131 = scmp.eq.s32.totalorder %s30, 1
      %p132 = por %p130, %p131
      %p133 = scmp.ne.s32.totalorder %s124, %s125
      %p134 = scmp.eq.s32.totalorder %s30, 0
      %p135 = por %p133, %p134
      %p136 = scmp.ne.s32.totalorder %s124, %s125
      %p137 = scmp.eq.s32.totalorder %s31, 1
      %p138 = por %p136, %p137
      %p140 = scmp.ne.s32.totalorder %s125, %s139
      %p141 = scmp.eq.s32.totalorder %s31, 0
      %p142 = por %p140, %p141
      %s144 = sadd.s32 %s143, 1
      %p147 = scmp.eq.s32.totalorder %s25, 1
      %p148 = scmp.ne.s32.totalorder %s143, %s145
      %p149 = scmp.eq.s32.totalorder %s25, 0
      %p150 = por %p148, %p149
      %p151 = scmp.ne.s32.totalorder %s143, %s145
      %p152 = scmp.eq.s32.totalorder %s30, 1
      %p153 = por %p151, %p152
      %p154 = scmp.ne.s32.totalorder %s145, %s146
      %p155 = scmp.eq.s32.totalorder %s30, 0
      %p156 = por %p154, %p155
      %p157 = scmp.ne.s32.totalorder %s145, %s146
      %p158 = scmp.eq.s32.totalorder %s31, 1
      %p159 = por %p157, %p158
      %p161 = scmp.ne.s32.totalorder %s146, %s160
      %p162 = scmp.eq.s32.totalorder %s31, 0
      %p163 = por %p161, %p162
      %s165 = sadd.s32 %s164, 1
      %p168 = scmp.eq.s32.totalorder %s25, 1
      %p169 = scmp.ne.s32.totalorder %s164, %s166
      %p170 = scmp.eq.s32.totalorder %s25, 0
      %p171 = por %p169, %p170
      %p172 = scmp.ne.s32.totalorder %s164, %s166
      %p173 = scmp.eq.s32.totalorder %s30, 1
      %p174 = por %p172, %p173
      %p175 = scmp.ne.s32.totalorder %s166, %s167
      %p176 = scmp.eq.s32.totalorder %s30, 0
      %p177 = por %p175, %p176
      %p178 = scmp.ne.s32.totalorder %s166, %s167
      %p179 = scmp.eq.s32.totalorder %s31, 1
      %p180 = por %p178, %p179
      %p182 = scmp.ne.s32.totalorder %s167, %s181
      %p183 = scmp.eq.s32.totalorder %s31, 0
      %p184 = por %p182, %p183
      %s186 = sadd.s32 %s185, 1
      %p189 = scmp.eq.s32.totalorder %s25, 1
      %p190 = scmp.ne.s32.totalorder %s185, %s187
      %p191 = scmp.eq.s32.totalorder %s25, 0
      %p192 = por %p190, %p191
      %p193 = scmp.ne.s32.totalorder %s185, %s187
      %p194 = scmp.eq.s32.totalorder %s30, 1
      %p195 = por %p193, %p194
      %p196 = scmp.ne.s32.totalorder %s187, %s188
      %p197 = scmp.eq.s32.totalorder %s30, 0
      %p198 = por %p196, %p197
      %p199 = scmp.ne.s32.totalorder %s187, %s188
      %p200 = scmp.eq.s32.totalorder %s31, 1
      %p201 = por %p199, %p200
      %p203 = scmp.ne.s32.totalorder %s188, %s202
      %p204 = scmp.eq.s32.totalorder %s31, 0
      %p205 = por %p203, %p204
      %s207 = sadd.s32 %s206, 1
      %p210 = scmp.eq.s32.totalorder %s25, 1
      %p211 = scmp.ne.s32.totalorder %s206, %s208
      %p212 = scmp.eq.s32.totalorder %s25, 0
      %p213 = por %p211, %p212
      %p214 = scmp.ne.s32.totalorder %s206, %s208
      %p215 = scmp.eq.s32.totalorder %s30, 1
      %p216 = por %p214, %p215
      %p217 = scmp.ne.s32.totalorder %s208, %s209
      %p218 = scmp.eq.s32.totalorder %s30, 0
      %p219 = por %p217, %p218
      %p220 = scmp.ne.s32.totalorder %s208, %s209
      %p221 = scmp.eq.s32.totalorder %s31, 1
      %p222 = por %p220, %p221
      %p224 = scmp.ne.s32.totalorder %s209, %s223
      %p225 = scmp.eq.s32.totalorder %s31, 0
      %p226 = por %p224, %p225
      %s228 = sadd.s32 %s227, 1
      %p231 = scmp.eq.s32.totalorder %s25, 1
      %p232 = scmp.ne.s32.totalorder %s227, %s229
      %p233 = scmp.eq.s32.totalorder %s25, 0
      %p234 = por %p232, %p233
      %p235 = scmp.ne.s32.totalorder %s227, %s229
      %p236 = scmp.eq.s32.totalorder %s30, 1
      %p237 = por %p235, %p236
      %p238 = scmp.ne.s32.totalorder %s229, %s230
      %p239 = scmp.eq.s32.totalorder %s30, 0
      %p240 = por %p238, %p239
      %p241 = scmp.ne.s32.totalorder %s229, %s230
      %p242 = scmp.eq.s32.totalorder %s31, 1
      %p243 = por %p241, %p242
      %p245 = scmp.ne.s32.totalorder %s230, %s244
      %p246 = scmp.eq.s32.totalorder %s31, 0
      %p247 = por %p245, %p246
      %s249 = sadd.s32 %s248, 1
      %p252 = scmp.eq.s32.totalorder %s25, 1
      %p253 = scmp.ne.s32.totalorder %s248, %s250
      %p254 = scmp.eq.s32.totalorder %s25, 0
      %p255 = por %p253, %p254
      %p256 = scmp.ne.s32.totalorder %s248, %s250
      %p257 = scmp.eq.s32.totalorder %s30, 1
      %p258 = por %p256, %p257
      %p259 = scmp.ne.s32.totalorder %s250, %s251
      %p260 = scmp.eq.s32.totalorder %s30, 0
      %p261 = por %p259, %p260
      %p262 = scmp.ne.s32.totalorder %s250, %s251
      %p263 = scmp.eq.s32.totalorder %s31, 1
      %p264 = por %p262, %p263
      %p266 = scmp.ne.s32.totalorder %s251, %s265
      %p267 = scmp.eq.s32.totalorder %s31, 0
      %p268 = por %p266, %p267
      %s270 = sadd.s32 %s269, 1
      %p273 = scmp.eq.s32.totalorder %s25, 1
      %p274 = scmp.ne.s32.totalorder %s269, %s271
      %p275 = scmp.eq.s32.totalorder %s25, 0
      %p276 = por %p274, %p275
      %p277 = scmp.ne.s32.totalorder %s269, %s271
      %p278 = scmp.eq.s32.totalorder %s30, 1
      %p279 = por %p277, %p278
      %p280 = scmp.ne.s32.totalorder %s271, %s272
      %p281 = scmp.eq.s32.totalorder %s30, 0
      %p282 = por %p280, %p281
      %p283 = scmp.ne.s32.totalorder %s271, %s272
      %p284 = scmp.eq.s32.totalorder %s31, 1
      %p285 = por %p283, %p284
      %p287 = scmp.ne.s32.totalorder %s272, %s286
      %p288 = scmp.eq.s32.totalorder %s31, 0
      %p289 = por %p287, %p288
      %s290 = ssub.s32 %s25, %s32
      %p291 = scmp.eq.s32.totalorder %s290, 0
      %s293 = sadd.s32 %s292, 1
      %s294 = scalar_select %p291, %s292, %s293
      %p297 = pneg %p291
      %p298 = scmp.eq.s32.totalorder %s25, 1
      %p299 = por %p297, %p298
      %p300 = scmp.ne.s32.totalorder %s292, %s295
      %p301 = scmp.eq.s32.totalorder %s25, 0
      %p302 = por %p300, %p301
      %p303 = scmp.ne.s32.totalorder %s292, %s295
      %p304 = scmp.eq.s32.totalorder %s30, 1
      %p305 = por %p303, %p304
      %p306 = scmp.ne.s32.totalorder %s295, %s296
      %p307 = scmp.eq.s32.totalorder %s30, 0
      %p308 = por %p306, %p307
      %p309 = scmp.ne.s32.totalorder %s295, %s296
      %p310 = scmp.eq.s32.totalorder %s31, 1
      %p311 = por %p309, %p310
      %p313 = scmp.ne.s32.totalorder %s296, %s312
      %p314 = scmp.eq.s32.totalorder %s31, 0
      %p315 = por %p313, %p314
      %p316 = scmp.le.s32.totalorder 1, %s25
      %p317 = scmp.lt.s32.totalorder %s25, 3
      %p318 = pnand %p316, %p317
      %p319 = pneg %p318
      // Predicated region
      $region9: #{tpu_custom_call.1} parent=5 // pred_check
        _
      $region10: #{tpu_custom_call.1} parent=5 // pred_check_branch
        %321 = sbr.rel (%p318) target = $region12
      $region11: #{tpu_custom_call.1} parent=5 // pred_region
        %s322 = ssub.s32 %s25, 1
        // Predicated region
        $region13: #{tpu_custom_call.1} parent=11 // pred_check
          %p323 = pneg %p72
        $region14: #{tpu_custom_call.1} parent=11 // pred_check_branch
          %325 = sbr.rel (%p323) target = $region16
        $region15: #{tpu_custom_call.1} parent=11 // pred_region
          %s327 = ssub.s32 64, 64
          %328 = vsyncadd [#allocation3], %s327
          %s330 = sshll.u32 [#allocation2], 4
          %s331 = int_to_ptr.vmem [resolvable:$true] %s330
          %333 = dma.hbm_to_vmem [thread:$0]  %s1, 64, %s331, [#allocation3]
        $region16: #{tpu_custom_call.1} parent=11 // pred_fallthru
          _
        // Predicated region
        $region17: #{tpu_custom_call.1} parent=11 // pred_check
          %p334 = pneg %p93
        $region18: #{tpu_custom_call.1} parent=11 // pred_check_branch
          %336 = sbr.rel (%p334) target = $region20
        $region19: #{tpu_custom_call.1} parent=11 // pred_region
          %s338 = ssub.s32 256, 256
          %339 = vsyncadd [#allocation6], %s338
          %s341 = sshll.u32 [#allocation5], 4
          %s342 = int_to_ptr.vmem [resolvable:$true] %s341
          %344 = dma.hbm_to_vmem [thread:$0]  %s2, 256, %s342, [#allocation6]
        $region20: #{tpu_custom_call.1} parent=11 // pred_fallthru
          _
        // Predicated region
        $region21: #{tpu_custom_call.1} parent=11 // pred_check
          %p345 = pneg %p114
        $region22: #{tpu_custom_call.1} parent=11 // pred_check_branch
          %347 = sbr.rel (%p345) target = $region24
        $region23: #{tpu_custom_call.1} parent=11 // pred_region
          %s349 = ssub.s32 128, 128
          %350 = vsyncadd [#allocation6], %s349
          %s352 = sshll.u32 [#allocation7], 4
          %s353 = int_to_ptr.vmem [resolvable:$true] %s352
          %355 = dma.hbm_to_vmem [thread:$0]  %s3, 128, %s353, [#allocation6]
        $region24: #{tpu_custom_call.1} parent=11 // pred_fallthru
          _
        // Predicated region
        $region25: #{tpu_custom_call.1} parent=11 // pred_check
          %p356 = pneg %p135
        $region26: #{tpu_custom_call.1} parent=11 // pred_check_branch
          %358 = sbr.rel (%p356) target = $region28
        $region27: #{tpu_custom_call.1} parent=11 // pred_region
          %s360 = ssub.s32 64, 64
          %361 = vsyncadd [#allocation9], %s360
          %s363 = sshll.u32 [#allocation8], 4
          %s364 = int_to_ptr.vmem [resolvable:$true] %s363
          %366 = dma.hbm_to_vmem [thread:$0]  %s4, 64, %s364, [#allocation9]
        $region28: #{tpu_custom_call.1} parent=11 // pred_fallthru
          _
        // Predicated region
        $region29: #{tpu_custom_call.1} parent=11 // pred_check
          %p367 = pneg %p156
        $region30: #{tpu_custom_call.1} parent=11 // pred_check_branch
          %369 = sbr.rel (%p367) target = $region32
        $region31: #{tpu_custom_call.1} parent=11 // pred_region
          %s371 = ssub.s32 256, 256
          %372 = vsyncadd [#allocation9], %s371
          %s373 = sshll.u32 [#allocation10], 4
          %s374 = int_to_ptr.vmem [resolvable:$true] %s373
          %379 = dma.hbm_to_vmem [thread:$0]  %s5, 256, %s374, [#allocation9], 128, 128, 8
        $region32: #{tpu_custom_call.1} parent=11 // pred_fallthru
          _
        // Predicated region
        $region33: #{tpu_custom_call.1} parent=11 // pred_check
          %p380 = pneg %p177
        $region34: #{tpu_custom_call.1} parent=11 // pred_check_branch
          %382 = sbr.rel (%p380) target = $region36
        $region35: #{tpu_custom_call.1} parent=11 // pred_region
          _
        $region36: #{tpu_custom_call.1} parent=11 // pred_fallthru
          _
        // Predicated region
        $region37: #{tpu_custom_call.1} parent=11 // pred_check
          %p383 = pneg %p198
        $region38: #{tpu_custom_call.1} parent=11 // pred_check_branch
          %385 = sbr.rel (%p383) target = $region40
        $region39: #{tpu_custom_call.1} parent=11 // pred_region
          %s387 = ssub.s32 256, 256
          %388 = vsyncadd [#allocation12], %s387
          %s389 = sshll.u32 [#allocation11], 4
          %s390 = int_to_ptr.vmem [resolvable:$true] %s389
          %395 = dma.hbm_to_vmem [thread:$0]  %s7, 256, %s390, [#allocation12], 128, 128, 8
        $region40: #{tpu_custom_call.1} parent=11 // pred_fallthru
          _
        // Predicated region
        $region41: #{tpu_custom_call.1} parent=11 // pred_check
          %p396 = pneg %p219
        $region42: #{tpu_custom_call.1} parent=11 // pred_check_branch
          %398 = sbr.rel (%p396) target = $region44
        $region43: #{tpu_custom_call.1} parent=11 // pred_region
          _
        $region44: #{tpu_custom_call.1} parent=11 // pred_fallthru
          _
        // Predicated region
        $region45: #{tpu_custom_call.1} parent=11 // pred_check
          %p399 = pneg %p240
        $region46: #{tpu_custom_call.1} parent=11 // pred_check_branch
          %401 = sbr.rel (%p399) target = $region48
        $region47: #{tpu_custom_call.1} parent=11 // pred_region
          _
        $region48: #{tpu_custom_call.1} parent=11 // pred_fallthru
          _
        // Predicated region
        $region49: #{tpu_custom_call.1} parent=11 // pred_check
          %p402 = pneg %p261
        $region50: #{tpu_custom_call.1} parent=11 // pred_check_branch
          %404 = sbr.rel (%p402) target = $region52
        $region51: #{tpu_custom_call.1} parent=11 // pred_region
          %s406 = ssub.s32 256, 256
          %407 = vsyncadd [#allocation12], %s406
          %s408 = sshll.u32 [#allocation13], 4
          %s409 = int_to_ptr.vmem [resolvable:$true] %s408
          %414 = dma.hbm_to_vmem [thread:$0]  %s10, 256, %s409, [#allocation12], 128, 128, 8
        $region52: #{tpu_custom_call.1} parent=11 // pred_fallthru
          _
        // Predicated region
        $region53: #{tpu_custom_call.1} parent=11 // pred_check
          %p415 = pneg %p282
        $region54: #{tpu_custom_call.1} parent=11 // pred_check_branch
          %417 = sbr.rel (%p415) target = $region56
        $region55: #{tpu_custom_call.1} parent=11 // pred_region
          _
        $region56: #{tpu_custom_call.1} parent=11 // pred_fallthru
          _
      $region12: #{tpu_custom_call.1} parent=5 // pred_fallthru
        _
      %p418 = scmp.lt.s32.totalorder %s25, 2
      // Predicated region
      $region57: #{tpu_custom_call.1} parent=5 // pred_check
        %p419 = pneg %p418
      $region58: #{tpu_custom_call.1} parent=5 // pred_check_branch
        %421 = sbr.rel (%p419) target = $region60
      $region59: #{tpu_custom_call.1} parent=5 // pred_region
        // Predicated region
        $region61: #{tpu_custom_call.1} parent=59 // pred_check
          %p422 = pneg %p45
        $region62: #{tpu_custom_call.1} parent=59 // pred_check_branch
          %424 = sbr.rel (%p422) target = $region64
        $region63: #{tpu_custom_call.1} parent=59 // pred_region
          %s425 = smul.u32 2, %s25
          %p426 = scmp.lt.s32.totalorder %s425, 3
          %s427 = scalar_select %p426, %s425, 3
          %s428 = smul.addr %s427, 8
          %s429 = scalar_lea.vmem %s0, %s428
          %s430 = smul.u32 2, %s25
        $region64: #{tpu_custom_call.1} parent=59 // pred_fallthru
          _
      $region60: #{tpu_custom_call.1} parent=5 // pred_fallthru
        _
      %p431 = scmp.le.s32.totalorder 1, %s25
      %p432 = scmp.lt.s32.totalorder %s25, 3
      %p433 = pnand %p431, %p432
      %p434 = pneg %p433
      // Predicated region
      $region65: #{tpu_custom_call.1} parent=5 // pred_check
        _
      $region66: #{tpu_custom_call.1} parent=5 // pred_check_branch
        %436 = sbr.rel (%p433) target = $region68
      $region67: #{tpu_custom_call.1} parent=5 // pred_region
        %s437 = ssub.s32 %s25, 1
        // Predicated region
        $region69: #{tpu_custom_call.1} parent=67 // pred_check
          %p438 = pneg %p72
        $region70: #{tpu_custom_call.1} parent=67 // pred_check_branch
          %440 = sbr.rel (%p438) target = $region72
        $region71: #{tpu_custom_call.1} parent=67 // pred_region
          %441 = dma.done [#allocation3], 64
        $region72: #{tpu_custom_call.1} parent=67 // pred_fallthru
          _
        // Predicated region
        $region73: #{tpu_custom_call.1} parent=67 // pred_check
          %p442 = pneg %p93
        $region74: #{tpu_custom_call.1} parent=67 // pred_check_branch
          %444 = sbr.rel (%p442) target = $region76
        $region75: #{tpu_custom_call.1} parent=67 // pred_region
          %445 = dma.done [#allocation6], 256
        $region76: #{tpu_custom_call.1} parent=67 // pred_fallthru
          _
        // Predicated region
        $region77: #{tpu_custom_call.1} parent=67 // pred_check
          %p446 = pneg %p114
        $region78: #{tpu_custom_call.1} parent=67 // pred_check_branch
          %448 = sbr.rel (%p446) target = $region80
        $region79: #{tpu_custom_call.1} parent=67 // pred_region
          %449 = dma.done [#allocation6], 128
        $region80: #{tpu_custom_call.1} parent=67 // pred_fallthru
          _
        // Predicated region
        $region81: #{tpu_custom_call.1} parent=67 // pred_check
          %p450 = pneg %p135
        $region82: #{tpu_custom_call.1} parent=67 // pred_check_branch
          %452 = sbr.rel (%p450) target = $region84
        $region83: #{tpu_custom_call.1} parent=67 // pred_region
          %453 = dma.done [#allocation9], 64
        $region84: #{tpu_custom_call.1} parent=67 // pred_fallthru
          _
        // Predicated region
        $region85: #{tpu_custom_call.1} parent=67 // pred_check
          %p454 = pneg %p156
        $region86: #{tpu_custom_call.1} parent=67 // pred_check_branch
          %456 = sbr.rel (%p454) target = $region88
        $region87: #{tpu_custom_call.1} parent=67 // pred_region
          %457 = dma.done [#allocation9], 256
        $region88: #{tpu_custom_call.1} parent=67 // pred_fallthru
          _
        // Predicated region
        $region89: #{tpu_custom_call.1} parent=67 // pred_check
          %p458 = pneg %p198
        $region90: #{tpu_custom_call.1} parent=67 // pred_check_branch
          %460 = sbr.rel (%p458) target = $region92
        $region91: #{tpu_custom_call.1} parent=67 // pred_region
          %461 = dma.done [#allocation12], 256
        $region92: #{tpu_custom_call.1} parent=67 // pred_fallthru
          _
        // Predicated region
        $region93: #{tpu_custom_call.1} parent=67 // pred_check
          %p462 = pneg %p261
        $region94: #{tpu_custom_call.1} parent=67 // pred_check_branch
          %464 = sbr.rel (%p462) target = $region96
        $region95: #{tpu_custom_call.1} parent=67 // pred_region
          %465 = dma.done [#allocation12], 256
        $region96: #{tpu_custom_call.1} parent=67 // pred_fallthru
          _
        %s466 = smul.u32 2, %s30
        %p467 = scmp.lt.s32.totalorder %s466, 3
        %s468 = scalar_select %p467, %s466, 3
        %s469 = smul.addr %s468, 8
        %s470 = scalar_lea.vmem %s0, %s469
        %p471 = pneg %p51
        %p472 = pneg %p48
        %p473 = pneg %p72
        %p474 = pneg %p69
        %p475 = pneg %p93
        %p476 = pneg %p90
        %p477 = pneg %p114
        %p478 = pneg %p111
        %p479 = pneg %p135
        %p480 = pneg %p132
        %p481 = pneg %p156
        %p482 = pneg %p153
        %p483 = pneg %p177
        %p484 = pneg %p174
        %p485 = pneg %p198
        %p486 = pneg %p195
        %p487 = pneg %p219
        %p488 = pneg %p216
        %p489 = pneg %p240
        %p490 = pneg %p237
        %p491 = pneg %p261
        %p492 = pneg %p258
        %p493 = pneg %p282
        %p494 = pneg %p279
        %p495 = pneg %p308
        %p496 = pneg %p305
        %s497 = sand.u32 %s295, 1
        %s498 = scalar_lea.sflag [#allocation4], %s497
        %s499 = sand.u32 %s295, 1
        %s500 = smul.addr %s499, 8
        %s501 = scalar_lea.vmem [#allocation14], %s500
        %s502 = smul.u32 2, %s30
        %p503 = scmp.lt.s32.totalorder %s502, 3
        %s504 = scalar_select %p503, %s502, 3
        %s505 = smul.addr %s504, 8
        %s506 = scalar_lea.vmem %s0, %s505
        %s507 = smul.u32 2, %s30
        %v508 = vld [vmem:[%s506] sm:$0xff]
        %v509 = vld [vmem:[%s506 + $0x8] sm:$0xff]
        %v510 = vld [vmem:[#allocation5] sm:$0xff]
        %v511 = vld [vmem:[#allocation5 + $0x8] sm:$0xff]
        %v512 = vld [vmem:[#allocation2] ss:$2 sm:$0x3]
        %v513 = vld [vmem:[#allocation2 + $0x1] sm:$0x1]
        %v515 = vlaneseq
        %v516 = vshrl.u32 %v515, 7
        %v517 = vsub.s32 0, %v516
        %v518 = vrot.slane %v512, %v517
        %v519 = vlaneseq
        %v520 = vshrl.u32 %v519, 7
        %v521 = vsub.s32 1, %v520
        %v522 = vrot.slane %v512, %v521
        %v525 = vmul.f32 %v508, %v518
        %v526 = vmul.f32 %v509, %v522
        %s528 = vtos %v513
        %v529 = vstv %s528
        %531 = vmatprep.subr.mxu0 0.0
        %532 = vmatpush1.xpose.msra.mxu0 0.0
        %533 = vmatprep.subr.mxu0 0.0
        %534 = vmatpush1.xpose.msra.mxu0 0.0
        %535 = vmatprep.subr.mxu0 0.0
        %536 = vmatpush1.xpose.msra.mxu0 0.0
        %537 = vmatprep.subr.mxu0 0.0
        %538 = vmatpush1.xpose.msra.mxu0 0.0
        %539 = vmatprep.subr.mxu0 0.0
        %540 = vmatpush1.xpose.msra.mxu0 0.0
        %541 = vmatprep.subr.mxu0 0.0
        %542 = vmatpush1.xpose.msra.mxu0 0.0
        %543 = vmatprep.subr.mxu0 0.0
        %544 = vmatpush1.xpose.msra.mxu0 0.0
        %545 = vmatprep.subr.mxu0 0.0
        %546 = vmatpush1.xpose.msra.mxu0 0.0
        %547 = vmatprep.subr.mxu0 0.0
        %548 = vmatpush1.xpose.msra.mxu0 0.0
        %549 = vmatprep.subr.mxu0 0.0
        %550 = vmatpush1.xpose.msra.mxu0 0.0
        %551 = vmatprep.subr.mxu0 0.0
        %552 = vmatpush1.xpose.msra.mxu0 0.0
        %553 = vmatprep.subr.mxu0 0.0
        %554 = vmatpush1.xpose.msra.mxu0 0.0
        %555 = vmatprep.subr.mxu0 0.0
        %556 = vmatpush1.xpose.msra.mxu0 0.0
        %557 = vmatprep.subr.mxu0 0.0
        %558 = vmatpush1.xpose.msra.mxu0 0.0
        %559 = vmatprep.subr.mxu0 0.0
        %560 = vmatpush1.xpose.msra.mxu0 0.0
        %v561 = vand.u32 %v511, 4294901760
        %562 = vmatprep.subr.mxu0 %v561
        %v563 = vand.u32 %v510, 4294901760
        %564 = vmatpush1.xpose.msra.mxu0 %v563
        %565 = vmatprep.subr.mxu0 0.0
        %566 = vmatpush2.xpose.msra.mxu0 0.0
        %567 = vmatprep.subr.mxu0 0.0
        %568 = vmatpush2.xpose.msra.mxu0 0.0
        %569 = vmatprep.subr.mxu0 0.0
        %570 = vmatpush2.xpose.msra.mxu0 0.0
        %571 = vmatprep.subr.mxu0 0.0
        %572 = vmatpush2.xpose.msra.mxu0 0.0
        %573 = vmatprep.subr.mxu0 0.0
        %574 = vmatpush2.xpose.msra.mxu0 0.0
        %575 = vmatprep.subr.mxu0 0.0
        %576 = vmatpush2.xpose.msra.mxu0 0.0
        %577 = vmatprep.subr.mxu0 0.0
        %578 = vmatpush2.xpose.msra.mxu0 0.0
        %579 = vmatprep.subr.mxu0 0.0
        %580 = vmatpush2.xpose.msra.mxu0 0.0
        %581 = vmatprep.subr.mxu0 0.0
        %582 = vmatpush2.xpose.msra.mxu0 0.0
        %583 = vmatprep.subr.mxu0 0.0
        %584 = vmatpush2.xpose.msra.mxu0 0.0
        %585 = vmatprep.subr.mxu0 0.0
        %586 = vmatpush2.xpose.msra.mxu0 0.0
        %587 = vmatprep.subr.mxu0 0.0
        %588 = vmatpush2.xpose.msra.mxu0 0.0
        %589 = vmatprep.subr.mxu0 0.0
        %590 = vmatpush2.xpose.msra.mxu0 0.0
        %591 = vmatprep.subr.mxu0 0.0
        %592 = vmatpush2.xpose.msra.mxu0 0.0
        %593 = vmatprep.subr.mxu0 0.0
        %594 = vmatpush2.xpose.msra.mxu0 0.0
        %595 = vmatprep.subr.mxu0 0.0
        %596 = vmatpush2.xpose.msra.mxu0 0.0
        %v597 = vand.u32 %v526, 4294901760
        %v598 = vsub.f32 %v526, %v597
        %v599 = vand.u32 %v598, 4294901760
        %v600 = vsub.f32 %v598, %v599
        %v601 = vand.u32 %v600, 4294901760
        %602 = vmatprep.mubr.f32.mxu0 %v601
        %v603 = vand.u32 %v525, 4294901760
        %v604 = vsub.f32 %v525, %v603
        %v605 = vand.u32 %v604, 4294901760
        %v606 = vsub.f32 %v604, %v605
        %v607 = vand.u32 %v606, 4294901760
        %608 = vmatmul.mubr.f32.gmra.mxu0 %v607
        %v609 = vpop.f32.mrf.mxu0
        %v610 = vadd.f32 %v529, %v609
        %v611 = vpop.f32.mrf.mxu0
        %612 = vdwg.mxu0
        %613 = vmatprep.subr.mxu0 0.0
        %614 = vmatpush1.xpose.msra.mxu0 0.0
        %615 = vmatprep.subr.mxu0 0.0
        %616 = vmatpush1.xpose.msra.mxu0 0.0
        %617 = vmatprep.subr.mxu0 0.0
        %618 = vmatpush1.xpose.msra.mxu0 0.0
        %619 = vmatprep.subr.mxu0 0.0
        %620 = vmatpush1.xpose.msra.mxu0 0.0
        %621 = vmatprep.subr.mxu0 0.0
        %622 = vmatpush1.xpose.msra.mxu0 0.0
        %623 = vmatprep.subr.mxu0 0.0
        %624 = vmatpush1.xpose.msra.mxu0 0.0
        %625 = vmatprep.subr.mxu0 0.0
        %626 = vmatpush1.xpose.msra.mxu0 0.0
        %627 = vmatprep.subr.mxu0 0.0
        %628 = vmatpush1.xpose.msra.mxu0 0.0
        %629 = vmatprep.subr.mxu0 0.0
        %630 = vmatpush1.xpose.msra.mxu0 0.0
        %631 = vmatprep.subr.mxu0 0.0
        %632 = vmatpush1.xpose.msra.mxu0 0.0
        %633 = vmatprep.subr.mxu0 0.0
        %634 = vmatpush1.xpose.msra.mxu0 0.0
        %635 = vmatprep.subr.mxu0 0.0
        %636 = vmatpush1.xpose.msra.mxu0 0.0
        %637 = vmatprep.subr.mxu0 0.0
        %638 = vmatpush1.xpose.msra.mxu0 0.0
        %639 = vmatprep.subr.mxu0 0.0
        %640 = vmatpush1.xpose.msra.mxu0 0.0
        %641 = vmatprep.subr.mxu0 0.0
        %642 = vmatpush1.xpose.msra.mxu0 0.0
        %v643 = vand.u32 %v511, 4294901760
        %v644 = vsub.f32 %v511, %v643
        %v645 = vand.u32 %v644, 4294901760
        %v646 = vsub.f32 %v644, %v645
        %v647 = vand.u32 %v646, 4294901760
        %648 = vmatprep.subr.mxu0 %v647
        %v649 = vand.u32 %v510, 4294901760
        %v650 = vsub.f32 %v510, %v649
        %v651 = vand.u32 %v650, 4294901760
        %v652 = vsub.f32 %v650, %v651
        %v653 = vand.u32 %v652, 4294901760
        %654 = vmatpush1.xpose.msra.mxu0 %v653
        %655 = vmatprep.subr.mxu0 0.0
        %656 = vmatpush2.xpose.msra.mxu0 0.0
        %657 = vmatprep.subr.mxu0 0.0
        %658 = vmatpush2.xpose.msra.mxu0 0.0
        %659 = vmatprep.subr.mxu0 0.0
        %660 = vmatpush2.xpose.msra.mxu0 0.0
        %661 = vmatprep.subr.mxu0 0.0
        %662 = vmatpush2.xpose.msra.mxu0 0.0
        %663 = vmatprep.subr.mxu0 0.0
        %664 = vmatpush2.xpose.msra.mxu0 0.0
        %665 = vmatprep.subr.mxu0 0.0
        %666 = vmatpush2.xpose.msra.mxu0 0.0
        %667 = vmatprep.subr.mxu0 0.0
        %668 = vmatpush2.xpose.msra.mxu0 0.0
        %669 = vmatprep.subr.mxu0 0.0
        %670 = vmatpush2.xpose.msra.mxu0 0.0
        %671 = vmatprep.subr.mxu0 0.0
        %672 = vmatpush2.xpose.msra.mxu0 0.0
        %673 = vmatprep.subr.mxu0 0.0
        %674 = vmatpush2.xpose.msra.mxu0 0.0
        %675 = vmatprep.subr.mxu0 0.0
        %676 = vmatpush2.xpose.msra.mxu0 0.0
        %677 = vmatprep.subr.mxu0 0.0
        %678 = vmatpush2.xpose.msra.mxu0 0.0
        %679 = vmatprep.subr.mxu0 0.0
        %680 = vmatpush2.xpose.msra.mxu0 0.0
        %681 = vmatprep.subr.mxu0 0.0
        %682 = vmatpush2.xpose.msra.mxu0 0.0
        %683 = vmatprep.subr.mxu0 0.0
        %684 = vmatpush2.xpose.msra.mxu0 0.0
        %685 = vmatprep.subr.mxu0 0.0
        %686 = vmatpush2.xpose.msra.mxu0 0.0
        %v687 = vand.u32 %v526, 4294901760
        %688 = vmatprep.mubr.f32.mxu0 %v687
        %v689 = vand.u32 %v525, 4294901760
        %690 = vmatmul.mubr.f32.gmra.mxu0 %v689
        %v691 = vpop.f32.mrf.mxu0
        %v692 = vadd.f32 %v610, %v691
        %v693 = vpop.f32.mrf.mxu0
        %694 = vdwg.mxu0
        %695 = vmatprep.subr.mxu0 0.0
        %696 = vmatpush1.xpose.msra.mxu0 0.0
        %697 = vmatprep.subr.mxu0 0.0
        %698 = vmatpush1.xpose.msra.mxu0 0.0
        %699 = vmatprep.subr.mxu0 0.0
        %700 = vmatpush1.xpose.msra.mxu0 0.0
        %701 = vmatprep.subr.mxu0 0.0
        %702 = vmatpush1.xpose.msra.mxu0 0.0
        %703 = vmatprep.subr.mxu0 0.0
        %704 = vmatpush1.xpose.msra.mxu0 0.0
        %705 = vmatprep.subr.mxu0 0.0
        %706 = vmatpush1.xpose.msra.mxu0 0.0
        %707 = vmatprep.subr.mxu0 0.0
        %708 = vmatpush1.xpose.msra.mxu0 0.0
        %709 = vmatprep.subr.mxu0 0.0
        %710 = vmatpush1.xpose.msra.mxu0 0.0
        %711 = vmatprep.subr.mxu0 0.0
        %712 = vmatpush1.xpose.msra.mxu0 0.0
        %713 = vmatprep.subr.mxu0 0.0
        %714 = vmatpush1.xpose.msra.mxu0 0.0
        %715 = vmatprep.subr.mxu0 0.0
        %716 = vmatpush1.xpose.msra.mxu0 0.0
        %717 = vmatprep.subr.mxu0 0.0
        %718 = vmatpush1.xpose.msra.mxu0 0.0
        %719 = vmatprep.subr.mxu0 0.0
        %720 = vmatpush1.xpose.msra.mxu0 0.0
        %721 = vmatprep.subr.mxu0 0.0
        %722 = vmatpush1.xpose.msra.mxu0 0.0
        %723 = vmatprep.subr.mxu0 0.0
        %724 = vmatpush1.xpose.msra.mxu0 0.0
        %v725 = vand.u32 %v511, 4294901760
        %v726 = vsub.f32 %v511, %v725
        %727 = vmatprep.subr.mxu0 %v726
        %v728 = vand.u32 %v510, 4294901760
        %v729 = vsub.f32 %v510, %v728
        %730 = vmatpush1.xpose.msra.mxu0 %v729
        %731 = vmatprep.subr.mxu0 0.0
        %732 = vmatpush2.xpose.msra.mxu0 0.0
        %733 = vmatprep.subr.mxu0 0.0
        %734 = vmatpush2.xpose.msra.mxu0 0.0
        %735 = vmatprep.subr.mxu0 0.0
        %736 = vmatpush2.xpose.msra.mxu0 0.0
        %737 = vmatprep.subr.mxu0 0.0
        %738 = vmatpush2.xpose.msra.mxu0 0.0
        %739 = vmatprep.subr.mxu0 0.0
        %740 = vmatpush2.xpose.msra.mxu0 0.0
        %741 = vmatprep.subr.mxu0 0.0
        %742 = vmatpush2.xpose.msra.mxu0 0.0
        %743 = vmatprep.subr.mxu0 0.0
        %744 = vmatpush2.xpose.msra.mxu0 0.0
        %745 = vmatprep.subr.mxu0 0.0
        %746 = vmatpush2.xpose.msra.mxu0 0.0
        %747 = vmatprep.subr.mxu0 0.0
        %748 = vmatpush2.xpose.msra.mxu0 0.0
        %749 = vmatprep.subr.mxu0 0.0
        %750 = vmatpush2.xpose.msra.mxu0 0.0
        %751 = vmatprep.subr.mxu0 0.0
        %752 = vmatpush2.xpose.msra.mxu0 0.0
        %753 = vmatprep.subr.mxu0 0.0
        %754 = vmatpush2.xpose.msra.mxu0 0.0
        %755 = vmatprep.subr.mxu0 0.0
        %756 = vmatpush2.xpose.msra.mxu0 0.0
        %757 = vmatprep.subr.mxu0 0.0
        %758 = vmatpush2.xpose.msra.mxu0 0.0
        %759 = vmatprep.subr.mxu0 0.0
        %760 = vmatpush2.xpose.msra.mxu0 0.0
        %761 = vmatprep.subr.mxu0 0.0
        %762 = vmatpush2.xpose.msra.mxu0 0.0
        %v763 = vand.u32 %v526, 4294901760
        %v764 = vsub.f32 %v526, %v763
        %765 = vmatprep.mubr.f32.mxu0 %v764
        %v766 = vand.u32 %v525, 4294901760
        %v767 = vsub.f32 %v525, %v766
        %768 = vmatmul.mubr.f32.gmra.mxu0 %v767
        %v769 = vpop.f32.mrf.mxu0
        %v770 = vadd.f32 %v692, %v769
        %v771 = vpop.f32.mrf.mxu0
        %772 = vdwg.mxu0
        %773 = vmatprep.subr.mxu0 0.0
        %774 = vmatpush1.xpose.msra.mxu0 0.0
        %775 = vmatprep.subr.mxu0 0.0
        %776 = vmatpush1.xpose.msra.mxu0 0.0
        %777 = vmatprep.subr.mxu0 0.0
        %778 = vmatpush1.xpose.msra.mxu0 0.0
        %779 = vmatprep.subr.mxu0 0.0
        %780 = vmatpush1.xpose.msra.mxu0 0.0
        %781 = vmatprep.subr.mxu0 0.0
        %782 = vmatpush1.xpose.msra.mxu0 0.0
        %783 = vmatprep.subr.mxu0 0.0
        %784 = vmatpush1.xpose.msra.mxu0 0.0
        %785 = vmatprep.subr.mxu0 0.0
        %786 = vmatpush1.xpose.msra.mxu0 0.0
        %787 = vmatprep.subr.mxu0 0.0
        %788 = vmatpush1.xpose.msra.mxu0 0.0
        %789 = vmatprep.subr.mxu0 0.0
        %790 = vmatpush1.xpose.msra.mxu0 0.0
        %791 = vmatprep.subr.mxu0 0.0
        %792 = vmatpush1.xpose.msra.mxu0 0.0
        %793 = vmatprep.subr.mxu0 0.0
        %794 = vmatpush1.xpose.msra.mxu0 0.0
        %795 = vmatprep.subr.mxu0 0.0
        %796 = vmatpush1.xpose.msra.mxu0 0.0
        %797 = vmatprep.subr.mxu0 0.0
        %798 = vmatpush1.xpose.msra.mxu0 0.0
        %799 = vmatprep.subr.mxu0 0.0
        %800 = vmatpush1.xpose.msra.mxu0 0.0
        %801 = vmatprep.subr.mxu0 0.0
        %802 = vmatpush1.xpose.msra.mxu0 0.0
        %v803 = vand.u32 %v511, 4294901760
        %804 = vmatprep.subr.mxu0 %v803
        %v805 = vand.u32 %v510, 4294901760
        %806 = vmatpush1.xpose.msra.mxu0 %v805
        %807 = vmatprep.subr.mxu0 0.0
        %808 = vmatpush2.xpose.msra.mxu0 0.0
        %809 = vmatprep.subr.mxu0 0.0
        %810 = vmatpush2.xpose.msra.mxu0 0.0
        %811 = vmatprep.subr.mxu0 0.0
        %812 = vmatpush2.xpose.msra.mxu0 0.0
        %813 = vmatprep.subr.mxu0 0.0
        %814 = vmatpush2.xpose.msra.mxu0 0.0
        %815 = vmatprep.subr.mxu0 0.0
        %816 = vmatpush2.xpose.msra.mxu0 0.0
        %817 = vmatprep.subr.mxu0 0.0
        %818 = vmatpush2.xpose.msra.mxu0 0.0
        %819 = vmatprep.subr.mxu0 0.0
        %820 = vmatpush2.xpose.msra.mxu0 0.0
        %821 = vmatprep.subr.mxu0 0.0
        %822 = vmatpush2.xpose.msra.mxu0 0.0
        %823 = vmatprep.subr.mxu0 0.0
        %824 = vmatpush2.xpose.msra.mxu0 0.0
        %825 = vmatprep.subr.mxu0 0.0
        %826 = vmatpush2.xpose.msra.mxu0 0.0
        %827 = vmatprep.subr.mxu0 0.0
        %828 = vmatpush2.xpose.msra.mxu0 0.0
        %829 = vmatprep.subr.mxu0 0.0
        %830 = vmatpush2.xpose.msra.mxu0 0.0
        %831 = vmatprep.subr.mxu0 0.0
        %832 = vmatpush2.xpose.msra.mxu0 0.0
        %833 = vmatprep.subr.mxu0 0.0
        %834 = vmatpush2.xpose.msra.mxu0 0.0
        %835 = vmatprep.subr.mxu0 0.0
        %836 = vmatpush2.xpose.msra.mxu0 0.0
        %837 = vmatprep.subr.mxu0 0.0
        %838 = vmatpush2.xpose.msra.mxu0 0.0
        %v839 = vand.u32 %v526, 4294901760
        %v840 = vsub.f32 %v526, %v839
        %v841 = vand.u32 %v840, 4294901760
        %842 = vmatprep.mubr.f32.mxu0 %v841
        %v843 = vand.u32 %v525, 4294901760
        %v844 = vsub.f32 %v525, %v843
        %v845 = vand.u32 %v844, 4294901760
        %846 = vmatmul.mubr.f32.gmra.mxu0 %v845
        %v847 = vpop.f32.mrf.mxu0
        %v848 = vadd.f32 %v770, %v847
        %v849 = vpop.f32.mrf.mxu0
        %850 = vdwg.mxu0
        %851 = vmatprep.subr.mxu0 0.0
        %852 = vmatpush1.xpose.msra.mxu0 0.0
        %853 = vmatprep.subr.mxu0 0.0
        %854 = vmatpush1.xpose.msra.mxu0 0.0
        %855 = vmatprep.subr.mxu0 0.0
        %856 = vmatpush1.xpose.msra.mxu0 0.0
        %857 = vmatprep.subr.mxu0 0.0
        %858 = vmatpush1.xpose.msra.mxu0 0.0
        %859 = vmatprep.subr.mxu0 0.0
        %860 = vmatpush1.xpose.msra.mxu0 0.0
        %861 = vmatprep.subr.mxu0 0.0
        %862 = vmatpush1.xpose.msra.mxu0 0.0
        %863 = vmatprep.subr.mxu0 0.0
        %864 = vmatpush1.xpose.msra.mxu0 0.0
        %865 = vmatprep.subr.mxu0 0.0
        %866 = vmatpush1.xpose.msra.mxu0 0.0
        %867 = vmatprep.subr.mxu0 0.0
        %868 = vmatpush1.xpose.msra.mxu0 0.0
        %869 = vmatprep.subr.mxu0 0.0
        %870 = vmatpush1.xpose.msra.mxu0 0.0
        %871 = vmatprep.subr.mxu0 0.0
        %872 = vmatpush1.xpose.msra.mxu0 0.0
        %873 = vmatprep.subr.mxu0 0.0
        %874 = vmatpush1.xpose.msra.mxu0 0.0
        %875 = vmatprep.subr.mxu0 0.0
        %876 = vmatpush1.xpose.msra.mxu0 0.0
        %877 = vmatprep.subr.mxu0 0.0
        %878 = vmatpush1.xpose.msra.mxu0 0.0
        %879 = vmatprep.subr.mxu0 0.0
        %880 = vmatpush1.xpose.msra.mxu0 0.0
        %v881 = vand.u32 %v511, 4294901760
        %v882 = vsub.f32 %v511, %v881
        %v883 = vand.u32 %v882, 4294901760
        %884 = vmatprep.subr.mxu0 %v883
        %v885 = vand.u32 %v510, 4294901760
        %v886 = vsub.f32 %v510, %v885
        %v887 = vand.u32 %v886, 4294901760
        %888 = vmatpush1.xpose.msra.mxu0 %v887
        %889 = vmatprep.subr.mxu0 0.0
        %890 = vmatpush2.xpose.msra.mxu0 0.0
        %891 = vmatprep.subr.mxu0 0.0
        %892 = vmatpush2.xpose.msra.mxu0 0.0
        %893 = vmatprep.subr.mxu0 0.0
        %894 = vmatpush2.xpose.msra.mxu0 0.0
        %895 = vmatprep.subr.mxu0 0.0
        %896 = vmatpush2.xpose.msra.mxu0 0.0
        %897 = vmatprep.subr.mxu0 0.0
        %898 = vmatpush2.xpose.msra.mxu0 0.0
        %899 = vmatprep.subr.mxu0 0.0
        %900 = vmatpush2.xpose.msra.mxu0 0.0
        %901 = vmatprep.subr.mxu0 0.0
        %902 = vmatpush2.xpose.msra.mxu0 0.0
        %903 = vmatprep.subr.mxu0 0.0
        %904 = vmatpush2.xpose.msra.mxu0 0.0
        %905 = vmatprep.subr.mxu0 0.0
        %906 = vmatpush2.xpose.msra.mxu0 0.0
        %907 = vmatprep.subr.mxu0 0.0
        %908 = vmatpush2.xpose.msra.mxu0 0.0
        %909 = vmatprep.subr.mxu0 0.0
        %910 = vmatpush2.xpose.msra.mxu0 0.0
        %911 = vmatprep.subr.mxu0 0.0
        %912 = vmatpush2.xpose.msra.mxu0 0.0
        %913 = vmatprep.subr.mxu0 0.0
        %914 = vmatpush2.xpose.msra.mxu0 0.0
        %915 = vmatprep.subr.mxu0 0.0
        %916 = vmatpush2.xpose.msra.mxu0 0.0
        %917 = vmatprep.subr.mxu0 0.0
        %918 = vmatpush2.xpose.msra.mxu0 0.0
        %919 = vmatprep.subr.mxu0 0.0
        %920 = vmatpush2.xpose.msra.mxu0 0.0
        %v921 = vand.u32 %v526, 4294901760
        %922 = vmatprep.mubr.f32.mxu0 %v921
        %v923 = vand.u32 %v525, 4294901760
        %924 = vmatmul.mubr.f32.gmra.mxu0 %v923
        %v925 = vpop.f32.mrf.mxu0
        %v926 = vadd.f32 %v848, %v925
        %v927 = vpop.f32.mrf.mxu0
        %928 = vdwg.mxu0
        %929 = vmatprep.subr.mxu0 0.0
        %930 = vmatpush1.xpose.msra.mxu0 0.0
        %931 = vmatprep.subr.mxu0 0.0
        %932 = vmatpush1.xpose.msra.mxu0 0.0
        %933 = vmatprep.subr.mxu0 0.0
        %934 = vmatpush1.xpose.msra.mxu0 0.0
        %935 = vmatprep.subr.mxu0 0.0
        %936 = vmatpush1.xpose.msra.mxu0 0.0
        %937 = vmatprep.subr.mxu0 0.0
        %938 = vmatpush1.xpose.msra.mxu0 0.0
        %939 = vmatprep.subr.mxu0 0.0
        %940 = vmatpush1.xpose.msra.mxu0 0.0
        %941 = vmatprep.subr.mxu0 0.0
        %942 = vmatpush1.xpose.msra.mxu0 0.0
        %943 = vmatprep.subr.mxu0 0.0
        %944 = vmatpush1.xpose.msra.mxu0 0.0
        %945 = vmatprep.subr.mxu0 0.0
        %946 = vmatpush1.xpose.msra.mxu0 0.0
        %947 = vmatprep.subr.mxu0 0.0
        %948 = vmatpush1.xpose.msra.mxu0 0.0
        %949 = vmatprep.subr.mxu0 0.0
        %950 = vmatpush1.xpose.msra.mxu0 0.0
        %951 = vmatprep.subr.mxu0 0.0
        %952 = vmatpush1.xpose.msra.mxu0 0.0
        %953 = vmatprep.subr.mxu0 0.0
        %954 = vmatpush1.xpose.msra.mxu0 0.0
        %955 = vmatprep.subr.mxu0 0.0
        %956 = vmatpush1.xpose.msra.mxu0 0.0
        %957 = vmatprep.subr.mxu0 0.0
        %958 = vmatpush1.xpose.msra.mxu0 0.0
        %v959 = vand.u32 %v511, 4294901760
        %960 = vmatprep.subr.mxu0 %v959
        %v961 = vand.u32 %v510, 4294901760
        %962 = vmatpush1.xpose.msra.mxu0 %v961
        %963 = vmatprep.subr.mxu0 0.0
        %964 = vmatpush2.xpose.msra.mxu0 0.0
        %965 = vmatprep.subr.mxu0 0.0
        %966 = vmatpush2.xpose.msra.mxu0 0.0
        %967 = vmatprep.subr.mxu0 0.0
        %968 = vmatpush2.xpose.msra.mxu0 0.0
        %969 = vmatprep.subr.mxu0 0.0
        %970 = vmatpush2.xpose.msra.mxu0 0.0
        %971 = vmatprep.subr.mxu0 0.0
        %972 = vmatpush2.xpose.msra.mxu0 0.0
        %973 = vmatprep.subr.mxu0 0.0
        %974 = vmatpush2.xpose.msra.mxu0 0.0
        %975 = vmatprep.subr.mxu0 0.0
        %976 = vmatpush2.xpose.msra.mxu0 0.0
        %977 = vmatprep.subr.mxu0 0.0
        %978 = vmatpush2.xpose.msra.mxu0 0.0
        %979 = vmatprep.subr.mxu0 0.0
        %980 = vmatpush2.xpose.msra.mxu0 0.0
        %981 = vmatprep.subr.mxu0 0.0
        %982 = vmatpush2.xpose.msra.mxu0 0.0
        %983 = vmatprep.subr.mxu0 0.0
        %984 = vmatpush2.xpose.msra.mxu0 0.0
        %985 = vmatprep.subr.mxu0 0.0
        %986 = vmatpush2.xpose.msra.mxu0 0.0
        %987 = vmatprep.subr.mxu0 0.0
        %988 = vmatpush2.xpose.msra.mxu0 0.0
        %989 = vmatprep.subr.mxu0 0.0
        %990 = vmatpush2.xpose.msra.mxu0 0.0
        %991 = vmatprep.subr.mxu0 0.0
        %992 = vmatpush2.xpose.msra.mxu0 0.0
        %993 = vmatprep.subr.mxu0 0.0
        %994 = vmatpush2.xpose.msra.mxu0 0.0
        %v995 = vand.u32 %v526, 4294901760
        %996 = vmatprep.mubr.f32.mxu0 %v995
        %v997 = vand.u32 %v525, 4294901760
        %998 = vmatmul.mubr.f32.gmra.mxu0 %v997
        %v999 = vpop.f32.mrf.mxu0
        %v1000 = vadd.f32 %v926, %v999
        %v1001 = vpop.f32.mrf.mxu0
        %1002 = vdwg.mxu0
        %v1003 = vand.u32 2147483647, %v508
        %v1004 = vand.u32 2147483647, %v509
        %1005 = vmatprep.subr.mxu0 0.0
        %1006 = vmatpush1.xpose.msra.mxu0 0.0
        %1007 = vmatprep.subr.mxu0 0.0
        %1008 = vmatpush1.xpose.msra.mxu0 0.0
        %1009 = vmatprep.subr.mxu0 0.0
        %1010 = vmatpush1.xpose.msra.mxu0 0.0
        %1011 = vmatprep.subr.mxu0 0.0
        %1012 = vmatpush1.xpose.msra.mxu0 0.0
        %1013 = vmatprep.subr.mxu0 0.0
        %1014 = vmatpush1.xpose.msra.mxu0 0.0
        %1015 = vmatprep.subr.mxu0 0.0
        %1016 = vmatpush1.xpose.msra.mxu0 0.0
        %1017 = vmatprep.subr.mxu0 0.0
        %1018 = vmatpush1.xpose.msra.mxu0 0.0
        %1019 = vmatprep.subr.mxu0 0.0
        %1020 = vmatpush1.xpose.msra.mxu0 0.0
        %1021 = vmatprep.subr.mxu0 0.0
        %1022 = vmatpush1.xpose.msra.mxu0 0.0
        %1023 = vmatprep.subr.mxu0 0.0
        %1024 = vmatpush1.xpose.msra.mxu0 0.0
        %1025 = vmatprep.subr.mxu0 0.0
        %1026 = vmatpush1.xpose.msra.mxu0 0.0
        %1027 = vmatprep.subr.mxu0 0.0
        %1028 = vmatpush1.xpose.msra.mxu0 0.0
        %1029 = vmatprep.subr.mxu0 0.0
        %1030 = vmatpush1.xpose.msra.mxu0 0.0
        %1031 = vmatprep.subr.mxu0 0.0
        %1032 = vmatpush1.xpose.msra.mxu0 0.0
        %1033 = vmatprep.subr.mxu0 0.0
        %1034 = vmatpush1.xpose.msra.mxu0 0.0
        %v1035 = vand.u32 %v511, 4294901760
        %1036 = vmatprep.subr.mxu0 %v1035
        %v1037 = vand.u32 %v510, 4294901760
        %1038 = vmatpush1.xpose.msra.mxu0 %v1037
        %1039 = vmatprep.subr.mxu0 0.0
        %1040 = vmatpush2.xpose.msra.mxu0 0.0
        %1041 = vmatprep.subr.mxu0 0.0
        %1042 = vmatpush2.xpose.msra.mxu0 0.0
        %1043 = vmatprep.subr.mxu0 0.0
        %1044 = vmatpush2.xpose.msra.mxu0 0.0
        %1045 = vmatprep.subr.mxu0 0.0
        %1046 = vmatpush2.xpose.msra.mxu0 0.0
        %1047 = vmatprep.subr.mxu0 0.0
        %1048 = vmatpush2.xpose.msra.mxu0 0.0
        %1049 = vmatprep.subr.mxu0 0.0
        %1050 = vmatpush2.xpose.msra.mxu0 0.0
        %1051 = vmatprep.subr.mxu0 0.0
        %1052 = vmatpush2.xpose.msra.mxu0 0.0
        %1053 = vmatprep.subr.mxu0 0.0
        %1054 = vmatpush2.xpose.msra.mxu0 0.0
        %1055 = vmatprep.subr.mxu0 0.0
        %1056 = vmatpush2.xpose.msra.mxu0 0.0
        %1057 = vmatprep.subr.mxu0 0.0
        %1058 = vmatpush2.xpose.msra.mxu0 0.0
        %1059 = vmatprep.subr.mxu0 0.0
        %1060 = vmatpush2.xpose.msra.mxu0 0.0
        %1061 = vmatprep.subr.mxu0 0.0
        %1062 = vmatpush2.xpose.msra.mxu0 0.0
        %1063 = vmatprep.subr.mxu0 0.0
        %1064 = vmatpush2.xpose.msra.mxu0 0.0
        %1065 = vmatprep.subr.mxu0 0.0
        %1066 = vmatpush2.xpose.msra.mxu0 0.0
        %1067 = vmatprep.subr.mxu0 0.0
        %1068 = vmatpush2.xpose.msra.mxu0 0.0
        %1069 = vmatprep.subr.mxu0 0.0
        %1070 = vmatpush2.xpose.msra.mxu0 0.0
        %v1071 = vand.u32 %v1004, 4294901760
        %v1072 = vsub.f32 %v1004, %v1071
        %v1073 = vand.u32 %v1072, 4294901760
        %v1074 = vsub.f32 %v1072, %v1073
        %v1075 = vand.u32 %v1074, 4294901760
        %1076 = vmatprep.mubr.f32.mxu0 %v1075
        %v1077 = vand.u32 %v1003, 4294901760
        %v1078 = vsub.f32 %v1003, %v1077
        %v1079 = vand.u32 %v1078, 4294901760
        %v1080 = vsub.f32 %v1078, %v1079
        %v1081 = vand.u32 %v1080, 4294901760
        %1082 = vmatmul.mubr.f32.gmra.mxu0 %v1081
        %v1083 = vpop.f32.mrf.mxu0
        %v1084 = vadd.f32 0.0, %v1083
        %v1085 = vpop.f32.mrf.mxu0
        %1086 = vdwg.mxu0
        %1087 = vmatprep.subr.mxu0 0.0
        %1088 = vmatpush1.xpose.msra.mxu0 0.0
        %1089 = vmatprep.subr.mxu0 0.0
        %1090 = vmatpush1.xpose.msra.mxu0 0.0
        %1091 = vmatprep.subr.mxu0 0.0
        %1092 = vmatpush1.xpose.msra.mxu0 0.0
        %1093 = vmatprep.subr.mxu0 0.0
        %1094 = vmatpush1.xpose.msra.mxu0 0.0
        %1095 = vmatprep.subr.mxu0 0.0
        %1096 = vmatpush1.xpose.msra.mxu0 0.0
        %1097 = vmatprep.subr.mxu0 0.0
        %1098 = vmatpush1.xpose.msra.mxu0 0.0
        %1099 = vmatprep.subr.mxu0 0.0
        %1100 = vmatpush1.xpose.msra.mxu0 0.0
        %1101 = vmatprep.subr.mxu0 0.0
        %1102 = vmatpush1.xpose.msra.mxu0 0.0
        %1103 = vmatprep.subr.mxu0 0.0
        %1104 = vmatpush1.xpose.msra.mxu0 0.0
        %1105 = vmatprep.subr.mxu0 0.0
        %1106 = vmatpush1.xpose.msra.mxu0 0.0
        %1107 = vmatprep.subr.mxu0 0.0
        %1108 = vmatpush1.xpose.msra.mxu0 0.0
        %1109 = vmatprep.subr.mxu0 0.0
        %1110 = vmatpush1.xpose.msra.mxu0 0.0
        %1111 = vmatprep.subr.mxu0 0.0
        %1112 = vmatpush1.xpose.msra.mxu0 0.0
        %1113 = vmatprep.subr.mxu0 0.0
        %1114 = vmatpush1.xpose.msra.mxu0 0.0
        %1115 = vmatprep.subr.mxu0 0.0
        %1116 = vmatpush1.xpose.msra.mxu0 0.0
        %v1117 = vand.u32 %v511, 4294901760
        %v1118 = vsub.f32 %v511, %v1117
        %v1119 = vand.u32 %v1118, 4294901760
        %v1120 = vsub.f32 %v1118, %v1119
        %v1121 = vand.u32 %v1120, 4294901760
        %1122 = vmatprep.subr.mxu0 %v1121
        %v1123 = vand.u32 %v510, 4294901760
        %v1124 = vsub.f32 %v510, %v1123
        %v1125 = vand.u32 %v1124, 4294901760
        %v1126 = vsub.f32 %v1124, %v1125
        %v1127 = vand.u32 %v1126, 4294901760
        %1128 = vmatpush1.xpose.msra.mxu0 %v1127
        %1129 = vmatprep.subr.mxu0 0.0
        %1130 = vmatpush2.xpose.msra.mxu0 0.0
        %1131 = vmatprep.subr.mxu0 0.0
        %1132 = vmatpush2.xpose.msra.mxu0 0.0
        %1133 = vmatprep.subr.mxu0 0.0
        %1134 = vmatpush2.xpose.msra.mxu0 0.0
        %1135 = vmatprep.subr.mxu0 0.0
        %1136 = vmatpush2.xpose.msra.mxu0 0.0
        %1137 = vmatprep.subr.mxu0 0.0
        %1138 = vmatpush2.xpose.msra.mxu0 0.0
        %1139 = vmatprep.subr.mxu0 0.0
        %1140 = vmatpush2.xpose.msra.mxu0 0.0
        %1141 = vmatprep.subr.mxu0 0.0
        %1142 = vmatpush2.xpose.msra.mxu0 0.0
        %1143 = vmatprep.subr.mxu0 0.0
        %1144 = vmatpush2.xpose.msra.mxu0 0.0
        %1145 = vmatprep.subr.mxu0 0.0
        %1146 = vmatpush2.xpose.msra.mxu0 0.0
        %1147 = vmatprep.subr.mxu0 0.0
        %1148 = vmatpush2.xpose.msra.mxu0 0.0
        %1149 = vmatprep.subr.mxu0 0.0
        %1150 = vmatpush2.xpose.msra.mxu0 0.0
        %1151 = vmatprep.subr.mxu0 0.0
        %1152 = vmatpush2.xpose.msra.mxu0 0.0
        %1153 = vmatprep.subr.mxu0 0.0
        %1154 = vmatpush2.xpose.msra.mxu0 0.0
        %1155 = vmatprep.subr.mxu0 0.0
        %1156 = vmatpush2.xpose.msra.mxu0 0.0
        %1157 = vmatprep.subr.mxu0 0.0
        %1158 = vmatpush2.xpose.msra.mxu0 0.0
        %1159 = vmatprep.subr.mxu0 0.0
        %1160 = vmatpush2.xpose.msra.mxu0 0.0
        %v1161 = vand.u32 %v1004, 4294901760
        %1162 = vmatprep.mubr.f32.mxu0 %v1161
        %v1163 = vand.u32 %v1003, 4294901760
        %1164 = vmatmul.mubr.f32.gmra.mxu0 %v1163
        %v1165 = vpop.f32.mrf.mxu0
        %v1166 = vadd.f32 %v1084, %v1165
        %v1167 = vpop.f32.mrf.mxu0
        %1168 = vdwg.mxu0
        %1169 = vmatprep.subr.mxu0 0.0
        %1170 = vmatpush1.xpose.msra.mxu0 0.0
        %1171 = vmatprep.subr.mxu0 0.0
        %1172 = vmatpush1.xpose.msra.mxu0 0.0
        %1173 = vmatprep.subr.mxu0 0.0
        %1174 = vmatpush1.xpose.msra.mxu0 0.0
        %1175 = vmatprep.subr.mxu0 0.0
        %1176 = vmatpush1.xpose.msra.mxu0 0.0
        %1177 = vmatprep.subr.mxu0 0.0
        %1178 = vmatpush1.xpose.msra.mxu0 0.0
        %1179 = vmatprep.subr.mxu0 0.0
        %1180 = vmatpush1.xpose.msra.mxu0 0.0
        %1181 = vmatprep.subr.mxu0 0.0
        %1182 = vmatpush1.xpose.msra.mxu0 0.0
        %1183 = vmatprep.subr.mxu0 0.0
        %1184 = vmatpush1.xpose.msra.mxu0 0.0
        %1185 = vmatprep.subr.mxu0 0.0
        %1186 = vmatpush1.xpose.msra.mxu0 0.0
        %1187 = vmatprep.subr.mxu0 0.0
        %1188 = vmatpush1.xpose.msra.mxu0 0.0
        %1189 = vmatprep.subr.mxu0 0.0
        %1190 = vmatpush1.xpose.msra.mxu0 0.0
        %1191 = vmatprep.subr.mxu0 0.0
        %1192 = vmatpush1.xpose.msra.mxu0 0.0
        %1193 = vmatprep.subr.mxu0 0.0
        %1194 = vmatpush1.xpose.msra.mxu0 0.0
        %1195 = vmatprep.subr.mxu0 0.0
        %1196 = vmatpush1.xpose.msra.mxu0 0.0
        %1197 = vmatprep.subr.mxu0 0.0
        %1198 = vmatpush1.xpose.msra.mxu0 0.0
        %v1199 = vand.u32 %v511, 4294901760
        %v1200 = vsub.f32 %v511, %v1199
        %1201 = vmatprep.subr.mxu0 %v1200
        %v1202 = vand.u32 %v510, 4294901760
        %v1203 = vsub.f32 %v510, %v1202
        %1204 = vmatpush1.xpose.msra.mxu0 %v1203
        %1205 = vmatprep.subr.mxu0 0.0
        %1206 = vmatpush2.xpose.msra.mxu0 0.0
        %1207 = vmatprep.subr.mxu0 0.0
        %1208 = vmatpush2.xpose.msra.mxu0 0.0
        %1209 = vmatprep.subr.mxu0 0.0
        %1210 = vmatpush2.xpose.msra.mxu0 0.0
        %1211 = vmatprep.subr.mxu0 0.0
        %1212 = vmatpush2.xpose.msra.mxu0 0.0
        %1213 = vmatprep.subr.mxu0 0.0
        %1214 = vmatpush2.xpose.msra.mxu0 0.0
        %1215 = vmatprep.subr.mxu0 0.0
        %1216 = vmatpush2.xpose.msra.mxu0 0.0
        %1217 = vmatprep.subr.mxu0 0.0
        %1218 = vmatpush2.xpose.msra.mxu0 0.0
        %1219 = vmatprep.subr.mxu0 0.0
        %1220 = vmatpush2.xpose.msra.mxu0 0.0
        %1221 = vmatprep.subr.mxu0 0.0
        %1222 = vmatpush2.xpose.msra.mxu0 0.0
        %1223 = vmatprep.subr.mxu0 0.0
        %1224 = vmatpush2.xpose.msra.mxu0 0.0
        %1225 = vmatprep.subr.mxu0 0.0
        %1226 = vmatpush2.xpose.msra.mxu0 0.0
        %1227 = vmatprep.subr.mxu0 0.0
        %1228 = vmatpush2.xpose.msra.mxu0 0.0
        %1229 = vmatprep.subr.mxu0 0.0
        %1230 = vmatpush2.xpose.msra.mxu0 0.0
        %1231 = vmatprep.subr.mxu0 0.0
        %1232 = vmatpush2.xpose.msra.mxu0 0.0
        %1233 = vmatprep.subr.mxu0 0.0
        %1234 = vmatpush2.xpose.msra.mxu0 0.0
        %1235 = vmatprep.subr.mxu0 0.0
        %1236 = vmatpush2.xpose.msra.mxu0 0.0
        %v1237 = vand.u32 %v1004, 4294901760
        %v1238 = vsub.f32 %v1004, %v1237
        %1239 = vmatprep.mubr.f32.mxu0 %v1238
        %v1240 = vand.u32 %v1003, 4294901760
        %v1241 = vsub.f32 %v1003, %v1240
        %1242 = vmatmul.mubr.f32.gmra.mxu0 %v1241
        %v1243 = vpop.f32.mrf.mxu0
        %v1244 = vadd.f32 %v1166, %v1243
        %v1245 = vpop.f32.mrf.mxu0
        %1246 = vdwg.mxu0
        %1247 = vmatprep.subr.mxu0 0.0
        %1248 = vmatpush1.xpose.msra.mxu0 0.0
        %1249 = vmatprep.subr.mxu0 0.0
        %1250 = vmatpush1.xpose.msra.mxu0 0.0
        %1251 = vmatprep.subr.mxu0 0.0
        %1252 = vmatpush1.xpose.msra.mxu0 0.0
        %1253 = vmatprep.subr.mxu0 0.0
        %1254 = vmatpush1.xpose.msra.mxu0 0.0
        %1255 = vmatprep.subr.mxu0 0.0
        %1256 = vmatpush1.xpose.msra.mxu0 0.0
        %1257 = vmatprep.subr.mxu0 0.0
        %1258 = vmatpush1.xpose.msra.mxu0 0.0
        %1259 = vmatprep.subr.mxu0 0.0
        %1260 = vmatpush1.xpose.msra.mxu0 0.0
        %1261 = vmatprep.subr.mxu0 0.0
        %1262 = vmatpush1.xpose.msra.mxu0 0.0
        %1263 = vmatprep.subr.mxu0 0.0
        %1264 = vmatpush1.xpose.msra.mxu0 0.0
        %1265 = vmatprep.subr.mxu0 0.0
        %1266 = vmatpush1.xpose.msra.mxu0 0.0
        %1267 = vmatprep.subr.mxu0 0.0
        %1268 = vmatpush1.xpose.msra.mxu0 0.0
        %1269 = vmatprep.subr.mxu0 0.0
        %1270 = vmatpush1.xpose.msra.mxu0 0.0
        %1271 = vmatprep.subr.mxu0 0.0
        %1272 = vmatpush1.xpose.msra.mxu0 0.0
        %1273 = vmatprep.subr.mxu0 0.0
        %1274 = vmatpush1.xpose.msra.mxu0 0.0
        %1275 = vmatprep.subr.mxu0 0.0
        %1276 = vmatpush1.xpose.msra.mxu0 0.0
        %v1277 = vand.u32 %v511, 4294901760
        %1278 = vmatprep.subr.mxu0 %v1277
        %v1279 = vand.u32 %v510, 4294901760
        %1280 = vmatpush1.xpose.msra.mxu0 %v1279
        %1281 = vmatprep.subr.mxu0 0.0
        %1282 = vmatpush2.xpose.msra.mxu0 0.0
        %1283 = vmatprep.subr.mxu0 0.0
        %1284 = vmatpush2.xpose.msra.mxu0 0.0
        %1285 = vmatprep.subr.mxu0 0.0
        %1286 = vmatpush2.xpose.msra.mxu0 0.0
        %1287 = vmatprep.subr.mxu0 0.0
        %1288 = vmatpush2.xpose.msra.mxu0 0.0
        %1289 = vmatprep.subr.mxu0 0.0
        %1290 = vmatpush2.xpose.msra.mxu0 0.0
        %1291 = vmatprep.subr.mxu0 0.0
        %1292 = vmatpush2.xpose.msra.mxu0 0.0
        %1293 = vmatprep.subr.mxu0 0.0
        %1294 = vmatpush2.xpose.msra.mxu0 0.0
        %1295 = vmatprep.subr.mxu0 0.0
        %1296 = vmatpush2.xpose.msra.mxu0 0.0
        %1297 = vmatprep.subr.mxu0 0.0
        %1298 = vmatpush2.xpose.msra.mxu0 0.0
        %1299 = vmatprep.subr.mxu0 0.0
        %1300 = vmatpush2.xpose.msra.mxu0 0.0
        %1301 = vmatprep.subr.mxu0 0.0
        %1302 = vmatpush2.xpose.msra.mxu0 0.0
        %1303 = vmatprep.subr.mxu0 0.0
        %1304 = vmatpush2.xpose.msra.mxu0 0.0
        %1305 = vmatprep.subr.mxu0 0.0
        %1306 = vmatpush2.xpose.msra.mxu0 0.0
        %1307 = vmatprep.subr.mxu0 0.0
        %1308 = vmatpush2.xpose.msra.mxu0 0.0
        %1309 = vmatprep.subr.mxu0 0.0
        %1310 = vmatpush2.xpose.msra.mxu0 0.0
        %1311 = vmatprep.subr.mxu0 0.0
        %1312 = vmatpush2.xpose.msra.mxu0 0.0
        %v1313 = vand.u32 %v1004, 4294901760
        %v1314 = vsub.f32 %v1004, %v1313
        %v1315 = vand.u32 %v1314, 4294901760
        %1316 = vmatprep.mubr.f32.mxu0 %v1315
        %v1317 = vand.u32 %v1003, 4294901760
        %v1318 = vsub.f32 %v1003, %v1317
        %v1319 = vand.u32 %v1318, 4294901760
        %1320 = vmatmul.mubr.f32.gmra.mxu0 %v1319
        %v1321 = vpop.f32.mrf.mxu0
        %v1322 = vadd.f32 %v1244, %v1321
        %v1323 = vpop.f32.mrf.mxu0
        %1324 = vdwg.mxu0
        %1325 = vmatprep.subr.mxu0 0.0
        %1326 = vmatpush1.xpose.msra.mxu0 0.0
        %1327 = vmatprep.subr.mxu0 0.0
        %1328 = vmatpush1.xpose.msra.mxu0 0.0
        %1329 = vmatprep.subr.mxu0 0.0
        %1330 = vmatpush1.xpose.msra.mxu0 0.0
        %1331 = vmatprep.subr.mxu0 0.0
        %1332 = vmatpush1.xpose.msra.mxu0 0.0
        %1333 = vmatprep.subr.mxu0 0.0
        %1334 = vmatpush1.xpose.msra.mxu0 0.0
        %1335 = vmatprep.subr.mxu0 0.0
        %1336 = vmatpush1.xpose.msra.mxu0 0.0
        %1337 = vmatprep.subr.mxu0 0.0
        %1338 = vmatpush1.xpose.msra.mxu0 0.0
        %1339 = vmatprep.subr.mxu0 0.0
        %1340 = vmatpush1.xpose.msra.mxu0 0.0
        %1341 = vmatprep.subr.mxu0 0.0
        %1342 = vmatpush1.xpose.msra.mxu0 0.0
        %1343 = vmatprep.subr.mxu0 0.0
        %1344 = vmatpush1.xpose.msra.mxu0 0.0
        %1345 = vmatprep.subr.mxu0 0.0
        %1346 = vmatpush1.xpose.msra.mxu0 0.0
        %1347 = vmatprep.subr.mxu0 0.0
        %1348 = vmatpush1.xpose.msra.mxu0 0.0
        %1349 = vmatprep.subr.mxu0 0.0
        %1350 = vmatpush1.xpose.msra.mxu0 0.0
        %1351 = vmatprep.subr.mxu0 0.0
        %1352 = vmatpush1.xpose.msra.mxu0 0.0
        %1353 = vmatprep.subr.mxu0 0.0
        %1354 = vmatpush1.xpose.msra.mxu0 0.0
        %v1355 = vand.u32 %v511, 4294901760
        %v1356 = vsub.f32 %v511, %v1355
        %v1357 = vand.u32 %v1356, 4294901760
        %1358 = vmatprep.subr.mxu0 %v1357
        %v1359 = vand.u32 %v510, 4294901760
        %v1360 = vsub.f32 %v510, %v1359
        %v1361 = vand.u32 %v1360, 4294901760
        %1362 = vmatpush1.xpose.msra.mxu0 %v1361
        %1363 = vmatprep.subr.mxu0 0.0
        %1364 = vmatpush2.xpose.msra.mxu0 0.0
        %1365 = vmatprep.subr.mxu0 0.0
        %1366 = vmatpush2.xpose.msra.mxu0 0.0
        %1367 = vmatprep.subr.mxu0 0.0
        %1368 = vmatpush2.xpose.msra.mxu0 0.0
        %1369 = vmatprep.subr.mxu0 0.0
        %1370 = vmatpush2.xpose.msra.mxu0 0.0
        %1371 = vmatprep.subr.mxu0 0.0
        %1372 = vmatpush2.xpose.msra.mxu0 0.0
        %1373 = vmatprep.subr.mxu0 0.0
        %1374 = vmatpush2.xpose.msra.mxu0 0.0
        %1375 = vmatprep.subr.mxu0 0.0
        %1376 = vmatpush2.xpose.msra.mxu0 0.0
        %1377 = vmatprep.subr.mxu0 0.0
        %1378 = vmatpush2.xpose.msra.mxu0 0.0
        %1379 = vmatprep.subr.mxu0 0.0
        %1380 = vmatpush2.xpose.msra.mxu0 0.0
        %1381 = vmatprep.subr.mxu0 0.0
        %1382 = vmatpush2.xpose.msra.mxu0 0.0
        %1383 = vmatprep.subr.mxu0 0.0
        %1384 = vmatpush2.xpose.msra.mxu0 0.0
        %1385 = vmatprep.subr.mxu0 0.0
        %1386 = vmatpush2.xpose.msra.mxu0 0.0
        %1387 = vmatprep.subr.mxu0 0.0
        %1388 = vmatpush2.xpose.msra.mxu0 0.0
        %1389 = vmatprep.subr.mxu0 0.0
        %1390 = vmatpush2.xpose.msra.mxu0 0.0
        %1391 = vmatprep.subr.mxu0 0.0
        %1392 = vmatpush2.xpose.msra.mxu0 0.0
        %1393 = vmatprep.subr.mxu0 0.0
        %1394 = vmatpush2.xpose.msra.mxu0 0.0
        %v1395 = vand.u32 %v1004, 4294901760
        %1396 = vmatprep.mubr.f32.mxu0 %v1395
        %v1397 = vand.u32 %v1003, 4294901760
        %1398 = vmatmul.mubr.f32.gmra.mxu0 %v1397
        %v1399 = vpop.f32.mrf.mxu0
        %v1400 = vadd.f32 %v1322, %v1399
        %v1401 = vpop.f32.mrf.mxu0
        %1402 = vdwg.mxu0
        %1403 = vmatprep.subr.mxu0 0.0
        %1404 = vmatpush1.xpose.msra.mxu0 0.0
        %1405 = vmatprep.subr.mxu0 0.0
        %1406 = vmatpush1.xpose.msra.mxu0 0.0
        %1407 = vmatprep.subr.mxu0 0.0
        %1408 = vmatpush1.xpose.msra.mxu0 0.0
        %1409 = vmatprep.subr.mxu0 0.0
        %1410 = vmatpush1.xpose.msra.mxu0 0.0
        %1411 = vmatprep.subr.mxu0 0.0
        %1412 = vmatpush1.xpose.msra.mxu0 0.0
        %1413 = vmatprep.subr.mxu0 0.0
        %1414 = vmatpush1.xpose.msra.mxu0 0.0
        %1415 = vmatprep.subr.mxu0 0.0
        %1416 = vmatpush1.xpose.msra.mxu0 0.0
        %1417 = vmatprep.subr.mxu0 0.0
        %1418 = vmatpush1.xpose.msra.mxu0 0.0
        %1419 = vmatprep.subr.mxu0 0.0
        %1420 = vmatpush1.xpose.msra.mxu0 0.0
        %1421 = vmatprep.subr.mxu0 0.0
        %1422 = vmatpush1.xpose.msra.mxu0 0.0
        %1423 = vmatprep.subr.mxu0 0.0
        %1424 = vmatpush1.xpose.msra.mxu0 0.0
        %1425 = vmatprep.subr.mxu0 0.0
        %1426 = vmatpush1.xpose.msra.mxu0 0.0
        %1427 = vmatprep.subr.mxu0 0.0
        %1428 = vmatpush1.xpose.msra.mxu0 0.0
        %1429 = vmatprep.subr.mxu0 0.0
        %1430 = vmatpush1.xpose.msra.mxu0 0.0
        %1431 = vmatprep.subr.mxu0 0.0
        %1432 = vmatpush1.xpose.msra.mxu0 0.0
        %v1433 = vand.u32 %v511, 4294901760
        %1434 = vmatprep.subr.mxu0 %v1433
        %v1435 = vand.u32 %v510, 4294901760
        %1436 = vmatpush1.xpose.msra.mxu0 %v1435
        %1437 = vmatprep.subr.mxu0 0.0
        %1438 = vmatpush2.xpose.msra.mxu0 0.0
        %1439 = vmatprep.subr.mxu0 0.0
        %1440 = vmatpush2.xpose.msra.mxu0 0.0
        %1441 = vmatprep.subr.mxu0 0.0
        %1442 = vmatpush2.xpose.msra.mxu0 0.0
        %1443 = vmatprep.subr.mxu0 0.0
        %1444 = vmatpush2.xpose.msra.mxu0 0.0
        %1445 = vmatprep.subr.mxu0 0.0
        %1446 = vmatpush2.xpose.msra.mxu0 0.0
        %1447 = vmatprep.subr.mxu0 0.0
        %1448 = vmatpush2.xpose.msra.mxu0 0.0
        %1449 = vmatprep.subr.mxu0 0.0
        %1450 = vmatpush2.xpose.msra.mxu0 0.0
        %1451 = vmatprep.subr.mxu0 0.0
        %1452 = vmatpush2.xpose.msra.mxu0 0.0
        %1453 = vmatprep.subr.mxu0 0.0
        %1454 = vmatpush2.xpose.msra.mxu0 0.0
        %1455 = vmatprep.subr.mxu0 0.0
        %1456 = vmatpush2.xpose.msra.mxu0 0.0
        %1457 = vmatprep.subr.mxu0 0.0
        %1458 = vmatpush2.xpose.msra.mxu0 0.0
        %1459 = vmatprep.subr.mxu0 0.0
        %1460 = vmatpush2.xpose.msra.mxu0 0.0
        %1461 = vmatprep.subr.mxu0 0.0
        %1462 = vmatpush2.xpose.msra.mxu0 0.0
        %1463 = vmatprep.subr.mxu0 0.0
        %1464 = vmatpush2.xpose.msra.mxu0 0.0
        %1465 = vmatprep.subr.mxu0 0.0
        %1466 = vmatpush2.xpose.msra.mxu0 0.0
        %1467 = vmatprep.subr.mxu0 0.0
        %1468 = vmatpush2.xpose.msra.mxu0 0.0
        %v1469 = vand.u32 %v1004, 4294901760
        %1470 = vmatprep.mubr.f32.mxu0 %v1469
        %v1471 = vand.u32 %v1003, 4294901760
        %1472 = vmatmul.mubr.f32.gmra.mxu0 %v1471
        %v1473 = vpop.f32.mrf.mxu0
        %v1474 = vadd.f32 %v1400, %v1473
        %v1475 = vpop.f32.mrf.mxu0
        %1476 = vdwg.mxu0
        %vm1477 = vcmp.gt.f32.partialorder %v1474, 0.0
        %v1478 = vsel %vm1477, %v1000, -1e+10
        %vm1479 = vcmask 64512
        %v1480 = vsel %vm1479, %v1478, -inf
        %v1481 = vrot.slane %v1480, 4
        %v1482 = vmax.f32 %v1480, %v1481
        %v1483 = vrot.slane %v1482, 2
        %v1484 = vmax.f32 %v1482, %v1483
        %v1485 = vrot.slane %v1484, 1
        %v1486 = vmax.f32 %v1484, %v1485
        %v1487 = vsub.f32 %v1478, %v1486
        %v1488 = vmul.f32 %v1487, 1.442695
        %v1489 = vpow.pop %v1488
        %v1490 = vsel %vm1479, %v1489, 0.0
        %v1491 = vrot.slane %v1490, 4
        %v1492 = vadd.f32 %v1490, %v1491
        %v1493 = vrot.slane %v1492, 2
        %v1494 = vadd.f32 %v1492, %v1493
        %v1495 = vrot.slane %v1494, 1
        %v1496 = vadd.f32 %v1494, %v1495
        %v1497 = vrcp.pop %v1496
        %v1498 = vmul.f32 %v1489, %v1497
        %v1500 = vsel %vm1479, %v1498, 0
        %1502 = vmatprep.subr.mxu0 0.0
        %1503 = vmatpush1.msra.mxu0 0.0
        %1504 = vmatprep.subr.mxu0 0.0
        %1505 = vmatpush1.msra.mxu0 0.0
        %1506 = vmatprep.subr.mxu0 0.0
        %1507 = vmatpush1.msra.mxu0 0.0
        %1508 = vmatprep.subr.mxu0 0.0
        %1509 = vmatpush1.msra.mxu0 0.0
        %1510 = vmatprep.subr.mxu0 0.0
        %1511 = vmatpush1.msra.mxu0 0.0
        %1512 = vmatprep.subr.mxu0 0.0
        %1513 = vmatpush1.msra.mxu0 0.0
        %1514 = vmatprep.subr.mxu0 0.0
        %1515 = vmatpush1.msra.mxu0 0.0
        %1516 = vmatprep.subr.mxu0 0.0
        %1517 = vmatpush1.msra.mxu0 0.0
        %1518 = vmatprep.subr.mxu0 0.0
        %1519 = vmatpush1.msra.mxu0 0.0
        %1520 = vmatprep.subr.mxu0 0.0
        %1521 = vmatpush1.msra.mxu0 0.0
        %1522 = vmatprep.subr.mxu0 0.0
        %1523 = vmatpush1.msra.mxu0 0.0
        %1524 = vmatprep.subr.mxu0 0.0
        %1525 = vmatpush1.msra.mxu0 0.0
        %1526 = vmatprep.subr.mxu0 0.0
        %1527 = vmatpush1.msra.mxu0 0.0
        %1528 = vmatprep.subr.mxu0 0.0
        %1529 = vmatpush1.msra.mxu0 0.0
        %1530 = vmatprep.subr.mxu0 0.0
        %1531 = vmatpush1.msra.mxu0 0.0
        %v1532 = vand.u32 %v511, 4294901760
        %1533 = vmatprep.subr.mxu0 %v1532
        %v1534 = vand.u32 %v510, 4294901760
        %1535 = vmatpush1.msra.mxu0 %v1534
        %1536 = vmatprep.subr.mxu0 0.0
        %1537 = vmatpush2.msra.mxu0 0.0
        %1538 = vmatprep.subr.mxu0 0.0
        %1539 = vmatpush2.msra.mxu0 0.0
        %1540 = vmatprep.subr.mxu0 0.0
        %1541 = vmatpush2.msra.mxu0 0.0
        %1542 = vmatprep.subr.mxu0 0.0
        %1543 = vmatpush2.msra.mxu0 0.0
        %1544 = vmatprep.subr.mxu0 0.0
        %1545 = vmatpush2.msra.mxu0 0.0
        %1546 = vmatprep.subr.mxu0 0.0
        %1547 = vmatpush2.msra.mxu0 0.0
        %1548 = vmatprep.subr.mxu0 0.0
        %1549 = vmatpush2.msra.mxu0 0.0
        %1550 = vmatprep.subr.mxu0 0.0
        %1551 = vmatpush2.msra.mxu0 0.0
        %1552 = vmatprep.subr.mxu0 0.0
        %1553 = vmatpush2.msra.mxu0 0.0
        %1554 = vmatprep.subr.mxu0 0.0
        %1555 = vmatpush2.msra.mxu0 0.0
        %1556 = vmatprep.subr.mxu0 0.0
        %1557 = vmatpush2.msra.mxu0 0.0
        %1558 = vmatprep.subr.mxu0 0.0
        %1559 = vmatpush2.msra.mxu0 0.0
        %1560 = vmatprep.subr.mxu0 0.0
        %1561 = vmatpush2.msra.mxu0 0.0
        %1562 = vmatprep.subr.mxu0 0.0
        %1563 = vmatpush2.msra.mxu0 0.0
        %1564 = vmatprep.subr.mxu0 0.0
        %1565 = vmatpush2.msra.mxu0 0.0
        %1566 = vmatprep.subr.mxu0 0.0
        %1567 = vmatpush2.msra.mxu0 0.0
        %1568 = vmatprep.mubr.f32.mxu0 0.0
        %v1569 = vand.u32 %v1500, 4294901760
        %v1570 = vsub.f32 %v1500, %v1569
        %v1571 = vand.u32 %v1570, 4294901760
        %v1572 = vsub.f32 %v1570, %v1571
        %v1573 = vand.u32 %v1572, 4294901760
        %1574 = vmatmul.mubr.f32.gmra.mxu0 %v1573
        %v1575 = vpop.f32.mrf.mxu0
        %v1576 = vadd.f32 0.0, %v1575
        %v1577 = vpop.f32.mrf.mxu0
        %v1578 = vadd.f32 0.0, %v1577
        %1579 = vdwg.mxu0
        %1580 = vmatprep.subr.mxu0 0.0
        %1581 = vmatpush1.msra.mxu0 0.0
        %1582 = vmatprep.subr.mxu0 0.0
        %1583 = vmatpush1.msra.mxu0 0.0
        %1584 = vmatprep.subr.mxu0 0.0
        %1585 = vmatpush1.msra.mxu0 0.0
        %1586 = vmatprep.subr.mxu0 0.0
        %1587 = vmatpush1.msra.mxu0 0.0
        %1588 = vmatprep.subr.mxu0 0.0
        %1589 = vmatpush1.msra.mxu0 0.0
        %1590 = vmatprep.subr.mxu0 0.0
        %1591 = vmatpush1.msra.mxu0 0.0
        %1592 = vmatprep.subr.mxu0 0.0
        %1593 = vmatpush1.msra.mxu0 0.0
        %1594 = vmatprep.subr.mxu0 0.0
        %1595 = vmatpush1.msra.mxu0 0.0
        %1596 = vmatprep.subr.mxu0 0.0
        %1597 = vmatpush1.msra.mxu0 0.0
        %1598 = vmatprep.subr.mxu0 0.0
        %1599 = vmatpush1.msra.mxu0 0.0
        %1600 = vmatprep.subr.mxu0 0.0
        %1601 = vmatpush1.msra.mxu0 0.0
        %1602 = vmatprep.subr.mxu0 0.0
        %1603 = vmatpush1.msra.mxu0 0.0
        %1604 = vmatprep.subr.mxu0 0.0
        %1605 = vmatpush1.msra.mxu0 0.0
        %1606 = vmatprep.subr.mxu0 0.0
        %1607 = vmatpush1.msra.mxu0 0.0
        %1608 = vmatprep.subr.mxu0 0.0
        %1609 = vmatpush1.msra.mxu0 0.0
        %v1610 = vand.u32 %v511, 4294901760
        %v1611 = vsub.f32 %v511, %v1610
        %v1612 = vand.u32 %v1611, 4294901760
        %v1613 = vsub.f32 %v1611, %v1612
        %v1614 = vand.u32 %v1613, 4294901760
        %1615 = vmatprep.subr.mxu0 %v1614
        %v1616 = vand.u32 %v510, 4294901760
        %v1617 = vsub.f32 %v510, %v1616
        %v1618 = vand.u32 %v1617, 4294901760
        %v1619 = vsub.f32 %v1617, %v1618
        %v1620 = vand.u32 %v1619, 4294901760
        %1621 = vmatpush1.msra.mxu0 %v1620
        %1622 = vmatprep.subr.mxu0 0.0
        %1623 = vmatpush2.msra.mxu0 0.0
        %1624 = vmatprep.subr.mxu0 0.0
        %1625 = vmatpush2.msra.mxu0 0.0
        %1626 = vmatprep.subr.mxu0 0.0
        %1627 = vmatpush2.msra.mxu0 0.0
        %1628 = vmatprep.subr.mxu0 0.0
        %1629 = vmatpush2.msra.mxu0 0.0
        %1630 = vmatprep.subr.mxu0 0.0
        %1631 = vmatpush2.msra.mxu0 0.0
        %1632 = vmatprep.subr.mxu0 0.0
        %1633 = vmatpush2.msra.mxu0 0.0
        %1634 = vmatprep.subr.mxu0 0.0
        %1635 = vmatpush2.msra.mxu0 0.0
        %1636 = vmatprep.subr.mxu0 0.0
        %1637 = vmatpush2.msra.mxu0 0.0
        %1638 = vmatprep.subr.mxu0 0.0
        %1639 = vmatpush2.msra.mxu0 0.0
        %1640 = vmatprep.subr.mxu0 0.0
        %1641 = vmatpush2.msra.mxu0 0.0
        %1642 = vmatprep.subr.mxu0 0.0
        %1643 = vmatpush2.msra.mxu0 0.0
        %1644 = vmatprep.subr.mxu0 0.0
        %1645 = vmatpush2.msra.mxu0 0.0
        %1646 = vmatprep.subr.mxu0 0.0
        %1647 = vmatpush2.msra.mxu0 0.0
        %1648 = vmatprep.subr.mxu0 0.0
        %1649 = vmatpush2.msra.mxu0 0.0
        %1650 = vmatprep.subr.mxu0 0.0
        %1651 = vmatpush2.msra.mxu0 0.0
        %1652 = vmatprep.subr.mxu0 0.0
        %1653 = vmatpush2.msra.mxu0 0.0
        %1654 = vmatprep.mubr.f32.mxu0 0.0
        %v1655 = vand.u32 %v1500, 4294901760
        %1656 = vmatmul.mubr.f32.gmra.mxu0 %v1655
        %v1657 = vpop.f32.mrf.mxu0
        %v1658 = vadd.f32 %v1576, %v1657
        %v1659 = vpop.f32.mrf.mxu0
        %v1660 = vadd.f32 %v1578, %v1659
        %1661 = vdwg.mxu0
        %1662 = vmatprep.subr.mxu0 0.0
        %1663 = vmatpush1.msra.mxu0 0.0
        %1664 = vmatprep.subr.mxu0 0.0
        %1665 = vmatpush1.msra.mxu0 0.0
        %1666 = vmatprep.subr.mxu0 0.0
        %1667 = vmatpush1.msra.mxu0 0.0
        %1668 = vmatprep.subr.mxu0 0.0
        %1669 = vmatpush1.msra.mxu0 0.0
        %1670 = vmatprep.subr.mxu0 0.0
        %1671 = vmatpush1.msra.mxu0 0.0
        %1672 = vmatprep.subr.mxu0 0.0
        %1673 = vmatpush1.msra.mxu0 0.0
        %1674 = vmatprep.subr.mxu0 0.0
        %1675 = vmatpush1.msra.mxu0 0.0
        %1676 = vmatprep.subr.mxu0 0.0
        %1677 = vmatpush1.msra.mxu0 0.0
        %1678 = vmatprep.subr.mxu0 0.0
        %1679 = vmatpush1.msra.mxu0 0.0
        %1680 = vmatprep.subr.mxu0 0.0
        %1681 = vmatpush1.msra.mxu0 0.0
        %1682 = vmatprep.subr.mxu0 0.0
        %1683 = vmatpush1.msra.mxu0 0.0
        %1684 = vmatprep.subr.mxu0 0.0
        %1685 = vmatpush1.msra.mxu0 0.0
        %1686 = vmatprep.subr.mxu0 0.0
        %1687 = vmatpush1.msra.mxu0 0.0
        %1688 = vmatprep.subr.mxu0 0.0
        %1689 = vmatpush1.msra.mxu0 0.0
        %1690 = vmatprep.subr.mxu0 0.0
        %1691 = vmatpush1.msra.mxu0 0.0
        %v1692 = vand.u32 %v511, 4294901760
        %v1693 = vsub.f32 %v511, %v1692
        %1694 = vmatprep.subr.mxu0 %v1693
        %v1695 = vand.u32 %v510, 4294901760
        %v1696 = vsub.f32 %v510, %v1695
        %1697 = vmatpush1.msra.mxu0 %v1696
        %1698 = vmatprep.subr.mxu0 0.0
        %1699 = vmatpush2.msra.mxu0 0.0
        %1700 = vmatprep.subr.mxu0 0.0
        %1701 = vmatpush2.msra.mxu0 0.0
        %1702 = vmatprep.subr.mxu0 0.0
        %1703 = vmatpush2.msra.mxu0 0.0
        %1704 = vmatprep.subr.mxu0 0.0
        %1705 = vmatpush2.msra.mxu0 0.0
        %1706 = vmatprep.subr.mxu0 0.0
        %1707 = vmatpush2.msra.mxu0 0.0
        %1708 = vmatprep.subr.mxu0 0.0
        %1709 = vmatpush2.msra.mxu0 0.0
        %1710 = vmatprep.subr.mxu0 0.0
        %1711 = vmatpush2.msra.mxu0 0.0
        %1712 = vmatprep.subr.mxu0 0.0
        %1713 = vmatpush2.msra.mxu0 0.0
        %1714 = vmatprep.subr.mxu0 0.0
        %1715 = vmatpush2.msra.mxu0 0.0
        %1716 = vmatprep.subr.mxu0 0.0
        %1717 = vmatpush2.msra.mxu0 0.0
        %1718 = vmatprep.subr.mxu0 0.0
        %1719 = vmatpush2.msra.mxu0 0.0
        %1720 = vmatprep.subr.mxu0 0.0
        %1721 = vmatpush2.msra.mxu0 0.0
        %1722 = vmatprep.subr.mxu0 0.0
        %1723 = vmatpush2.msra.mxu0 0.0
        %1724 = vmatprep.subr.mxu0 0.0
        %1725 = vmatpush2.msra.mxu0 0.0
        %1726 = vmatprep.subr.mxu0 0.0
        %1727 = vmatpush2.msra.mxu0 0.0
        %1728 = vmatprep.subr.mxu0 0.0
        %1729 = vmatpush2.msra.mxu0 0.0
        %1730 = vmatprep.mubr.f32.mxu0 0.0
        %v1731 = vand.u32 %v1500, 4294901760
        %v1732 = vsub.f32 %v1500, %v1731
        %1733 = vmatmul.mubr.f32.gmra.mxu0 %v1732
        %v1734 = vpop.f32.mrf.mxu0
        %v1735 = vadd.f32 %v1658, %v1734
        %v1736 = vpop.f32.mrf.mxu0
        %v1737 = vadd.f32 %v1660, %v1736
        %1738 = vdwg.mxu0
        %1739 = vmatprep.subr.mxu0 0.0
        %1740 = vmatpush1.msra.mxu0 0.0
        %1741 = vmatprep.subr.mxu0 0.0
        %1742 = vmatpush1.msra.mxu0 0.0
        %1743 = vmatprep.subr.mxu0 0.0
        %1744 = vmatpush1.msra.mxu0 0.0
        %1745 = vmatprep.subr.mxu0 0.0
        %1746 = vmatpush1.msra.mxu0 0.0
        %1747 = vmatprep.subr.mxu0 0.0
        %1748 = vmatpush1.msra.mxu0 0.0
        %1749 = vmatprep.subr.mxu0 0.0
        %1750 = vmatpush1.msra.mxu0 0.0
        %1751 = vmatprep.subr.mxu0 0.0
        %1752 = vmatpush1.msra.mxu0 0.0
        %1753 = vmatprep.subr.mxu0 0.0
        %1754 = vmatpush1.msra.mxu0 0.0
        %1755 = vmatprep.subr.mxu0 0.0
        %1756 = vmatpush1.msra.mxu0 0.0
        %1757 = vmatprep.subr.mxu0 0.0
        %1758 = vmatpush1.msra.mxu0 0.0
        %1759 = vmatprep.subr.mxu0 0.0
        %1760 = vmatpush1.msra.mxu0 0.0
        %1761 = vmatprep.subr.mxu0 0.0
        %1762 = vmatpush1.msra.mxu0 0.0
        %1763 = vmatprep.subr.mxu0 0.0
        %1764 = vmatpush1.msra.mxu0 0.0
        %1765 = vmatprep.subr.mxu0 0.0
        %1766 = vmatpush1.msra.mxu0 0.0
        %1767 = vmatprep.subr.mxu0 0.0
        %1768 = vmatpush1.msra.mxu0 0.0
        %v1769 = vand.u32 %v511, 4294901760
        %1770 = vmatprep.subr.mxu0 %v1769
        %v1771 = vand.u32 %v510, 4294901760
        %1772 = vmatpush1.msra.mxu0 %v1771
        %1773 = vmatprep.subr.mxu0 0.0
        %1774 = vmatpush2.msra.mxu0 0.0
        %1775 = vmatprep.subr.mxu0 0.0
        %1776 = vmatpush2.msra.mxu0 0.0
        %1777 = vmatprep.subr.mxu0 0.0
        %1778 = vmatpush2.msra.mxu0 0.0
        %1779 = vmatprep.subr.mxu0 0.0
        %1780 = vmatpush2.msra.mxu0 0.0
        %1781 = vmatprep.subr.mxu0 0.0
        %1782 = vmatpush2.msra.mxu0 0.0
        %1783 = vmatprep.subr.mxu0 0.0
        %1784 = vmatpush2.msra.mxu0 0.0
        %1785 = vmatprep.subr.mxu0 0.0
        %1786 = vmatpush2.msra.mxu0 0.0
        %1787 = vmatprep.subr.mxu0 0.0
        %1788 = vmatpush2.msra.mxu0 0.0
        %1789 = vmatprep.subr.mxu0 0.0
        %1790 = vmatpush2.msra.mxu0 0.0
        %1791 = vmatprep.subr.mxu0 0.0
        %1792 = vmatpush2.msra.mxu0 0.0
        %1793 = vmatprep.subr.mxu0 0.0
        %1794 = vmatpush2.msra.mxu0 0.0
        %1795 = vmatprep.subr.mxu0 0.0
        %1796 = vmatpush2.msra.mxu0 0.0
        %1797 = vmatprep.subr.mxu0 0.0
        %1798 = vmatpush2.msra.mxu0 0.0
        %1799 = vmatprep.subr.mxu0 0.0
        %1800 = vmatpush2.msra.mxu0 0.0
        %1801 = vmatprep.subr.mxu0 0.0
        %1802 = vmatpush2.msra.mxu0 0.0
        %1803 = vmatprep.subr.mxu0 0.0
        %1804 = vmatpush2.msra.mxu0 0.0
        %1805 = vmatprep.mubr.f32.mxu0 0.0
        %v1806 = vand.u32 %v1500, 4294901760
        %v1807 = vsub.f32 %v1500, %v1806
        %v1808 = vand.u32 %v1807, 4294901760
        %1809 = vmatmul.mubr.f32.gmra.mxu0 %v1808
        %v1810 = vpop.f32.mrf.mxu0
        %v1811 = vadd.f32 %v1735, %v1810
        %v1812 = vpop.f32.mrf.mxu0
        %v1813 = vadd.f32 %v1737, %v1812
        %1814 = vdwg.mxu0
        %1815 = vmatprep.subr.mxu0 0.0
        %1816 = vmatpush1.msra.mxu0 0.0
        %1817 = vmatprep.subr.mxu0 0.0
        %1818 = vmatpush1.msra.mxu0 0.0
        %1819 = vmatprep.subr.mxu0 0.0
        %1820 = vmatpush1.msra.mxu0 0.0
        %1821 = vmatprep.subr.mxu0 0.0
        %1822 = vmatpush1.msra.mxu0 0.0
        %1823 = vmatprep.subr.mxu0 0.0
        %1824 = vmatpush1.msra.mxu0 0.0
        %1825 = vmatprep.subr.mxu0 0.0
        %1826 = vmatpush1.msra.mxu0 0.0
        %1827 = vmatprep.subr.mxu0 0.0
        %1828 = vmatpush1.msra.mxu0 0.0
        %1829 = vmatprep.subr.mxu0 0.0
        %1830 = vmatpush1.msra.mxu0 0.0
        %1831 = vmatprep.subr.mxu0 0.0
        %1832 = vmatpush1.msra.mxu0 0.0
        %1833 = vmatprep.subr.mxu0 0.0
        %1834 = vmatpush1.msra.mxu0 0.0
        %1835 = vmatprep.subr.mxu0 0.0
        %1836 = vmatpush1.msra.mxu0 0.0
        %1837 = vmatprep.subr.mxu0 0.0
        %1838 = vmatpush1.msra.mxu0 0.0
        %1839 = vmatprep.subr.mxu0 0.0
        %1840 = vmatpush1.msra.mxu0 0.0
        %1841 = vmatprep.subr.mxu0 0.0
        %1842 = vmatpush1.msra.mxu0 0.0
        %1843 = vmatprep.subr.mxu0 0.0
        %1844 = vmatpush1.msra.mxu0 0.0
        %v1845 = vand.u32 %v511, 4294901760
        %v1846 = vsub.f32 %v511, %v1845
        %v1847 = vand.u32 %v1846, 4294901760
        %1848 = vmatprep.subr.mxu0 %v1847
        %v1849 = vand.u32 %v510, 4294901760
        %v1850 = vsub.f32 %v510, %v1849
        %v1851 = vand.u32 %v1850, 4294901760
        %1852 = vmatpush1.msra.mxu0 %v1851
        %1853 = vmatprep.subr.mxu0 0.0
        %1854 = vmatpush2.msra.mxu0 0.0
        %1855 = vmatprep.subr.mxu0 0.0
        %1856 = vmatpush2.msra.mxu0 0.0
        %1857 = vmatprep.subr.mxu0 0.0
        %1858 = vmatpush2.msra.mxu0 0.0
        %1859 = vmatprep.subr.mxu0 0.0
        %1860 = vmatpush2.msra.mxu0 0.0
        %1861 = vmatprep.subr.mxu0 0.0
        %1862 = vmatpush2.msra.mxu0 0.0
        %1863 = vmatprep.subr.mxu0 0.0
        %1864 = vmatpush2.msra.mxu0 0.0
        %1865 = vmatprep.subr.mxu0 0.0
        %1866 = vmatpush2.msra.mxu0 0.0
        %1867 = vmatprep.subr.mxu0 0.0
        %1868 = vmatpush2.msra.mxu0 0.0
        %1869 = vmatprep.subr.mxu0 0.0
        %1870 = vmatpush2.msra.mxu0 0.0
        %1871 = vmatprep.subr.mxu0 0.0
        %1872 = vmatpush2.msra.mxu0 0.0
        %1873 = vmatprep.subr.mxu0 0.0
        %1874 = vmatpush2.msra.mxu0 0.0
        %1875 = vmatprep.subr.mxu0 0.0
        %1876 = vmatpush2.msra.mxu0 0.0
        %1877 = vmatprep.subr.mxu0 0.0
        %1878 = vmatpush2.msra.mxu0 0.0
        %1879 = vmatprep.subr.mxu0 0.0
        %1880 = vmatpush2.msra.mxu0 0.0
        %1881 = vmatprep.subr.mxu0 0.0
        %1882 = vmatpush2.msra.mxu0 0.0
        %1883 = vmatprep.subr.mxu0 0.0
        %1884 = vmatpush2.msra.mxu0 0.0
        %1885 = vmatprep.mubr.f32.mxu0 0.0
        %v1886 = vand.u32 %v1500, 4294901760
        %1887 = vmatmul.mubr.f32.gmra.mxu0 %v1886
        %v1888 = vpop.f32.mrf.mxu0
        %v1889 = vadd.f32 %v1811, %v1888
        %v1890 = vpop.f32.mrf.mxu0
        %v1891 = vadd.f32 %v1813, %v1890
        %1892 = vdwg.mxu0
        %1893 = vmatprep.subr.mxu0 0.0
        %1894 = vmatpush1.msra.mxu0 0.0
        %1895 = vmatprep.subr.mxu0 0.0
        %1896 = vmatpush1.msra.mxu0 0.0
        %1897 = vmatprep.subr.mxu0 0.0
        %1898 = vmatpush1.msra.mxu0 0.0
        %1899 = vmatprep.subr.mxu0 0.0
        %1900 = vmatpush1.msra.mxu0 0.0
        %1901 = vmatprep.subr.mxu0 0.0
        %1902 = vmatpush1.msra.mxu0 0.0
        %1903 = vmatprep.subr.mxu0 0.0
        %1904 = vmatpush1.msra.mxu0 0.0
        %1905 = vmatprep.subr.mxu0 0.0
        %1906 = vmatpush1.msra.mxu0 0.0
        %1907 = vmatprep.subr.mxu0 0.0
        %1908 = vmatpush1.msra.mxu0 0.0
        %1909 = vmatprep.subr.mxu0 0.0
        %1910 = vmatpush1.msra.mxu0 0.0
        %1911 = vmatprep.subr.mxu0 0.0
        %1912 = vmatpush1.msra.mxu0 0.0
        %1913 = vmatprep.subr.mxu0 0.0
        %1914 = vmatpush1.msra.mxu0 0.0
        %1915 = vmatprep.subr.mxu0 0.0
        %1916 = vmatpush1.msra.mxu0 0.0
        %1917 = vmatprep.subr.mxu0 0.0
        %1918 = vmatpush1.msra.mxu0 0.0
        %1919 = vmatprep.subr.mxu0 0.0
        %1920 = vmatpush1.msra.mxu0 0.0
        %1921 = vmatprep.subr.mxu0 0.0
        %1922 = vmatpush1.msra.mxu0 0.0
        %v1923 = vand.u32 %v511, 4294901760
        %1924 = vmatprep.subr.mxu0 %v1923
        %v1925 = vand.u32 %v510, 4294901760
        %1926 = vmatpush1.msra.mxu0 %v1925
        %1927 = vmatprep.subr.mxu0 0.0
        %1928 = vmatpush2.msra.mxu0 0.0
        %1929 = vmatprep.subr.mxu0 0.0
        %1930 = vmatpush2.msra.mxu0 0.0
        %1931 = vmatprep.subr.mxu0 0.0
        %1932 = vmatpush2.msra.mxu0 0.0
        %1933 = vmatprep.subr.mxu0 0.0
        %1934 = vmatpush2.msra.mxu0 0.0
        %1935 = vmatprep.subr.mxu0 0.0
        %1936 = vmatpush2.msra.mxu0 0.0
        %1937 = vmatprep.subr.mxu0 0.0
        %1938 = vmatpush2.msra.mxu0 0.0
        %1939 = vmatprep.subr.mxu0 0.0
        %1940 = vmatpush2.msra.mxu0 0.0
        %1941 = vmatprep.subr.mxu0 0.0
        %1942 = vmatpush2.msra.mxu0 0.0
        %1943 = vmatprep.subr.mxu0 0.0
        %1944 = vmatpush2.msra.mxu0 0.0
        %1945 = vmatprep.subr.mxu0 0.0
        %1946 = vmatpush2.msra.mxu0 0.0
        %1947 = vmatprep.subr.mxu0 0.0
        %1948 = vmatpush2.msra.mxu0 0.0
        %1949 = vmatprep.subr.mxu0 0.0
        %1950 = vmatpush2.msra.mxu0 0.0
        %1951 = vmatprep.subr.mxu0 0.0
        %1952 = vmatpush2.msra.mxu0 0.0
        %1953 = vmatprep.subr.mxu0 0.0
        %1954 = vmatpush2.msra.mxu0 0.0
        %1955 = vmatprep.subr.mxu0 0.0
        %1956 = vmatpush2.msra.mxu0 0.0
        %1957 = vmatprep.subr.mxu0 0.0
        %1958 = vmatpush2.msra.mxu0 0.0
        %1959 = vmatprep.mubr.f32.mxu0 0.0
        %v1960 = vand.u32 %v1500, 4294901760
        %1961 = vmatmul.mubr.f32.gmra.mxu0 %v1960
        %v1962 = vpop.f32.mrf.mxu0
        %v1963 = vadd.f32 %v1889, %v1962
        %v1964 = vpop.f32.mrf.mxu0
        %v1965 = vadd.f32 %v1891, %v1964
        %1966 = vdwg.mxu0
        %v1967 = vld [vmem:[#allocation7] sm:$0xff]
        %v1968 = vmul.f32 %v508, %v1963
        %v1969 = vmul.f32 %v509, %v1965
        %v1971 = vsel %vm1479, %v1967, 0
        %1973 = vmatprep.subr.mxu0 0.0
        %1974 = vmatpush1.msra.mxu0 0.0
        %1975 = vmatprep.subr.mxu0 0.0
        %1976 = vmatpush1.msra.mxu0 0.0
        %1977 = vmatprep.subr.mxu0 0.0
        %1978 = vmatpush1.msra.mxu0 0.0
        %1979 = vmatprep.subr.mxu0 0.0
        %1980 = vmatpush1.msra.mxu0 0.0
        %1981 = vmatprep.subr.mxu0 0.0
        %1982 = vmatpush1.msra.mxu0 0.0
        %1983 = vmatprep.subr.mxu0 0.0
        %1984 = vmatpush1.msra.mxu0 0.0
        %1985 = vmatprep.subr.mxu0 0.0
        %1986 = vmatpush1.msra.mxu0 0.0
        %1987 = vmatprep.subr.mxu0 0.0
        %1988 = vmatpush1.msra.mxu0 0.0
        %1989 = vmatprep.subr.mxu0 0.0
        %1990 = vmatpush1.msra.mxu0 0.0
        %1991 = vmatprep.subr.mxu0 0.0
        %1992 = vmatpush1.msra.mxu0 0.0
        %1993 = vmatprep.subr.mxu0 0.0
        %1994 = vmatpush1.msra.mxu0 0.0
        %1995 = vmatprep.subr.mxu0 0.0
        %1996 = vmatpush1.msra.mxu0 0.0
        %1997 = vmatprep.subr.mxu0 0.0
        %1998 = vmatpush1.msra.mxu0 0.0
        %1999 = vmatprep.subr.mxu0 0.0
        %2000 = vmatpush1.msra.mxu0 0.0
        %2001 = vmatprep.subr.mxu0 0.0
        %2002 = vmatpush1.msra.mxu0 0.0
        %v2003 = vand.u32 %v1969, 4294901760
        %2004 = vmatprep.subr.mxu0 %v2003
        %v2005 = vand.u32 %v1968, 4294901760
        %2006 = vmatpush1.msra.mxu0 %v2005
        %2007 = vmatprep.subr.mxu0 0.0
        %2008 = vmatpush2.msra.mxu0 0.0
        %2009 = vmatprep.subr.mxu0 0.0
        %2010 = vmatpush2.msra.mxu0 0.0
        %2011 = vmatprep.subr.mxu0 0.0
        %2012 = vmatpush2.msra.mxu0 0.0
        %2013 = vmatprep.subr.mxu0 0.0
        %2014 = vmatpush2.msra.mxu0 0.0
        %2015 = vmatprep.subr.mxu0 0.0
        %2016 = vmatpush2.msra.mxu0 0.0
        %2017 = vmatprep.subr.mxu0 0.0
        %2018 = vmatpush2.msra.mxu0 0.0
        %2019 = vmatprep.subr.mxu0 0.0
        %2020 = vmatpush2.msra.mxu0 0.0
        %2021 = vmatprep.subr.mxu0 0.0
        %2022 = vmatpush2.msra.mxu0 0.0
        %2023 = vmatprep.subr.mxu0 0.0
        %2024 = vmatpush2.msra.mxu0 0.0
        %2025 = vmatprep.subr.mxu0 0.0
        %2026 = vmatpush2.msra.mxu0 0.0
        %2027 = vmatprep.subr.mxu0 0.0
        %2028 = vmatpush2.msra.mxu0 0.0
        %2029 = vmatprep.subr.mxu0 0.0
        %2030 = vmatpush2.msra.mxu0 0.0
        %2031 = vmatprep.subr.mxu0 0.0
        %2032 = vmatpush2.msra.mxu0 0.0
        %2033 = vmatprep.subr.mxu0 0.0
        %2034 = vmatpush2.msra.mxu0 0.0
        %2035 = vmatprep.subr.mxu0 0.0
        %2036 = vmatpush2.msra.mxu0 0.0
        %2037 = vmatprep.subr.mxu0 0.0
        %2038 = vmatpush2.msra.mxu0 0.0
        %2039 = vmatprep.mubr.f32.mxu0 0.0
        %v2040 = vand.u32 %v1971, 4294901760
        %v2041 = vsub.f32 %v1971, %v2040
        %v2042 = vand.u32 %v2041, 4294901760
        %v2043 = vsub.f32 %v2041, %v2042
        %v2044 = vand.u32 %v2043, 4294901760
        %2045 = vmatmul.mubr.f32.gmra.mxu0 %v2044
        %v2046 = vpop.f32.mrf.mxu0
        %v2047 = vadd.f32 0.0, %v2046
        %v2048 = vpop.f32.mrf.mxu0
        %v2049 = vadd.f32 0.0, %v2048
        %2050 = vdwg.mxu0
        %2051 = vmatprep.subr.mxu0 0.0
        %2052 = vmatpush1.msra.mxu0 0.0
        %2053 = vmatprep.subr.mxu0 0.0
        %2054 = vmatpush1.msra.mxu0 0.0
        %2055 = vmatprep.subr.mxu0 0.0
        %2056 = vmatpush1.msra.mxu0 0.0
        %2057 = vmatprep.subr.mxu0 0.0
        %2058 = vmatpush1.msra.mxu0 0.0
        %2059 = vmatprep.subr.mxu0 0.0
        %2060 = vmatpush1.msra.mxu0 0.0
        %2061 = vmatprep.subr.mxu0 0.0
        %2062 = vmatpush1.msra.mxu0 0.0
        %2063 = vmatprep.subr.mxu0 0.0
        %2064 = vmatpush1.msra.mxu0 0.0
        %2065 = vmatprep.subr.mxu0 0.0
        %2066 = vmatpush1.msra.mxu0 0.0
        %2067 = vmatprep.subr.mxu0 0.0
        %2068 = vmatpush1.msra.mxu0 0.0
        %2069 = vmatprep.subr.mxu0 0.0
        %2070 = vmatpush1.msra.mxu0 0.0
        %2071 = vmatprep.subr.mxu0 0.0
        %2072 = vmatpush1.msra.mxu0 0.0
        %2073 = vmatprep.subr.mxu0 0.0
        %2074 = vmatpush1.msra.mxu0 0.0
        %2075 = vmatprep.subr.mxu0 0.0
        %2076 = vmatpush1.msra.mxu0 0.0
        %2077 = vmatprep.subr.mxu0 0.0
        %2078 = vmatpush1.msra.mxu0 0.0
        %2079 = vmatprep.subr.mxu0 0.0
        %2080 = vmatpush1.msra.mxu0 0.0
        %v2081 = vand.u32 %v1969, 4294901760
        %v2082 = vsub.f32 %v1969, %v2081
        %v2083 = vand.u32 %v2082, 4294901760
        %v2084 = vsub.f32 %v2082, %v2083
        %v2085 = vand.u32 %v2084, 4294901760
        %2086 = vmatprep.subr.mxu0 %v2085
        %v2087 = vand.u32 %v1968, 4294901760
        %v2088 = vsub.f32 %v1968, %v2087
        %v2089 = vand.u32 %v2088, 4294901760
        %v2090 = vsub.f32 %v2088, %v2089
        %v2091 = vand.u32 %v2090, 4294901760
        %2092 = vmatpush1.msra.mxu0 %v2091
        %2093 = vmatprep.subr.mxu0 0.0
        %2094 = vmatpush2.msra.mxu0 0.0
        %2095 = vmatprep.subr.mxu0 0.0
        %2096 = vmatpush2.msra.mxu0 0.0
        %2097 = vmatprep.subr.mxu0 0.0
        %2098 = vmatpush2.msra.mxu0 0.0
        %2099 = vmatprep.subr.mxu0 0.0
        %2100 = vmatpush2.msra.mxu0 0.0
        %2101 = vmatprep.subr.mxu0 0.0
        %2102 = vmatpush2.msra.mxu0 0.0
        %2103 = vmatprep.subr.mxu0 0.0
        %2104 = vmatpush2.msra.mxu0 0.0
        %2105 = vmatprep.subr.mxu0 0.0
        %2106 = vmatpush2.msra.mxu0 0.0
        %2107 = vmatprep.subr.mxu0 0.0
        %2108 = vmatpush2.msra.mxu0 0.0
        %2109 = vmatprep.subr.mxu0 0.0
        %2110 = vmatpush2.msra.mxu0 0.0
        %2111 = vmatprep.subr.mxu0 0.0
        %2112 = vmatpush2.msra.mxu0 0.0
        %2113 = vmatprep.subr.mxu0 0.0
        %2114 = vmatpush2.msra.mxu0 0.0
        %2115 = vmatprep.subr.mxu0 0.0
        %2116 = vmatpush2.msra.mxu0 0.0
        %2117 = vmatprep.subr.mxu0 0.0
        %2118 = vmatpush2.msra.mxu0 0.0
        %2119 = vmatprep.subr.mxu0 0.0
        %2120 = vmatpush2.msra.mxu0 0.0
        %2121 = vmatprep.subr.mxu0 0.0
        %2122 = vmatpush2.msra.mxu0 0.0
        %2123 = vmatprep.subr.mxu0 0.0
        %2124 = vmatpush2.msra.mxu0 0.0
        %2125 = vmatprep.mubr.f32.mxu0 0.0
        %v2126 = vand.u32 %v1971, 4294901760
        %2127 = vmatmul.mubr.f32.gmra.mxu0 %v2126
        %v2128 = vpop.f32.mrf.mxu0
        %v2129 = vadd.f32 %v2047, %v2128
        %v2130 = vpop.f32.mrf.mxu0
        %v2131 = vadd.f32 %v2049, %v2130
        %2132 = vdwg.mxu0
        %2133 = vmatprep.subr.mxu0 0.0
        %2134 = vmatpush1.msra.mxu0 0.0
        %2135 = vmatprep.subr.mxu0 0.0
        %2136 = vmatpush1.msra.mxu0 0.0
        %2137 = vmatprep.subr.mxu0 0.0
        %2138 = vmatpush1.msra.mxu0 0.0
        %2139 = vmatprep.subr.mxu0 0.0
        %2140 = vmatpush1.msra.mxu0 0.0
        %2141 = vmatprep.subr.mxu0 0.0
        %2142 = vmatpush1.msra.mxu0 0.0
        %2143 = vmatprep.subr.mxu0 0.0
        %2144 = vmatpush1.msra.mxu0 0.0
        %2145 = vmatprep.subr.mxu0 0.0
        %2146 = vmatpush1.msra.mxu0 0.0
        %2147 = vmatprep.subr.mxu0 0.0
        %2148 = vmatpush1.msra.mxu0 0.0
        %2149 = vmatprep.subr.mxu0 0.0
        %2150 = vmatpush1.msra.mxu0 0.0
        %2151 = vmatprep.subr.mxu0 0.0
        %2152 = vmatpush1.msra.mxu0 0.0
        %2153 = vmatprep.subr.mxu0 0.0
        %2154 = vmatpush1.msra.mxu0 0.0
        %2155 = vmatprep.subr.mxu0 0.0
        %2156 = vmatpush1.msra.mxu0 0.0
        %2157 = vmatprep.subr.mxu0 0.0
        %2158 = vmatpush1.msra.mxu0 0.0
        %2159 = vmatprep.subr.mxu0 0.0
        %2160 = vmatpush1.msra.mxu0 0.0
        %2161 = vmatprep.subr.mxu0 0.0
        %2162 = vmatpush1.msra.mxu0 0.0
        %v2163 = vand.u32 %v1969, 4294901760
        %v2164 = vsub.f32 %v1969, %v2163
        %2165 = vmatprep.subr.mxu0 %v2164
        %v2166 = vand.u32 %v1968, 4294901760
        %v2167 = vsub.f32 %v1968, %v2166
        %2168 = vmatpush1.msra.mxu0 %v2167
        %2169 = vmatprep.subr.mxu0 0.0
        %2170 = vmatpush2.msra.mxu0 0.0
        %2171 = vmatprep.subr.mxu0 0.0
        %2172 = vmatpush2.msra.mxu0 0.0
        %2173 = vmatprep.subr.mxu0 0.0
        %2174 = vmatpush2.msra.mxu0 0.0
        %2175 = vmatprep.subr.mxu0 0.0
        %2176 = vmatpush2.msra.mxu0 0.0
        %2177 = vmatprep.subr.mxu0 0.0
        %2178 = vmatpush2.msra.mxu0 0.0
        %2179 = vmatprep.subr.mxu0 0.0
        %2180 = vmatpush2.msra.mxu0 0.0
        %2181 = vmatprep.subr.mxu0 0.0
        %2182 = vmatpush2.msra.mxu0 0.0
        %2183 = vmatprep.subr.mxu0 0.0
        %2184 = vmatpush2.msra.mxu0 0.0
        %2185 = vmatprep.subr.mxu0 0.0
        %2186 = vmatpush2.msra.mxu0 0.0
        %2187 = vmatprep.subr.mxu0 0.0
        %2188 = vmatpush2.msra.mxu0 0.0
        %2189 = vmatprep.subr.mxu0 0.0
        %2190 = vmatpush2.msra.mxu0 0.0
        %2191 = vmatprep.subr.mxu0 0.0
        %2192 = vmatpush2.msra.mxu0 0.0
        %2193 = vmatprep.subr.mxu0 0.0
        %2194 = vmatpush2.msra.mxu0 0.0
        %2195 = vmatprep.subr.mxu0 0.0
        %2196 = vmatpush2.msra.mxu0 0.0
        %2197 = vmatprep.subr.mxu0 0.0
        %2198 = vmatpush2.msra.mxu0 0.0
        %2199 = vmatprep.subr.mxu0 0.0
        %2200 = vmatpush2.msra.mxu0 0.0
        %2201 = vmatprep.mubr.f32.mxu0 0.0
        %v2202 = vand.u32 %v1971, 4294901760
        %v2203 = vsub.f32 %v1971, %v2202
        %2204 = vmatmul.mubr.f32.gmra.mxu0 %v2203
        %v2205 = vpop.f32.mrf.mxu0
        %v2206 = vadd.f32 %v2129, %v2205
        %v2207 = vpop.f32.mrf.mxu0
        %v2208 = vadd.f32 %v2131, %v2207
        %2209 = vdwg.mxu0
        %2210 = vmatprep.subr.mxu0 0.0
        %2211 = vmatpush1.msra.mxu0 0.0
        %2212 = vmatprep.subr.mxu0 0.0
        %2213 = vmatpush1.msra.mxu0 0.0
        %2214 = vmatprep.subr.mxu0 0.0
        %2215 = vmatpush1.msra.mxu0 0.0
        %2216 = vmatprep.subr.mxu0 0.0
        %2217 = vmatpush1.msra.mxu0 0.0
        %2218 = vmatprep.subr.mxu0 0.0
        %2219 = vmatpush1.msra.mxu0 0.0
        %2220 = vmatprep.subr.mxu0 0.0
        %2221 = vmatpush1.msra.mxu0 0.0
        %2222 = vmatprep.subr.mxu0 0.0
        %2223 = vmatpush1.msra.mxu0 0.0
        %2224 = vmatprep.subr.mxu0 0.0
        %2225 = vmatpush1.msra.mxu0 0.0
        %2226 = vmatprep.subr.mxu0 0.0
        %2227 = vmatpush1.msra.mxu0 0.0
        %2228 = vmatprep.subr.mxu0 0.0
        %2229 = vmatpush1.msra.mxu0 0.0
        %2230 = vmatprep.subr.mxu0 0.0
        %2231 = vmatpush1.msra.mxu0 0.0
        %2232 = vmatprep.subr.mxu0 0.0
        %2233 = vmatpush1.msra.mxu0 0.0
        %2234 = vmatprep.subr.mxu0 0.0
        %2235 = vmatpush1.msra.mxu0 0.0
        %2236 = vmatprep.subr.mxu0 0.0
        %2237 = vmatpush1.msra.mxu0 0.0
        %2238 = vmatprep.subr.mxu0 0.0
        %2239 = vmatpush1.msra.mxu0 0.0
        %v2240 = vand.u32 %v1969, 4294901760
        %2241 = vmatprep.subr.mxu0 %v2240
        %v2242 = vand.u32 %v1968, 4294901760
        %2243 = vmatpush1.msra.mxu0 %v2242
        %2244 = vmatprep.subr.mxu0 0.0
        %2245 = vmatpush2.msra.mxu0 0.0
        %2246 = vmatprep.subr.mxu0 0.0
        %2247 = vmatpush2.msra.mxu0 0.0
        %2248 = vmatprep.subr.mxu0 0.0
        %2249 = vmatpush2.msra.mxu0 0.0
        %2250 = vmatprep.subr.mxu0 0.0
        %2251 = vmatpush2.msra.mxu0 0.0
        %2252 = vmatprep.subr.mxu0 0.0
        %2253 = vmatpush2.msra.mxu0 0.0
        %2254 = vmatprep.subr.mxu0 0.0
        %2255 = vmatpush2.msra.mxu0 0.0
        %2256 = vmatprep.subr.mxu0 0.0
        %2257 = vmatpush2.msra.mxu0 0.0
        %2258 = vmatprep.subr.mxu0 0.0
        %2259 = vmatpush2.msra.mxu0 0.0
        %2260 = vmatprep.subr.mxu0 0.0
        %2261 = vmatpush2.msra.mxu0 0.0
        %2262 = vmatprep.subr.mxu0 0.0
        %2263 = vmatpush2.msra.mxu0 0.0
        %2264 = vmatprep.subr.mxu0 0.0
        %2265 = vmatpush2.msra.mxu0 0.0
        %2266 = vmatprep.subr.mxu0 0.0
        %2267 = vmatpush2.msra.mxu0 0.0
        %2268 = vmatprep.subr.mxu0 0.0
        %2269 = vmatpush2.msra.mxu0 0.0
        %2270 = vmatprep.subr.mxu0 0.0
        %2271 = vmatpush2.msra.mxu0 0.0
        %2272 = vmatprep.subr.mxu0 0.0
        %2273 = vmatpush2.msra.mxu0 0.0
        %2274 = vmatprep.subr.mxu0 0.0
        %2275 = vmatpush2.msra.mxu0 0.0
        %2276 = vmatprep.mubr.f32.mxu0 0.0
        %v2277 = vand.u32 %v1971, 4294901760
        %v2278 = vsub.f32 %v1971, %v2277
        %v2279 = vand.u32 %v2278, 4294901760
        %2280 = vmatmul.mubr.f32.gmra.mxu0 %v2279
        %v2281 = vpop.f32.mrf.mxu0
        %v2282 = vadd.f32 %v2206, %v2281
        %v2283 = vpop.f32.mrf.mxu0
        %v2284 = vadd.f32 %v2208, %v2283
        %2285 = vdwg.mxu0
        %2286 = vmatprep.subr.mxu0 0.0
        %2287 = vmatpush1.msra.mxu0 0.0
        %2288 = vmatprep.subr.mxu0 0.0
        %2289 = vmatpush1.msra.mxu0 0.0
        %2290 = vmatprep.subr.mxu0 0.0
        %2291 = vmatpush1.msra.mxu0 0.0
        %2292 = vmatprep.subr.mxu0 0.0
        %2293 = vmatpush1.msra.mxu0 0.0
        %2294 = vmatprep.subr.mxu0 0.0
        %2295 = vmatpush1.msra.mxu0 0.0
        %2296 = vmatprep.subr.mxu0 0.0
        %2297 = vmatpush1.msra.mxu0 0.0
        %2298 = vmatprep.subr.mxu0 0.0
        %2299 = vmatpush1.msra.mxu0 0.0
        %2300 = vmatprep.subr.mxu0 0.0
        %2301 = vmatpush1.msra.mxu0 0.0
        %2302 = vmatprep.subr.mxu0 0.0
        %2303 = vmatpush1.msra.mxu0 0.0
        %2304 = vmatprep.subr.mxu0 0.0
        %2305 = vmatpush1.msra.mxu0 0.0
        %2306 = vmatprep.subr.mxu0 0.0
        %2307 = vmatpush1.msra.mxu0 0.0
        %2308 = vmatprep.subr.mxu0 0.0
        %2309 = vmatpush1.msra.mxu0 0.0
        %2310 = vmatprep.subr.mxu0 0.0
        %2311 = vmatpush1.msra.mxu0 0.0
        %2312 = vmatprep.subr.mxu0 0.0
        %2313 = vmatpush1.msra.mxu0 0.0
        %2314 = vmatprep.subr.mxu0 0.0
        %2315 = vmatpush1.msra.mxu0 0.0
        %v2316 = vand.u32 %v1969, 4294901760
        %v2317 = vsub.f32 %v1969, %v2316
        %v2318 = vand.u32 %v2317, 4294901760
        %2319 = vmatprep.subr.mxu0 %v2318
        %v2320 = vand.u32 %v1968, 4294901760
        %v2321 = vsub.f32 %v1968, %v2320
        %v2322 = vand.u32 %v2321, 4294901760
        %2323 = vmatpush1.msra.mxu0 %v2322
        %2324 = vmatprep.subr.mxu0 0.0
        %2325 = vmatpush2.msra.mxu0 0.0
        %2326 = vmatprep.subr.mxu0 0.0
        %2327 = vmatpush2.msra.mxu0 0.0
        %2328 = vmatprep.subr.mxu0 0.0
        %2329 = vmatpush2.msra.mxu0 0.0
        %2330 = vmatprep.subr.mxu0 0.0
        %2331 = vmatpush2.msra.mxu0 0.0
        %2332 = vmatprep.subr.mxu0 0.0
        %2333 = vmatpush2.msra.mxu0 0.0
        %2334 = vmatprep.subr.mxu0 0.0
        %2335 = vmatpush2.msra.mxu0 0.0
        %2336 = vmatprep.subr.mxu0 0.0
        %2337 = vmatpush2.msra.mxu0 0.0
        %2338 = vmatprep.subr.mxu0 0.0
        %2339 = vmatpush2.msra.mxu0 0.0
        %2340 = vmatprep.subr.mxu0 0.0
        %2341 = vmatpush2.msra.mxu0 0.0
        %2342 = vmatprep.subr.mxu0 0.0
        %2343 = vmatpush2.msra.mxu0 0.0
        %2344 = vmatprep.subr.mxu0 0.0
        %2345 = vmatpush2.msra.mxu0 0.0
        %2346 = vmatprep.subr.mxu0 0.0
        %2347 = vmatpush2.msra.mxu0 0.0
        %2348 = vmatprep.subr.mxu0 0.0
        %2349 = vmatpush2.msra.mxu0 0.0
        %2350 = vmatprep.subr.mxu0 0.0
        %2351 = vmatpush2.msra.mxu0 0.0
        %2352 = vmatprep.subr.mxu0 0.0
        %2353 = vmatpush2.msra.mxu0 0.0
        %2354 = vmatprep.subr.mxu0 0.0
        %2355 = vmatpush2.msra.mxu0 0.0
        %2356 = vmatprep.mubr.f32.mxu0 0.0
        %v2357 = vand.u32 %v1971, 4294901760
        %2358 = vmatmul.mubr.f32.gmra.mxu0 %v2357
        %v2359 = vpop.f32.mrf.mxu0
        %v2360 = vadd.f32 %v2282, %v2359
        %v2361 = vpop.f32.mrf.mxu0
        %v2362 = vadd.f32 %v2284, %v2361
        %2363 = vdwg.mxu0
        %2364 = vmatprep.subr.mxu0 0.0
        %2365 = vmatpush1.msra.mxu0 0.0
        %2366 = vmatprep.subr.mxu0 0.0
        %2367 = vmatpush1.msra.mxu0 0.0
        %2368 = vmatprep.subr.mxu0 0.0
        %2369 = vmatpush1.msra.mxu0 0.0
        %2370 = vmatprep.subr.mxu0 0.0
        %2371 = vmatpush1.msra.mxu0 0.0
        %2372 = vmatprep.subr.mxu0 0.0
        %2373 = vmatpush1.msra.mxu0 0.0
        %2374 = vmatprep.subr.mxu0 0.0
        %2375 = vmatpush1.msra.mxu0 0.0
        %2376 = vmatprep.subr.mxu0 0.0
        %2377 = vmatpush1.msra.mxu0 0.0
        %2378 = vmatprep.subr.mxu0 0.0
        %2379 = vmatpush1.msra.mxu0 0.0
        %2380 = vmatprep.subr.mxu0 0.0
        %2381 = vmatpush1.msra.mxu0 0.0
        %2382 = vmatprep.subr.mxu0 0.0
        %2383 = vmatpush1.msra.mxu0 0.0
        %2384 = vmatprep.subr.mxu0 0.0
        %2385 = vmatpush1.msra.mxu0 0.0
        %2386 = vmatprep.subr.mxu0 0.0
        %2387 = vmatpush1.msra.mxu0 0.0
        %2388 = vmatprep.subr.mxu0 0.0
        %2389 = vmatpush1.msra.mxu0 0.0
        %2390 = vmatprep.subr.mxu0 0.0
        %2391 = vmatpush1.msra.mxu0 0.0
        %2392 = vmatprep.subr.mxu0 0.0
        %2393 = vmatpush1.msra.mxu0 0.0
        %v2394 = vand.u32 %v1969, 4294901760
        %2395 = vmatprep.subr.mxu0 %v2394
        %v2396 = vand.u32 %v1968, 4294901760
        %2397 = vmatpush1.msra.mxu0 %v2396
        %2398 = vmatprep.subr.mxu0 0.0
        %2399 = vmatpush2.msra.mxu0 0.0
        %2400 = vmatprep.subr.mxu0 0.0
        %2401 = vmatpush2.msra.mxu0 0.0
        %2402 = vmatprep.subr.mxu0 0.0
        %2403 = vmatpush2.msra.mxu0 0.0
        %2404 = vmatprep.subr.mxu0 0.0
        %2405 = vmatpush2.msra.mxu0 0.0
        %2406 = vmatprep.subr.mxu0 0.0
        %2407 = vmatpush2.msra.mxu0 0.0
        %2408 = vmatprep.subr.mxu0 0.0
        %2409 = vmatpush2.msra.mxu0 0.0
        %2410 = vmatprep.subr.mxu0 0.0
        %2411 = vmatpush2.msra.mxu0 0.0
        %2412 = vmatprep.subr.mxu0 0.0
        %2413 = vmatpush2.msra.mxu0 0.0
        %2414 = vmatprep.subr.mxu0 0.0
        %2415 = vmatpush2.msra.mxu0 0.0
        %2416 = vmatprep.subr.mxu0 0.0
        %2417 = vmatpush2.msra.mxu0 0.0
        %2418 = vmatprep.subr.mxu0 0.0
        %2419 = vmatpush2.msra.mxu0 0.0
        %2420 = vmatprep.subr.mxu0 0.0
        %2421 = vmatpush2.msra.mxu0 0.0
        %2422 = vmatprep.subr.mxu0 0.0
        %2423 = vmatpush2.msra.mxu0 0.0
        %2424 = vmatprep.subr.mxu0 0.0
        %2425 = vmatpush2.msra.mxu0 0.0
        %2426 = vmatprep.subr.mxu0 0.0
        %2427 = vmatpush2.msra.mxu0 0.0
        %2428 = vmatprep.subr.mxu0 0.0
        %2429 = vmatpush2.msra.mxu0 0.0
        %2430 = vmatprep.mubr.f32.mxu0 0.0
        %v2431 = vand.u32 %v1971, 4294901760
        %2432 = vmatmul.mubr.f32.gmra.mxu0 %v2431
        %v2433 = vpop.f32.mrf.mxu0
        %v2434 = vadd.f32 %v2360, %v2433
        %v2435 = vpop.f32.mrf.mxu0
        %v2436 = vadd.f32 %v2362, %v2435
        %2437 = vdwg.mxu0
        %v2438 = vld [vmem:[#allocation8] ss:$2 sm:$0x3]
        %s2439 = scalar_lea.vmem [#allocation8], 1
        %v2440 = vld [vmem:[%s2439] ss:$2 sm:$0x3]
        %v2441 = vld [vmem:[%s8] sm:$0xff]
        %v2442 = vld [vmem:[%s8 + $0x8] sm:$0xff]
        %v2443 = vld [vmem:[%s8 + $0x10] sm:$0xff]
        %v2444 = vld [vmem:[%s8 + $0x18] sm:$0xff]
        %v2445 = vld [vmem:[%s8 + $0x20] sm:$0xff]
        %v2446 = vld [vmem:[%s8 + $0x28] sm:$0xff]
        %v2447 = vld [vmem:[%s8 + $0x30] sm:$0xff]
        %v2448 = vld [vmem:[%s8 + $0x38] sm:$0xff]
        %v2449 = vld [vmem:[#allocation10] sm:$0xff]
        %v2450 = vld [vmem:[#allocation10 + $0x8] sm:$0xff]
        %2451 = vrot.lane.b32.xlu0 %v2434, 1
        %v2452 = vpop.permute.xlu0 %2451
        %2453 = vrot.lane.b32.xlu0 %v2436, 1
        %v2454 = vpop.permute.xlu0 %2453
        %v2455 = vlaneseq
        %v2456 = vand.u32 %v2455, 127
        %vm2457 = vcmp.lt.s32.totalorder %v2456, 1
        %v2458 = vsel %vm2457, %v2452, %v2454
        %v2459 = vsel %vm2457, %v2454, %v2452
        %v2461 = vlaneseq
        %v2462 = vshrl.u32 %v2461, 7
        %v2463 = vsub.s32 0, %v2462
        %v2464 = vrot.slane %v2438, %v2463
        %v2465 = vlaneseq
        %v2466 = vshrl.u32 %v2465, 7
        %v2467 = vsub.s32 1, %v2466
        %v2468 = vrot.slane %v2438, %v2467
        %v2471 = vmul.f32 %v2459, %v2464
        %v2472 = vmul.f32 %v2458, %v2468
        %2473 = vrot.lane.b32.xlu0 %v2434, 127
        %v2474 = vpop.permute.xlu0 %2473
        %2475 = vrot.lane.b32.xlu0 %v2436, 127
        %v2476 = vpop.permute.xlu0 %2475
        %vm2477 = vcmp.lt.s32.totalorder %v2456, 127
        %v2478 = vsel %vm2477, %v2474, %v2476
        %v2479 = vsel %vm2477, %v2476, %v2474
        %v2481 = vlaneseq
        %v2482 = vshrl.u32 %v2481, 7
        %v2483 = vsub.s32 0, %v2482
        %v2484 = vrot.slane %v2440, %v2483
        %v2485 = vlaneseq
        %v2486 = vshrl.u32 %v2485, 7
        %v2487 = vsub.s32 1, %v2486
        %v2488 = vrot.slane %v2440, %v2487
        %v2491 = vmul.f32 %v2478, %v2484
        %v2492 = vmul.f32 %v2479, %v2488
        %vm2493 = vcmask 195584
        %v2495 = vsel %vm2493, %v2449, 0
        %v2498 = vsel %vm2493, %v2450, 0
        %2500 = vmatprep.subr.mxu0 0.0
        %2501 = vmatpush1.msra.mxu0 0.0
        %2502 = vmatprep.subr.mxu0 0.0
        %2503 = vmatpush1.msra.mxu0 0.0
        %2504 = vmatprep.subr.mxu0 0.0
        %2505 = vmatpush1.msra.mxu0 0.0
        %2506 = vmatprep.subr.mxu0 0.0
        %2507 = vmatpush1.msra.mxu0 0.0
        %2508 = vmatprep.subr.mxu0 0.0
        %2509 = vmatpush1.msra.mxu0 0.0
        %2510 = vmatprep.subr.mxu0 0.0
        %2511 = vmatpush1.msra.mxu0 0.0
        %2512 = vmatprep.subr.mxu0 0.0
        %2513 = vmatpush1.msra.mxu0 0.0
        %2514 = vmatprep.subr.mxu0 0.0
        %2515 = vmatpush1.msra.mxu0 0.0
        %2516 = vmatprep.subr.mxu0 0.0
        %2517 = vmatpush1.msra.mxu0 0.0
        %2518 = vmatprep.subr.mxu0 0.0
        %2519 = vmatpush1.msra.mxu0 0.0
        %2520 = vmatprep.subr.mxu0 0.0
        %2521 = vmatpush1.msra.mxu0 0.0
        %2522 = vmatprep.subr.mxu0 0.0
        %2523 = vmatpush1.msra.mxu0 0.0
        %2524 = vmatprep.subr.mxu0 0.0
        %2525 = vmatpush1.msra.mxu0 0.0
        %v2526 = vand.u32 %v2492, 4294901760
        %2527 = vmatprep.subr.mxu0 %v2526
        %v2528 = vand.u32 %v2491, 4294901760
        %2529 = vmatpush1.msra.mxu0 %v2528
        %v2530 = vand.u32 %v2436, 4294901760
        %2531 = vmatprep.subr.mxu0 %v2530
        %v2532 = vand.u32 %v2434, 4294901760
        %2533 = vmatpush1.msra.mxu0 %v2532
        %v2534 = vand.u32 %v2472, 4294901760
        %2535 = vmatprep.subr.mxu0 %v2534
        %v2536 = vand.u32 %v2471, 4294901760
        %2537 = vmatpush1.msra.mxu0 %v2536
        %2538 = vmatprep.subr.mxu0 0.0
        %2539 = vmatpush2.msra.mxu0 0.0
        %2540 = vmatprep.subr.mxu0 0.0
        %2541 = vmatpush2.msra.mxu0 0.0
        %2542 = vmatprep.subr.mxu0 0.0
        %2543 = vmatpush2.msra.mxu0 0.0
        %2544 = vmatprep.subr.mxu0 0.0
        %2545 = vmatpush2.msra.mxu0 0.0
        %2546 = vmatprep.subr.mxu0 0.0
        %2547 = vmatpush2.msra.mxu0 0.0
        %2548 = vmatprep.subr.mxu0 0.0
        %2549 = vmatpush2.msra.mxu0 0.0
        %2550 = vmatprep.subr.mxu0 0.0
        %2551 = vmatpush2.msra.mxu0 0.0
        %2552 = vmatprep.subr.mxu0 0.0
        %2553 = vmatpush2.msra.mxu0 0.0
        %2554 = vmatprep.subr.mxu0 0.0
        %2555 = vmatpush2.msra.mxu0 0.0
        %2556 = vmatprep.subr.mxu0 0.0
        %2557 = vmatpush2.msra.mxu0 0.0
        %2558 = vmatprep.subr.mxu0 0.0
        %2559 = vmatpush2.msra.mxu0 0.0
        %2560 = vmatprep.subr.mxu0 0.0
        %2561 = vmatpush2.msra.mxu0 0.0
        %2562 = vmatprep.subr.mxu0 0.0
        %2563 = vmatpush2.msra.mxu0 0.0
        %2564 = vmatprep.subr.mxu0 0.0
        %2565 = vmatpush2.msra.mxu0 0.0
        %2566 = vmatprep.subr.mxu0 0.0
        %2567 = vmatpush2.msra.mxu0 0.0
        %2568 = vmatprep.subr.mxu0 0.0
        %2569 = vmatpush2.msra.mxu0 0.0
        %2570 = vmatprep.mubr.f32.mxu0 0.0
        %v2571 = vand.u32 %v2495, 4294901760
        %v2572 = vsub.f32 %v2495, %v2571
        %v2573 = vand.u32 %v2572, 4294901760
        %v2574 = vsub.f32 %v2572, %v2573
        %v2575 = vand.u32 %v2574, 4294901760
        %2576 = vmatmul.mubr.f32.gmra.mxu0 %v2575
        %v2577 = vpop.f32.mrf.mxu0
        %v2578 = vadd.f32 0.0, %v2577
        %v2579 = vpop.f32.mrf.mxu0
        %v2580 = vadd.f32 0.0, %v2579
        %2581 = vmatprep.mubr.f32.mxu0 0.0
        %v2582 = vand.u32 %v2498, 4294901760
        %v2583 = vsub.f32 %v2498, %v2582
        %v2584 = vand.u32 %v2583, 4294901760
        %v2585 = vsub.f32 %v2583, %v2584
        %v2586 = vand.u32 %v2585, 4294901760
        %2587 = vmatmul.mubr.f32.gmra.mxu0 %v2586
        %v2588 = vpop.f32.mrf.mxu0
        %v2589 = vadd.f32 0.0, %v2588
        %v2590 = vpop.f32.mrf.mxu0
        %v2591 = vadd.f32 0.0, %v2590
        %2592 = vdwg.mxu0
        %2593 = vmatprep.subr.mxu0 0.0
        %2594 = vmatpush1.msra.mxu0 0.0
        %2595 = vmatprep.subr.mxu0 0.0
        %2596 = vmatpush1.msra.mxu0 0.0
        %2597 = vmatprep.subr.mxu0 0.0
        %2598 = vmatpush1.msra.mxu0 0.0
        %2599 = vmatprep.subr.mxu0 0.0
        %2600 = vmatpush1.msra.mxu0 0.0
        %2601 = vmatprep.subr.mxu0 0.0
        %2602 = vmatpush1.msra.mxu0 0.0
        %2603 = vmatprep.subr.mxu0 0.0
        %2604 = vmatpush1.msra.mxu0 0.0
        %2605 = vmatprep.subr.mxu0 0.0
        %2606 = vmatpush1.msra.mxu0 0.0
        %2607 = vmatprep.subr.mxu0 0.0
        %2608 = vmatpush1.msra.mxu0 0.0
        %2609 = vmatprep.subr.mxu0 0.0
        %2610 = vmatpush1.msra.mxu0 0.0
        %2611 = vmatprep.subr.mxu0 0.0
        %2612 = vmatpush1.msra.mxu0 0.0
        %2613 = vmatprep.subr.mxu0 0.0
        %2614 = vmatpush1.msra.mxu0 0.0
        %2615 = vmatprep.subr.mxu0 0.0
        %2616 = vmatpush1.msra.mxu0 0.0
        %2617 = vmatprep.subr.mxu0 0.0
        %2618 = vmatpush1.msra.mxu0 0.0
        %v2619 = vand.u32 %v2492, 4294901760
        %v2620 = vsub.f32 %v2492, %v2619
        %v2621 = vand.u32 %v2620, 4294901760
        %v2622 = vsub.f32 %v2620, %v2621
        %v2623 = vand.u32 %v2622, 4294901760
        %2624 = vmatprep.subr.mxu0 %v2623
        %v2625 = vand.u32 %v2491, 4294901760
        %v2626 = vsub.f32 %v2491, %v2625
        %v2627 = vand.u32 %v2626, 4294901760
        %v2628 = vsub.f32 %v2626, %v2627
        %v2629 = vand.u32 %v2628, 4294901760
        %2630 = vmatpush1.msra.mxu0 %v2629
        %v2631 = vand.u32 %v2436, 4294901760
        %v2632 = vsub.f32 %v2436, %v2631
        %v2633 = vand.u32 %v2632, 4294901760
        %v2634 = vsub.f32 %v2632, %v2633
        %v2635 = vand.u32 %v2634, 4294901760
        %2636 = vmatprep.subr.mxu0 %v2635
        %v2637 = vand.u32 %v2434, 4294901760
        %v2638 = vsub.f32 %v2434, %v2637
        %v2639 = vand.u32 %v2638, 4294901760
        %v2640 = vsub.f32 %v2638, %v2639
        %v2641 = vand.u32 %v2640, 4294901760
        %2642 = vmatpush1.msra.mxu0 %v2641
        %v2643 = vand.u32 %v2472, 4294901760
        %v2644 = vsub.f32 %v2472, %v2643
        %v2645 = vand.u32 %v2644, 4294901760
        %v2646 = vsub.f32 %v2644, %v2645
        %v2647 = vand.u32 %v2646, 4294901760
        %2648 = vmatprep.subr.mxu0 %v2647
        %v2649 = vand.u32 %v2471, 4294901760
        %v2650 = vsub.f32 %v2471, %v2649
        %v2651 = vand.u32 %v2650, 4294901760
        %v2652 = vsub.f32 %v2650, %v2651
        %v2653 = vand.u32 %v2652, 4294901760
        %2654 = vmatpush1.msra.mxu0 %v2653
        %2655 = vmatprep.subr.mxu0 0.0
        %2656 = vmatpush2.msra.mxu0 0.0
        %2657 = vmatprep.subr.mxu0 0.0
        %2658 = vmatpush2.msra.mxu0 0.0
        %2659 = vmatprep.subr.mxu0 0.0
        %2660 = vmatpush2.msra.mxu0 0.0
        %2661 = vmatprep.subr.mxu0 0.0
        %2662 = vmatpush2.msra.mxu0 0.0
        %2663 = vmatprep.subr.mxu0 0.0
        %2664 = vmatpush2.msra.mxu0 0.0
        %2665 = vmatprep.subr.mxu0 0.0
        %2666 = vmatpush2.msra.mxu0 0.0
        %2667 = vmatprep.subr.mxu0 0.0
        %2668 = vmatpush2.msra.mxu0 0.0
        %2669 = vmatprep.subr.mxu0 0.0
        %2670 = vmatpush2.msra.mxu0 0.0
        %2671 = vmatprep.subr.mxu0 0.0
        %2672 = vmatpush2.msra.mxu0 0.0
        %2673 = vmatprep.subr.mxu0 0.0
        %2674 = vmatpush2.msra.mxu0 0.0
        %2675 = vmatprep.subr.mxu0 0.0
        %2676 = vmatpush2.msra.mxu0 0.0
        %2677 = vmatprep.subr.mxu0 0.0
        %2678 = vmatpush2.msra.mxu0 0.0
        %2679 = vmatprep.subr.mxu0 0.0
        %2680 = vmatpush2.msra.mxu0 0.0
        %2681 = vmatprep.subr.mxu0 0.0
        %2682 = vmatpush2.msra.mxu0 0.0
        %2683 = vmatprep.subr.mxu0 0.0
        %2684 = vmatpush2.msra.mxu0 0.0
        %2685 = vmatprep.subr.mxu0 0.0
        %2686 = vmatpush2.msra.mxu0 0.0
        %2687 = vmatprep.mubr.f32.mxu0 0.0
        %v2688 = vand.u32 %v2495, 4294901760
        %2689 = vmatmul.mubr.f32.gmra.mxu0 %v2688
        %v2690 = vpop.f32.mrf.mxu0
        %v2691 = vadd.f32 %v2578, %v2690
        %v2692 = vpop.f32.mrf.mxu0
        %v2693 = vadd.f32 %v2580, %v2692
        %2694 = vmatprep.mubr.f32.mxu0 0.0
        %v2695 = vand.u32 %v2498, 4294901760
        %2696 = vmatmul.mubr.f32.gmra.mxu0 %v2695
        %v2697 = vpop.f32.mrf.mxu0
        %v2698 = vadd.f32 %v2589, %v2697
        %v2699 = vpop.f32.mrf.mxu0
        %v2700 = vadd.f32 %v2591, %v2699
        %2701 = vdwg.mxu0
        %2702 = vmatprep.subr.mxu0 0.0
        %2703 = vmatpush1.msra.mxu0 0.0
        %2704 = vmatprep.subr.mxu0 0.0
        %2705 = vmatpush1.msra.mxu0 0.0
        %2706 = vmatprep.subr.mxu0 0.0
        %2707 = vmatpush1.msra.mxu0 0.0
        %2708 = vmatprep.subr.mxu0 0.0
        %2709 = vmatpush1.msra.mxu0 0.0
        %2710 = vmatprep.subr.mxu0 0.0
        %2711 = vmatpush1.msra.mxu0 0.0
        %2712 = vmatprep.subr.mxu0 0.0
        %2713 = vmatpush1.msra.mxu0 0.0
        %2714 = vmatprep.subr.mxu0 0.0
        %2715 = vmatpush1.msra.mxu0 0.0
        %2716 = vmatprep.subr.mxu0 0.0
        %2717 = vmatpush1.msra.mxu0 0.0
        %2718 = vmatprep.subr.mxu0 0.0
        %2719 = vmatpush1.msra.mxu0 0.0
        %2720 = vmatprep.subr.mxu0 0.0
        %2721 = vmatpush1.msra.mxu0 0.0
        %2722 = vmatprep.subr.mxu0 0.0
        %2723 = vmatpush1.msra.mxu0 0.0
        %2724 = vmatprep.subr.mxu0 0.0
        %2725 = vmatpush1.msra.mxu0 0.0
        %2726 = vmatprep.subr.mxu0 0.0
        %2727 = vmatpush1.msra.mxu0 0.0
        %v2728 = vand.u32 %v2492, 4294901760
        %v2729 = vsub.f32 %v2492, %v2728
        %2730 = vmatprep.subr.mxu0 %v2729
        %v2731 = vand.u32 %v2491, 4294901760
        %v2732 = vsub.f32 %v2491, %v2731
        %2733 = vmatpush1.msra.mxu0 %v2732
        %v2734 = vand.u32 %v2436, 4294901760
        %v2735 = vsub.f32 %v2436, %v2734
        %2736 = vmatprep.subr.mxu0 %v2735
        %v2737 = vand.u32 %v2434, 4294901760
        %v2738 = vsub.f32 %v2434, %v2737
        %2739 = vmatpush1.msra.mxu0 %v2738
        %v2740 = vand.u32 %v2472, 4294901760
        %v2741 = vsub.f32 %v2472, %v2740
        %2742 = vmatprep.subr.mxu0 %v2741
        %v2743 = vand.u32 %v2471, 4294901760
        %v2744 = vsub.f32 %v2471, %v2743
        %2745 = vmatpush1.msra.mxu0 %v2744
        %2746 = vmatprep.subr.mxu0 0.0
        %2747 = vmatpush2.msra.mxu0 0.0
        %2748 = vmatprep.subr.mxu0 0.0
        %2749 = vmatpush2.msra.mxu0 0.0
        %2750 = vmatprep.subr.mxu0 0.0
        %2751 = vmatpush2.msra.mxu0 0.0
        %2752 = vmatprep.subr.mxu0 0.0
        %2753 = vmatpush2.msra.mxu0 0.0
        %2754 = vmatprep.subr.mxu0 0.0
        %2755 = vmatpush2.msra.mxu0 0.0
        %2756 = vmatprep.subr.mxu0 0.0
        %2757 = vmatpush2.msra.mxu0 0.0
        %2758 = vmatprep.subr.mxu0 0.0
        %2759 = vmatpush2.msra.mxu0 0.0
        %2760 = vmatprep.subr.mxu0 0.0
        %2761 = vmatpush2.msra.mxu0 0.0
        %2762 = vmatprep.subr.mxu0 0.0
        %2763 = vmatpush2.msra.mxu0 0.0
        %2764 = vmatprep.subr.mxu0 0.0
        %2765 = vmatpush2.msra.mxu0 0.0
        %2766 = vmatprep.subr.mxu0 0.0
        %2767 = vmatpush2.msra.mxu0 0.0
        %2768 = vmatprep.subr.mxu0 0.0
        %2769 = vmatpush2.msra.mxu0 0.0
        %2770 = vmatprep.subr.mxu0 0.0
        %2771 = vmatpush2.msra.mxu0 0.0
        %2772 = vmatprep.subr.mxu0 0.0
        %2773 = vmatpush2.msra.mxu0 0.0
        %2774 = vmatprep.subr.mxu0 0.0
        %2775 = vmatpush2.msra.mxu0 0.0
        %2776 = vmatprep.subr.mxu0 0.0
        %2777 = vmatpush2.msra.mxu0 0.0
        %2778 = vmatprep.mubr.f32.mxu0 0.0
        %v2779 = vand.u32 %v2495, 4294901760
        %v2780 = vsub.f32 %v2495, %v2779
        %2781 = vmatmul.mubr.f32.gmra.mxu0 %v2780
        %v2782 = vpop.f32.mrf.mxu0
        %v2783 = vadd.f32 %v2691, %v2782
        %v2784 = vpop.f32.mrf.mxu0
        %v2785 = vadd.f32 %v2693, %v2784
        %2786 = vmatprep.mubr.f32.mxu0 0.0
        %v2787 = vand.u32 %v2498, 4294901760
        %v2788 = vsub.f32 %v2498, %v2787
        %2789 = vmatmul.mubr.f32.gmra.mxu0 %v2788
        %v2790 = vpop.f32.mrf.mxu0
        %v2791 = vadd.f32 %v2698, %v2790
        %v2792 = vpop.f32.mrf.mxu0
        %v2793 = vadd.f32 %v2700, %v2792
        %2794 = vdwg.mxu0
        %2795 = vmatprep.subr.mxu0 0.0
        %2796 = vmatpush1.msra.mxu0 0.0
        %2797 = vmatprep.subr.mxu0 0.0
        %2798 = vmatpush1.msra.mxu0 0.0
        %2799 = vmatprep.subr.mxu0 0.0
        %2800 = vmatpush1.msra.mxu0 0.0
        %2801 = vmatprep.subr.mxu0 0.0
        %2802 = vmatpush1.msra.mxu0 0.0
        %2803 = vmatprep.subr.mxu0 0.0
        %2804 = vmatpush1.msra.mxu0 0.0
        %2805 = vmatprep.subr.mxu0 0.0
        %2806 = vmatpush1.msra.mxu0 0.0
        %2807 = vmatprep.subr.mxu0 0.0
        %2808 = vmatpush1.msra.mxu0 0.0
        %2809 = vmatprep.subr.mxu0 0.0
        %2810 = vmatpush1.msra.mxu0 0.0
        %2811 = vmatprep.subr.mxu0 0.0
        %2812 = vmatpush1.msra.mxu0 0.0
        %2813 = vmatprep.subr.mxu0 0.0
        %2814 = vmatpush1.msra.mxu0 0.0
        %2815 = vmatprep.subr.mxu0 0.0
        %2816 = vmatpush1.msra.mxu0 0.0
        %2817 = vmatprep.subr.mxu0 0.0
        %2818 = vmatpush1.msra.mxu0 0.0
        %2819 = vmatprep.subr.mxu0 0.0
        %2820 = vmatpush1.msra.mxu0 0.0
        %v2821 = vand.u32 %v2492, 4294901760
        %2822 = vmatprep.subr.mxu0 %v2821
        %v2823 = vand.u32 %v2491, 4294901760
        %2824 = vmatpush1.msra.mxu0 %v2823
        %v2825 = vand.u32 %v2436, 4294901760
        %2826 = vmatprep.subr.mxu0 %v2825
        %v2827 = vand.u32 %v2434, 4294901760
        %2828 = vmatpush1.msra.mxu0 %v2827
        %v2829 = vand.u32 %v2472, 4294901760
        %2830 = vmatprep.subr.mxu0 %v2829
        %v2831 = vand.u32 %v2471, 4294901760
        %2832 = vmatpush1.msra.mxu0 %v2831
        %2833 = vmatprep.subr.mxu0 0.0
        %2834 = vmatpush2.msra.mxu0 0.0
        %2835 = vmatprep.subr.mxu0 0.0
        %2836 = vmatpush2.msra.mxu0 0.0
        %2837 = vmatprep.subr.mxu0 0.0
        %2838 = vmatpush2.msra.mxu0 0.0
        %2839 = vmatprep.subr.mxu0 0.0
        %2840 = vmatpush2.msra.mxu0 0.0
        %2841 = vmatprep.subr.mxu0 0.0
        %2842 = vmatpush2.msra.mxu0 0.0
        %2843 = vmatprep.subr.mxu0 0.0
        %2844 = vmatpush2.msra.mxu0 0.0
        %2845 = vmatprep.subr.mxu0 0.0
        %2846 = vmatpush2.msra.mxu0 0.0
        %2847 = vmatprep.subr.mxu0 0.0
        %2848 = vmatpush2.msra.mxu0 0.0
        %2849 = vmatprep.subr.mxu0 0.0
        %2850 = vmatpush2.msra.mxu0 0.0
        %2851 = vmatprep.subr.mxu0 0.0
        %2852 = vmatpush2.msra.mxu0 0.0
        %2853 = vmatprep.subr.mxu0 0.0
        %2854 = vmatpush2.msra.mxu0 0.0
        %2855 = vmatprep.subr.mxu0 0.0
        %2856 = vmatpush2.msra.mxu0 0.0
        %2857 = vmatprep.subr.mxu0 0.0
        %2858 = vmatpush2.msra.mxu0 0.0
        %2859 = vmatprep.subr.mxu0 0.0
        %2860 = vmatpush2.msra.mxu0 0.0
        %2861 = vmatprep.subr.mxu0 0.0
        %2862 = vmatpush2.msra.mxu0 0.0
        %2863 = vmatprep.subr.mxu0 0.0
        %2864 = vmatpush2.msra.mxu0 0.0
        %2865 = vmatprep.mubr.f32.mxu0 0.0
        %v2866 = vand.u32 %v2495, 4294901760
        %v2867 = vsub.f32 %v2495, %v2866
        %v2868 = vand.u32 %v2867, 4294901760
        %2869 = vmatmul.mubr.f32.gmra.mxu0 %v2868
        %v2870 = vpop.f32.mrf.mxu0
        %v2871 = vadd.f32 %v2783, %v2870
        %v2872 = vpop.f32.mrf.mxu0
        %v2873 = vadd.f32 %v2785, %v2872
        %2874 = vmatprep.mubr.f32.mxu0 0.0
        %v2875 = vand.u32 %v2498, 4294901760
        %v2876 = vsub.f32 %v2498, %v2875
        %v2877 = vand.u32 %v2876, 4294901760
        %2878 = vmatmul.mubr.f32.gmra.mxu0 %v2877
        %v2879 = vpop.f32.mrf.mxu0
        %v2880 = vadd.f32 %v2791, %v2879
        %v2881 = vpop.f32.mrf.mxu0
        %v2882 = vadd.f32 %v2793, %v2881
        %2883 = vdwg.mxu0
        %2884 = vmatprep.subr.mxu0 0.0
        %2885 = vmatpush1.msra.mxu0 0.0
        %2886 = vmatprep.subr.mxu0 0.0
        %2887 = vmatpush1.msra.mxu0 0.0
        %2888 = vmatprep.subr.mxu0 0.0
        %2889 = vmatpush1.msra.mxu0 0.0
        %2890 = vmatprep.subr.mxu0 0.0
        %2891 = vmatpush1.msra.mxu0 0.0
        %2892 = vmatprep.subr.mxu0 0.0
        %2893 = vmatpush1.msra.mxu0 0.0
        %2894 = vmatprep.subr.mxu0 0.0
        %2895 = vmatpush1.msra.mxu0 0.0
        %2896 = vmatprep.subr.mxu0 0.0
        %2897 = vmatpush1.msra.mxu0 0.0
        %2898 = vmatprep.subr.mxu0 0.0
        %2899 = vmatpush1.msra.mxu0 0.0
        %2900 = vmatprep.subr.mxu0 0.0
        %2901 = vmatpush1.msra.mxu0 0.0
        %2902 = vmatprep.subr.mxu0 0.0
        %2903 = vmatpush1.msra.mxu0 0.0
        %2904 = vmatprep.subr.mxu0 0.0
        %2905 = vmatpush1.msra.mxu0 0.0
        %2906 = vmatprep.subr.mxu0 0.0
        %2907 = vmatpush1.msra.mxu0 0.0
        %2908 = vmatprep.subr.mxu0 0.0
        %2909 = vmatpush1.msra.mxu0 0.0
        %v2910 = vand.u32 %v2492, 4294901760
        %v2911 = vsub.f32 %v2492, %v2910
        %v2912 = vand.u32 %v2911, 4294901760
        %2913 = vmatprep.subr.mxu0 %v2912
        %v2914 = vand.u32 %v2491, 4294901760
        %v2915 = vsub.f32 %v2491, %v2914
        %v2916 = vand.u32 %v2915, 4294901760
        %2917 = vmatpush1.msra.mxu0 %v2916
        %v2918 = vand.u32 %v2436, 4294901760
        %v2919 = vsub.f32 %v2436, %v2918
        %v2920 = vand.u32 %v2919, 4294901760
        %2921 = vmatprep.subr.mxu0 %v2920
        %v2922 = vand.u32 %v2434, 4294901760
        %v2923 = vsub.f32 %v2434, %v2922
        %v2924 = vand.u32 %v2923, 4294901760
        %2925 = vmatpush1.msra.mxu0 %v2924
        %v2926 = vand.u32 %v2472, 4294901760
        %v2927 = vsub.f32 %v2472, %v2926
        %v2928 = vand.u32 %v2927, 4294901760
        %2929 = vmatprep.subr.mxu0 %v2928
        %v2930 = vand.u32 %v2471, 4294901760
        %v2931 = vsub.f32 %v2471, %v2930
        %v2932 = vand.u32 %v2931, 4294901760
        %2933 = vmatpush1.msra.mxu0 %v2932
        %2934 = vmatprep.subr.mxu0 0.0
        %2935 = vmatpush2.msra.mxu0 0.0
        %2936 = vmatprep.subr.mxu0 0.0
        %2937 = vmatpush2.msra.mxu0 0.0
        %2938 = vmatprep.subr.mxu0 0.0
        %2939 = vmatpush2.msra.mxu0 0.0
        %2940 = vmatprep.subr.mxu0 0.0
        %2941 = vmatpush2.msra.mxu0 0.0
        %2942 = vmatprep.subr.mxu0 0.0
        %2943 = vmatpush2.msra.mxu0 0.0
        %2944 = vmatprep.subr.mxu0 0.0
        %2945 = vmatpush2.msra.mxu0 0.0
        %2946 = vmatprep.subr.mxu0 0.0
        %2947 = vmatpush2.msra.mxu0 0.0
        %2948 = vmatprep.subr.mxu0 0.0
        %2949 = vmatpush2.msra.mxu0 0.0
        %2950 = vmatprep.subr.mxu0 0.0
        %2951 = vmatpush2.msra.mxu0 0.0
        %2952 = vmatprep.subr.mxu0 0.0
        %2953 = vmatpush2.msra.mxu0 0.0
        %2954 = vmatprep.subr.mxu0 0.0
        %2955 = vmatpush2.msra.mxu0 0.0
        %2956 = vmatprep.subr.mxu0 0.0
        %2957 = vmatpush2.msra.mxu0 0.0
        %2958 = vmatprep.subr.mxu0 0.0
        %2959 = vmatpush2.msra.mxu0 0.0
        %2960 = vmatprep.subr.mxu0 0.0
        %2961 = vmatpush2.msra.mxu0 0.0
        %2962 = vmatprep.subr.mxu0 0.0
        %2963 = vmatpush2.msra.mxu0 0.0
        %2964 = vmatprep.subr.mxu0 0.0
        %2965 = vmatpush2.msra.mxu0 0.0
        %2966 = vmatprep.mubr.f32.mxu0 0.0
        %v2967 = vand.u32 %v2495, 4294901760
        %2968 = vmatmul.mubr.f32.gmra.mxu0 %v2967
        %v2969 = vpop.f32.mrf.mxu0
        %v2970 = vadd.f32 %v2871, %v2969
        %v2971 = vpop.f32.mrf.mxu0
        %v2972 = vadd.f32 %v2873, %v2971
        %2973 = vmatprep.mubr.f32.mxu0 0.0
        %v2974 = vand.u32 %v2498, 4294901760
        %2975 = vmatmul.mubr.f32.gmra.mxu0 %v2974
        %v2976 = vpop.f32.mrf.mxu0
        %v2977 = vadd.f32 %v2880, %v2976
        %v2978 = vpop.f32.mrf.mxu0
        %v2979 = vadd.f32 %v2882, %v2978
        %2980 = vdwg.mxu0
        %2981 = vmatprep.subr.mxu0 0.0
        %2982 = vmatpush1.msra.mxu0 0.0
        %2983 = vmatprep.subr.mxu0 0.0
        %2984 = vmatpush1.msra.mxu0 0.0
        %2985 = vmatprep.subr.mxu0 0.0
        %2986 = vmatpush1.msra.mxu0 0.0
        %2987 = vmatprep.subr.mxu0 0.0
        %2988 = vmatpush1.msra.mxu0 0.0
        %2989 = vmatprep.subr.mxu0 0.0
        %2990 = vmatpush1.msra.mxu0 0.0
        %2991 = vmatprep.subr.mxu0 0.0
        %2992 = vmatpush1.msra.mxu0 0.0
        %2993 = vmatprep.subr.mxu0 0.0
        %2994 = vmatpush1.msra.mxu0 0.0
        %2995 = vmatprep.subr.mxu0 0.0
        %2996 = vmatpush1.msra.mxu0 0.0
        %2997 = vmatprep.subr.mxu0 0.0
        %2998 = vmatpush1.msra.mxu0 0.0
        %2999 = vmatprep.subr.mxu0 0.0
        %3000 = vmatpush1.msra.mxu0 0.0
        %3001 = vmatprep.subr.mxu0 0.0
        %3002 = vmatpush1.msra.mxu0 0.0
        %3003 = vmatprep.subr.mxu0 0.0
        %3004 = vmatpush1.msra.mxu0 0.0
        %3005 = vmatprep.subr.mxu0 0.0
        %3006 = vmatpush1.msra.mxu0 0.0
        %v3007 = vand.u32 %v2492, 4294901760
        %3008 = vmatprep.subr.mxu0 %v3007
        %v3009 = vand.u32 %v2491, 4294901760
        %3010 = vmatpush1.msra.mxu0 %v3009
        %v3011 = vand.u32 %v2436, 4294901760
        %3012 = vmatprep.subr.mxu0 %v3011
        %v3013 = vand.u32 %v2434, 4294901760
        %3014 = vmatpush1.msra.mxu0 %v3013
        %v3015 = vand.u32 %v2472, 4294901760
        %3016 = vmatprep.subr.mxu0 %v3015
        %v3017 = vand.u32 %v2471, 4294901760
        %3018 = vmatpush1.msra.mxu0 %v3017
        %3019 = vmatprep.subr.mxu0 0.0
        %3020 = vmatpush2.msra.mxu0 0.0
        %3021 = vmatprep.subr.mxu0 0.0
        %3022 = vmatpush2.msra.mxu0 0.0
        %3023 = vmatprep.subr.mxu0 0.0
        %3024 = vmatpush2.msra.mxu0 0.0
        %3025 = vmatprep.subr.mxu0 0.0
        %3026 = vmatpush2.msra.mxu0 0.0
        %3027 = vmatprep.subr.mxu0 0.0
        %3028 = vmatpush2.msra.mxu0 0.0
        %3029 = vmatprep.subr.mxu0 0.0
        %3030 = vmatpush2.msra.mxu0 0.0
        %3031 = vmatprep.subr.mxu0 0.0
        %3032 = vmatpush2.msra.mxu0 0.0
        %3033 = vmatprep.subr.mxu0 0.0
        %3034 = vmatpush2.msra.mxu0 0.0
        %3035 = vmatprep.subr.mxu0 0.0
        %3036 = vmatpush2.msra.mxu0 0.0
        %3037 = vmatprep.subr.mxu0 0.0
        %3038 = vmatpush2.msra.mxu0 0.0
        %3039 = vmatprep.subr.mxu0 0.0
        %3040 = vmatpush2.msra.mxu0 0.0
        %3041 = vmatprep.subr.mxu0 0.0
        %3042 = vmatpush2.msra.mxu0 0.0
        %3043 = vmatprep.subr.mxu0 0.0
        %3044 = vmatpush2.msra.mxu0 0.0
        %3045 = vmatprep.subr.mxu0 0.0
        %3046 = vmatpush2.msra.mxu0 0.0
        %3047 = vmatprep.subr.mxu0 0.0
        %3048 = vmatpush2.msra.mxu0 0.0
        %3049 = vmatprep.subr.mxu0 0.0
        %3050 = vmatpush2.msra.mxu0 0.0
        %3051 = vmatprep.mubr.f32.mxu0 0.0
        %v3052 = vand.u32 %v2495, 4294901760
        %3053 = vmatmul.mubr.f32.gmra.mxu0 %v3052
        %v3054 = vpop.f32.mrf.mxu0
        %v3055 = vadd.f32 %v2970, %v3054
        %v3056 = vpop.f32.mrf.mxu0
        %v3057 = vadd.f32 %v2972, %v3056
        %3058 = vmatprep.mubr.f32.mxu0 0.0
        %v3059 = vand.u32 %v2498, 4294901760
        %3060 = vmatmul.mubr.f32.gmra.mxu0 %v3059
        %v3061 = vpop.f32.mrf.mxu0
        %v3062 = vadd.f32 %v2977, %v3061
        %v3063 = vpop.f32.mrf.mxu0
        %v3064 = vadd.f32 %v2979, %v3063
        %3065 = vdwg.mxu0
        %3067 = vset.pattern.permute.xlu0 0
        %3068 = vperm.xlu0 %3067, %v2441
        %v3069 = vpop.permute.xlu0 %3068
        %3072 = vset.pattern.permute.xlu0 0
        %3073 = vperm.xlu0 %3072, %v2442
        %v3074 = vpop.permute.xlu0 %3073
        %v3076 = vmul.f32 %v3055, %v3069
        %v3077 = vmul.f32 %v3057, %v3069
        %v3078 = vmul.f32 %v3062, %v3074
        %v3079 = vmul.f32 %v3064, %v3074
        %3080 = vset.pattern.permute.xlu0 1
        %3081 = vperm.xlu0 %3080, %v2441
        %v3082 = vpop.permute.xlu0 %3081
        %3084 = vset.pattern.permute.xlu0 1
        %3085 = vperm.xlu0 %3084, %v2442
        %v3086 = vpop.permute.xlu0 %3085
        %v3088 = vadd.f32 %v3076, %v3082
        %v3089 = vadd.f32 %v3077, %v3082
        %v3090 = vadd.f32 %v3078, %v3086
        %v3091 = vadd.f32 %v3079, %v3086
        %v3092 = vmax.f32 %v3088, 0.0
        %v3093 = vmax.f32 %v3089, 0.0
        %v3094 = vmax.f32 %v3090, 0.0
        %v3095 = vmax.f32 %v3091, 0.0
        %v3096 = vld [vmem:[%s6] sm:$0xff]
        %v3097 = vld [vmem:[%s6 + $0x8] sm:$0xff]
        %v3098 = vld [vmem:[%s6 + $0x10] sm:$0xff]
        %v3099 = vld [vmem:[%s6 + $0x18] sm:$0xff]
        %3100 = vrot.lane.b32.xlu0 %v3092, 1
        %v3101 = vpop.permute.xlu0 %3100
        %3102 = vrot.lane.b32.xlu0 %v3094, 1
        %v3103 = vpop.permute.xlu0 %3102
        %3104 = vrot.lane.b32.xlu0 %v3093, 1
        %v3105 = vpop.permute.xlu0 %3104
        %3106 = vrot.lane.b32.xlu0 %v3095, 1
        %v3107 = vpop.permute.xlu0 %3106
        %v3108 = vsel %vm2457, %v3101, %v3105
        %v3109 = vsel %vm2457, %v3103, %v3107
        %v3110 = vsel %vm2457, %v3105, %v3101
        %v3111 = vsel %vm2457, %v3107, %v3103
        %v3112 = vmul.f32 %v3110, %v2464
        %v3113 = vmul.f32 %v3108, %v2468
        %v3114 = vmul.f32 %v3111, %v2464
        %v3115 = vmul.f32 %v3109, %v2468
        %3116 = vrot.lane.b32.xlu0 %v3092, 127
        %v3117 = vpop.permute.xlu0 %3116
        %3118 = vrot.lane.b32.xlu0 %v3094, 127
        %v3119 = vpop.permute.xlu0 %3118
        %3120 = vrot.lane.b32.xlu0 %v3093, 127
        %v3121 = vpop.permute.xlu0 %3120
        %3122 = vrot.lane.b32.xlu0 %v3095, 127
        %v3123 = vpop.permute.xlu0 %3122
        %v3124 = vsel %vm2477, %v3117, %v3121
        %v3125 = vsel %vm2477, %v3119, %v3123
        %v3126 = vsel %vm2477, %v3121, %v3117
        %v3127 = vsel %vm2477, %v3123, %v3119
        %v3128 = vmul.f32 %v3124, %v2484
        %v3129 = vmul.f32 %v3126, %v2488
        %v3130 = vmul.f32 %v3125, %v2484
        %v3131 = vmul.f32 %v3127, %v2488
        %vm3132 = vcmask 392192
        %v3134 = vsel %vm3132, %v3096, 0
        %v3137 = vsel %vm3132, %v3097, 0
        %v3140 = vsel %vm3132, %v3098, 0
        %v3143 = vsel %vm3132, %v3099, 0
        %3145 = vmatprep.subr.mxu0 0.0
        %3146 = vmatpush1.msra.mxu0 0.0
        %3147 = vmatprep.subr.mxu0 0.0
        %3148 = vmatpush1.msra.mxu0 0.0
        %3149 = vmatprep.subr.mxu0 0.0
        %3150 = vmatpush1.msra.mxu0 0.0
        %3151 = vmatprep.subr.mxu0 0.0
        %3152 = vmatpush1.msra.mxu0 0.0
        %3153 = vmatprep.subr.mxu0 0.0
        %3154 = vmatpush1.msra.mxu0 0.0
        %3155 = vmatprep.subr.mxu0 0.0
        %3156 = vmatpush1.msra.mxu0 0.0
        %3157 = vmatprep.subr.mxu0 0.0
        %3158 = vmatpush1.msra.mxu0 0.0
        %3159 = vmatprep.subr.mxu0 0.0
        %3160 = vmatpush1.msra.mxu0 0.0
        %3161 = vmatprep.subr.mxu0 0.0
        %3162 = vmatpush1.msra.mxu0 0.0
        %3163 = vmatprep.subr.mxu0 0.0
        %3164 = vmatpush1.msra.mxu0 0.0
        %v3165 = vand.u32 %v3131, 4294901760
        %3166 = vmatprep.subr.mxu0 %v3165
        %v3167 = vand.u32 %v3130, 4294901760
        %3168 = vmatpush1.msra.mxu0 %v3167
        %v3169 = vand.u32 %v3129, 4294901760
        %3170 = vmatprep.subr.mxu0 %v3169
        %v3171 = vand.u32 %v3128, 4294901760
        %3172 = vmatpush1.msra.mxu0 %v3171
        %v3173 = vand.u32 %v3095, 4294901760
        %3174 = vmatprep.subr.mxu0 %v3173
        %v3175 = vand.u32 %v3094, 4294901760
        %3176 = vmatpush1.msra.mxu0 %v3175
        %v3177 = vand.u32 %v3093, 4294901760
        %3178 = vmatprep.subr.mxu0 %v3177
        %v3179 = vand.u32 %v3092, 4294901760
        %3180 = vmatpush1.msra.mxu0 %v3179
        %v3181 = vand.u32 %v3115, 4294901760
        %3182 = vmatprep.subr.mxu0 %v3181
        %v3183 = vand.u32 %v3114, 4294901760
        %3184 = vmatpush1.msra.mxu0 %v3183
        %v3185 = vand.u32 %v3113, 4294901760
        %3186 = vmatprep.subr.mxu0 %v3185
        %v3187 = vand.u32 %v3112, 4294901760
        %3188 = vmatpush1.msra.mxu0 %v3187
        %3189 = vmatprep.subr.mxu0 0.0
        %3190 = vmatpush2.msra.mxu0 0.0
        %3191 = vmatprep.subr.mxu0 0.0
        %3192 = vmatpush2.msra.mxu0 0.0
        %3193 = vmatprep.subr.mxu0 0.0
        %3194 = vmatpush2.msra.mxu0 0.0
        %3195 = vmatprep.subr.mxu0 0.0
        %3196 = vmatpush2.msra.mxu0 0.0
        %3197 = vmatprep.subr.mxu0 0.0
        %3198 = vmatpush2.msra.mxu0 0.0
        %3199 = vmatprep.subr.mxu0 0.0
        %3200 = vmatpush2.msra.mxu0 0.0
        %3201 = vmatprep.subr.mxu0 0.0
        %3202 = vmatpush2.msra.mxu0 0.0
        %3203 = vmatprep.subr.mxu0 0.0
        %3204 = vmatpush2.msra.mxu0 0.0
        %3205 = vmatprep.subr.mxu0 0.0
        %3206 = vmatpush2.msra.mxu0 0.0
        %3207 = vmatprep.subr.mxu0 0.0
        %3208 = vmatpush2.msra.mxu0 0.0
        %3209 = vmatprep.subr.mxu0 0.0
        %3210 = vmatpush2.msra.mxu0 0.0
        %3211 = vmatprep.subr.mxu0 0.0
        %3212 = vmatpush2.msra.mxu0 0.0
        %3213 = vmatprep.subr.mxu0 0.0
        %3214 = vmatpush2.msra.mxu0 0.0
        %3215 = vmatprep.subr.mxu0 0.0
        %3216 = vmatpush2.msra.mxu0 0.0
        %3217 = vmatprep.subr.mxu0 0.0
        %3218 = vmatpush2.msra.mxu0 0.0
        %3219 = vmatprep.subr.mxu0 0.0
        %3220 = vmatpush2.msra.mxu0 0.0
        %3221 = vmatprep.mubr.f32.mxu0 0.0
        %v3222 = vand.u32 %v3134, 4294901760
        %v3223 = vsub.f32 %v3134, %v3222
        %v3224 = vand.u32 %v3223, 4294901760
        %v3225 = vsub.f32 %v3223, %v3224
        %v3226 = vand.u32 %v3225, 4294901760
        %3227 = vmatmul.mubr.f32.gmra.mxu0 %v3226
        %v3228 = vpop.f32.mrf.mxu0
        %v3229 = vadd.f32 0.0, %v3228
        %v3230 = vpop.f32.mrf.mxu0
        %v3231 = vadd.f32 0.0, %v3230
        %3232 = vmatprep.mubr.f32.mxu0 0.0
        %v3233 = vand.u32 %v3137, 4294901760
        %v3234 = vsub.f32 %v3137, %v3233
        %v3235 = vand.u32 %v3234, 4294901760
        %v3236 = vsub.f32 %v3234, %v3235
        %v3237 = vand.u32 %v3236, 4294901760
        %3238 = vmatmul.mubr.f32.gmra.mxu0 %v3237
        %v3239 = vpop.f32.mrf.mxu0
        %v3240 = vadd.f32 0.0, %v3239
        %v3241 = vpop.f32.mrf.mxu0
        %v3242 = vadd.f32 0.0, %v3241
        %3243 = vmatprep.mubr.f32.mxu0 0.0
        %v3244 = vand.u32 %v3140, 4294901760
        %v3245 = vsub.f32 %v3140, %v3244
        %v3246 = vand.u32 %v3245, 4294901760
        %v3247 = vsub.f32 %v3245, %v3246
        %v3248 = vand.u32 %v3247, 4294901760
        %3249 = vmatmul.mubr.f32.gmra.mxu0 %v3248
        %v3250 = vpop.f32.mrf.mxu0
        %v3251 = vadd.f32 0.0, %v3250
        %v3252 = vpop.f32.mrf.mxu0
        %v3253 = vadd.f32 0.0, %v3252
        %3254 = vmatprep.mubr.f32.mxu0 0.0
        %v3255 = vand.u32 %v3143, 4294901760
        %v3256 = vsub.f32 %v3143, %v3255
        %v3257 = vand.u32 %v3256, 4294901760
        %v3258 = vsub.f32 %v3256, %v3257
        %v3259 = vand.u32 %v3258, 4294901760
        %3260 = vmatmul.mubr.f32.gmra.mxu0 %v3259
        %v3261 = vpop.f32.mrf.mxu0
        %v3262 = vadd.f32 0.0, %v3261
        %v3263 = vpop.f32.mrf.mxu0
        %v3264 = vadd.f32 0.0, %v3263
        %3265 = vdwg.mxu0
        %3266 = vmatprep.subr.mxu0 0.0
        %3267 = vmatpush1.msra.mxu0 0.0
        %3268 = vmatprep.subr.mxu0 0.0
        %3269 = vmatpush1.msra.mxu0 0.0
        %3270 = vmatprep.subr.mxu0 0.0
        %3271 = vmatpush1.msra.mxu0 0.0
        %3272 = vmatprep.subr.mxu0 0.0
        %3273 = vmatpush1.msra.mxu0 0.0
        %3274 = vmatprep.subr.mxu0 0.0
        %3275 = vmatpush1.msra.mxu0 0.0
        %3276 = vmatprep.subr.mxu0 0.0
        %3277 = vmatpush1.msra.mxu0 0.0
        %3278 = vmatprep.subr.mxu0 0.0
        %3279 = vmatpush1.msra.mxu0 0.0
        %3280 = vmatprep.subr.mxu0 0.0
        %3281 = vmatpush1.msra.mxu0 0.0
        %3282 = vmatprep.subr.mxu0 0.0
        %3283 = vmatpush1.msra.mxu0 0.0
        %3284 = vmatprep.subr.mxu0 0.0
        %3285 = vmatpush1.msra.mxu0 0.0
        %v3286 = vand.u32 %v3131, 4294901760
        %v3287 = vsub.f32 %v3131, %v3286
        %v3288 = vand.u32 %v3287, 4294901760
        %v3289 = vsub.f32 %v3287, %v3288
        %v3290 = vand.u32 %v3289, 4294901760
        %3291 = vmatprep.subr.mxu0 %v3290
        %v3292 = vand.u32 %v3130, 4294901760
        %v3293 = vsub.f32 %v3130, %v3292
        %v3294 = vand.u32 %v3293, 4294901760
        %v3295 = vsub.f32 %v3293, %v3294
        %v3296 = vand.u32 %v3295, 4294901760
        %3297 = vmatpush1.msra.mxu0 %v3296
        %v3298 = vand.u32 %v3129, 4294901760
        %v3299 = vsub.f32 %v3129, %v3298
        %v3300 = vand.u32 %v3299, 4294901760
        %v3301 = vsub.f32 %v3299, %v3300
        %v3302 = vand.u32 %v3301, 4294901760
        %3303 = vmatprep.subr.mxu0 %v3302
        %v3304 = vand.u32 %v3128, 4294901760
        %v3305 = vsub.f32 %v3128, %v3304
        %v3306 = vand.u32 %v3305, 4294901760
        %v3307 = vsub.f32 %v3305, %v3306
        %v3308 = vand.u32 %v3307, 4294901760
        %3309 = vmatpush1.msra.mxu0 %v3308
        %v3310 = vand.u32 %v3095, 4294901760
        %v3311 = vsub.f32 %v3095, %v3310
        %v3312 = vand.u32 %v3311, 4294901760
        %v3313 = vsub.f32 %v3311, %v3312
        %v3314 = vand.u32 %v3313, 4294901760
        %3315 = vmatprep.subr.mxu0 %v3314
        %v3316 = vand.u32 %v3094, 4294901760
        %v3317 = vsub.f32 %v3094, %v3316
        %v3318 = vand.u32 %v3317, 4294901760
        %v3319 = vsub.f32 %v3317, %v3318
        %v3320 = vand.u32 %v3319, 4294901760
        %3321 = vmatpush1.msra.mxu0 %v3320
        %v3322 = vand.u32 %v3093, 4294901760
        %v3323 = vsub.f32 %v3093, %v3322
        %v3324 = vand.u32 %v3323, 4294901760
        %v3325 = vsub.f32 %v3323, %v3324
        %v3326 = vand.u32 %v3325, 4294901760
        %3327 = vmatprep.subr.mxu0 %v3326
        %v3328 = vand.u32 %v3092, 4294901760
        %v3329 = vsub.f32 %v3092, %v3328
        %v3330 = vand.u32 %v3329, 4294901760
        %v3331 = vsub.f32 %v3329, %v3330
        %v3332 = vand.u32 %v3331, 4294901760
        %3333 = vmatpush1.msra.mxu0 %v3332
        %v3334 = vand.u32 %v3115, 4294901760
        %v3335 = vsub.f32 %v3115, %v3334
        %v3336 = vand.u32 %v3335, 4294901760
        %v3337 = vsub.f32 %v3335, %v3336
        %v3338 = vand.u32 %v3337, 4294901760
        %3339 = vmatprep.subr.mxu0 %v3338
        %v3340 = vand.u32 %v3114, 4294901760
        %v3341 = vsub.f32 %v3114, %v3340
        %v3342 = vand.u32 %v3341, 4294901760
        %v3343 = vsub.f32 %v3341, %v3342
        %v3344 = vand.u32 %v3343, 4294901760
        %3345 = vmatpush1.msra.mxu0 %v3344
        %v3346 = vand.u32 %v3113, 4294901760
        %v3347 = vsub.f32 %v3113, %v3346
        %v3348 = vand.u32 %v3347, 4294901760
        %v3349 = vsub.f32 %v3347, %v3348
        %v3350 = vand.u32 %v3349, 4294901760
        %3351 = vmatprep.subr.mxu0 %v3350
        %v3352 = vand.u32 %v3112, 4294901760
        %v3353 = vsub.f32 %v3112, %v3352
        %v3354 = vand.u32 %v3353, 4294901760
        %v3355 = vsub.f32 %v3353, %v3354
        %v3356 = vand.u32 %v3355, 4294901760
        %3357 = vmatpush1.msra.mxu0 %v3356
        %3358 = vmatprep.subr.mxu0 0.0
        %3359 = vmatpush2.msra.mxu0 0.0
        %3360 = vmatprep.subr.mxu0 0.0
        %3361 = vmatpush2.msra.mxu0 0.0
        %3362 = vmatprep.subr.mxu0 0.0
        %3363 = vmatpush2.msra.mxu0 0.0
        %3364 = vmatprep.subr.mxu0 0.0
        %3365 = vmatpush2.msra.mxu0 0.0
        %3366 = vmatprep.subr.mxu0 0.0
        %3367 = vmatpush2.msra.mxu0 0.0
        %3368 = vmatprep.subr.mxu0 0.0
        %3369 = vmatpush2.msra.mxu0 0.0
        %3370 = vmatprep.subr.mxu0 0.0
        %3371 = vmatpush2.msra.mxu0 0.0
        %3372 = vmatprep.subr.mxu0 0.0
        %3373 = vmatpush2.msra.mxu0 0.0
        %3374 = vmatprep.subr.mxu0 0.0
        %3375 = vmatpush2.msra.mxu0 0.0
        %3376 = vmatprep.subr.mxu0 0.0
        %3377 = vmatpush2.msra.mxu0 0.0
        %3378 = vmatprep.subr.mxu0 0.0
        %3379 = vmatpush2.msra.mxu0 0.0
        %3380 = vmatprep.subr.mxu0 0.0
        %3381 = vmatpush2.msra.mxu0 0.0
        %3382 = vmatprep.subr.mxu0 0.0
        %3383 = vmatpush2.msra.mxu0 0.0
        %3384 = vmatprep.subr.mxu0 0.0
        %3385 = vmatpush2.msra.mxu0 0.0
        %3386 = vmatprep.subr.mxu0 0.0
        %3387 = vmatpush2.msra.mxu0 0.0
        %3388 = vmatprep.subr.mxu0 0.0
        %3389 = vmatpush2.msra.mxu0 0.0
        %3390 = vmatprep.mubr.f32.mxu0 0.0
        %v3391 = vand.u32 %v3134, 4294901760
        %3392 = vmatmul.mubr.f32.gmra.mxu0 %v3391
        %v3393 = vpop.f32.mrf.mxu0
        %v3394 = vadd.f32 %v3229, %v3393
        %v3395 = vpop.f32.mrf.mxu0
        %v3396 = vadd.f32 %v3231, %v3395
        %3397 = vmatprep.mubr.f32.mxu0 0.0
        %v3398 = vand.u32 %v3137, 4294901760
        %3399 = vmatmul.mubr.f32.gmra.mxu0 %v3398
        %v3400 = vpop.f32.mrf.mxu0
        %v3401 = vadd.f32 %v3240, %v3400
        %v3402 = vpop.f32.mrf.mxu0
        %v3403 = vadd.f32 %v3242, %v3402
        %3404 = vmatprep.mubr.f32.mxu0 0.0
        %v3405 = vand.u32 %v3140, 4294901760
        %3406 = vmatmul.mubr.f32.gmra.mxu0 %v3405
        %v3407 = vpop.f32.mrf.mxu0
        %v3408 = vadd.f32 %v3251, %v3407
        %v3409 = vpop.f32.mrf.mxu0
        %v3410 = vadd.f32 %v3253, %v3409
        %3411 = vmatprep.mubr.f32.mxu0 0.0
        %v3412 = vand.u32 %v3143, 4294901760
        %3413 = vmatmul.mubr.f32.gmra.mxu0 %v3412
        %v3414 = vpop.f32.mrf.mxu0
        %v3415 = vadd.f32 %v3262, %v3414
        %v3416 = vpop.f32.mrf.mxu0
        %v3417 = vadd.f32 %v3264, %v3416
        %3418 = vdwg.mxu0
        %3419 = vmatprep.subr.mxu0 0.0
        %3420 = vmatpush1.msra.mxu0 0.0
        %3421 = vmatprep.subr.mxu0 0.0
        %3422 = vmatpush1.msra.mxu0 0.0
        %3423 = vmatprep.subr.mxu0 0.0
        %3424 = vmatpush1.msra.mxu0 0.0
        %3425 = vmatprep.subr.mxu0 0.0
        %3426 = vmatpush1.msra.mxu0 0.0
        %3427 = vmatprep.subr.mxu0 0.0
        %3428 = vmatpush1.msra.mxu0 0.0
        %3429 = vmatprep.subr.mxu0 0.0
        %3430 = vmatpush1.msra.mxu0 0.0
        %3431 = vmatprep.subr.mxu0 0.0
        %3432 = vmatpush1.msra.mxu0 0.0
        %3433 = vmatprep.subr.mxu0 0.0
        %3434 = vmatpush1.msra.mxu0 0.0
        %3435 = vmatprep.subr.mxu0 0.0
        %3436 = vmatpush1.msra.mxu0 0.0
        %3437 = vmatprep.subr.mxu0 0.0
        %3438 = vmatpush1.msra.mxu0 0.0
        %v3439 = vand.u32 %v3131, 4294901760
        %v3440 = vsub.f32 %v3131, %v3439
        %3441 = vmatprep.subr.mxu0 %v3440
        %v3442 = vand.u32 %v3130, 4294901760
        %v3443 = vsub.f32 %v3130, %v3442
        %3444 = vmatpush1.msra.mxu0 %v3443
        %v3445 = vand.u32 %v3129, 4294901760
        %v3446 = vsub.f32 %v3129, %v3445
        %3447 = vmatprep.subr.mxu0 %v3446
        %v3448 = vand.u32 %v3128, 4294901760
        %v3449 = vsub.f32 %v3128, %v3448
        %3450 = vmatpush1.msra.mxu0 %v3449
        %v3451 = vand.u32 %v3095, 4294901760
        %v3452 = vsub.f32 %v3095, %v3451
        %3453 = vmatprep.subr.mxu0 %v3452
        %v3454 = vand.u32 %v3094, 4294901760
        %v3455 = vsub.f32 %v3094, %v3454
        %3456 = vmatpush1.msra.mxu0 %v3455
        %v3457 = vand.u32 %v3093, 4294901760
        %v3458 = vsub.f32 %v3093, %v3457
        %3459 = vmatprep.subr.mxu0 %v3458
        %v3460 = vand.u32 %v3092, 4294901760
        %v3461 = vsub.f32 %v3092, %v3460
        %3462 = vmatpush1.msra.mxu0 %v3461
        %v3463 = vand.u32 %v3115, 4294901760
        %v3464 = vsub.f32 %v3115, %v3463
        %3465 = vmatprep.subr.mxu0 %v3464
        %v3466 = vand.u32 %v3114, 4294901760
        %v3467 = vsub.f32 %v3114, %v3466
        %3468 = vmatpush1.msra.mxu0 %v3467
        %v3469 = vand.u32 %v3113, 4294901760
        %v3470 = vsub.f32 %v3113, %v3469
        %3471 = vmatprep.subr.mxu0 %v3470
        %v3472 = vand.u32 %v3112, 4294901760
        %v3473 = vsub.f32 %v3112, %v3472
        %3474 = vmatpush1.msra.mxu0 %v3473
        %3475 = vmatprep.subr.mxu0 0.0
        %3476 = vmatpush2.msra.mxu0 0.0
        %3477 = vmatprep.subr.mxu0 0.0
        %3478 = vmatpush2.msra.mxu0 0.0
        %3479 = vmatprep.subr.mxu0 0.0
        %3480 = vmatpush2.msra.mxu0 0.0
        %3481 = vmatprep.subr.mxu0 0.0
        %3482 = vmatpush2.msra.mxu0 0.0
        %3483 = vmatprep.subr.mxu0 0.0
        %3484 = vmatpush2.msra.mxu0 0.0
        %3485 = vmatprep.subr.mxu0 0.0
        %3486 = vmatpush2.msra.mxu0 0.0
        %3487 = vmatprep.subr.mxu0 0.0
        %3488 = vmatpush2.msra.mxu0 0.0
        %3489 = vmatprep.subr.mxu0 0.0
        %3490 = vmatpush2.msra.mxu0 0.0
        %3491 = vmatprep.subr.mxu0 0.0
        %3492 = vmatpush2.msra.mxu0 0.0
        %3493 = vmatprep.subr.mxu0 0.0
        %3494 = vmatpush2.msra.mxu0 0.0
        %3495 = vmatprep.subr.mxu0 0.0
        %3496 = vmatpush2.msra.mxu0 0.0
        %3497 = vmatprep.subr.mxu0 0.0
        %3498 = vmatpush2.msra.mxu0 0.0
        %3499 = vmatprep.subr.mxu0 0.0
        %3500 = vmatpush2.msra.mxu0 0.0
        %3501 = vmatprep.subr.mxu0 0.0
        %3502 = vmatpush2.msra.mxu0 0.0
        %3503 = vmatprep.subr.mxu0 0.0
        %3504 = vmatpush2.msra.mxu0 0.0
        %3505 = vmatprep.subr.mxu0 0.0
        %3506 = vmatpush2.msra.mxu0 0.0
        %3507 = vmatprep.mubr.f32.mxu0 0.0
        %v3508 = vand.u32 %v3134, 4294901760
        %v3509 = vsub.f32 %v3134, %v3508
        %3510 = vmatmul.mubr.f32.gmra.mxu0 %v3509
        %v3511 = vpop.f32.mrf.mxu0
        %v3512 = vadd.f32 %v3394, %v3511
        %v3513 = vpop.f32.mrf.mxu0
        %v3514 = vadd.f32 %v3396, %v3513
        %3515 = vmatprep.mubr.f32.mxu0 0.0
        %v3516 = vand.u32 %v3137, 4294901760
        %v3517 = vsub.f32 %v3137, %v3516
        %3518 = vmatmul.mubr.f32.gmra.mxu0 %v3517
        %v3519 = vpop.f32.mrf.mxu0
        %v3520 = vadd.f32 %v3401, %v3519
        %v3521 = vpop.f32.mrf.mxu0
        %v3522 = vadd.f32 %v3403, %v3521
        %3523 = vmatprep.mubr.f32.mxu0 0.0
        %v3524 = vand.u32 %v3140, 4294901760
        %v3525 = vsub.f32 %v3140, %v3524
        %3526 = vmatmul.mubr.f32.gmra.mxu0 %v3525
        %v3527 = vpop.f32.mrf.mxu0
        %v3528 = vadd.f32 %v3408, %v3527
        %v3529 = vpop.f32.mrf.mxu0
        %v3530 = vadd.f32 %v3410, %v3529
        %3531 = vmatprep.mubr.f32.mxu0 0.0
        %v3532 = vand.u32 %v3143, 4294901760
        %v3533 = vsub.f32 %v3143, %v3532
        %3534 = vmatmul.mubr.f32.gmra.mxu0 %v3533
        %v3535 = vpop.f32.mrf.mxu0
        %v3536 = vadd.f32 %v3415, %v3535
        %v3537 = vpop.f32.mrf.mxu0
        %v3538 = vadd.f32 %v3417, %v3537
        %3539 = vdwg.mxu0
        %3540 = vmatprep.subr.mxu0 0.0
        %3541 = vmatpush1.msra.mxu0 0.0
        %3542 = vmatprep.subr.mxu0 0.0
        %3543 = vmatpush1.msra.mxu0 0.0
        %3544 = vmatprep.subr.mxu0 0.0
        %3545 = vmatpush1.msra.mxu0 0.0
        %3546 = vmatprep.subr.mxu0 0.0
        %3547 = vmatpush1.msra.mxu0 0.0
        %3548 = vmatprep.subr.mxu0 0.0
        %3549 = vmatpush1.msra.mxu0 0.0
        %3550 = vmatprep.subr.mxu0 0.0
        %3551 = vmatpush1.msra.mxu0 0.0
        %3552 = vmatprep.subr.mxu0 0.0
        %3553 = vmatpush1.msra.mxu0 0.0
        %3554 = vmatprep.subr.mxu0 0.0
        %3555 = vmatpush1.msra.mxu0 0.0
        %3556 = vmatprep.subr.mxu0 0.0
        %3557 = vmatpush1.msra.mxu0 0.0
        %3558 = vmatprep.subr.mxu0 0.0
        %3559 = vmatpush1.msra.mxu0 0.0
        %v3560 = vand.u32 %v3131, 4294901760
        %3561 = vmatprep.subr.mxu0 %v3560
        %v3562 = vand.u32 %v3130, 4294901760
        %3563 = vmatpush1.msra.mxu0 %v3562
        %v3564 = vand.u32 %v3129, 4294901760
        %3565 = vmatprep.subr.mxu0 %v3564
        %v3566 = vand.u32 %v3128, 4294901760
        %3567 = vmatpush1.msra.mxu0 %v3566
        %v3568 = vand.u32 %v3095, 4294901760
        %3569 = vmatprep.subr.mxu0 %v3568
        %v3570 = vand.u32 %v3094, 4294901760
        %3571 = vmatpush1.msra.mxu0 %v3570
        %v3572 = vand.u32 %v3093, 4294901760
        %3573 = vmatprep.subr.mxu0 %v3572
        %v3574 = vand.u32 %v3092, 4294901760
        %3575 = vmatpush1.msra.mxu0 %v3574
        %v3576 = vand.u32 %v3115, 4294901760
        %3577 = vmatprep.subr.mxu0 %v3576
        %v3578 = vand.u32 %v3114, 4294901760
        %3579 = vmatpush1.msra.mxu0 %v3578
        %v3580 = vand.u32 %v3113, 4294901760
        %3581 = vmatprep.subr.mxu0 %v3580
        %v3582 = vand.u32 %v3112, 4294901760
        %3583 = vmatpush1.msra.mxu0 %v3582
        %3584 = vmatprep.subr.mxu0 0.0
        %3585 = vmatpush2.msra.mxu0 0.0
        %3586 = vmatprep.subr.mxu0 0.0
        %3587 = vmatpush2.msra.mxu0 0.0
        %3588 = vmatprep.subr.mxu0 0.0
        %3589 = vmatpush2.msra.mxu0 0.0
        %3590 = vmatprep.subr.mxu0 0.0
        %3591 = vmatpush2.msra.mxu0 0.0
        %3592 = vmatprep.subr.mxu0 0.0
        %3593 = vmatpush2.msra.mxu0 0.0
        %3594 = vmatprep.subr.mxu0 0.0
        %3595 = vmatpush2.msra.mxu0 0.0
        %3596 = vmatprep.subr.mxu0 0.0
        %3597 = vmatpush2.msra.mxu0 0.0
        %3598 = vmatprep.subr.mxu0 0.0
        %3599 = vmatpush2.msra.mxu0 0.0
        %3600 = vmatprep.subr.mxu0 0.0
        %3601 = vmatpush2.msra.mxu0 0.0
        %3602 = vmatprep.subr.mxu0 0.0
        %3603 = vmatpush2.msra.mxu0 0.0
        %3604 = vmatprep.subr.mxu0 0.0
        %3605 = vmatpush2.msra.mxu0 0.0
        %3606 = vmatprep.subr.mxu0 0.0
        %3607 = vmatpush2.msra.mxu0 0.0
        %3608 = vmatprep.subr.mxu0 0.0
        %3609 = vmatpush2.msra.mxu0 0.0
        %3610 = vmatprep.subr.mxu0 0.0
        %3611 = vmatpush2.msra.mxu0 0.0
        %3612 = vmatprep.subr.mxu0 0.0
        %3613 = vmatpush2.msra.mxu0 0.0
        %3614 = vmatprep.subr.mxu0 0.0
        %3615 = vmatpush2.msra.mxu0 0.0
        %3616 = vmatprep.mubr.f32.mxu0 0.0
        %v3617 = vand.u32 %v3134, 4294901760
        %v3618 = vsub.f32 %v3134, %v3617
        %v3619 = vand.u32 %v3618, 4294901760
        %3620 = vmatmul.mubr.f32.gmra.mxu0 %v3619
        %v3621 = vpop.f32.mrf.mxu0
        %v3622 = vadd.f32 %v3512, %v3621
        %v3623 = vpop.f32.mrf.mxu0
        %v3624 = vadd.f32 %v3514, %v3623
        %3625 = vmatprep.mubr.f32.mxu0 0.0
        %v3626 = vand.u32 %v3137, 4294901760
        %v3627 = vsub.f32 %v3137, %v3626
        %v3628 = vand.u32 %v3627, 4294901760
        %3629 = vmatmul.mubr.f32.gmra.mxu0 %v3628
        %v3630 = vpop.f32.mrf.mxu0
        %v3631 = vadd.f32 %v3520, %v3630
        %v3632 = vpop.f32.mrf.mxu0
        %v3633 = vadd.f32 %v3522, %v3632
        %3634 = vmatprep.mubr.f32.mxu0 0.0
        %v3635 = vand.u32 %v3140, 4294901760
        %v3636 = vsub.f32 %v3140, %v3635
        %v3637 = vand.u32 %v3636, 4294901760
        %3638 = vmatmul.mubr.f32.gmra.mxu0 %v3637
        %v3639 = vpop.f32.mrf.mxu0
        %v3640 = vadd.f32 %v3528, %v3639
        %v3641 = vpop.f32.mrf.mxu0
        %v3642 = vadd.f32 %v3530, %v3641
        %3643 = vmatprep.mubr.f32.mxu0 0.0
        %v3644 = vand.u32 %v3143, 4294901760
        %v3645 = vsub.f32 %v3143, %v3644
        %v3646 = vand.u32 %v3645, 4294901760
        %3647 = vmatmul.mubr.f32.gmra.mxu0 %v3646
        %v3648 = vpop.f32.mrf.mxu0
        %v3649 = vadd.f32 %v3536, %v3648
        %v3650 = vpop.f32.mrf.mxu0
        %v3651 = vadd.f32 %v3538, %v3650
        %3652 = vdwg.mxu0
        %3653 = vmatprep.subr.mxu0 0.0
        %3654 = vmatpush1.msra.mxu0 0.0
        %3655 = vmatprep.subr.mxu0 0.0
        %3656 = vmatpush1.msra.mxu0 0.0
        %3657 = vmatprep.subr.mxu0 0.0
        %3658 = vmatpush1.msra.mxu0 0.0
        %3659 = vmatprep.subr.mxu0 0.0
        %3660 = vmatpush1.msra.mxu0 0.0
        %3661 = vmatprep.subr.mxu0 0.0
        %3662 = vmatpush1.msra.mxu0 0.0
        %3663 = vmatprep.subr.mxu0 0.0
        %3664 = vmatpush1.msra.mxu0 0.0
        %3665 = vmatprep.subr.mxu0 0.0
        %3666 = vmatpush1.msra.mxu0 0.0
        %3667 = vmatprep.subr.mxu0 0.0
        %3668 = vmatpush1.msra.mxu0 0.0
        %3669 = vmatprep.subr.mxu0 0.0
        %3670 = vmatpush1.msra.mxu0 0.0
        %3671 = vmatprep.subr.mxu0 0.0
        %3672 = vmatpush1.msra.mxu0 0.0
        %v3673 = vand.u32 %v3131, 4294901760
        %v3674 = vsub.f32 %v3131, %v3673
        %v3675 = vand.u32 %v3674, 4294901760
        %3676 = vmatprep.subr.mxu0 %v3675
        %v3677 = vand.u32 %v3130, 4294901760
        %v3678 = vsub.f32 %v3130, %v3677
        %v3679 = vand.u32 %v3678, 4294901760
        %3680 = vmatpush1.msra.mxu0 %v3679
        %v3681 = vand.u32 %v3129, 4294901760
        %v3682 = vsub.f32 %v3129, %v3681
        %v3683 = vand.u32 %v3682, 4294901760
        %3684 = vmatprep.subr.mxu0 %v3683
        %v3685 = vand.u32 %v3128, 4294901760
        %v3686 = vsub.f32 %v3128, %v3685
        %v3687 = vand.u32 %v3686, 4294901760
        %3688 = vmatpush1.msra.mxu0 %v3687
        %v3689 = vand.u32 %v3095, 4294901760
        %v3690 = vsub.f32 %v3095, %v3689
        %v3691 = vand.u32 %v3690, 4294901760
        %3692 = vmatprep.subr.mxu0 %v3691
        %v3693 = vand.u32 %v3094, 4294901760
        %v3694 = vsub.f32 %v3094, %v3693
        %v3695 = vand.u32 %v3694, 4294901760
        %3696 = vmatpush1.msra.mxu0 %v3695
        %v3697 = vand.u32 %v3093, 4294901760
        %v3698 = vsub.f32 %v3093, %v3697
        %v3699 = vand.u32 %v3698, 4294901760
        %3700 = vmatprep.subr.mxu0 %v3699
        %v3701 = vand.u32 %v3092, 4294901760
        %v3702 = vsub.f32 %v3092, %v3701
        %v3703 = vand.u32 %v3702, 4294901760
        %3704 = vmatpush1.msra.mxu0 %v3703
        %v3705 = vand.u32 %v3115, 4294901760
        %v3706 = vsub.f32 %v3115, %v3705
        %v3707 = vand.u32 %v3706, 4294901760
        %3708 = vmatprep.subr.mxu0 %v3707
        %v3709 = vand.u32 %v3114, 4294901760
        %v3710 = vsub.f32 %v3114, %v3709
        %v3711 = vand.u32 %v3710, 4294901760
        %3712 = vmatpush1.msra.mxu0 %v3711
        %v3713 = vand.u32 %v3113, 4294901760
        %v3714 = vsub.f32 %v3113, %v3713
        %v3715 = vand.u32 %v3714, 4294901760
        %3716 = vmatprep.subr.mxu0 %v3715
        %v3717 = vand.u32 %v3112, 4294901760
        %v3718 = vsub.f32 %v3112, %v3717
        %v3719 = vand.u32 %v3718, 4294901760
        %3720 = vmatpush1.msra.mxu0 %v3719
        %3721 = vmatprep.subr.mxu0 0.0
        %3722 = vmatpush2.msra.mxu0 0.0
        %3723 = vmatprep.subr.mxu0 0.0
        %3724 = vmatpush2.msra.mxu0 0.0
        %3725 = vmatprep.subr.mxu0 0.0
        %3726 = vmatpush2.msra.mxu0 0.0
        %3727 = vmatprep.subr.mxu0 0.0
        %3728 = vmatpush2.msra.mxu0 0.0
        %3729 = vmatprep.subr.mxu0 0.0
        %3730 = vmatpush2.msra.mxu0 0.0
        %3731 = vmatprep.subr.mxu0 0.0
        %3732 = vmatpush2.msra.mxu0 0.0
        %3733 = vmatprep.subr.mxu0 0.0
        %3734 = vmatpush2.msra.mxu0 0.0
        %3735 = vmatprep.subr.mxu0 0.0
        %3736 = vmatpush2.msra.mxu0 0.0
        %3737 = vmatprep.subr.mxu0 0.0
        %3738 = vmatpush2.msra.mxu0 0.0
        %3739 = vmatprep.subr.mxu0 0.0
        %3740 = vmatpush2.msra.mxu0 0.0
        %3741 = vmatprep.subr.mxu0 0.0
        %3742 = vmatpush2.msra.mxu0 0.0
        %3743 = vmatprep.subr.mxu0 0.0
        %3744 = vmatpush2.msra.mxu0 0.0
        %3745 = vmatprep.subr.mxu0 0.0
        %3746 = vmatpush2.msra.mxu0 0.0
        %3747 = vmatprep.subr.mxu0 0.0
        %3748 = vmatpush2.msra.mxu0 0.0
        %3749 = vmatprep.subr.mxu0 0.0
        %3750 = vmatpush2.msra.mxu0 0.0
        %3751 = vmatprep.subr.mxu0 0.0
        %3752 = vmatpush2.msra.mxu0 0.0
        %3753 = vmatprep.mubr.f32.mxu0 0.0
        %v3754 = vand.u32 %v3134, 4294901760
        %3755 = vmatmul.mubr.f32.gmra.mxu0 %v3754
        %v3756 = vpop.f32.mrf.mxu0
        %v3757 = vadd.f32 %v3622, %v3756
        %v3758 = vpop.f32.mrf.mxu0
        %v3759 = vadd.f32 %v3624, %v3758
        %3760 = vmatprep.mubr.f32.mxu0 0.0
        %v3761 = vand.u32 %v3137, 4294901760
        %3762 = vmatmul.mubr.f32.gmra.mxu0 %v3761
        %v3763 = vpop.f32.mrf.mxu0
        %v3764 = vadd.f32 %v3631, %v3763
        %v3765 = vpop.f32.mrf.mxu0
        %v3766 = vadd.f32 %v3633, %v3765
        %3767 = vmatprep.mubr.f32.mxu0 0.0
        %v3768 = vand.u32 %v3140, 4294901760
        %3769 = vmatmul.mubr.f32.gmra.mxu0 %v3768
        %v3770 = vpop.f32.mrf.mxu0
        %v3771 = vadd.f32 %v3640, %v3770
        %v3772 = vpop.f32.mrf.mxu0
        %v3773 = vadd.f32 %v3642, %v3772
        %3774 = vmatprep.mubr.f32.mxu0 0.0
        %v3775 = vand.u32 %v3143, 4294901760
        %3776 = vmatmul.mubr.f32.gmra.mxu0 %v3775
        %v3777 = vpop.f32.mrf.mxu0
        %v3778 = vadd.f32 %v3649, %v3777
        %v3779 = vpop.f32.mrf.mxu0
        %v3780 = vadd.f32 %v3651, %v3779
        %3781 = vdwg.mxu0
        %3782 = vmatprep.subr.mxu0 0.0
        %3783 = vmatpush1.msra.mxu0 0.0
        %3784 = vmatprep.subr.mxu0 0.0
        %3785 = vmatpush1.msra.mxu0 0.0
        %3786 = vmatprep.subr.mxu0 0.0
        %3787 = vmatpush1.msra.mxu0 0.0
        %3788 = vmatprep.subr.mxu0 0.0
        %3789 = vmatpush1.msra.mxu0 0.0
        %3790 = vmatprep.subr.mxu0 0.0
        %3791 = vmatpush1.msra.mxu0 0.0
        %3792 = vmatprep.subr.mxu0 0.0
        %3793 = vmatpush1.msra.mxu0 0.0
        %3794 = vmatprep.subr.mxu0 0.0
        %3795 = vmatpush1.msra.mxu0 0.0
        %3796 = vmatprep.subr.mxu0 0.0
        %3797 = vmatpush1.msra.mxu0 0.0
        %3798 = vmatprep.subr.mxu0 0.0
        %3799 = vmatpush1.msra.mxu0 0.0
        %3800 = vmatprep.subr.mxu0 0.0
        %3801 = vmatpush1.msra.mxu0 0.0
        %v3802 = vand.u32 %v3131, 4294901760
        %3803 = vmatprep.subr.mxu0 %v3802
        %v3804 = vand.u32 %v3130, 4294901760
        %3805 = vmatpush1.msra.mxu0 %v3804
        %v3806 = vand.u32 %v3129, 4294901760
        %3807 = vmatprep.subr.mxu0 %v3806
        %v3808 = vand.u32 %v3128, 4294901760
        %3809 = vmatpush1.msra.mxu0 %v3808
        %v3810 = vand.u32 %v3095, 4294901760
        %3811 = vmatprep.subr.mxu0 %v3810
        %v3812 = vand.u32 %v3094, 4294901760
        %3813 = vmatpush1.msra.mxu0 %v3812
        %v3814 = vand.u32 %v3093, 4294901760
        %3815 = vmatprep.subr.mxu0 %v3814
        %v3816 = vand.u32 %v3092, 4294901760
        %3817 = vmatpush1.msra.mxu0 %v3816
        %v3818 = vand.u32 %v3115, 4294901760
        %3819 = vmatprep.subr.mxu0 %v3818
        %v3820 = vand.u32 %v3114, 4294901760
        %3821 = vmatpush1.msra.mxu0 %v3820
        %v3822 = vand.u32 %v3113, 4294901760
        %3823 = vmatprep.subr.mxu0 %v3822
        %v3824 = vand.u32 %v3112, 4294901760
        %3825 = vmatpush1.msra.mxu0 %v3824
        %3826 = vmatprep.subr.mxu0 0.0
        %3827 = vmatpush2.msra.mxu0 0.0
        %3828 = vmatprep.subr.mxu0 0.0
        %3829 = vmatpush2.msra.mxu0 0.0
        %3830 = vmatprep.subr.mxu0 0.0
        %3831 = vmatpush2.msra.mxu0 0.0
        %3832 = vmatprep.subr.mxu0 0.0
        %3833 = vmatpush2.msra.mxu0 0.0
        %3834 = vmatprep.subr.mxu0 0.0
        %3835 = vmatpush2.msra.mxu0 0.0
        %3836 = vmatprep.subr.mxu0 0.0
        %3837 = vmatpush2.msra.mxu0 0.0
        %3838 = vmatprep.subr.mxu0 0.0
        %3839 = vmatpush2.msra.mxu0 0.0
        %3840 = vmatprep.subr.mxu0 0.0
        %3841 = vmatpush2.msra.mxu0 0.0
        %3842 = vmatprep.subr.mxu0 0.0
        %3843 = vmatpush2.msra.mxu0 0.0
        %3844 = vmatprep.subr.mxu0 0.0
        %3845 = vmatpush2.msra.mxu0 0.0
        %3846 = vmatprep.subr.mxu0 0.0
        %3847 = vmatpush2.msra.mxu0 0.0
        %3848 = vmatprep.subr.mxu0 0.0
        %3849 = vmatpush2.msra.mxu0 0.0
        %3850 = vmatprep.subr.mxu0 0.0
        %3851 = vmatpush2.msra.mxu0 0.0
        %3852 = vmatprep.subr.mxu0 0.0
        %3853 = vmatpush2.msra.mxu0 0.0
        %3854 = vmatprep.subr.mxu0 0.0
        %3855 = vmatpush2.msra.mxu0 0.0
        %3856 = vmatprep.subr.mxu0 0.0
        %3857 = vmatpush2.msra.mxu0 0.0
        %3858 = vmatprep.mubr.f32.mxu0 0.0
        %v3859 = vand.u32 %v3134, 4294901760
        %3860 = vmatmul.mubr.f32.gmra.mxu0 %v3859
        %v3861 = vpop.f32.mrf.mxu0
        %v3862 = vadd.f32 %v3757, %v3861
        %v3863 = vpop.f32.mrf.mxu0
        %v3864 = vadd.f32 %v3759, %v3863
        %3865 = vmatprep.mubr.f32.mxu0 0.0
        %v3866 = vand.u32 %v3137, 4294901760
        %3867 = vmatmul.mubr.f32.gmra.mxu0 %v3866
        %v3868 = vpop.f32.mrf.mxu0
        %v3869 = vadd.f32 %v3764, %v3868
        %v3870 = vpop.f32.mrf.mxu0
        %v3871 = vadd.f32 %v3766, %v3870
        %3872 = vmatprep.mubr.f32.mxu0 0.0
        %v3873 = vand.u32 %v3140, 4294901760
        %3874 = vmatmul.mubr.f32.gmra.mxu0 %v3873
        %v3875 = vpop.f32.mrf.mxu0
        %v3876 = vadd.f32 %v3771, %v3875
        %v3877 = vpop.f32.mrf.mxu0
        %v3878 = vadd.f32 %v3773, %v3877
        %3879 = vmatprep.mubr.f32.mxu0 0.0
        %v3880 = vand.u32 %v3143, 4294901760
        %3881 = vmatmul.mubr.f32.gmra.mxu0 %v3880
        %v3882 = vpop.f32.mrf.mxu0
        %v3883 = vadd.f32 %v3778, %v3882
        %v3884 = vpop.f32.mrf.mxu0
        %v3885 = vadd.f32 %v3780, %v3884
        %3886 = vdwg.mxu0
        %3888 = vset.pattern.permute.xlu0 0
        %3889 = vperm.xlu0 %3888, %v2443
        %v3890 = vpop.permute.xlu0 %3889
        %3893 = vset.pattern.permute.xlu0 0
        %3894 = vperm.xlu0 %3893, %v2444
        %v3895 = vpop.permute.xlu0 %3894
        %3898 = vset.pattern.permute.xlu0 0
        %3899 = vperm.xlu0 %3898, %v2445
        %v3900 = vpop.permute.xlu0 %3899
        %3903 = vset.pattern.permute.xlu0 0
        %3904 = vperm.xlu0 %3903, %v2446
        %v3905 = vpop.permute.xlu0 %3904
        %v3907 = vmul.f32 %v3862, %v3890
        %v3908 = vmul.f32 %v3864, %v3890
        %v3909 = vmul.f32 %v3869, %v3895
        %v3910 = vmul.f32 %v3871, %v3895
        %v3911 = vmul.f32 %v3876, %v3900
        %v3912 = vmul.f32 %v3878, %v3900
        %v3913 = vmul.f32 %v3883, %v3905
        %v3914 = vmul.f32 %v3885, %v3905
        %3915 = vset.pattern.permute.xlu0 1
        %3916 = vperm.xlu0 %3915, %v2443
        %v3917 = vpop.permute.xlu0 %3916
        %3919 = vset.pattern.permute.xlu0 1
        %3920 = vperm.xlu0 %3919, %v2444
        %v3921 = vpop.permute.xlu0 %3920
        %3923 = vset.pattern.permute.xlu0 1
        %3924 = vperm.xlu0 %3923, %v2445
        %v3925 = vpop.permute.xlu0 %3924
        %3927 = vset.pattern.permute.xlu0 1
        %3928 = vperm.xlu0 %3927, %v2446
        %v3929 = vpop.permute.xlu0 %3928
        %v3931 = vadd.f32 %v3907, %v3917
        %v3932 = vadd.f32 %v3908, %v3917
        %v3933 = vadd.f32 %v3909, %v3921
        %v3934 = vadd.f32 %v3910, %v3921
        %v3935 = vadd.f32 %v3911, %v3925
        %v3936 = vadd.f32 %v3912, %v3925
        %v3937 = vadd.f32 %v3913, %v3929
        %v3938 = vadd.f32 %v3914, %v3929
        %v3939 = vmax.f32 %v3931, 0.0
        %v3940 = vmax.f32 %v3932, 0.0
        %v3941 = vmax.f32 %v3933, 0.0
        %v3942 = vmax.f32 %v3934, 0.0
        %v3943 = vmax.f32 %v3935, 0.0
        %v3944 = vmax.f32 %v3936, 0.0
        %v3945 = vmax.f32 %v3937, 0.0
        %v3946 = vmax.f32 %v3938, 0.0
        %v3947 = vld [vmem:[#allocation11] sm:$0xff]
        %v3948 = vld [vmem:[#allocation11 + $0x8] sm:$0xff]
        %3949 = vrot.lane.b32.xlu0 %v3939, 1
        %v3950 = vpop.permute.xlu0 %3949
        %3951 = vrot.lane.b32.xlu0 %v3941, 1
        %v3952 = vpop.permute.xlu0 %3951
        %3953 = vrot.lane.b32.xlu0 %v3943, 1
        %v3954 = vpop.permute.xlu0 %3953
        %3955 = vrot.lane.b32.xlu0 %v3945, 1
        %v3956 = vpop.permute.xlu0 %3955
        %3957 = vrot.lane.b32.xlu0 %v3940, 1
        %v3958 = vpop.permute.xlu0 %3957
        %3959 = vrot.lane.b32.xlu0 %v3942, 1
        %v3960 = vpop.permute.xlu0 %3959
        %3961 = vrot.lane.b32.xlu0 %v3944, 1
        %v3962 = vpop.permute.xlu0 %3961
        %3963 = vrot.lane.b32.xlu0 %v3946, 1
        %v3964 = vpop.permute.xlu0 %3963
        %v3965 = vsel %vm2457, %v3950, %v3958
        %v3966 = vsel %vm2457, %v3952, %v3960
        %v3967 = vsel %vm2457, %v3954, %v3962
        %v3968 = vsel %vm2457, %v3956, %v3964
        %v3969 = vsel %vm2457, %v3958, %v3950
        %v3970 = vsel %vm2457, %v3960, %v3952
        %v3971 = vsel %vm2457, %v3962, %v3954
        %v3972 = vsel %vm2457, %v3964, %v3956
        %v3973 = vmul.f32 %v3969, %v2464
        %v3974 = vmul.f32 %v3965, %v2468
        %v3975 = vmul.f32 %v3970, %v2464
        %v3976 = vmul.f32 %v3966, %v2468
        %v3977 = vmul.f32 %v3971, %v2464
        %v3978 = vmul.f32 %v3967, %v2468
        %v3979 = vmul.f32 %v3972, %v2464
        %v3980 = vmul.f32 %v3968, %v2468
        %3981 = vrot.lane.b32.xlu0 %v3939, 127
        %v3982 = vpop.permute.xlu0 %3981
        %3983 = vrot.lane.b32.xlu0 %v3941, 127
        %v3984 = vpop.permute.xlu0 %3983
        %3985 = vrot.lane.b32.xlu0 %v3943, 127
        %v3986 = vpop.permute.xlu0 %3985
        %3987 = vrot.lane.b32.xlu0 %v3945, 127
        %v3988 = vpop.permute.xlu0 %3987
        %3989 = vrot.lane.b32.xlu0 %v3940, 127
        %v3990 = vpop.permute.xlu0 %3989
        %3991 = vrot.lane.b32.xlu0 %v3942, 127
        %v3992 = vpop.permute.xlu0 %3991
        %3993 = vrot.lane.b32.xlu0 %v3944, 127
        %v3994 = vpop.permute.xlu0 %3993
        %3995 = vrot.lane.b32.xlu0 %v3946, 127
        %v3996 = vpop.permute.xlu0 %3995
        %v3997 = vsel %vm2477, %v3982, %v3990
        %v3998 = vsel %vm2477, %v3984, %v3992
        %v3999 = vsel %vm2477, %v3986, %v3994
        %v4000 = vsel %vm2477, %v3988, %v3996
        %v4001 = vsel %vm2477, %v3990, %v3982
        %v4002 = vsel %vm2477, %v3992, %v3984
        %v4003 = vsel %vm2477, %v3994, %v3986
        %v4004 = vsel %vm2477, %v3996, %v3988
        %v4005 = vmul.f32 %v3997, %v2484
        %v4006 = vmul.f32 %v4001, %v2488
        %v4007 = vmul.f32 %v3998, %v2484
        %v4008 = vmul.f32 %v4002, %v2488
        %v4009 = vmul.f32 %v3999, %v2484
        %v4010 = vmul.f32 %v4003, %v2488
        %v4011 = vmul.f32 %v4000, %v2484
        %v4012 = vmul.f32 %v4004, %v2488
        %vm4013 = vcmask 785408
        %v4015 = vsel %vm4013, %v3947, 0
        %v4018 = vsel %vm4013, %v3948, 0
        %4020 = vmatprep.subr.mxu0 0.0
        %4021 = vmatpush1.msra.mxu0 0.0
        %4022 = vmatprep.subr.mxu0 0.0
        %4023 = vmatpush1.msra.mxu0 0.0
        %4024 = vmatprep.subr.mxu0 0.0
        %4025 = vmatpush1.msra.mxu0 0.0
        %4026 = vmatprep.subr.mxu0 0.0
        %4027 = vmatpush1.msra.mxu0 0.0
        %v4028 = vand.u32 %v4012, 4294901760
        %4029 = vmatprep.subr.mxu0 %v4028
        %v4030 = vand.u32 %v4011, 4294901760
        %4031 = vmatpush1.msra.mxu0 %v4030
        %v4032 = vand.u32 %v4010, 4294901760
        %4033 = vmatprep.subr.mxu0 %v4032
        %v4034 = vand.u32 %v4009, 4294901760
        %4035 = vmatpush1.msra.mxu0 %v4034
        %v4036 = vand.u32 %v4008, 4294901760
        %4037 = vmatprep.subr.mxu0 %v4036
        %v4038 = vand.u32 %v4007, 4294901760
        %4039 = vmatpush1.msra.mxu0 %v4038
        %v4040 = vand.u32 %v4006, 4294901760
        %4041 = vmatprep.subr.mxu0 %v4040
        %v4042 = vand.u32 %v4005, 4294901760
        %4043 = vmatpush1.msra.mxu0 %v4042
        %v4044 = vand.u32 %v3946, 4294901760
        %4045 = vmatprep.subr.mxu0 %v4044
        %v4046 = vand.u32 %v3945, 4294901760
        %4047 = vmatpush1.msra.mxu0 %v4046
        %v4048 = vand.u32 %v3944, 4294901760
        %4049 = vmatprep.subr.mxu0 %v4048
        %v4050 = vand.u32 %v3943, 4294901760
        %4051 = vmatpush1.msra.mxu0 %v4050
        %v4052 = vand.u32 %v3942, 4294901760
        %4053 = vmatprep.subr.mxu0 %v4052
        %v4054 = vand.u32 %v3941, 4294901760
        %4055 = vmatpush1.msra.mxu0 %v4054
        %v4056 = vand.u32 %v3940, 4294901760
        %4057 = vmatprep.subr.mxu0 %v4056
        %v4058 = vand.u32 %v3939, 4294901760
        %4059 = vmatpush1.msra.mxu0 %v4058
        %v4060 = vand.u32 %v3980, 4294901760
        %4061 = vmatprep.subr.mxu0 %v4060
        %v4062 = vand.u32 %v3979, 4294901760
        %4063 = vmatpush1.msra.mxu0 %v4062
        %v4064 = vand.u32 %v3978, 4294901760
        %4065 = vmatprep.subr.mxu0 %v4064
        %v4066 = vand.u32 %v3977, 4294901760
        %4067 = vmatpush1.msra.mxu0 %v4066
        %v4068 = vand.u32 %v3976, 4294901760
        %4069 = vmatprep.subr.mxu0 %v4068
        %v4070 = vand.u32 %v3975, 4294901760
        %4071 = vmatpush1.msra.mxu0 %v4070
        %v4072 = vand.u32 %v3974, 4294901760
        %4073 = vmatprep.subr.mxu0 %v4072
        %v4074 = vand.u32 %v3973, 4294901760
        %4075 = vmatpush1.msra.mxu0 %v4074
        %4076 = vmatprep.subr.mxu0 0.0
        %4077 = vmatpush2.msra.mxu0 0.0
        %4078 = vmatprep.subr.mxu0 0.0
        %4079 = vmatpush2.msra.mxu0 0.0
        %4080 = vmatprep.subr.mxu0 0.0
        %4081 = vmatpush2.msra.mxu0 0.0
        %4082 = vmatprep.subr.mxu0 0.0
        %4083 = vmatpush2.msra.mxu0 0.0
        %4084 = vmatprep.subr.mxu0 0.0
        %4085 = vmatpush2.msra.mxu0 0.0
        %4086 = vmatprep.subr.mxu0 0.0
        %4087 = vmatpush2.msra.mxu0 0.0
        %4088 = vmatprep.subr.mxu0 0.0
        %4089 = vmatpush2.msra.mxu0 0.0
        %4090 = vmatprep.subr.mxu0 0.0
        %4091 = vmatpush2.msra.mxu0 0.0
        %4092 = vmatprep.subr.mxu0 0.0
        %4093 = vmatpush2.msra.mxu0 0.0
        %4094 = vmatprep.subr.mxu0 0.0
        %4095 = vmatpush2.msra.mxu0 0.0
        %4096 = vmatprep.subr.mxu0 0.0
        %4097 = vmatpush2.msra.mxu0 0.0
        %4098 = vmatprep.subr.mxu0 0.0
        %4099 = vmatpush2.msra.mxu0 0.0
        %4100 = vmatprep.subr.mxu0 0.0
        %4101 = vmatpush2.msra.mxu0 0.0
        %4102 = vmatprep.subr.mxu0 0.0
        %4103 = vmatpush2.msra.mxu0 0.0
        %4104 = vmatprep.subr.mxu0 0.0
        %4105 = vmatpush2.msra.mxu0 0.0
        %4106 = vmatprep.subr.mxu0 0.0
        %4107 = vmatpush2.msra.mxu0 0.0
        %4108 = vmatprep.mubr.f32.mxu0 0.0
        %v4109 = vand.u32 %v4015, 4294901760
        %v4110 = vsub.f32 %v4015, %v4109
        %v4111 = vand.u32 %v4110, 4294901760
        %v4112 = vsub.f32 %v4110, %v4111
        %v4113 = vand.u32 %v4112, 4294901760
        %4114 = vmatmul.mubr.f32.gmra.mxu0 %v4113
        %v4115 = vpop.f32.mrf.mxu0
        %v4116 = vadd.f32 0.0, %v4115
        %v4117 = vpop.f32.mrf.mxu0
        %v4118 = vadd.f32 0.0, %v4117
        %4119 = vmatprep.mubr.f32.mxu0 0.0
        %v4120 = vand.u32 %v4018, 4294901760
        %v4121 = vsub.f32 %v4018, %v4120
        %v4122 = vand.u32 %v4121, 4294901760
        %v4123 = vsub.f32 %v4121, %v4122
        %v4124 = vand.u32 %v4123, 4294901760
        %4125 = vmatmul.mubr.f32.gmra.mxu0 %v4124
        %v4126 = vpop.f32.mrf.mxu0
        %v4127 = vadd.f32 0.0, %v4126
        %v4128 = vpop.f32.mrf.mxu0
        %v4129 = vadd.f32 0.0, %v4128
        %4130 = vdwg.mxu0
        %4131 = vmatprep.subr.mxu0 0.0
        %4132 = vmatpush1.msra.mxu0 0.0
        %4133 = vmatprep.subr.mxu0 0.0
        %4134 = vmatpush1.msra.mxu0 0.0
        %4135 = vmatprep.subr.mxu0 0.0
        %4136 = vmatpush1.msra.mxu0 0.0
        %4137 = vmatprep.subr.mxu0 0.0
        %4138 = vmatpush1.msra.mxu0 0.0
        %v4139 = vand.u32 %v4012, 4294901760
        %v4140 = vsub.f32 %v4012, %v4139
        %v4141 = vand.u32 %v4140, 4294901760
        %v4142 = vsub.f32 %v4140, %v4141
        %v4143 = vand.u32 %v4142, 4294901760
        %4144 = vmatprep.subr.mxu0 %v4143
        %v4145 = vand.u32 %v4011, 4294901760
        %v4146 = vsub.f32 %v4011, %v4145
        %v4147 = vand.u32 %v4146, 4294901760
        %v4148 = vsub.f32 %v4146, %v4147
        %v4149 = vand.u32 %v4148, 4294901760
        %4150 = vmatpush1.msra.mxu0 %v4149
        %v4151 = vand.u32 %v4010, 4294901760
        %v4152 = vsub.f32 %v4010, %v4151
        %v4153 = vand.u32 %v4152, 4294901760
        %v4154 = vsub.f32 %v4152, %v4153
        %v4155 = vand.u32 %v4154, 4294901760
        %4156 = vmatprep.subr.mxu0 %v4155
        %v4157 = vand.u32 %v4009, 4294901760
        %v4158 = vsub.f32 %v4009, %v4157
        %v4159 = vand.u32 %v4158, 4294901760
        %v4160 = vsub.f32 %v4158, %v4159
        %v4161 = vand.u32 %v4160, 4294901760
        %4162 = vmatpush1.msra.mxu0 %v4161
        %v4163 = vand.u32 %v4008, 4294901760
        %v4164 = vsub.f32 %v4008, %v4163
        %v4165 = vand.u32 %v4164, 4294901760
        %v4166 = vsub.f32 %v4164, %v4165
        %v4167 = vand.u32 %v4166, 4294901760
        %4168 = vmatprep.subr.mxu0 %v4167
        %v4169 = vand.u32 %v4007, 4294901760
        %v4170 = vsub.f32 %v4007, %v4169
        %v4171 = vand.u32 %v4170, 4294901760
        %v4172 = vsub.f32 %v4170, %v4171
        %v4173 = vand.u32 %v4172, 4294901760
        %4174 = vmatpush1.msra.mxu0 %v4173
        %v4175 = vand.u32 %v4006, 4294901760
        %v4176 = vsub.f32 %v4006, %v4175
        %v4177 = vand.u32 %v4176, 4294901760
        %v4178 = vsub.f32 %v4176, %v4177
        %v4179 = vand.u32 %v4178, 4294901760
        %4180 = vmatprep.subr.mxu0 %v4179
        %v4181 = vand.u32 %v4005, 4294901760
        %v4182 = vsub.f32 %v4005, %v4181
        %v4183 = vand.u32 %v4182, 4294901760
        %v4184 = vsub.f32 %v4182, %v4183
        %v4185 = vand.u32 %v4184, 4294901760
        %4186 = vmatpush1.msra.mxu0 %v4185
        %v4187 = vand.u32 %v3946, 4294901760
        %v4188 = vsub.f32 %v3946, %v4187
        %v4189 = vand.u32 %v4188, 4294901760
        %v4190 = vsub.f32 %v4188, %v4189
        %v4191 = vand.u32 %v4190, 4294901760
        %4192 = vmatprep.subr.mxu0 %v4191
        %v4193 = vand.u32 %v3945, 4294901760
        %v4194 = vsub.f32 %v3945, %v4193
        %v4195 = vand.u32 %v4194, 4294901760
        %v4196 = vsub.f32 %v4194, %v4195
        %v4197 = vand.u32 %v4196, 4294901760
        %4198 = vmatpush1.msra.mxu0 %v4197
        %v4199 = vand.u32 %v3944, 4294901760
        %v4200 = vsub.f32 %v3944, %v4199
        %v4201 = vand.u32 %v4200, 4294901760
        %v4202 = vsub.f32 %v4200, %v4201
        %v4203 = vand.u32 %v4202, 4294901760
        %4204 = vmatprep.subr.mxu0 %v4203
        %v4205 = vand.u32 %v3943, 4294901760
        %v4206 = vsub.f32 %v3943, %v4205
        %v4207 = vand.u32 %v4206, 4294901760
        %v4208 = vsub.f32 %v4206, %v4207
        %v4209 = vand.u32 %v4208, 4294901760
        %4210 = vmatpush1.msra.mxu0 %v4209
        %v4211 = vand.u32 %v3942, 4294901760
        %v4212 = vsub.f32 %v3942, %v4211
        %v4213 = vand.u32 %v4212, 4294901760
        %v4214 = vsub.f32 %v4212, %v4213
        %v4215 = vand.u32 %v4214, 4294901760
        %4216 = vmatprep.subr.mxu0 %v4215
        %v4217 = vand.u32 %v3941, 4294901760
        %v4218 = vsub.f32 %v3941, %v4217
        %v4219 = vand.u32 %v4218, 4294901760
        %v4220 = vsub.f32 %v4218, %v4219
        %v4221 = vand.u32 %v4220, 4294901760
        %4222 = vmatpush1.msra.mxu0 %v4221
        %v4223 = vand.u32 %v3940, 4294901760
        %v4224 = vsub.f32 %v3940, %v4223
        %v4225 = vand.u32 %v4224, 4294901760
        %v4226 = vsub.f32 %v4224, %v4225
        %v4227 = vand.u32 %v4226, 4294901760
        %4228 = vmatprep.subr.mxu0 %v4227
        %v4229 = vand.u32 %v3939, 4294901760
        %v4230 = vsub.f32 %v3939, %v4229
        %v4231 = vand.u32 %v4230, 4294901760
        %v4232 = vsub.f32 %v4230, %v4231
        %v4233 = vand.u32 %v4232, 4294901760
        %4234 = vmatpush1.msra.mxu0 %v4233
        %v4235 = vand.u32 %v3980, 4294901760
        %v4236 = vsub.f32 %v3980, %v4235
        %v4237 = vand.u32 %v4236, 4294901760
        %v4238 = vsub.f32 %v4236, %v4237
        %v4239 = vand.u32 %v4238, 4294901760
        %4240 = vmatprep.subr.mxu0 %v4239
        %v4241 = vand.u32 %v3979, 4294901760
        %v4242 = vsub.f32 %v3979, %v4241
        %v4243 = vand.u32 %v4242, 4294901760
        %v4244 = vsub.f32 %v4242, %v4243
        %v4245 = vand.u32 %v4244, 4294901760
        %4246 = vmatpush1.msra.mxu0 %v4245
        %v4247 = vand.u32 %v3978, 4294901760
        %v4248 = vsub.f32 %v3978, %v4247
        %v4249 = vand.u32 %v4248, 4294901760
        %v4250 = vsub.f32 %v4248, %v4249
        %v4251 = vand.u32 %v4250, 4294901760
        %4252 = vmatprep.subr.mxu0 %v4251
        %v4253 = vand.u32 %v3977, 4294901760
        %v4254 = vsub.f32 %v3977, %v4253
        %v4255 = vand.u32 %v4254, 4294901760
        %v4256 = vsub.f32 %v4254, %v4255
        %v4257 = vand.u32 %v4256, 4294901760
        %4258 = vmatpush1.msra.mxu0 %v4257
        %v4259 = vand.u32 %v3976, 4294901760
        %v4260 = vsub.f32 %v3976, %v4259
        %v4261 = vand.u32 %v4260, 4294901760
        %v4262 = vsub.f32 %v4260, %v4261
        %v4263 = vand.u32 %v4262, 4294901760
        %4264 = vmatprep.subr.mxu0 %v4263
        %v4265 = vand.u32 %v3975, 4294901760
        %v4266 = vsub.f32 %v3975, %v4265
        %v4267 = vand.u32 %v4266, 4294901760
        %v4268 = vsub.f32 %v4266, %v4267
        %v4269 = vand.u32 %v4268, 4294901760
        %4270 = vmatpush1.msra.mxu0 %v4269
        %v4271 = vand.u32 %v3974, 4294901760
        %v4272 = vsub.f32 %v3974, %v4271
        %v4273 = vand.u32 %v4272, 4294901760
        %v4274 = vsub.f32 %v4272, %v4273
        %v4275 = vand.u32 %v4274, 4294901760
        %4276 = vmatprep.subr.mxu0 %v4275
        %v4277 = vand.u32 %v3973, 4294901760
        %v4278 = vsub.f32 %v3973, %v4277
        %v4279 = vand.u32 %v4278, 4294901760
        %v4280 = vsub.f32 %v4278, %v4279
        %v4281 = vand.u32 %v4280, 4294901760
        %4282 = vmatpush1.msra.mxu0 %v4281
        %4283 = vmatprep.subr.mxu0 0.0
        %4284 = vmatpush2.msra.mxu0 0.0
        %4285 = vmatprep.subr.mxu0 0.0
        %4286 = vmatpush2.msra.mxu0 0.0
        %4287 = vmatprep.subr.mxu0 0.0
        %4288 = vmatpush2.msra.mxu0 0.0
        %4289 = vmatprep.subr.mxu0 0.0
        %4290 = vmatpush2.msra.mxu0 0.0
        %4291 = vmatprep.subr.mxu0 0.0
        %4292 = vmatpush2.msra.mxu0 0.0
        %4293 = vmatprep.subr.mxu0 0.0
        %4294 = vmatpush2.msra.mxu0 0.0
        %4295 = vmatprep.subr.mxu0 0.0
        %4296 = vmatpush2.msra.mxu0 0.0
        %4297 = vmatprep.subr.mxu0 0.0
        %4298 = vmatpush2.msra.mxu0 0.0
        %4299 = vmatprep.subr.mxu0 0.0
        %4300 = vmatpush2.msra.mxu0 0.0
        %4301 = vmatprep.subr.mxu0 0.0
        %4302 = vmatpush2.msra.mxu0 0.0
        %4303 = vmatprep.subr.mxu0 0.0
        %4304 = vmatpush2.msra.mxu0 0.0
        %4305 = vmatprep.subr.mxu0 0.0
        %4306 = vmatpush2.msra.mxu0 0.0
        %4307 = vmatprep.subr.mxu0 0.0
        %4308 = vmatpush2.msra.mxu0 0.0
        %4309 = vmatprep.subr.mxu0 0.0
        %4310 = vmatpush2.msra.mxu0 0.0
        %4311 = vmatprep.subr.mxu0 0.0
        %4312 = vmatpush2.msra.mxu0 0.0
        %4313 = vmatprep.subr.mxu0 0.0
        %4314 = vmatpush2.msra.mxu0 0.0
        %4315 = vmatprep.mubr.f32.mxu0 0.0
        %v4316 = vand.u32 %v4015, 4294901760
        %4317 = vmatmul.mubr.f32.gmra.mxu0 %v4316
        %v4318 = vpop.f32.mrf.mxu0
        %v4319 = vadd.f32 %v4116, %v4318
        %v4320 = vpop.f32.mrf.mxu0
        %v4321 = vadd.f32 %v4118, %v4320
        %4322 = vmatprep.mubr.f32.mxu0 0.0
        %v4323 = vand.u32 %v4018, 4294901760
        %4324 = vmatmul.mubr.f32.gmra.mxu0 %v4323
        %v4325 = vpop.f32.mrf.mxu0
        %v4326 = vadd.f32 %v4127, %v4325
        %v4327 = vpop.f32.mrf.mxu0
        %v4328 = vadd.f32 %v4129, %v4327
        %4329 = vdwg.mxu0
        %4330 = vmatprep.subr.mxu0 0.0
        %4331 = vmatpush1.msra.mxu0 0.0
        %4332 = vmatprep.subr.mxu0 0.0
        %4333 = vmatpush1.msra.mxu0 0.0
        %4334 = vmatprep.subr.mxu0 0.0
        %4335 = vmatpush1.msra.mxu0 0.0
        %4336 = vmatprep.subr.mxu0 0.0
        %4337 = vmatpush1.msra.mxu0 0.0
        %v4338 = vand.u32 %v4012, 4294901760
        %v4339 = vsub.f32 %v4012, %v4338
        %4340 = vmatprep.subr.mxu0 %v4339
        %v4341 = vand.u32 %v4011, 4294901760
        %v4342 = vsub.f32 %v4011, %v4341
        %4343 = vmatpush1.msra.mxu0 %v4342
        %v4344 = vand.u32 %v4010, 4294901760
        %v4345 = vsub.f32 %v4010, %v4344
        %4346 = vmatprep.subr.mxu0 %v4345
        %v4347 = vand.u32 %v4009, 4294901760
        %v4348 = vsub.f32 %v4009, %v4347
        %4349 = vmatpush1.msra.mxu0 %v4348
        %v4350 = vand.u32 %v4008, 4294901760
        %v4351 = vsub.f32 %v4008, %v4350
        %4352 = vmatprep.subr.mxu0 %v4351
        %v4353 = vand.u32 %v4007, 4294901760
        %v4354 = vsub.f32 %v4007, %v4353
        %4355 = vmatpush1.msra.mxu0 %v4354
        %v4356 = vand.u32 %v4006, 4294901760
        %v4357 = vsub.f32 %v4006, %v4356
        %4358 = vmatprep.subr.mxu0 %v4357
        %v4359 = vand.u32 %v4005, 4294901760
        %v4360 = vsub.f32 %v4005, %v4359
        %4361 = vmatpush1.msra.mxu0 %v4360
        %v4362 = vand.u32 %v3946, 4294901760
        %v4363 = vsub.f32 %v3946, %v4362
        %4364 = vmatprep.subr.mxu0 %v4363
        %v4365 = vand.u32 %v3945, 4294901760
        %v4366 = vsub.f32 %v3945, %v4365
        %4367 = vmatpush1.msra.mxu0 %v4366
        %v4368 = vand.u32 %v3944, 4294901760
        %v4369 = vsub.f32 %v3944, %v4368
        %4370 = vmatprep.subr.mxu0 %v4369
        %v4371 = vand.u32 %v3943, 4294901760
        %v4372 = vsub.f32 %v3943, %v4371
        %4373 = vmatpush1.msra.mxu0 %v4372
        %v4374 = vand.u32 %v3942, 4294901760
        %v4375 = vsub.f32 %v3942, %v4374
        %4376 = vmatprep.subr.mxu0 %v4375
        %v4377 = vand.u32 %v3941, 4294901760
        %v4378 = vsub.f32 %v3941, %v4377
        %4379 = vmatpush1.msra.mxu0 %v4378
        %v4380 = vand.u32 %v3940, 4294901760
        %v4381 = vsub.f32 %v3940, %v4380
        %4382 = vmatprep.subr.mxu0 %v4381
        %v4383 = vand.u32 %v3939, 4294901760
        %v4384 = vsub.f32 %v3939, %v4383
        %4385 = vmatpush1.msra.mxu0 %v4384
        %v4386 = vand.u32 %v3980, 4294901760
        %v4387 = vsub.f32 %v3980, %v4386
        %4388 = vmatprep.subr.mxu0 %v4387
        %v4389 = vand.u32 %v3979, 4294901760
        %v4390 = vsub.f32 %v3979, %v4389
        %4391 = vmatpush1.msra.mxu0 %v4390
        %v4392 = vand.u32 %v3978, 4294901760
        %v4393 = vsub.f32 %v3978, %v4392
        %4394 = vmatprep.subr.mxu0 %v4393
        %v4395 = vand.u32 %v3977, 4294901760
        %v4396 = vsub.f32 %v3977, %v4395
        %4397 = vmatpush1.msra.mxu0 %v4396
        %v4398 = vand.u32 %v3976, 4294901760
        %v4399 = vsub.f32 %v3976, %v4398
        %4400 = vmatprep.subr.mxu0 %v4399
        %v4401 = vand.u32 %v3975, 4294901760
        %v4402 = vsub.f32 %v3975, %v4401
        %4403 = vmatpush1.msra.mxu0 %v4402
        %v4404 = vand.u32 %v3974, 4294901760
        %v4405 = vsub.f32 %v3974, %v4404
        %4406 = vmatprep.subr.mxu0 %v4405
        %v4407 = vand.u32 %v3973, 4294901760
        %v4408 = vsub.f32 %v3973, %v4407
        %4409 = vmatpush1.msra.mxu0 %v4408
        %4410 = vmatprep.subr.mxu0 0.0
        %4411 = vmatpush2.msra.mxu0 0.0
        %4412 = vmatprep.subr.mxu0 0.0
        %4413 = vmatpush2.msra.mxu0 0.0
        %4414 = vmatprep.subr.mxu0 0.0
        %4415 = vmatpush2.msra.mxu0 0.0
        %4416 = vmatprep.subr.mxu0 0.0
        %4417 = vmatpush2.msra.mxu0 0.0
        %4418 = vmatprep.subr.mxu0 0.0
        %4419 = vmatpush2.msra.mxu0 0.0
        %4420 = vmatprep.subr.mxu0 0.0
        %4421 = vmatpush2.msra.mxu0 0.0
        %4422 = vmatprep.subr.mxu0 0.0
        %4423 = vmatpush2.msra.mxu0 0.0
        %4424 = vmatprep.subr.mxu0 0.0
        %4425 = vmatpush2.msra.mxu0 0.0
        %4426 = vmatprep.subr.mxu0 0.0
        %4427 = vmatpush2.msra.mxu0 0.0
        %4428 = vmatprep.subr.mxu0 0.0
        %4429 = vmatpush2.msra.mxu0 0.0
        %4430 = vmatprep.subr.mxu0 0.0
        %4431 = vmatpush2.msra.mxu0 0.0
        %4432 = vmatprep.subr.mxu0 0.0
        %4433 = vmatpush2.msra.mxu0 0.0
        %4434 = vmatprep.subr.mxu0 0.0
        %4435 = vmatpush2.msra.mxu0 0.0
        %4436 = vmatprep.subr.mxu0 0.0
        %4437 = vmatpush2.msra.mxu0 0.0
        %4438 = vmatprep.subr.mxu0 0.0
        %4439 = vmatpush2.msra.mxu0 0.0
        %4440 = vmatprep.subr.mxu0 0.0
        %4441 = vmatpush2.msra.mxu0 0.0
        %4442 = vmatprep.mubr.f32.mxu0 0.0
        %v4443 = vand.u32 %v4015, 4294901760
        %v4444 = vsub.f32 %v4015, %v4443
        %4445 = vmatmul.mubr.f32.gmra.mxu0 %v4444
        %v4446 = vpop.f32.mrf.mxu0
        %v4447 = vadd.f32 %v4319, %v4446
        %v4448 = vpop.f32.mrf.mxu0
        %v4449 = vadd.f32 %v4321, %v4448
        %4450 = vmatprep.mubr.f32.mxu0 0.0
        %v4451 = vand.u32 %v4018, 4294901760
        %v4452 = vsub.f32 %v4018, %v4451
        %4453 = vmatmul.mubr.f32.gmra.mxu0 %v4452
        %v4454 = vpop.f32.mrf.mxu0
        %v4455 = vadd.f32 %v4326, %v4454
        %v4456 = vpop.f32.mrf.mxu0
        %v4457 = vadd.f32 %v4328, %v4456
        %4458 = vdwg.mxu0
        %4459 = vmatprep.subr.mxu0 0.0
        %4460 = vmatpush1.msra.mxu0 0.0
        %4461 = vmatprep.subr.mxu0 0.0
        %4462 = vmatpush1.msra.mxu0 0.0
        %4463 = vmatprep.subr.mxu0 0.0
        %4464 = vmatpush1.msra.mxu0 0.0
        %4465 = vmatprep.subr.mxu0 0.0
        %4466 = vmatpush1.msra.mxu0 0.0
        %v4467 = vand.u32 %v4012, 4294901760
        %4468 = vmatprep.subr.mxu0 %v4467
        %v4469 = vand.u32 %v4011, 4294901760
        %4470 = vmatpush1.msra.mxu0 %v4469
        %v4471 = vand.u32 %v4010, 4294901760
        %4472 = vmatprep.subr.mxu0 %v4471
        %v4473 = vand.u32 %v4009, 4294901760
        %4474 = vmatpush1.msra.mxu0 %v4473
        %v4475 = vand.u32 %v4008, 4294901760
        %4476 = vmatprep.subr.mxu0 %v4475
        %v4477 = vand.u32 %v4007, 4294901760
        %4478 = vmatpush1.msra.mxu0 %v4477
        %v4479 = vand.u32 %v4006, 4294901760
        %4480 = vmatprep.subr.mxu0 %v4479
        %v4481 = vand.u32 %v4005, 4294901760
        %4482 = vmatpush1.msra.mxu0 %v4481
        %v4483 = vand.u32 %v3946, 4294901760
        %4484 = vmatprep.subr.mxu0 %v4483
        %v4485 = vand.u32 %v3945, 4294901760
        %4486 = vmatpush1.msra.mxu0 %v4485
        %v4487 = vand.u32 %v3944, 4294901760
        %4488 = vmatprep.subr.mxu0 %v4487
        %v4489 = vand.u32 %v3943, 4294901760
        %4490 = vmatpush1.msra.mxu0 %v4489
        %v4491 = vand.u32 %v3942, 4294901760
        %4492 = vmatprep.subr.mxu0 %v4491
        %v4493 = vand.u32 %v3941, 4294901760
        %4494 = vmatpush1.msra.mxu0 %v4493
        %v4495 = vand.u32 %v3940, 4294901760
        %4496 = vmatprep.subr.mxu0 %v4495
        %v4497 = vand.u32 %v3939, 4294901760
        %4498 = vmatpush1.msra.mxu0 %v4497
        %v4499 = vand.u32 %v3980, 4294901760
        %4500 = vmatprep.subr.mxu0 %v4499
        %v4501 = vand.u32 %v3979, 4294901760
        %4502 = vmatpush1.msra.mxu0 %v4501
        %v4503 = vand.u32 %v3978, 4294901760
        %4504 = vmatprep.subr.mxu0 %v4503
        %v4505 = vand.u32 %v3977, 4294901760
        %4506 = vmatpush1.msra.mxu0 %v4505
        %v4507 = vand.u32 %v3976, 4294901760
        %4508 = vmatprep.subr.mxu0 %v4507
        %v4509 = vand.u32 %v3975, 4294901760
        %4510 = vmatpush1.msra.mxu0 %v4509
        %v4511 = vand.u32 %v3974, 4294901760
        %4512 = vmatprep.subr.mxu0 %v4511
        %v4513 = vand.u32 %v3973, 4294901760
        %4514 = vmatpush1.msra.mxu0 %v4513
        %4515 = vmatprep.subr.mxu0 0.0
        %4516 = vmatpush2.msra.mxu0 0.0
        %4517 = vmatprep.subr.mxu0 0.0
        %4518 = vmatpush2.msra.mxu0 0.0
        %4519 = vmatprep.subr.mxu0 0.0
        %4520 = vmatpush2.msra.mxu0 0.0
        %4521 = vmatprep.subr.mxu0 0.0
        %4522 = vmatpush2.msra.mxu0 0.0
        %4523 = vmatprep.subr.mxu0 0.0
        %4524 = vmatpush2.msra.mxu0 0.0
        %4525 = vmatprep.subr.mxu0 0.0
        %4526 = vmatpush2.msra.mxu0 0.0
        %4527 = vmatprep.subr.mxu0 0.0
        %4528 = vmatpush2.msra.mxu0 0.0
        %4529 = vmatprep.subr.mxu0 0.0
        %4530 = vmatpush2.msra.mxu0 0.0
        %4531 = vmatprep.subr.mxu0 0.0
        %4532 = vmatpush2.msra.mxu0 0.0
        %4533 = vmatprep.subr.mxu0 0.0
        %4534 = vmatpush2.msra.mxu0 0.0
        %4535 = vmatprep.subr.mxu0 0.0
        %4536 = vmatpush2.msra.mxu0 0.0
        %4537 = vmatprep.subr.mxu0 0.0
        %4538 = vmatpush2.msra.mxu0 0.0
        %4539 = vmatprep.subr.mxu0 0.0
        %4540 = vmatpush2.msra.mxu0 0.0
        %4541 = vmatprep.subr.mxu0 0.0
        %4542 = vmatpush2.msra.mxu0 0.0
        %4543 = vmatprep.subr.mxu0 0.0
        %4544 = vmatpush2.msra.mxu0 0.0
        %4545 = vmatprep.subr.mxu0 0.0
        %4546 = vmatpush2.msra.mxu0 0.0
        %4547 = vmatprep.mubr.f32.mxu0 0.0
        %v4548 = vand.u32 %v4015, 4294901760
        %v4549 = vsub.f32 %v4015, %v4548
        %v4550 = vand.u32 %v4549, 4294901760
        %4551 = vmatmul.mubr.f32.gmra.mxu0 %v4550
        %v4552 = vpop.f32.mrf.mxu0
        %v4553 = vadd.f32 %v4447, %v4552
        %v4554 = vpop.f32.mrf.mxu0
        %v4555 = vadd.f32 %v4449, %v4554
        %4556 = vmatprep.mubr.f32.mxu0 0.0
        %v4557 = vand.u32 %v4018, 4294901760
        %v4558 = vsub.f32 %v4018, %v4557
        %v4559 = vand.u32 %v4558, 4294901760
        %4560 = vmatmul.mubr.f32.gmra.mxu0 %v4559
        %v4561 = vpop.f32.mrf.mxu0
        %v4562 = vadd.f32 %v4455, %v4561
        %v4563 = vpop.f32.mrf.mxu0
        %v4564 = vadd.f32 %v4457, %v4563
        %4565 = vdwg.mxu0
        %4566 = vmatprep.subr.mxu0 0.0
        %4567 = vmatpush1.msra.mxu0 0.0
        %4568 = vmatprep.subr.mxu0 0.0
        %4569 = vmatpush1.msra.mxu0 0.0
        %4570 = vmatprep.subr.mxu0 0.0
        %4571 = vmatpush1.msra.mxu0 0.0
        %4572 = vmatprep.subr.mxu0 0.0
        %4573 = vmatpush1.msra.mxu0 0.0
        %v4574 = vand.u32 %v4012, 4294901760
        %v4575 = vsub.f32 %v4012, %v4574
        %v4576 = vand.u32 %v4575, 4294901760
        %4577 = vmatprep.subr.mxu0 %v4576
        %v4578 = vand.u32 %v4011, 4294901760
        %v4579 = vsub.f32 %v4011, %v4578
        %v4580 = vand.u32 %v4579, 4294901760
        %4581 = vmatpush1.msra.mxu0 %v4580
        %v4582 = vand.u32 %v4010, 4294901760
        %v4583 = vsub.f32 %v4010, %v4582
        %v4584 = vand.u32 %v4583, 4294901760
        %4585 = vmatprep.subr.mxu0 %v4584
        %v4586 = vand.u32 %v4009, 4294901760
        %v4587 = vsub.f32 %v4009, %v4586
        %v4588 = vand.u32 %v4587, 4294901760
        %4589 = vmatpush1.msra.mxu0 %v4588
        %v4590 = vand.u32 %v4008, 4294901760
        %v4591 = vsub.f32 %v4008, %v4590
        %v4592 = vand.u32 %v4591, 4294901760
        %4593 = vmatprep.subr.mxu0 %v4592
        %v4594 = vand.u32 %v4007, 4294901760
        %v4595 = vsub.f32 %v4007, %v4594
        %v4596 = vand.u32 %v4595, 4294901760
        %4597 = vmatpush1.msra.mxu0 %v4596
        %v4598 = vand.u32 %v4006, 4294901760
        %v4599 = vsub.f32 %v4006, %v4598
        %v4600 = vand.u32 %v4599, 4294901760
        %4601 = vmatprep.subr.mxu0 %v4600
        %v4602 = vand.u32 %v4005, 4294901760
        %v4603 = vsub.f32 %v4005, %v4602
        %v4604 = vand.u32 %v4603, 4294901760
        %4605 = vmatpush1.msra.mxu0 %v4604
        %v4606 = vand.u32 %v3946, 4294901760
        %v4607 = vsub.f32 %v3946, %v4606
        %v4608 = vand.u32 %v4607, 4294901760
        %4609 = vmatprep.subr.mxu0 %v4608
        %v4610 = vand.u32 %v3945, 4294901760
        %v4611 = vsub.f32 %v3945, %v4610
        %v4612 = vand.u32 %v4611, 4294901760
        %4613 = vmatpush1.msra.mxu0 %v4612
        %v4614 = vand.u32 %v3944, 4294901760
        %v4615 = vsub.f32 %v3944, %v4614
        %v4616 = vand.u32 %v4615, 4294901760
        %4617 = vmatprep.subr.mxu0 %v4616
        %v4618 = vand.u32 %v3943, 4294901760
        %v4619 = vsub.f32 %v3943, %v4618
        %v4620 = vand.u32 %v4619, 4294901760
        %4621 = vmatpush1.msra.mxu0 %v4620
        %v4622 = vand.u32 %v3942, 4294901760
        %v4623 = vsub.f32 %v3942, %v4622
        %v4624 = vand.u32 %v4623, 4294901760
        %4625 = vmatprep.subr.mxu0 %v4624
        %v4626 = vand.u32 %v3941, 4294901760
        %v4627 = vsub.f32 %v3941, %v4626
        %v4628 = vand.u32 %v4627, 4294901760
        %4629 = vmatpush1.msra.mxu0 %v4628
        %v4630 = vand.u32 %v3940, 4294901760
        %v4631 = vsub.f32 %v3940, %v4630
        %v4632 = vand.u32 %v4631, 4294901760
        %4633 = vmatprep.subr.mxu0 %v4632
        %v4634 = vand.u32 %v3939, 4294901760
        %v4635 = vsub.f32 %v3939, %v4634
        %v4636 = vand.u32 %v4635, 4294901760
        %4637 = vmatpush1.msra.mxu0 %v4636
        %v4638 = vand.u32 %v3980, 4294901760
        %v4639 = vsub.f32 %v3980, %v4638
        %v4640 = vand.u32 %v4639, 4294901760
        %4641 = vmatprep.subr.mxu0 %v4640
        %v4642 = vand.u32 %v3979, 4294901760
        %v4643 = vsub.f32 %v3979, %v4642
        %v4644 = vand.u32 %v4643, 4294901760
        %4645 = vmatpush1.msra.mxu0 %v4644
        %v4646 = vand.u32 %v3978, 4294901760
        %v4647 = vsub.f32 %v3978, %v4646
        %v4648 = vand.u32 %v4647, 4294901760
        %4649 = vmatprep.subr.mxu0 %v4648
        %v4650 = vand.u32 %v3977, 4294901760
        %v4651 = vsub.f32 %v3977, %v4650
        %v4652 = vand.u32 %v4651, 4294901760
        %4653 = vmatpush1.msra.mxu0 %v4652
        %v4654 = vand.u32 %v3976, 4294901760
        %v4655 = vsub.f32 %v3976, %v4654
        %v4656 = vand.u32 %v4655, 4294901760
        %4657 = vmatprep.subr.mxu0 %v4656
        %v4658 = vand.u32 %v3975, 4294901760
        %v4659 = vsub.f32 %v3975, %v4658
        %v4660 = vand.u32 %v4659, 4294901760
        %4661 = vmatpush1.msra.mxu0 %v4660
        %v4662 = vand.u32 %v3974, 4294901760
        %v4663 = vsub.f32 %v3974, %v4662
        %v4664 = vand.u32 %v4663, 4294901760
        %4665 = vmatprep.subr.mxu0 %v4664
        %v4666 = vand.u32 %v3973, 4294901760
        %v4667 = vsub.f32 %v3973, %v4666
        %v4668 = vand.u32 %v4667, 4294901760
        %4669 = vmatpush1.msra.mxu0 %v4668
        %4670 = vmatprep.subr.mxu0 0.0
        %4671 = vmatpush2.msra.mxu0 0.0
        %4672 = vmatprep.subr.mxu0 0.0
        %4673 = vmatpush2.msra.mxu0 0.0
        %4674 = vmatprep.subr.mxu0 0.0
        %4675 = vmatpush2.msra.mxu0 0.0
        %4676 = vmatprep.subr.mxu0 0.0
        %4677 = vmatpush2.msra.mxu0 0.0
        %4678 = vmatprep.subr.mxu0 0.0
        %4679 = vmatpush2.msra.mxu0 0.0
        %4680 = vmatprep.subr.mxu0 0.0
        %4681 = vmatpush2.msra.mxu0 0.0
        %4682 = vmatprep.subr.mxu0 0.0
        %4683 = vmatpush2.msra.mxu0 0.0
        %4684 = vmatprep.subr.mxu0 0.0
        %4685 = vmatpush2.msra.mxu0 0.0
        %4686 = vmatprep.subr.mxu0 0.0
        %4687 = vmatpush2.msra.mxu0 0.0
        %4688 = vmatprep.subr.mxu0 0.0
        %4689 = vmatpush2.msra.mxu0 0.0
        %4690 = vmatprep.subr.mxu0 0.0
        %4691 = vmatpush2.msra.mxu0 0.0
        %4692 = vmatprep.subr.mxu0 0.0
        %4693 = vmatpush2.msra.mxu0 0.0
        %4694 = vmatprep.subr.mxu0 0.0
        %4695 = vmatpush2.msra.mxu0 0.0
        %4696 = vmatprep.subr.mxu0 0.0
        %4697 = vmatpush2.msra.mxu0 0.0
        %4698 = vmatprep.subr.mxu0 0.0
        %4699 = vmatpush2.msra.mxu0 0.0
        %4700 = vmatprep.subr.mxu0 0.0
        %4701 = vmatpush2.msra.mxu0 0.0
        %4702 = vmatprep.mubr.f32.mxu0 0.0
        %v4703 = vand.u32 %v4015, 4294901760
        %4704 = vmatmul.mubr.f32.gmra.mxu0 %v4703
        %v4705 = vpop.f32.mrf.mxu0
        %v4706 = vadd.f32 %v4553, %v4705
        %v4707 = vpop.f32.mrf.mxu0
        %v4708 = vadd.f32 %v4555, %v4707
        %4709 = vmatprep.mubr.f32.mxu0 0.0
        %v4710 = vand.u32 %v4018, 4294901760
        %4711 = vmatmul.mubr.f32.gmra.mxu0 %v4710
        %v4712 = vpop.f32.mrf.mxu0
        %v4713 = vadd.f32 %v4562, %v4712
        %v4714 = vpop.f32.mrf.mxu0
        %v4715 = vadd.f32 %v4564, %v4714
        %4716 = vdwg.mxu0
        %4717 = vmatprep.subr.mxu0 0.0
        %4718 = vmatpush1.msra.mxu0 0.0
        %4719 = vmatprep.subr.mxu0 0.0
        %4720 = vmatpush1.msra.mxu0 0.0
        %4721 = vmatprep.subr.mxu0 0.0
        %4722 = vmatpush1.msra.mxu0 0.0
        %4723 = vmatprep.subr.mxu0 0.0
        %4724 = vmatpush1.msra.mxu0 0.0
        %v4725 = vand.u32 %v4012, 4294901760
        %4726 = vmatprep.subr.mxu0 %v4725
        %v4727 = vand.u32 %v4011, 4294901760
        %4728 = vmatpush1.msra.mxu0 %v4727
        %v4729 = vand.u32 %v4010, 4294901760
        %4730 = vmatprep.subr.mxu0 %v4729
        %v4731 = vand.u32 %v4009, 4294901760
        %4732 = vmatpush1.msra.mxu0 %v4731
        %v4733 = vand.u32 %v4008, 4294901760
        %4734 = vmatprep.subr.mxu0 %v4733
        %v4735 = vand.u32 %v4007, 4294901760
        %4736 = vmatpush1.msra.mxu0 %v4735
        %v4737 = vand.u32 %v4006, 4294901760
        %4738 = vmatprep.subr.mxu0 %v4737
        %v4739 = vand.u32 %v4005, 4294901760
        %4740 = vmatpush1.msra.mxu0 %v4739
        %v4741 = vand.u32 %v3946, 4294901760
        %4742 = vmatprep.subr.mxu0 %v4741
        %v4743 = vand.u32 %v3945, 4294901760
        %4744 = vmatpush1.msra.mxu0 %v4743
        %v4745 = vand.u32 %v3944, 4294901760
        %4746 = vmatprep.subr.mxu0 %v4745
        %v4747 = vand.u32 %v3943, 4294901760
        %4748 = vmatpush1.msra.mxu0 %v4747
        %v4749 = vand.u32 %v3942, 4294901760
        %4750 = vmatprep.subr.mxu0 %v4749
        %v4751 = vand.u32 %v3941, 4294901760
        %4752 = vmatpush1.msra.mxu0 %v4751
        %v4753 = vand.u32 %v3940, 4294901760
        %4754 = vmatprep.subr.mxu0 %v4753
        %v4755 = vand.u32 %v3939, 4294901760
        %4756 = vmatpush1.msra.mxu0 %v4755
        %v4757 = vand.u32 %v3980, 4294901760
        %4758 = vmatprep.subr.mxu0 %v4757
        %v4759 = vand.u32 %v3979, 4294901760
        %4760 = vmatpush1.msra.mxu0 %v4759
        %v4761 = vand.u32 %v3978, 4294901760
        %4762 = vmatprep.subr.mxu0 %v4761
        %v4763 = vand.u32 %v3977, 4294901760
        %4764 = vmatpush1.msra.mxu0 %v4763
        %v4765 = vand.u32 %v3976, 4294901760
        %4766 = vmatprep.subr.mxu0 %v4765
        %v4767 = vand.u32 %v3975, 4294901760
        %4768 = vmatpush1.msra.mxu0 %v4767
        %v4769 = vand.u32 %v3974, 4294901760
        %4770 = vmatprep.subr.mxu0 %v4769
        %v4771 = vand.u32 %v3973, 4294901760
        %4772 = vmatpush1.msra.mxu0 %v4771
        %4773 = vmatprep.subr.mxu0 0.0
        %4774 = vmatpush2.msra.mxu0 0.0
        %4775 = vmatprep.subr.mxu0 0.0
        %4776 = vmatpush2.msra.mxu0 0.0
        %4777 = vmatprep.subr.mxu0 0.0
        %4778 = vmatpush2.msra.mxu0 0.0
        %4779 = vmatprep.subr.mxu0 0.0
        %4780 = vmatpush2.msra.mxu0 0.0
        %4781 = vmatprep.subr.mxu0 0.0
        %4782 = vmatpush2.msra.mxu0 0.0
        %4783 = vmatprep.subr.mxu0 0.0
        %4784 = vmatpush2.msra.mxu0 0.0
        %4785 = vmatprep.subr.mxu0 0.0
        %4786 = vmatpush2.msra.mxu0 0.0
        %4787 = vmatprep.subr.mxu0 0.0
        %4788 = vmatpush2.msra.mxu0 0.0
        %4789 = vmatprep.subr.mxu0 0.0
        %4790 = vmatpush2.msra.mxu0 0.0
        %4791 = vmatprep.subr.mxu0 0.0
        %4792 = vmatpush2.msra.mxu0 0.0
        %4793 = vmatprep.subr.mxu0 0.0
        %4794 = vmatpush2.msra.mxu0 0.0
        %4795 = vmatprep.subr.mxu0 0.0
        %4796 = vmatpush2.msra.mxu0 0.0
        %4797 = vmatprep.subr.mxu0 0.0
        %4798 = vmatpush2.msra.mxu0 0.0
        %4799 = vmatprep.subr.mxu0 0.0
        %4800 = vmatpush2.msra.mxu0 0.0
        %4801 = vmatprep.subr.mxu0 0.0
        %4802 = vmatpush2.msra.mxu0 0.0
        %4803 = vmatprep.subr.mxu0 0.0
        %4804 = vmatpush2.msra.mxu0 0.0
        %4805 = vmatprep.mubr.f32.mxu0 0.0
        %v4806 = vand.u32 %v4015, 4294901760
        %4807 = vmatmul.mubr.f32.gmra.mxu0 %v4806
        %v4808 = vpop.f32.mrf.mxu0
        %v4809 = vadd.f32 %v4706, %v4808
        %v4810 = vpop.f32.mrf.mxu0
        %v4811 = vadd.f32 %v4708, %v4810
        %4812 = vmatprep.mubr.f32.mxu0 0.0
        %v4813 = vand.u32 %v4018, 4294901760
        %4814 = vmatmul.mubr.f32.gmra.mxu0 %v4813
        %v4815 = vpop.f32.mrf.mxu0
        %v4816 = vadd.f32 %v4713, %v4815
        %v4817 = vpop.f32.mrf.mxu0
        %v4818 = vadd.f32 %v4715, %v4817
        %4819 = vdwg.mxu0
        %4821 = vset.pattern.permute.xlu0 0
        %4822 = vperm.xlu0 %4821, %v2447
        %v4823 = vpop.permute.xlu0 %4822
        %4826 = vset.pattern.permute.xlu0 0
        %4827 = vperm.xlu0 %4826, %v2448
        %v4828 = vpop.permute.xlu0 %4827
        %v4830 = vmul.f32 %v4809, %v4823
        %v4831 = vmul.f32 %v4811, %v4823
        %v4832 = vmul.f32 %v4816, %v4828
        %v4833 = vmul.f32 %v4818, %v4828
        %4834 = vset.pattern.permute.xlu0 1
        %4835 = vperm.xlu0 %4834, %v2447
        %v4836 = vpop.permute.xlu0 %4835
        %4838 = vset.pattern.permute.xlu0 1
        %4839 = vperm.xlu0 %4838, %v2448
        %v4840 = vpop.permute.xlu0 %4839
        %v4842 = vadd.f32 %v4830, %v4836
        %v4843 = vadd.f32 %v4831, %v4836
        %v4844 = vadd.f32 %v4832, %v4840
        %v4845 = vadd.f32 %v4833, %v4840
        %v4846 = vmax.f32 %v4842, 0.0
        %v4847 = vmax.f32 %v4843, 0.0
        %v4848 = vmax.f32 %v4844, 0.0
        %v4849 = vmax.f32 %v4845, 0.0
        %4850 = vmatprep.subr.mxu0 0.0
        %4851 = vmatpush1.xpose.msra.mxu0 0.0
        %4852 = vmatprep.subr.mxu0 0.0
        %4853 = vmatpush1.xpose.msra.mxu0 0.0
        %4854 = vmatprep.subr.mxu0 0.0
        %4855 = vmatpush1.xpose.msra.mxu0 0.0
        %4856 = vmatprep.subr.mxu0 0.0
        %4857 = vmatpush1.xpose.msra.mxu0 0.0
        %4858 = vmatprep.subr.mxu0 0.0
        %4859 = vmatpush1.xpose.msra.mxu0 0.0
        %4860 = vmatprep.subr.mxu0 0.0
        %4861 = vmatpush1.xpose.msra.mxu0 0.0
        %4862 = vmatprep.subr.mxu0 0.0
        %4863 = vmatpush1.xpose.msra.mxu0 0.0
        %4864 = vmatprep.subr.mxu0 0.0
        %4865 = vmatpush1.xpose.msra.mxu0 0.0
        %4866 = vmatprep.subr.mxu0 0.0
        %4867 = vmatpush1.xpose.msra.mxu0 0.0
        %4868 = vmatprep.subr.mxu0 0.0
        %4869 = vmatpush1.xpose.msra.mxu0 0.0
        %4870 = vmatprep.subr.mxu0 0.0
        %4871 = vmatpush1.xpose.msra.mxu0 0.0
        %4872 = vmatprep.subr.mxu0 0.0
        %4873 = vmatpush1.xpose.msra.mxu0 0.0
        %4874 = vmatprep.subr.mxu0 0.0
        %4875 = vmatpush1.xpose.msra.mxu0 0.0
        %4876 = vmatprep.subr.mxu0 0.0
        %4877 = vmatpush1.xpose.msra.mxu0 0.0
        %v4878 = vand.u32 %v4849, 4294901760
        %4879 = vmatprep.subr.mxu0 %v4878
        %v4880 = vand.u32 %v4848, 4294901760
        %4881 = vmatpush1.xpose.msra.mxu0 %v4880
        %v4882 = vand.u32 %v4847, 4294901760
        %4883 = vmatprep.subr.mxu0 %v4882
        %v4884 = vand.u32 %v4846, 4294901760
        %4885 = vmatpush1.xpose.msra.mxu0 %v4884
        %4886 = vmatprep.subr.mxu0 0.0
        %4887 = vmatpush2.xpose.msra.mxu0 0.0
        %4888 = vmatprep.subr.mxu0 0.0
        %4889 = vmatpush2.xpose.msra.mxu0 0.0
        %4890 = vmatprep.subr.mxu0 0.0
        %4891 = vmatpush2.xpose.msra.mxu0 0.0
        %4892 = vmatprep.subr.mxu0 0.0
        %4893 = vmatpush2.xpose.msra.mxu0 0.0
        %4894 = vmatprep.subr.mxu0 0.0
        %4895 = vmatpush2.xpose.msra.mxu0 0.0
        %4896 = vmatprep.subr.mxu0 0.0
        %4897 = vmatpush2.xpose.msra.mxu0 0.0
        %4898 = vmatprep.subr.mxu0 0.0
        %4899 = vmatpush2.xpose.msra.mxu0 0.0
        %4900 = vmatprep.subr.mxu0 0.0
        %4901 = vmatpush2.xpose.msra.mxu0 0.0
        %4902 = vmatprep.subr.mxu0 0.0
        %4903 = vmatpush2.xpose.msra.mxu0 0.0
        %4904 = vmatprep.subr.mxu0 0.0
        %4905 = vmatpush2.xpose.msra.mxu0 0.0
        %4906 = vmatprep.subr.mxu0 0.0
        %4907 = vmatpush2.xpose.msra.mxu0 0.0
        %4908 = vmatprep.subr.mxu0 0.0
        %4909 = vmatpush2.xpose.msra.mxu0 0.0
        %4910 = vmatprep.subr.mxu0 0.0
        %4911 = vmatpush2.xpose.msra.mxu0 0.0
        %4912 = vmatprep.subr.mxu0 0.0
        %4913 = vmatpush2.xpose.msra.mxu0 0.0
        %4914 = vmatprep.subr.mxu0 0.0
        %4915 = vmatpush2.xpose.msra.mxu0 0.0
        %4916 = vmatprep.subr.mxu0 0.0
        %4917 = vmatpush2.xpose.msra.mxu0 0.0
        %v4918 = vand.u32 %v511, 4294901760
        %v4919 = vsub.f32 %v511, %v4918
        %v4920 = vand.u32 %v4919, 4294901760
        %v4921 = vsub.f32 %v4919, %v4920
        %v4922 = vand.u32 %v4921, 4294901760
        %4923 = vmatprep.mubr.f32.mxu0 %v4922
        %v4924 = vand.u32 %v510, 4294901760
        %v4925 = vsub.f32 %v510, %v4924
        %v4926 = vand.u32 %v4925, 4294901760
        %v4927 = vsub.f32 %v4925, %v4926
        %v4928 = vand.u32 %v4927, 4294901760
        %4929 = vmatmul.mubr.f32.gmra.mxu0 %v4928
        %v4930 = vpop.f32.mrf.mxu0
        %v4931 = vadd.f32 0.0, %v4930
        %v4932 = vpop.f32.mrf.mxu0
        %4933 = vdwg.mxu0
        %4934 = vmatprep.subr.mxu0 0.0
        %4935 = vmatpush1.xpose.msra.mxu0 0.0
        %4936 = vmatprep.subr.mxu0 0.0
        %4937 = vmatpush1.xpose.msra.mxu0 0.0
        %4938 = vmatprep.subr.mxu0 0.0
        %4939 = vmatpush1.xpose.msra.mxu0 0.0
        %4940 = vmatprep.subr.mxu0 0.0
        %4941 = vmatpush1.xpose.msra.mxu0 0.0
        %4942 = vmatprep.subr.mxu0 0.0
        %4943 = vmatpush1.xpose.msra.mxu0 0.0
        %4944 = vmatprep.subr.mxu0 0.0
        %4945 = vmatpush1.xpose.msra.mxu0 0.0
        %4946 = vmatprep.subr.mxu0 0.0
        %4947 = vmatpush1.xpose.msra.mxu0 0.0
        %4948 = vmatprep.subr.mxu0 0.0
        %4949 = vmatpush1.xpose.msra.mxu0 0.0
        %4950 = vmatprep.subr.mxu0 0.0
        %4951 = vmatpush1.xpose.msra.mxu0 0.0
        %4952 = vmatprep.subr.mxu0 0.0
        %4953 = vmatpush1.xpose.msra.mxu0 0.0
        %4954 = vmatprep.subr.mxu0 0.0
        %4955 = vmatpush1.xpose.msra.mxu0 0.0
        %4956 = vmatprep.subr.mxu0 0.0
        %4957 = vmatpush1.xpose.msra.mxu0 0.0
        %4958 = vmatprep.subr.mxu0 0.0
        %4959 = vmatpush1.xpose.msra.mxu0 0.0
        %4960 = vmatprep.subr.mxu0 0.0
        %4961 = vmatpush1.xpose.msra.mxu0 0.0
        %v4962 = vand.u32 %v4849, 4294901760
        %v4963 = vsub.f32 %v4849, %v4962
        %v4964 = vand.u32 %v4963, 4294901760
        %v4965 = vsub.f32 %v4963, %v4964
        %v4966 = vand.u32 %v4965, 4294901760
        %4967 = vmatprep.subr.mxu0 %v4966
        %v4968 = vand.u32 %v4848, 4294901760
        %v4969 = vsub.f32 %v4848, %v4968
        %v4970 = vand.u32 %v4969, 4294901760
        %v4971 = vsub.f32 %v4969, %v4970
        %v4972 = vand.u32 %v4971, 4294901760
        %4973 = vmatpush1.xpose.msra.mxu0 %v4972
        %v4974 = vand.u32 %v4847, 4294901760
        %v4975 = vsub.f32 %v4847, %v4974
        %v4976 = vand.u32 %v4975, 4294901760
        %v4977 = vsub.f32 %v4975, %v4976
        %v4978 = vand.u32 %v4977, 4294901760
        %4979 = vmatprep.subr.mxu0 %v4978
        %v4980 = vand.u32 %v4846, 4294901760
        %v4981 = vsub.f32 %v4846, %v4980
        %v4982 = vand.u32 %v4981, 4294901760
        %v4983 = vsub.f32 %v4981, %v4982
        %v4984 = vand.u32 %v4983, 4294901760
        %4985 = vmatpush1.xpose.msra.mxu0 %v4984
        %4986 = vmatprep.subr.mxu0 0.0
        %4987 = vmatpush2.xpose.msra.mxu0 0.0
        %4988 = vmatprep.subr.mxu0 0.0
        %4989 = vmatpush2.xpose.msra.mxu0 0.0
        %4990 = vmatprep.subr.mxu0 0.0
        %4991 = vmatpush2.xpose.msra.mxu0 0.0
        %4992 = vmatprep.subr.mxu0 0.0
        %4993 = vmatpush2.xpose.msra.mxu0 0.0
        %4994 = vmatprep.subr.mxu0 0.0
        %4995 = vmatpush2.xpose.msra.mxu0 0.0
        %4996 = vmatprep.subr.mxu0 0.0
        %4997 = vmatpush2.xpose.msra.mxu0 0.0
        %4998 = vmatprep.subr.mxu0 0.0
        %4999 = vmatpush2.xpose.msra.mxu0 0.0
        %5000 = vmatprep.subr.mxu0 0.0
        %5001 = vmatpush2.xpose.msra.mxu0 0.0
        %5002 = vmatprep.subr.mxu0 0.0
        %5003 = vmatpush2.xpose.msra.mxu0 0.0
        %5004 = vmatprep.subr.mxu0 0.0
        %5005 = vmatpush2.xpose.msra.mxu0 0.0
        %5006 = vmatprep.subr.mxu0 0.0
        %5007 = vmatpush2.xpose.msra.mxu0 0.0
        %5008 = vmatprep.subr.mxu0 0.0
        %5009 = vmatpush2.xpose.msra.mxu0 0.0
        %5010 = vmatprep.subr.mxu0 0.0
        %5011 = vmatpush2.xpose.msra.mxu0 0.0
        %5012 = vmatprep.subr.mxu0 0.0
        %5013 = vmatpush2.xpose.msra.mxu0 0.0
        %5014 = vmatprep.subr.mxu0 0.0
        %5015 = vmatpush2.xpose.msra.mxu0 0.0
        %5016 = vmatprep.subr.mxu0 0.0
        %5017 = vmatpush2.xpose.msra.mxu0 0.0
        %v5018 = vand.u32 %v511, 4294901760
        %5019 = vmatprep.mubr.f32.mxu0 %v5018
        %v5020 = vand.u32 %v510, 4294901760
        %5021 = vmatmul.mubr.f32.gmra.mxu0 %v5020
        %v5022 = vpop.f32.mrf.mxu0
        %v5023 = vadd.f32 %v4931, %v5022
        %v5024 = vpop.f32.mrf.mxu0
        %5025 = vdwg.mxu0
        %5026 = vmatprep.subr.mxu0 0.0
        %5027 = vmatpush1.xpose.msra.mxu0 0.0
        %5028 = vmatprep.subr.mxu0 0.0
        %5029 = vmatpush1.xpose.msra.mxu0 0.0
        %5030 = vmatprep.subr.mxu0 0.0
        %5031 = vmatpush1.xpose.msra.mxu0 0.0
        %5032 = vmatprep.subr.mxu0 0.0
        %5033 = vmatpush1.xpose.msra.mxu0 0.0
        %5034 = vmatprep.subr.mxu0 0.0
        %5035 = vmatpush1.xpose.msra.mxu0 0.0
        %5036 = vmatprep.subr.mxu0 0.0
        %5037 = vmatpush1.xpose.msra.mxu0 0.0
        %5038 = vmatprep.subr.mxu0 0.0
        %5039 = vmatpush1.xpose.msra.mxu0 0.0
        %5040 = vmatprep.subr.mxu0 0.0
        %5041 = vmatpush1.xpose.msra.mxu0 0.0
        %5042 = vmatprep.subr.mxu0 0.0
        %5043 = vmatpush1.xpose.msra.mxu0 0.0
        %5044 = vmatprep.subr.mxu0 0.0
        %5045 = vmatpush1.xpose.msra.mxu0 0.0
        %5046 = vmatprep.subr.mxu0 0.0
        %5047 = vmatpush1.xpose.msra.mxu0 0.0
        %5048 = vmatprep.subr.mxu0 0.0
        %5049 = vmatpush1.xpose.msra.mxu0 0.0
        %5050 = vmatprep.subr.mxu0 0.0
        %5051 = vmatpush1.xpose.msra.mxu0 0.0
        %5052 = vmatprep.subr.mxu0 0.0
        %5053 = vmatpush1.xpose.msra.mxu0 0.0
        %v5054 = vand.u32 %v4849, 4294901760
        %v5055 = vsub.f32 %v4849, %v5054
        %5056 = vmatprep.subr.mxu0 %v5055
        %v5057 = vand.u32 %v4848, 4294901760
        %v5058 = vsub.f32 %v4848, %v5057
        %5059 = vmatpush1.xpose.msra.mxu0 %v5058
        %v5060 = vand.u32 %v4847, 4294901760
        %v5061 = vsub.f32 %v4847, %v5060
        %5062 = vmatprep.subr.mxu0 %v5061
        %v5063 = vand.u32 %v4846, 4294901760
        %v5064 = vsub.f32 %v4846, %v5063
        %5065 = vmatpush1.xpose.msra.mxu0 %v5064
        %5066 = vmatprep.subr.mxu0 0.0
        %5067 = vmatpush2.xpose.msra.mxu0 0.0
        %5068 = vmatprep.subr.mxu0 0.0
        %5069 = vmatpush2.xpose.msra.mxu0 0.0
        %5070 = vmatprep.subr.mxu0 0.0
        %5071 = vmatpush2.xpose.msra.mxu0 0.0
        %5072 = vmatprep.subr.mxu0 0.0
        %5073 = vmatpush2.xpose.msra.mxu0 0.0
        %5074 = vmatprep.subr.mxu0 0.0
        %5075 = vmatpush2.xpose.msra.mxu0 0.0
        %5076 = vmatprep.subr.mxu0 0.0
        %5077 = vmatpush2.xpose.msra.mxu0 0.0
        %5078 = vmatprep.subr.mxu0 0.0
        %5079 = vmatpush2.xpose.msra.mxu0 0.0
        %5080 = vmatprep.subr.mxu0 0.0
        %5081 = vmatpush2.xpose.msra.mxu0 0.0
        %5082 = vmatprep.subr.mxu0 0.0
        %5083 = vmatpush2.xpose.msra.mxu0 0.0
        %5084 = vmatprep.subr.mxu0 0.0
        %5085 = vmatpush2.xpose.msra.mxu0 0.0
        %5086 = vmatprep.subr.mxu0 0.0
        %5087 = vmatpush2.xpose.msra.mxu0 0.0
        %5088 = vmatprep.subr.mxu0 0.0
        %5089 = vmatpush2.xpose.msra.mxu0 0.0
        %5090 = vmatprep.subr.mxu0 0.0
        %5091 = vmatpush2.xpose.msra.mxu0 0.0
        %5092 = vmatprep.subr.mxu0 0.0
        %5093 = vmatpush2.xpose.msra.mxu0 0.0
        %5094 = vmatprep.subr.mxu0 0.0
        %5095 = vmatpush2.xpose.msra.mxu0 0.0
        %5096 = vmatprep.subr.mxu0 0.0
        %5097 = vmatpush2.xpose.msra.mxu0 0.0
        %v5098 = vand.u32 %v511, 4294901760
        %v5099 = vsub.f32 %v511, %v5098
        %5100 = vmatprep.mubr.f32.mxu0 %v5099
        %v5101 = vand.u32 %v510, 4294901760
        %v5102 = vsub.f32 %v510, %v5101
        %5103 = vmatmul.mubr.f32.gmra.mxu0 %v5102
        %v5104 = vpop.f32.mrf.mxu0
        %v5105 = vadd.f32 %v5023, %v5104
        %v5106 = vpop.f32.mrf.mxu0
        %5107 = vdwg.mxu0
        %5108 = vmatprep.subr.mxu0 0.0
        %5109 = vmatpush1.xpose.msra.mxu0 0.0
        %5110 = vmatprep.subr.mxu0 0.0
        %5111 = vmatpush1.xpose.msra.mxu0 0.0
        %5112 = vmatprep.subr.mxu0 0.0
        %5113 = vmatpush1.xpose.msra.mxu0 0.0
        %5114 = vmatprep.subr.mxu0 0.0
        %5115 = vmatpush1.xpose.msra.mxu0 0.0
        %5116 = vmatprep.subr.mxu0 0.0
        %5117 = vmatpush1.xpose.msra.mxu0 0.0
        %5118 = vmatprep.subr.mxu0 0.0
        %5119 = vmatpush1.xpose.msra.mxu0 0.0
        %5120 = vmatprep.subr.mxu0 0.0
        %5121 = vmatpush1.xpose.msra.mxu0 0.0
        %5122 = vmatprep.subr.mxu0 0.0
        %5123 = vmatpush1.xpose.msra.mxu0 0.0
        %5124 = vmatprep.subr.mxu0 0.0
        %5125 = vmatpush1.xpose.msra.mxu0 0.0
        %5126 = vmatprep.subr.mxu0 0.0
        %5127 = vmatpush1.xpose.msra.mxu0 0.0
        %5128 = vmatprep.subr.mxu0 0.0
        %5129 = vmatpush1.xpose.msra.mxu0 0.0
        %5130 = vmatprep.subr.mxu0 0.0
        %5131 = vmatpush1.xpose.msra.mxu0 0.0
        %5132 = vmatprep.subr.mxu0 0.0
        %5133 = vmatpush1.xpose.msra.mxu0 0.0
        %5134 = vmatprep.subr.mxu0 0.0
        %5135 = vmatpush1.xpose.msra.mxu0 0.0
        %v5136 = vand.u32 %v4849, 4294901760
        %5137 = vmatprep.subr.mxu0 %v5136
        %v5138 = vand.u32 %v4848, 4294901760
        %5139 = vmatpush1.xpose.msra.mxu0 %v5138
        %v5140 = vand.u32 %v4847, 4294901760
        %5141 = vmatprep.subr.mxu0 %v5140
        %v5142 = vand.u32 %v4846, 4294901760
        %5143 = vmatpush1.xpose.msra.mxu0 %v5142
        %5144 = vmatprep.subr.mxu0 0.0
        %5145 = vmatpush2.xpose.msra.mxu0 0.0
        %5146 = vmatprep.subr.mxu0 0.0
        %5147 = vmatpush2.xpose.msra.mxu0 0.0
        %5148 = vmatprep.subr.mxu0 0.0
        %5149 = vmatpush2.xpose.msra.mxu0 0.0
        %5150 = vmatprep.subr.mxu0 0.0
        %5151 = vmatpush2.xpose.msra.mxu0 0.0
        %5152 = vmatprep.subr.mxu0 0.0
        %5153 = vmatpush2.xpose.msra.mxu0 0.0
        %5154 = vmatprep.subr.mxu0 0.0
        %5155 = vmatpush2.xpose.msra.mxu0 0.0
        %5156 = vmatprep.subr.mxu0 0.0
        %5157 = vmatpush2.xpose.msra.mxu0 0.0
        %5158 = vmatprep.subr.mxu0 0.0
        %5159 = vmatpush2.xpose.msra.mxu0 0.0
        %5160 = vmatprep.subr.mxu0 0.0
        %5161 = vmatpush2.xpose.msra.mxu0 0.0
        %5162 = vmatprep.subr.mxu0 0.0
        %5163 = vmatpush2.xpose.msra.mxu0 0.0
        %5164 = vmatprep.subr.mxu0 0.0
        %5165 = vmatpush2.xpose.msra.mxu0 0.0
        %5166 = vmatprep.subr.mxu0 0.0
        %5167 = vmatpush2.xpose.msra.mxu0 0.0
        %5168 = vmatprep.subr.mxu0 0.0
        %5169 = vmatpush2.xpose.msra.mxu0 0.0
        %5170 = vmatprep.subr.mxu0 0.0
        %5171 = vmatpush2.xpose.msra.mxu0 0.0
        %5172 = vmatprep.subr.mxu0 0.0
        %5173 = vmatpush2.xpose.msra.mxu0 0.0
        %5174 = vmatprep.subr.mxu0 0.0
        %5175 = vmatpush2.xpose.msra.mxu0 0.0
        %v5176 = vand.u32 %v511, 4294901760
        %v5177 = vsub.f32 %v511, %v5176
        %v5178 = vand.u32 %v5177, 4294901760
        %5179 = vmatprep.mubr.f32.mxu0 %v5178
        %v5180 = vand.u32 %v510, 4294901760
        %v5181 = vsub.f32 %v510, %v5180
        %v5182 = vand.u32 %v5181, 4294901760
        %5183 = vmatmul.mubr.f32.gmra.mxu0 %v5182
        %v5184 = vpop.f32.mrf.mxu0
        %v5185 = vadd.f32 %v5105, %v5184
        %v5186 = vpop.f32.mrf.mxu0
        %5187 = vdwg.mxu0
        %5188 = vmatprep.subr.mxu0 0.0
        %5189 = vmatpush1.xpose.msra.mxu0 0.0
        %5190 = vmatprep.subr.mxu0 0.0
        %5191 = vmatpush1.xpose.msra.mxu0 0.0
        %5192 = vmatprep.subr.mxu0 0.0
        %5193 = vmatpush1.xpose.msra.mxu0 0.0
        %5194 = vmatprep.subr.mxu0 0.0
        %5195 = vmatpush1.xpose.msra.mxu0 0.0
        %5196 = vmatprep.subr.mxu0 0.0
        %5197 = vmatpush1.xpose.msra.mxu0 0.0
        %5198 = vmatprep.subr.mxu0 0.0
        %5199 = vmatpush1.xpose.msra.mxu0 0.0
        %5200 = vmatprep.subr.mxu0 0.0
        %5201 = vmatpush1.xpose.msra.mxu0 0.0
        %5202 = vmatprep.subr.mxu0 0.0
        %5203 = vmatpush1.xpose.msra.mxu0 0.0
        %5204 = vmatprep.subr.mxu0 0.0
        %5205 = vmatpush1.xpose.msra.mxu0 0.0
        %5206 = vmatprep.subr.mxu0 0.0
        %5207 = vmatpush1.xpose.msra.mxu0 0.0
        %5208 = vmatprep.subr.mxu0 0.0
        %5209 = vmatpush1.xpose.msra.mxu0 0.0
        %5210 = vmatprep.subr.mxu0 0.0
        %5211 = vmatpush1.xpose.msra.mxu0 0.0
        %5212 = vmatprep.subr.mxu0 0.0
        %5213 = vmatpush1.xpose.msra.mxu0 0.0
        %5214 = vmatprep.subr.mxu0 0.0
        %5215 = vmatpush1.xpose.msra.mxu0 0.0
        %v5216 = vand.u32 %v4849, 4294901760
        %v5217 = vsub.f32 %v4849, %v5216
        %v5218 = vand.u32 %v5217, 4294901760
        %5219 = vmatprep.subr.mxu0 %v5218
        %v5220 = vand.u32 %v4848, 4294901760
        %v5221 = vsub.f32 %v4848, %v5220
        %v5222 = vand.u32 %v5221, 4294901760
        %5223 = vmatpush1.xpose.msra.mxu0 %v5222
        %v5224 = vand.u32 %v4847, 4294901760
        %v5225 = vsub.f32 %v4847, %v5224
        %v5226 = vand.u32 %v5225, 4294901760
        %5227 = vmatprep.subr.mxu0 %v5226
        %v5228 = vand.u32 %v4846, 4294901760
        %v5229 = vsub.f32 %v4846, %v5228
        %v5230 = vand.u32 %v5229, 4294901760
        %5231 = vmatpush1.xpose.msra.mxu0 %v5230
        %5232 = vmatprep.subr.mxu0 0.0
        %5233 = vmatpush2.xpose.msra.mxu0 0.0
        %5234 = vmatprep.subr.mxu0 0.0
        %5235 = vmatpush2.xpose.msra.mxu0 0.0
        %5236 = vmatprep.subr.mxu0 0.0
        %5237 = vmatpush2.xpose.msra.mxu0 0.0
        %5238 = vmatprep.subr.mxu0 0.0
        %5239 = vmatpush2.xpose.msra.mxu0 0.0
        %5240 = vmatprep.subr.mxu0 0.0
        %5241 = vmatpush2.xpose.msra.mxu0 0.0
        %5242 = vmatprep.subr.mxu0 0.0
        %5243 = vmatpush2.xpose.msra.mxu0 0.0
        %5244 = vmatprep.subr.mxu0 0.0
        %5245 = vmatpush2.xpose.msra.mxu0 0.0
        %5246 = vmatprep.subr.mxu0 0.0
        %5247 = vmatpush2.xpose.msra.mxu0 0.0
        %5248 = vmatprep.subr.mxu0 0.0
        %5249 = vmatpush2.xpose.msra.mxu0 0.0
        %5250 = vmatprep.subr.mxu0 0.0
        %5251 = vmatpush2.xpose.msra.mxu0 0.0
        %5252 = vmatprep.subr.mxu0 0.0
        %5253 = vmatpush2.xpose.msra.mxu0 0.0
        %5254 = vmatprep.subr.mxu0 0.0
        %5255 = vmatpush2.xpose.msra.mxu0 0.0
        %5256 = vmatprep.subr.mxu0 0.0
        %5257 = vmatpush2.xpose.msra.mxu0 0.0
        %5258 = vmatprep.subr.mxu0 0.0
        %5259 = vmatpush2.xpose.msra.mxu0 0.0
        %5260 = vmatprep.subr.mxu0 0.0
        %5261 = vmatpush2.xpose.msra.mxu0 0.0
        %5262 = vmatprep.subr.mxu0 0.0
        %5263 = vmatpush2.xpose.msra.mxu0 0.0
        %v5264 = vand.u32 %v511, 4294901760
        %5265 = vmatprep.mubr.f32.mxu0 %v5264
        %v5266 = vand.u32 %v510, 4294901760
        %5267 = vmatmul.mubr.f32.gmra.mxu0 %v5266
        %v5268 = vpop.f32.mrf.mxu0
        %v5269 = vadd.f32 %v5185, %v5268
        %v5270 = vpop.f32.mrf.mxu0
        %5271 = vdwg.mxu0
        %5272 = vmatprep.subr.mxu0 0.0
        %5273 = vmatpush1.xpose.msra.mxu0 0.0
        %5274 = vmatprep.subr.mxu0 0.0
        %5275 = vmatpush1.xpose.msra.mxu0 0.0
        %5276 = vmatprep.subr.mxu0 0.0
        %5277 = vmatpush1.xpose.msra.mxu0 0.0
        %5278 = vmatprep.subr.mxu0 0.0
        %5279 = vmatpush1.xpose.msra.mxu0 0.0
        %5280 = vmatprep.subr.mxu0 0.0
        %5281 = vmatpush1.xpose.msra.mxu0 0.0
        %5282 = vmatprep.subr.mxu0 0.0
        %5283 = vmatpush1.xpose.msra.mxu0 0.0
        %5284 = vmatprep.subr.mxu0 0.0
        %5285 = vmatpush1.xpose.msra.mxu0 0.0
        %5286 = vmatprep.subr.mxu0 0.0
        %5287 = vmatpush1.xpose.msra.mxu0 0.0
        %5288 = vmatprep.subr.mxu0 0.0
        %5289 = vmatpush1.xpose.msra.mxu0 0.0
        %5290 = vmatprep.subr.mxu0 0.0
        %5291 = vmatpush1.xpose.msra.mxu0 0.0
        %5292 = vmatprep.subr.mxu0 0.0
        %5293 = vmatpush1.xpose.msra.mxu0 0.0
        %5294 = vmatprep.subr.mxu0 0.0
        %5295 = vmatpush1.xpose.msra.mxu0 0.0
        %5296 = vmatprep.subr.mxu0 0.0
        %5297 = vmatpush1.xpose.msra.mxu0 0.0
        %5298 = vmatprep.subr.mxu0 0.0
        %5299 = vmatpush1.xpose.msra.mxu0 0.0
        %v5300 = vand.u32 %v4849, 4294901760
        %5301 = vmatprep.subr.mxu0 %v5300
        %v5302 = vand.u32 %v4848, 4294901760
        %5303 = vmatpush1.xpose.msra.mxu0 %v5302
        %v5304 = vand.u32 %v4847, 4294901760
        %5305 = vmatprep.subr.mxu0 %v5304
        %v5306 = vand.u32 %v4846, 4294901760
        %5307 = vmatpush1.xpose.msra.mxu0 %v5306
        %5308 = vmatprep.subr.mxu0 0.0
        %5309 = vmatpush2.xpose.msra.mxu0 0.0
        %5310 = vmatprep.subr.mxu0 0.0
        %5311 = vmatpush2.xpose.msra.mxu0 0.0
        %5312 = vmatprep.subr.mxu0 0.0
        %5313 = vmatpush2.xpose.msra.mxu0 0.0
        %5314 = vmatprep.subr.mxu0 0.0
        %5315 = vmatpush2.xpose.msra.mxu0 0.0
        %5316 = vmatprep.subr.mxu0 0.0
        %5317 = vmatpush2.xpose.msra.mxu0 0.0
        %5318 = vmatprep.subr.mxu0 0.0
        %5319 = vmatpush2.xpose.msra.mxu0 0.0
        %5320 = vmatprep.subr.mxu0 0.0
        %5321 = vmatpush2.xpose.msra.mxu0 0.0
        %5322 = vmatprep.subr.mxu0 0.0
        %5323 = vmatpush2.xpose.msra.mxu0 0.0
        %5324 = vmatprep.subr.mxu0 0.0
        %5325 = vmatpush2.xpose.msra.mxu0 0.0
        %5326 = vmatprep.subr.mxu0 0.0
        %5327 = vmatpush2.xpose.msra.mxu0 0.0
        %5328 = vmatprep.subr.mxu0 0.0
        %5329 = vmatpush2.xpose.msra.mxu0 0.0
        %5330 = vmatprep.subr.mxu0 0.0
        %5331 = vmatpush2.xpose.msra.mxu0 0.0
        %5332 = vmatprep.subr.mxu0 0.0
        %5333 = vmatpush2.xpose.msra.mxu0 0.0
        %5334 = vmatprep.subr.mxu0 0.0
        %5335 = vmatpush2.xpose.msra.mxu0 0.0
        %5336 = vmatprep.subr.mxu0 0.0
        %5337 = vmatpush2.xpose.msra.mxu0 0.0
        %5338 = vmatprep.subr.mxu0 0.0
        %5339 = vmatpush2.xpose.msra.mxu0 0.0
        %v5340 = vand.u32 %v511, 4294901760
        %5341 = vmatprep.mubr.f32.mxu0 %v5340
        %v5342 = vand.u32 %v510, 4294901760
        %5343 = vmatmul.mubr.f32.gmra.mxu0 %v5342
        %v5344 = vpop.f32.mrf.mxu0
        %v5345 = vadd.f32 %v5269, %v5344
        %v5346 = vpop.f32.mrf.mxu0
        %5347 = vdwg.mxu0
        %v5348 = vmul.f32 %v5345, 0.03125
        %v5349 = vld [vmem:[%s11] sm:$0xf]
        %v5350 = vld [vmem:[%s9] sm:$0xff]
        %v5351 = vld [vmem:[%s9 + $0x8] sm:$0xff]
        %v5352 = vlaneseq
        %v5353 = vshrl.u32 %v5352, 7
        %v5354 = vsub.s32 0, %v5353
        %v5355 = vrot.slane %v5349, %v5354
        %vm5356 = vcmask 130048
        %v5358 = vsel %vm5356, %v5348, 0
        %5360 = vmatprep.subr.mxu0 0.0
        %5361 = vmatpush1.msra.mxu0 0.0
        %5362 = vmatprep.subr.mxu0 0.0
        %5363 = vmatpush1.msra.mxu0 0.0
        %5364 = vmatprep.subr.mxu0 0.0
        %5365 = vmatpush1.msra.mxu0 0.0
        %5366 = vmatprep.subr.mxu0 0.0
        %5367 = vmatpush1.msra.mxu0 0.0
        %5368 = vmatprep.subr.mxu0 0.0
        %5369 = vmatpush1.msra.mxu0 0.0
        %5370 = vmatprep.subr.mxu0 0.0
        %5371 = vmatpush1.msra.mxu0 0.0
        %5372 = vmatprep.subr.mxu0 0.0
        %5373 = vmatpush1.msra.mxu0 0.0
        %5374 = vmatprep.subr.mxu0 0.0
        %5375 = vmatpush1.msra.mxu0 0.0
        %5376 = vmatprep.subr.mxu0 0.0
        %5377 = vmatpush1.msra.mxu0 0.0
        %5378 = vmatprep.subr.mxu0 0.0
        %5379 = vmatpush1.msra.mxu0 0.0
        %5380 = vmatprep.subr.mxu0 0.0
        %5381 = vmatpush1.msra.mxu0 0.0
        %5382 = vmatprep.subr.mxu0 0.0
        %5383 = vmatpush1.msra.mxu0 0.0
        %5384 = vmatprep.subr.mxu0 0.0
        %5385 = vmatpush1.msra.mxu0 0.0
        %5386 = vmatprep.subr.mxu0 0.0
        %5387 = vmatpush1.msra.mxu0 0.0
        %5388 = vmatprep.subr.mxu0 0.0
        %v5389 = vand.u32 %v5351, 4294901760
        %5390 = vmatpush1.msra.mxu0 %v5389
        %5391 = vmatprep.subr.mxu0 0.0
        %v5392 = vand.u32 %v5350, 4294901760
        %5393 = vmatpush1.msra.mxu0 %v5392
        %5394 = vmatprep.subr.mxu0 0.0
        %5395 = vmatpush2.msra.mxu0 0.0
        %5396 = vmatprep.subr.mxu0 0.0
        %5397 = vmatpush2.msra.mxu0 0.0
        %5398 = vmatprep.subr.mxu0 0.0
        %5399 = vmatpush2.msra.mxu0 0.0
        %5400 = vmatprep.subr.mxu0 0.0
        %5401 = vmatpush2.msra.mxu0 0.0
        %5402 = vmatprep.subr.mxu0 0.0
        %5403 = vmatpush2.msra.mxu0 0.0
        %5404 = vmatprep.subr.mxu0 0.0
        %5405 = vmatpush2.msra.mxu0 0.0
        %5406 = vmatprep.subr.mxu0 0.0
        %5407 = vmatpush2.msra.mxu0 0.0
        %5408 = vmatprep.subr.mxu0 0.0
        %5409 = vmatpush2.msra.mxu0 0.0
        %5410 = vmatprep.subr.mxu0 0.0
        %5411 = vmatpush2.msra.mxu0 0.0
        %5412 = vmatprep.subr.mxu0 0.0
        %5413 = vmatpush2.msra.mxu0 0.0
        %5414 = vmatprep.subr.mxu0 0.0
        %5415 = vmatpush2.msra.mxu0 0.0
        %5416 = vmatprep.subr.mxu0 0.0
        %5417 = vmatpush2.msra.mxu0 0.0
        %5418 = vmatprep.subr.mxu0 0.0
        %5419 = vmatpush2.msra.mxu0 0.0
        %5420 = vmatprep.subr.mxu0 0.0
        %5421 = vmatpush2.msra.mxu0 0.0
        %5422 = vmatprep.subr.mxu0 0.0
        %5423 = vmatpush2.msra.mxu0 0.0
        %5424 = vmatprep.subr.mxu0 0.0
        %5425 = vmatpush2.msra.mxu0 0.0
        %5426 = vmatprep.mubr.f32.mxu0 0.0
        %v5427 = vand.u32 %v5358, 4294901760
        %v5428 = vsub.f32 %v5358, %v5427
        %v5429 = vand.u32 %v5428, 4294901760
        %v5430 = vsub.f32 %v5428, %v5429
        %v5431 = vand.u32 %v5430, 4294901760
        %5432 = vmatmul.mubr.f32.gmra.mxu0 %v5431
        %v5433 = vpop.f32.mrf.mxu0
        %v5434 = vadd.f32 %v5355, %v5433
        %v5435 = vpop.f32.mrf.mxu0
        %5436 = vdwg.mxu0
        %5437 = vmatprep.subr.mxu0 0.0
        %5438 = vmatpush1.msra.mxu0 0.0
        %5439 = vmatprep.subr.mxu0 0.0
        %5440 = vmatpush1.msra.mxu0 0.0
        %5441 = vmatprep.subr.mxu0 0.0
        %5442 = vmatpush1.msra.mxu0 0.0
        %5443 = vmatprep.subr.mxu0 0.0
        %5444 = vmatpush1.msra.mxu0 0.0
        %5445 = vmatprep.subr.mxu0 0.0
        %5446 = vmatpush1.msra.mxu0 0.0
        %5447 = vmatprep.subr.mxu0 0.0
        %5448 = vmatpush1.msra.mxu0 0.0
        %5449 = vmatprep.subr.mxu0 0.0
        %5450 = vmatpush1.msra.mxu0 0.0
        %5451 = vmatprep.subr.mxu0 0.0
        %5452 = vmatpush1.msra.mxu0 0.0
        %5453 = vmatprep.subr.mxu0 0.0
        %5454 = vmatpush1.msra.mxu0 0.0
        %5455 = vmatprep.subr.mxu0 0.0
        %5456 = vmatpush1.msra.mxu0 0.0
        %5457 = vmatprep.subr.mxu0 0.0
        %5458 = vmatpush1.msra.mxu0 0.0
        %5459 = vmatprep.subr.mxu0 0.0
        %5460 = vmatpush1.msra.mxu0 0.0
        %5461 = vmatprep.subr.mxu0 0.0
        %5462 = vmatpush1.msra.mxu0 0.0
        %5463 = vmatprep.subr.mxu0 0.0
        %5464 = vmatpush1.msra.mxu0 0.0
        %5465 = vmatprep.subr.mxu0 0.0
        %v5466 = vand.u32 %v5351, 4294901760
        %v5467 = vsub.f32 %v5351, %v5466
        %v5468 = vand.u32 %v5467, 4294901760
        %v5469 = vsub.f32 %v5467, %v5468
        %v5470 = vand.u32 %v5469, 4294901760
        %5471 = vmatpush1.msra.mxu0 %v5470
        %5472 = vmatprep.subr.mxu0 0.0
        %v5473 = vand.u32 %v5350, 4294901760
        %v5474 = vsub.f32 %v5350, %v5473
        %v5475 = vand.u32 %v5474, 4294901760
        %v5476 = vsub.f32 %v5474, %v5475
        %v5477 = vand.u32 %v5476, 4294901760
        %5478 = vmatpush1.msra.mxu0 %v5477
        %5479 = vmatprep.subr.mxu0 0.0
        %5480 = vmatpush2.msra.mxu0 0.0
        %5481 = vmatprep.subr.mxu0 0.0
        %5482 = vmatpush2.msra.mxu0 0.0
        %5483 = vmatprep.subr.mxu0 0.0
        %5484 = vmatpush2.msra.mxu0 0.0
        %5485 = vmatprep.subr.mxu0 0.0
        %5486 = vmatpush2.msra.mxu0 0.0
        %5487 = vmatprep.subr.mxu0 0.0
        %5488 = vmatpush2.msra.mxu0 0.0
        %5489 = vmatprep.subr.mxu0 0.0
        %5490 = vmatpush2.msra.mxu0 0.0
        %5491 = vmatprep.subr.mxu0 0.0
        %5492 = vmatpush2.msra.mxu0 0.0
        %5493 = vmatprep.subr.mxu0 0.0
        %5494 = vmatpush2.msra.mxu0 0.0
        %5495 = vmatprep.subr.mxu0 0.0
        %5496 = vmatpush2.msra.mxu0 0.0
        %5497 = vmatprep.subr.mxu0 0.0
        %5498 = vmatpush2.msra.mxu0 0.0
        %5499 = vmatprep.subr.mxu0 0.0
        %5500 = vmatpush2.msra.mxu0 0.0
        %5501 = vmatprep.subr.mxu0 0.0
        %5502 = vmatpush2.msra.mxu0 0.0
        %5503 = vmatprep.subr.mxu0 0.0
        %5504 = vmatpush2.msra.mxu0 0.0
        %5505 = vmatprep.subr.mxu0 0.0
        %5506 = vmatpush2.msra.mxu0 0.0
        %5507 = vmatprep.subr.mxu0 0.0
        %5508 = vmatpush2.msra.mxu0 0.0
        %5509 = vmatprep.subr.mxu0 0.0
        %5510 = vmatpush2.msra.mxu0 0.0
        %5511 = vmatprep.mubr.f32.mxu0 0.0
        %v5512 = vand.u32 %v5358, 4294901760
        %5513 = vmatmul.mubr.f32.gmra.mxu0 %v5512
        %v5514 = vpop.f32.mrf.mxu0
        %v5515 = vadd.f32 %v5434, %v5514
        %v5516 = vpop.f32.mrf.mxu0
        %5517 = vdwg.mxu0
        %5518 = vmatprep.subr.mxu0 0.0
        %5519 = vmatpush1.msra.mxu0 0.0
        %5520 = vmatprep.subr.mxu0 0.0
        %5521 = vmatpush1.msra.mxu0 0.0
        %5522 = vmatprep.subr.mxu0 0.0
        %5523 = vmatpush1.msra.mxu0 0.0
        %5524 = vmatprep.subr.mxu0 0.0
        %5525 = vmatpush1.msra.mxu0 0.0
        %5526 = vmatprep.subr.mxu0 0.0
        %5527 = vmatpush1.msra.mxu0 0.0
        %5528 = vmatprep.subr.mxu0 0.0
        %5529 = vmatpush1.msra.mxu0 0.0
        %5530 = vmatprep.subr.mxu0 0.0
        %5531 = vmatpush1.msra.mxu0 0.0
        %5532 = vmatprep.subr.mxu0 0.0
        %5533 = vmatpush1.msra.mxu0 0.0
        %5534 = vmatprep.subr.mxu0 0.0
        %5535 = vmatpush1.msra.mxu0 0.0
        %5536 = vmatprep.subr.mxu0 0.0
        %5537 = vmatpush1.msra.mxu0 0.0
        %5538 = vmatprep.subr.mxu0 0.0
        %5539 = vmatpush1.msra.mxu0 0.0
        %5540 = vmatprep.subr.mxu0 0.0
        %5541 = vmatpush1.msra.mxu0 0.0
        %5542 = vmatprep.subr.mxu0 0.0
        %5543 = vmatpush1.msra.mxu0 0.0
        %5544 = vmatprep.subr.mxu0 0.0
        %5545 = vmatpush1.msra.mxu0 0.0
        %5546 = vmatprep.subr.mxu0 0.0
        %v5547 = vand.u32 %v5351, 4294901760
        %v5548 = vsub.f32 %v5351, %v5547
        %5549 = vmatpush1.msra.mxu0 %v5548
        %5550 = vmatprep.subr.mxu0 0.0
        %v5551 = vand.u32 %v5350, 4294901760
        %v5552 = vsub.f32 %v5350, %v5551
        %5553 = vmatpush1.msra.mxu0 %v5552
        %5554 = vmatprep.subr.mxu0 0.0
        %5555 = vmatpush2.msra.mxu0 0.0
        %5556 = vmatprep.subr.mxu0 0.0
        %5557 = vmatpush2.msra.mxu0 0.0
        %5558 = vmatprep.subr.mxu0 0.0
        %5559 = vmatpush2.msra.mxu0 0.0
        %5560 = vmatprep.subr.mxu0 0.0
        %5561 = vmatpush2.msra.mxu0 0.0
        %5562 = vmatprep.subr.mxu0 0.0
        %5563 = vmatpush2.msra.mxu0 0.0
        %5564 = vmatprep.subr.mxu0 0.0
        %5565 = vmatpush2.msra.mxu0 0.0
        %5566 = vmatprep.subr.mxu0 0.0
        %5567 = vmatpush2.msra.mxu0 0.0
        %5568 = vmatprep.subr.mxu0 0.0
        %5569 = vmatpush2.msra.mxu0 0.0
        %5570 = vmatprep.subr.mxu0 0.0
        %5571 = vmatpush2.msra.mxu0 0.0
        %5572 = vmatprep.subr.mxu0 0.0
        %5573 = vmatpush2.msra.mxu0 0.0
        %5574 = vmatprep.subr.mxu0 0.0
        %5575 = vmatpush2.msra.mxu0 0.0
        %5576 = vmatprep.subr.mxu0 0.0
        %5577 = vmatpush2.msra.mxu0 0.0
        %5578 = vmatprep.subr.mxu0 0.0
        %5579 = vmatpush2.msra.mxu0 0.0
        %5580 = vmatprep.subr.mxu0 0.0
        %5581 = vmatpush2.msra.mxu0 0.0
        %5582 = vmatprep.subr.mxu0 0.0
        %5583 = vmatpush2.msra.mxu0 0.0
        %5584 = vmatprep.subr.mxu0 0.0
        %5585 = vmatpush2.msra.mxu0 0.0
        %5586 = vmatprep.mubr.f32.mxu0 0.0
        %v5587 = vand.u32 %v5358, 4294901760
        %v5588 = vsub.f32 %v5358, %v5587
        %5589 = vmatmul.mubr.f32.gmra.mxu0 %v5588
        %v5590 = vpop.f32.mrf.mxu0
        %v5591 = vadd.f32 %v5515, %v5590
        %v5592 = vpop.f32.mrf.mxu0
        %5593 = vdwg.mxu0
        %5594 = vmatprep.subr.mxu0 0.0
        %5595 = vmatpush1.msra.mxu0 0.0
        %5596 = vmatprep.subr.mxu0 0.0
        %5597 = vmatpush1.msra.mxu0 0.0
        %5598 = vmatprep.subr.mxu0 0.0
        %5599 = vmatpush1.msra.mxu0 0.0
        %5600 = vmatprep.subr.mxu0 0.0
        %5601 = vmatpush1.msra.mxu0 0.0
        %5602 = vmatprep.subr.mxu0 0.0
        %5603 = vmatpush1.msra.mxu0 0.0
        %5604 = vmatprep.subr.mxu0 0.0
        %5605 = vmatpush1.msra.mxu0 0.0
        %5606 = vmatprep.subr.mxu0 0.0
        %5607 = vmatpush1.msra.mxu0 0.0
        %5608 = vmatprep.subr.mxu0 0.0
        %5609 = vmatpush1.msra.mxu0 0.0
        %5610 = vmatprep.subr.mxu0 0.0
        %5611 = vmatpush1.msra.mxu0 0.0
        %5612 = vmatprep.subr.mxu0 0.0
        %5613 = vmatpush1.msra.mxu0 0.0
        %5614 = vmatprep.subr.mxu0 0.0
        %5615 = vmatpush1.msra.mxu0 0.0
        %5616 = vmatprep.subr.mxu0 0.0
        %5617 = vmatpush1.msra.mxu0 0.0
        %5618 = vmatprep.subr.mxu0 0.0
        %5619 = vmatpush1.msra.mxu0 0.0
        %5620 = vmatprep.subr.mxu0 0.0
        %5621 = vmatpush1.msra.mxu0 0.0
        %5622 = vmatprep.subr.mxu0 0.0
        %v5623 = vand.u32 %v5351, 4294901760
        %5624 = vmatpush1.msra.mxu0 %v5623
        %5625 = vmatprep.subr.mxu0 0.0
        %v5626 = vand.u32 %v5350, 4294901760
        %5627 = vmatpush1.msra.mxu0 %v5626
        %5628 = vmatprep.subr.mxu0 0.0
        %5629 = vmatpush2.msra.mxu0 0.0
        %5630 = vmatprep.subr.mxu0 0.0
        %5631 = vmatpush2.msra.mxu0 0.0
        %5632 = vmatprep.subr.mxu0 0.0
        %5633 = vmatpush2.msra.mxu0 0.0
        %5634 = vmatprep.subr.mxu0 0.0
        %5635 = vmatpush2.msra.mxu0 0.0
        %5636 = vmatprep.subr.mxu0 0.0
        %5637 = vmatpush2.msra.mxu0 0.0
        %5638 = vmatprep.subr.mxu0 0.0
        %5639 = vmatpush2.msra.mxu0 0.0
        %5640 = vmatprep.subr.mxu0 0.0
        %5641 = vmatpush2.msra.mxu0 0.0
        %5642 = vmatprep.subr.mxu0 0.0
        %5643 = vmatpush2.msra.mxu0 0.0
        %5644 = vmatprep.subr.mxu0 0.0
        %5645 = vmatpush2.msra.mxu0 0.0
        %5646 = vmatprep.subr.mxu0 0.0
        %5647 = vmatpush2.msra.mxu0 0.0
        %5648 = vmatprep.subr.mxu0 0.0
        %5649 = vmatpush2.msra.mxu0 0.0
        %5650 = vmatprep.subr.mxu0 0.0
        %5651 = vmatpush2.msra.mxu0 0.0
        %5652 = vmatprep.subr.mxu0 0.0
        %5653 = vmatpush2.msra.mxu0 0.0
        %5654 = vmatprep.subr.mxu0 0.0
        %5655 = vmatpush2.msra.mxu0 0.0
        %5656 = vmatprep.subr.mxu0 0.0
        %5657 = vmatpush2.msra.mxu0 0.0
        %5658 = vmatprep.subr.mxu0 0.0
        %5659 = vmatpush2.msra.mxu0 0.0
        %5660 = vmatprep.mubr.f32.mxu0 0.0
        %v5661 = vand.u32 %v5358, 4294901760
        %v5662 = vsub.f32 %v5358, %v5661
        %v5663 = vand.u32 %v5662, 4294901760
        %5664 = vmatmul.mubr.f32.gmra.mxu0 %v5663
        %v5665 = vpop.f32.mrf.mxu0
        %v5666 = vadd.f32 %v5591, %v5665
        %v5667 = vpop.f32.mrf.mxu0
        %5668 = vdwg.mxu0
        %5669 = vmatprep.subr.mxu0 0.0
        %5670 = vmatpush1.msra.mxu0 0.0
        %5671 = vmatprep.subr.mxu0 0.0
        %5672 = vmatpush1.msra.mxu0 0.0
        %5673 = vmatprep.subr.mxu0 0.0
        %5674 = vmatpush1.msra.mxu0 0.0
        %5675 = vmatprep.subr.mxu0 0.0
        %5676 = vmatpush1.msra.mxu0 0.0
        %5677 = vmatprep.subr.mxu0 0.0
        %5678 = vmatpush1.msra.mxu0 0.0
        %5679 = vmatprep.subr.mxu0 0.0
        %5680 = vmatpush1.msra.mxu0 0.0
        %5681 = vmatprep.subr.mxu0 0.0
        %5682 = vmatpush1.msra.mxu0 0.0
        %5683 = vmatprep.subr.mxu0 0.0
        %5684 = vmatpush1.msra.mxu0 0.0
        %5685 = vmatprep.subr.mxu0 0.0
        %5686 = vmatpush1.msra.mxu0 0.0
        %5687 = vmatprep.subr.mxu0 0.0
        %5688 = vmatpush1.msra.mxu0 0.0
        %5689 = vmatprep.subr.mxu0 0.0
        %5690 = vmatpush1.msra.mxu0 0.0
        %5691 = vmatprep.subr.mxu0 0.0
        %5692 = vmatpush1.msra.mxu0 0.0
        %5693 = vmatprep.subr.mxu0 0.0
        %5694 = vmatpush1.msra.mxu0 0.0
        %5695 = vmatprep.subr.mxu0 0.0
        %5696 = vmatpush1.msra.mxu0 0.0
        %5697 = vmatprep.subr.mxu0 0.0
        %v5698 = vand.u32 %v5351, 4294901760
        %v5699 = vsub.f32 %v5351, %v5698
        %v5700 = vand.u32 %v5699, 4294901760
        %5701 = vmatpush1.msra.mxu0 %v5700
        %5702 = vmatprep.subr.mxu0 0.0
        %v5703 = vand.u32 %v5350, 4294901760
        %v5704 = vsub.f32 %v5350, %v5703
        %v5705 = vand.u32 %v5704, 4294901760
        %5706 = vmatpush1.msra.mxu0 %v5705
        %5707 = vmatprep.subr.mxu0 0.0
        %5708 = vmatpush2.msra.mxu0 0.0
        %5709 = vmatprep.subr.mxu0 0.0
        %5710 = vmatpush2.msra.mxu0 0.0
        %5711 = vmatprep.subr.mxu0 0.0
        %5712 = vmatpush2.msra.mxu0 0.0
        %5713 = vmatprep.subr.mxu0 0.0
        %5714 = vmatpush2.msra.mxu0 0.0
        %5715 = vmatprep.subr.mxu0 0.0
        %5716 = vmatpush2.msra.mxu0 0.0
        %5717 = vmatprep.subr.mxu0 0.0
        %5718 = vmatpush2.msra.mxu0 0.0
        %5719 = vmatprep.subr.mxu0 0.0
        %5720 = vmatpush2.msra.mxu0 0.0
        %5721 = vmatprep.subr.mxu0 0.0
        %5722 = vmatpush2.msra.mxu0 0.0
        %5723 = vmatprep.subr.mxu0 0.0
        %5724 = vmatpush2.msra.mxu0 0.0
        %5725 = vmatprep.subr.mxu0 0.0
        %5726 = vmatpush2.msra.mxu0 0.0
        %5727 = vmatprep.subr.mxu0 0.0
        %5728 = vmatpush2.msra.mxu0 0.0
        %5729 = vmatprep.subr.mxu0 0.0
        %5730 = vmatpush2.msra.mxu0 0.0
        %5731 = vmatprep.subr.mxu0 0.0
        %5732 = vmatpush2.msra.mxu0 0.0
        %5733 = vmatprep.subr.mxu0 0.0
        %5734 = vmatpush2.msra.mxu0 0.0
        %5735 = vmatprep.subr.mxu0 0.0
        %5736 = vmatpush2.msra.mxu0 0.0
        %5737 = vmatprep.subr.mxu0 0.0
        %5738 = vmatpush2.msra.mxu0 0.0
        %5739 = vmatprep.mubr.f32.mxu0 0.0
        %v5740 = vand.u32 %v5358, 4294901760
        %5741 = vmatmul.mubr.f32.gmra.mxu0 %v5740
        %v5742 = vpop.f32.mrf.mxu0
        %v5743 = vadd.f32 %v5666, %v5742
        %v5744 = vpop.f32.mrf.mxu0
        %5745 = vdwg.mxu0
        %5746 = vmatprep.subr.mxu0 0.0
        %5747 = vmatpush1.msra.mxu0 0.0
        %5748 = vmatprep.subr.mxu0 0.0
        %5749 = vmatpush1.msra.mxu0 0.0
        %5750 = vmatprep.subr.mxu0 0.0
        %5751 = vmatpush1.msra.mxu0 0.0
        %5752 = vmatprep.subr.mxu0 0.0
        %5753 = vmatpush1.msra.mxu0 0.0
        %5754 = vmatprep.subr.mxu0 0.0
        %5755 = vmatpush1.msra.mxu0 0.0
        %5756 = vmatprep.subr.mxu0 0.0
        %5757 = vmatpush1.msra.mxu0 0.0
        %5758 = vmatprep.subr.mxu0 0.0
        %5759 = vmatpush1.msra.mxu0 0.0
        %5760 = vmatprep.subr.mxu0 0.0
        %5761 = vmatpush1.msra.mxu0 0.0
        %5762 = vmatprep.subr.mxu0 0.0
        %5763 = vmatpush1.msra.mxu0 0.0
        %5764 = vmatprep.subr.mxu0 0.0
        %5765 = vmatpush1.msra.mxu0 0.0
        %5766 = vmatprep.subr.mxu0 0.0
        %5767 = vmatpush1.msra.mxu0 0.0
        %5768 = vmatprep.subr.mxu0 0.0
        %5769 = vmatpush1.msra.mxu0 0.0
        %5770 = vmatprep.subr.mxu0 0.0
        %5771 = vmatpush1.msra.mxu0 0.0
        %5772 = vmatprep.subr.mxu0 0.0
        %5773 = vmatpush1.msra.mxu0 0.0
        %5774 = vmatprep.subr.mxu0 0.0
        %v5775 = vand.u32 %v5351, 4294901760
        %5776 = vmatpush1.msra.mxu0 %v5775
        %5777 = vmatprep.subr.mxu0 0.0
        %v5778 = vand.u32 %v5350, 4294901760
        %5779 = vmatpush1.msra.mxu0 %v5778
        %5780 = vmatprep.subr.mxu0 0.0
        %5781 = vmatpush2.msra.mxu0 0.0
        %5782 = vmatprep.subr.mxu0 0.0
        %5783 = vmatpush2.msra.mxu0 0.0
        %5784 = vmatprep.subr.mxu0 0.0
        %5785 = vmatpush2.msra.mxu0 0.0
        %5786 = vmatprep.subr.mxu0 0.0
        %5787 = vmatpush2.msra.mxu0 0.0
        %5788 = vmatprep.subr.mxu0 0.0
        %5789 = vmatpush2.msra.mxu0 0.0
        %5790 = vmatprep.subr.mxu0 0.0
        %5791 = vmatpush2.msra.mxu0 0.0
        %5792 = vmatprep.subr.mxu0 0.0
        %5793 = vmatpush2.msra.mxu0 0.0
        %5794 = vmatprep.subr.mxu0 0.0
        %5795 = vmatpush2.msra.mxu0 0.0
        %5796 = vmatprep.subr.mxu0 0.0
        %5797 = vmatpush2.msra.mxu0 0.0
        %5798 = vmatprep.subr.mxu0 0.0
        %5799 = vmatpush2.msra.mxu0 0.0
        %5800 = vmatprep.subr.mxu0 0.0
        %5801 = vmatpush2.msra.mxu0 0.0
        %5802 = vmatprep.subr.mxu0 0.0
        %5803 = vmatpush2.msra.mxu0 0.0
        %5804 = vmatprep.subr.mxu0 0.0
        %5805 = vmatpush2.msra.mxu0 0.0
        %5806 = vmatprep.subr.mxu0 0.0
        %5807 = vmatpush2.msra.mxu0 0.0
        %5808 = vmatprep.subr.mxu0 0.0
        %5809 = vmatpush2.msra.mxu0 0.0
        %5810 = vmatprep.subr.mxu0 0.0
        %5811 = vmatpush2.msra.mxu0 0.0
        %5812 = vmatprep.mubr.f32.mxu0 0.0
        %v5813 = vand.u32 %v5358, 4294901760
        %5814 = vmatmul.mubr.f32.gmra.mxu0 %v5813
        %v5815 = vpop.f32.mrf.mxu0
        %v5816 = vadd.f32 %v5743, %v5815
        %v5817 = vpop.f32.mrf.mxu0
        %5818 = vdwg.mxu0
        %v5819 = vsel %vm5356, %v5816, 0.0
        %5820 = vadd.xlane.f32.xlu0 %v5819
        %v5821 = vpop.xlane.xlu0 %5820
        %v5822 = vrcp.pop 16.0
        %v5823 = vmul.f32 %v5821, %v5822
        %v5824 = vsub.f32 %v5816, %v5823
        %v5825 = vmul.f32 %v5824, %v5824
        %v5826 = vsel %vm5356, %v5825, 0.0
        %5827 = vadd.xlane.f32.xlu0 %v5826
        %v5828 = vpop.xlane.xlu0 %5827
        %v5829 = vmul.f32 %v5828, %v5822
        %v5830 = vadd.f32 %v5829, 1e-05
        %v5831 = vrsqrt.pop %v5830
        %v5832 = vmul.f32 %v5824, %v5831
        %v5833 = vlaneseq
        %v5834 = vshrl.u32 %v5833, 7
        %v5835 = vsub.s32 1, %v5834
        %v5836 = vrot.slane %v5349, %v5835
        %v5837 = vmul.f32 %v5832, %v5836
        %v5838 = vlaneseq
        %v5839 = vshrl.u32 %v5838, 7
        %v5840 = vsub.s32 2, %v5839
        %v5841 = vrot.slane %v5349, %v5840
        %v5842 = vadd.f32 %v5837, %v5841
        %v5843 = vmax.f32 %v5842, 0.0
        %v5844 = vld [vmem:[#allocation13] sm:$0xff]
        %v5845 = vld [vmem:[#allocation13 + $0x8] sm:$0xff]
        %v5846 = vlaneseq
        %v5847 = vshrl.u32 %v5846, 7
        %v5848 = vsub.s32 3, %v5847
        %v5849 = vrot.slane %v5349, %v5848
        %v5851 = vsel %vm5356, %v5843, 0
        %5853 = vmatprep.subr.mxu0 0.0
        %5854 = vmatpush1.msra.mxu0 0.0
        %5855 = vmatprep.subr.mxu0 0.0
        %5856 = vmatpush1.msra.mxu0 0.0
        %5857 = vmatprep.subr.mxu0 0.0
        %5858 = vmatpush1.msra.mxu0 0.0
        %5859 = vmatprep.subr.mxu0 0.0
        %5860 = vmatpush1.msra.mxu0 0.0
        %5861 = vmatprep.subr.mxu0 0.0
        %5862 = vmatpush1.msra.mxu0 0.0
        %5863 = vmatprep.subr.mxu0 0.0
        %5864 = vmatpush1.msra.mxu0 0.0
        %5865 = vmatprep.subr.mxu0 0.0
        %5866 = vmatpush1.msra.mxu0 0.0
        %5867 = vmatprep.subr.mxu0 0.0
        %5868 = vmatpush1.msra.mxu0 0.0
        %5869 = vmatprep.subr.mxu0 0.0
        %5870 = vmatpush1.msra.mxu0 0.0
        %5871 = vmatprep.subr.mxu0 0.0
        %5872 = vmatpush1.msra.mxu0 0.0
        %5873 = vmatprep.subr.mxu0 0.0
        %5874 = vmatpush1.msra.mxu0 0.0
        %5875 = vmatprep.subr.mxu0 0.0
        %5876 = vmatpush1.msra.mxu0 0.0
        %5877 = vmatprep.subr.mxu0 0.0
        %5878 = vmatpush1.msra.mxu0 0.0
        %5879 = vmatprep.subr.mxu0 0.0
        %5880 = vmatpush1.msra.mxu0 0.0
        %5881 = vmatprep.subr.mxu0 0.0
        %v5882 = vand.u32 %v5845, 4294901760
        %5883 = vmatpush1.msra.mxu0 %v5882
        %5884 = vmatprep.subr.mxu0 0.0
        %v5885 = vand.u32 %v5844, 4294901760
        %5886 = vmatpush1.msra.mxu0 %v5885
        %5887 = vmatprep.subr.mxu0 0.0
        %5888 = vmatpush2.msra.mxu0 0.0
        %5889 = vmatprep.subr.mxu0 0.0
        %5890 = vmatpush2.msra.mxu0 0.0
        %5891 = vmatprep.subr.mxu0 0.0
        %5892 = vmatpush2.msra.mxu0 0.0
        %5893 = vmatprep.subr.mxu0 0.0
        %5894 = vmatpush2.msra.mxu0 0.0
        %5895 = vmatprep.subr.mxu0 0.0
        %5896 = vmatpush2.msra.mxu0 0.0
        %5897 = vmatprep.subr.mxu0 0.0
        %5898 = vmatpush2.msra.mxu0 0.0
        %5899 = vmatprep.subr.mxu0 0.0
        %5900 = vmatpush2.msra.mxu0 0.0
        %5901 = vmatprep.subr.mxu0 0.0
        %5902 = vmatpush2.msra.mxu0 0.0
        %5903 = vmatprep.subr.mxu0 0.0
        %5904 = vmatpush2.msra.mxu0 0.0
        %5905 = vmatprep.subr.mxu0 0.0
        %5906 = vmatpush2.msra.mxu0 0.0
        %5907 = vmatprep.subr.mxu0 0.0
        %5908 = vmatpush2.msra.mxu0 0.0
        %5909 = vmatprep.subr.mxu0 0.0
        %5910 = vmatpush2.msra.mxu0 0.0
        %5911 = vmatprep.subr.mxu0 0.0
        %5912 = vmatpush2.msra.mxu0 0.0
        %5913 = vmatprep.subr.mxu0 0.0
        %5914 = vmatpush2.msra.mxu0 0.0
        %5915 = vmatprep.subr.mxu0 0.0
        %5916 = vmatpush2.msra.mxu0 0.0
        %5917 = vmatprep.subr.mxu0 0.0
        %5918 = vmatpush2.msra.mxu0 0.0
        %5919 = vmatprep.mubr.f32.mxu0 0.0
        %v5920 = vand.u32 %v5851, 4294901760
        %v5921 = vsub.f32 %v5851, %v5920
        %v5922 = vand.u32 %v5921, 4294901760
        %v5923 = vsub.f32 %v5921, %v5922
        %v5924 = vand.u32 %v5923, 4294901760
        %5925 = vmatmul.mubr.f32.gmra.mxu0 %v5924
        %v5926 = vpop.f32.mrf.mxu0
        %v5927 = vadd.f32 %v5849, %v5926
        %v5928 = vpop.f32.mrf.mxu0
        %5929 = vdwg.mxu0
        %5930 = vmatprep.subr.mxu0 0.0
        %5931 = vmatpush1.msra.mxu0 0.0
        %5932 = vmatprep.subr.mxu0 0.0
        %5933 = vmatpush1.msra.mxu0 0.0
        %5934 = vmatprep.subr.mxu0 0.0
        %5935 = vmatpush1.msra.mxu0 0.0
        %5936 = vmatprep.subr.mxu0 0.0
        %5937 = vmatpush1.msra.mxu0 0.0
        %5938 = vmatprep.subr.mxu0 0.0
        %5939 = vmatpush1.msra.mxu0 0.0
        %5940 = vmatprep.subr.mxu0 0.0
        %5941 = vmatpush1.msra.mxu0 0.0
        %5942 = vmatprep.subr.mxu0 0.0
        %5943 = vmatpush1.msra.mxu0 0.0
        %5944 = vmatprep.subr.mxu0 0.0
        %5945 = vmatpush1.msra.mxu0 0.0
        %5946 = vmatprep.subr.mxu0 0.0
        %5947 = vmatpush1.msra.mxu0 0.0
        %5948 = vmatprep.subr.mxu0 0.0
        %5949 = vmatpush1.msra.mxu0 0.0
        %5950 = vmatprep.subr.mxu0 0.0
        %5951 = vmatpush1.msra.mxu0 0.0
        %5952 = vmatprep.subr.mxu0 0.0
        %5953 = vmatpush1.msra.mxu0 0.0
        %5954 = vmatprep.subr.mxu0 0.0
        %5955 = vmatpush1.msra.mxu0 0.0
        %5956 = vmatprep.subr.mxu0 0.0
        %5957 = vmatpush1.msra.mxu0 0.0
        %5958 = vmatprep.subr.mxu0 0.0
        %v5959 = vand.u32 %v5845, 4294901760
        %v5960 = vsub.f32 %v5845, %v5959
        %v5961 = vand.u32 %v5960, 4294901760
        %v5962 = vsub.f32 %v5960, %v5961
        %v5963 = vand.u32 %v5962, 4294901760
        %5964 = vmatpush1.msra.mxu0 %v5963
        %5965 = vmatprep.subr.mxu0 0.0
        %v5966 = vand.u32 %v5844, 4294901760
        %v5967 = vsub.f32 %v5844, %v5966
        %v5968 = vand.u32 %v5967, 4294901760
        %v5969 = vsub.f32 %v5967, %v5968
        %v5970 = vand.u32 %v5969, 4294901760
        %5971 = vmatpush1.msra.mxu0 %v5970
        %5972 = vmatprep.subr.mxu0 0.0
        %5973 = vmatpush2.msra.mxu0 0.0
        %5974 = vmatprep.subr.mxu0 0.0
        %5975 = vmatpush2.msra.mxu0 0.0
        %5976 = vmatprep.subr.mxu0 0.0
        %5977 = vmatpush2.msra.mxu0 0.0
        %5978 = vmatprep.subr.mxu0 0.0
        %5979 = vmatpush2.msra.mxu0 0.0
        %5980 = vmatprep.subr.mxu0 0.0
        %5981 = vmatpush2.msra.mxu0 0.0
        %5982 = vmatprep.subr.mxu0 0.0
        %5983 = vmatpush2.msra.mxu0 0.0
        %5984 = vmatprep.subr.mxu0 0.0
        %5985 = vmatpush2.msra.mxu0 0.0
        %5986 = vmatprep.subr.mxu0 0.0
        %5987 = vmatpush2.msra.mxu0 0.0
        %5988 = vmatprep.subr.mxu0 0.0
        %5989 = vmatpush2.msra.mxu0 0.0
        %5990 = vmatprep.subr.mxu0 0.0
        %5991 = vmatpush2.msra.mxu0 0.0
        %5992 = vmatprep.subr.mxu0 0.0
        %5993 = vmatpush2.msra.mxu0 0.0
        %5994 = vmatprep.subr.mxu0 0.0
        %5995 = vmatpush2.msra.mxu0 0.0
        %5996 = vmatprep.subr.mxu0 0.0
        %5997 = vmatpush2.msra.mxu0 0.0
        %5998 = vmatprep.subr.mxu0 0.0
        %5999 = vmatpush2.msra.mxu0 0.0
        %6000 = vmatprep.subr.mxu0 0.0
        %6001 = vmatpush2.msra.mxu0 0.0
        %6002 = vmatprep.subr.mxu0 0.0
        %6003 = vmatpush2.msra.mxu0 0.0
        %6004 = vmatprep.mubr.f32.mxu0 0.0
        %v6005 = vand.u32 %v5851, 4294901760
        %6006 = vmatmul.mubr.f32.gmra.mxu0 %v6005
        %v6007 = vpop.f32.mrf.mxu0
        %v6008 = vadd.f32 %v5927, %v6007
        %v6009 = vpop.f32.mrf.mxu0
        %6010 = vdwg.mxu0
        %6011 = vmatprep.subr.mxu0 0.0
        %6012 = vmatpush1.msra.mxu0 0.0
        %6013 = vmatprep.subr.mxu0 0.0
        %6014 = vmatpush1.msra.mxu0 0.0
        %6015 = vmatprep.subr.mxu0 0.0
        %6016 = vmatpush1.msra.mxu0 0.0
        %6017 = vmatprep.subr.mxu0 0.0
        %6018 = vmatpush1.msra.mxu0 0.0
        %6019 = vmatprep.subr.mxu0 0.0
        %6020 = vmatpush1.msra.mxu0 0.0
        %6021 = vmatprep.subr.mxu0 0.0
        %6022 = vmatpush1.msra.mxu0 0.0
        %6023 = vmatprep.subr.mxu0 0.0
        %6024 = vmatpush1.msra.mxu0 0.0
        %6025 = vmatprep.subr.mxu0 0.0
        %6026 = vmatpush1.msra.mxu0 0.0
        %6027 = vmatprep.subr.mxu0 0.0
        %6028 = vmatpush1.msra.mxu0 0.0
        %6029 = vmatprep.subr.mxu0 0.0
        %6030 = vmatpush1.msra.mxu0 0.0
        %6031 = vmatprep.subr.mxu0 0.0
        %6032 = vmatpush1.msra.mxu0 0.0
        %6033 = vmatprep.subr.mxu0 0.0
        %6034 = vmatpush1.msra.mxu0 0.0
        %6035 = vmatprep.subr.mxu0 0.0
        %6036 = vmatpush1.msra.mxu0 0.0
        %6037 = vmatprep.subr.mxu0 0.0
        %6038 = vmatpush1.msra.mxu0 0.0
        %6039 = vmatprep.subr.mxu0 0.0
        %v6040 = vand.u32 %v5845, 4294901760
        %v6041 = vsub.f32 %v5845, %v6040
        %6042 = vmatpush1.msra.mxu0 %v6041
        %6043 = vmatprep.subr.mxu0 0.0
        %v6044 = vand.u32 %v5844, 4294901760
        %v6045 = vsub.f32 %v5844, %v6044
        %6046 = vmatpush1.msra.mxu0 %v6045
        %6047 = vmatprep.subr.mxu0 0.0
        %6048 = vmatpush2.msra.mxu0 0.0
        %6049 = vmatprep.subr.mxu0 0.0
        %6050 = vmatpush2.msra.mxu0 0.0
        %6051 = vmatprep.subr.mxu0 0.0
        %6052 = vmatpush2.msra.mxu0 0.0
        %6053 = vmatprep.subr.mxu0 0.0
        %6054 = vmatpush2.msra.mxu0 0.0
        %6055 = vmatprep.subr.mxu0 0.0
        %6056 = vmatpush2.msra.mxu0 0.0
        %6057 = vmatprep.subr.mxu0 0.0
        %6058 = vmatpush2.msra.mxu0 0.0
        %6059 = vmatprep.subr.mxu0 0.0
        %6060 = vmatpush2.msra.mxu0 0.0
        %6061 = vmatprep.subr.mxu0 0.0
        %6062 = vmatpush2.msra.mxu0 0.0
        %6063 = vmatprep.subr.mxu0 0.0
        %6064 = vmatpush2.msra.mxu0 0.0
        %6065 = vmatprep.subr.mxu0 0.0
        %6066 = vmatpush2.msra.mxu0 0.0
        %6067 = vmatprep.subr.mxu0 0.0
        %6068 = vmatpush2.msra.mxu0 0.0
        %6069 = vmatprep.subr.mxu0 0.0
        %6070 = vmatpush2.msra.mxu0 0.0
        %6071 = vmatprep.subr.mxu0 0.0
        %6072 = vmatpush2.msra.mxu0 0.0
        %6073 = vmatprep.subr.mxu0 0.0
        %6074 = vmatpush2.msra.mxu0 0.0
        %6075 = vmatprep.subr.mxu0 0.0
        %6076 = vmatpush2.msra.mxu0 0.0
        %6077 = vmatprep.subr.mxu0 0.0
        %6078 = vmatpush2.msra.mxu0 0.0
        %6079 = vmatprep.mubr.f32.mxu0 0.0
        %v6080 = vand.u32 %v5851, 4294901760
        %v6081 = vsub.f32 %v5851, %v6080
        %6082 = vmatmul.mubr.f32.gmra.mxu0 %v6081
        %v6083 = vpop.f32.mrf.mxu0
        %v6084 = vadd.f32 %v6008, %v6083
        %v6085 = vpop.f32.mrf.mxu0
        %6086 = vdwg.mxu0
        %6087 = vmatprep.subr.mxu0 0.0
        %6088 = vmatpush1.msra.mxu0 0.0
        %6089 = vmatprep.subr.mxu0 0.0
        %6090 = vmatpush1.msra.mxu0 0.0
        %6091 = vmatprep.subr.mxu0 0.0
        %6092 = vmatpush1.msra.mxu0 0.0
        %6093 = vmatprep.subr.mxu0 0.0
        %6094 = vmatpush1.msra.mxu0 0.0
        %6095 = vmatprep.subr.mxu0 0.0
        %6096 = vmatpush1.msra.mxu0 0.0
        %6097 = vmatprep.subr.mxu0 0.0
        %6098 = vmatpush1.msra.mxu0 0.0
        %6099 = vmatprep.subr.mxu0 0.0
        %6100 = vmatpush1.msra.mxu0 0.0
        %6101 = vmatprep.subr.mxu0 0.0
        %6102 = vmatpush1.msra.mxu0 0.0
        %6103 = vmatprep.subr.mxu0 0.0
        %6104 = vmatpush1.msra.mxu0 0.0
        %6105 = vmatprep.subr.mxu0 0.0
        %6106 = vmatpush1.msra.mxu0 0.0
        %6107 = vmatprep.subr.mxu0 0.0
        %6108 = vmatpush1.msra.mxu0 0.0
        %6109 = vmatprep.subr.mxu0 0.0
        %6110 = vmatpush1.msra.mxu0 0.0
        %6111 = vmatprep.subr.mxu0 0.0
        %6112 = vmatpush1.msra.mxu0 0.0
        %6113 = vmatprep.subr.mxu0 0.0
        %6114 = vmatpush1.msra.mxu0 0.0
        %6115 = vmatprep.subr.mxu0 0.0
        %v6116 = vand.u32 %v5845, 4294901760
        %6117 = vmatpush1.msra.mxu0 %v6116
        %6118 = vmatprep.subr.mxu0 0.0
        %v6119 = vand.u32 %v5844, 4294901760
        %6120 = vmatpush1.msra.mxu0 %v6119
        %6121 = vmatprep.subr.mxu0 0.0
        %6122 = vmatpush2.msra.mxu0 0.0
        %6123 = vmatprep.subr.mxu0 0.0
        %6124 = vmatpush2.msra.mxu0 0.0
        %6125 = vmatprep.subr.mxu0 0.0
        %6126 = vmatpush2.msra.mxu0 0.0
        %6127 = vmatprep.subr.mxu0 0.0
        %6128 = vmatpush2.msra.mxu0 0.0
        %6129 = vmatprep.subr.mxu0 0.0
        %6130 = vmatpush2.msra.mxu0 0.0
        %6131 = vmatprep.subr.mxu0 0.0
        %6132 = vmatpush2.msra.mxu0 0.0
        %6133 = vmatprep.subr.mxu0 0.0
        %6134 = vmatpush2.msra.mxu0 0.0
        %6135 = vmatprep.subr.mxu0 0.0
        %6136 = vmatpush2.msra.mxu0 0.0
        %6137 = vmatprep.subr.mxu0 0.0
        %6138 = vmatpush2.msra.mxu0 0.0
        %6139 = vmatprep.subr.mxu0 0.0
        %6140 = vmatpush2.msra.mxu0 0.0
        %6141 = vmatprep.subr.mxu0 0.0
        %6142 = vmatpush2.msra.mxu0 0.0
        %6143 = vmatprep.subr.mxu0 0.0
        %6144 = vmatpush2.msra.mxu0 0.0
        %6145 = vmatprep.subr.mxu0 0.0
        %6146 = vmatpush2.msra.mxu0 0.0
        %6147 = vmatprep.subr.mxu0 0.0
        %6148 = vmatpush2.msra.mxu0 0.0
        %6149 = vmatprep.subr.mxu0 0.0
        %6150 = vmatpush2.msra.mxu0 0.0
        %6151 = vmatprep.subr.mxu0 0.0
        %6152 = vmatpush2.msra.mxu0 0.0
        %6153 = vmatprep.mubr.f32.mxu0 0.0
        %v6154 = vand.u32 %v5851, 4294901760
        %v6155 = vsub.f32 %v5851, %v6154
        %v6156 = vand.u32 %v6155, 4294901760
        %6157 = vmatmul.mubr.f32.gmra.mxu0 %v6156
        %v6158 = vpop.f32.mrf.mxu0
        %v6159 = vadd.f32 %v6084, %v6158
        %v6160 = vpop.f32.mrf.mxu0
        %6161 = vdwg.mxu0
        %6162 = vmatprep.subr.mxu0 0.0
        %6163 = vmatpush1.msra.mxu0 0.0
        %6164 = vmatprep.subr.mxu0 0.0
        %6165 = vmatpush1.msra.mxu0 0.0
        %6166 = vmatprep.subr.mxu0 0.0
        %6167 = vmatpush1.msra.mxu0 0.0
        %6168 = vmatprep.subr.mxu0 0.0
        %6169 = vmatpush1.msra.mxu0 0.0
        %6170 = vmatprep.subr.mxu0 0.0
        %6171 = vmatpush1.msra.mxu0 0.0
        %6172 = vmatprep.subr.mxu0 0.0
        %6173 = vmatpush1.msra.mxu0 0.0
        %6174 = vmatprep.subr.mxu0 0.0
        %6175 = vmatpush1.msra.mxu0 0.0
        %6176 = vmatprep.subr.mxu0 0.0
        %6177 = vmatpush1.msra.mxu0 0.0
        %6178 = vmatprep.subr.mxu0 0.0
        %6179 = vmatpush1.msra.mxu0 0.0
        %6180 = vmatprep.subr.mxu0 0.0
        %6181 = vmatpush1.msra.mxu0 0.0
        %6182 = vmatprep.subr.mxu0 0.0
        %6183 = vmatpush1.msra.mxu0 0.0
        %6184 = vmatprep.subr.mxu0 0.0
        %6185 = vmatpush1.msra.mxu0 0.0
        %6186 = vmatprep.subr.mxu0 0.0
        %6187 = vmatpush1.msra.mxu0 0.0
        %6188 = vmatprep.subr.mxu0 0.0
        %6189 = vmatpush1.msra.mxu0 0.0
        %6190 = vmatprep.subr.mxu0 0.0
        %v6191 = vand.u32 %v5845, 4294901760
        %v6192 = vsub.f32 %v5845, %v6191
        %v6193 = vand.u32 %v6192, 4294901760
        %6194 = vmatpush1.msra.mxu0 %v6193
        %6195 = vmatprep.subr.mxu0 0.0
        %v6196 = vand.u32 %v5844, 4294901760
        %v6197 = vsub.f32 %v5844, %v6196
        %v6198 = vand.u32 %v6197, 4294901760
        %6199 = vmatpush1.msra.mxu0 %v6198
        %6200 = vmatprep.subr.mxu0 0.0
        %6201 = vmatpush2.msra.mxu0 0.0
        %6202 = vmatprep.subr.mxu0 0.0
        %6203 = vmatpush2.msra.mxu0 0.0
        %6204 = vmatprep.subr.mxu0 0.0
        %6205 = vmatpush2.msra.mxu0 0.0
        %6206 = vmatprep.subr.mxu0 0.0
        %6207 = vmatpush2.msra.mxu0 0.0
        %6208 = vmatprep.subr.mxu0 0.0
        %6209 = vmatpush2.msra.mxu0 0.0
        %6210 = vmatprep.subr.mxu0 0.0
        %6211 = vmatpush2.msra.mxu0 0.0
        %6212 = vmatprep.subr.mxu0 0.0
        %6213 = vmatpush2.msra.mxu0 0.0
        %6214 = vmatprep.subr.mxu0 0.0
        %6215 = vmatpush2.msra.mxu0 0.0
        %6216 = vmatprep.subr.mxu0 0.0
        %6217 = vmatpush2.msra.mxu0 0.0
        %6218 = vmatprep.subr.mxu0 0.0
        %6219 = vmatpush2.msra.mxu0 0.0
        %6220 = vmatprep.subr.mxu0 0.0
        %6221 = vmatpush2.msra.mxu0 0.0
        %6222 = vmatprep.subr.mxu0 0.0
        %6223 = vmatpush2.msra.mxu0 0.0
        %6224 = vmatprep.subr.mxu0 0.0
        %6225 = vmatpush2.msra.mxu0 0.0
        %6226 = vmatprep.subr.mxu0 0.0
        %6227 = vmatpush2.msra.mxu0 0.0
        %6228 = vmatprep.subr.mxu0 0.0
        %6229 = vmatpush2.msra.mxu0 0.0
        %6230 = vmatprep.subr.mxu0 0.0
        %6231 = vmatpush2.msra.mxu0 0.0
        %6232 = vmatprep.mubr.f32.mxu0 0.0
        %v6233 = vand.u32 %v5851, 4294901760
        %6234 = vmatmul.mubr.f32.gmra.mxu0 %v6233
        %v6235 = vpop.f32.mrf.mxu0
        %v6236 = vadd.f32 %v6159, %v6235
        %v6237 = vpop.f32.mrf.mxu0
        %6238 = vdwg.mxu0
        %6239 = vmatprep.subr.mxu0 0.0
        %6240 = vmatpush1.msra.mxu0 0.0
        %6241 = vmatprep.subr.mxu0 0.0
        %6242 = vmatpush1.msra.mxu0 0.0
        %6243 = vmatprep.subr.mxu0 0.0
        %6244 = vmatpush1.msra.mxu0 0.0
        %6245 = vmatprep.subr.mxu0 0.0
        %6246 = vmatpush1.msra.mxu0 0.0
        %6247 = vmatprep.subr.mxu0 0.0
        %6248 = vmatpush1.msra.mxu0 0.0
        %6249 = vmatprep.subr.mxu0 0.0
        %6250 = vmatpush1.msra.mxu0 0.0
        %6251 = vmatprep.subr.mxu0 0.0
        %6252 = vmatpush1.msra.mxu0 0.0
        %6253 = vmatprep.subr.mxu0 0.0
        %6254 = vmatpush1.msra.mxu0 0.0
        %6255 = vmatprep.subr.mxu0 0.0
        %6256 = vmatpush1.msra.mxu0 0.0
        %6257 = vmatprep.subr.mxu0 0.0
        %6258 = vmatpush1.msra.mxu0 0.0
        %6259 = vmatprep.subr.mxu0 0.0
        %6260 = vmatpush1.msra.mxu0 0.0
        %6261 = vmatprep.subr.mxu0 0.0
        %6262 = vmatpush1.msra.mxu0 0.0
        %6263 = vmatprep.subr.mxu0 0.0
        %6264 = vmatpush1.msra.mxu0 0.0
        %6265 = vmatprep.subr.mxu0 0.0
        %6266 = vmatpush1.msra.mxu0 0.0
        %6267 = vmatprep.subr.mxu0 0.0
        %v6268 = vand.u32 %v5845, 4294901760
        %6269 = vmatpush1.msra.mxu0 %v6268
        %6270 = vmatprep.subr.mxu0 0.0
        %v6271 = vand.u32 %v5844, 4294901760
        %6272 = vmatpush1.msra.mxu0 %v6271
        %6273 = vmatprep.subr.mxu0 0.0
        %6274 = vmatpush2.msra.mxu0 0.0
        %6275 = vmatprep.subr.mxu0 0.0
        %6276 = vmatpush2.msra.mxu0 0.0
        %6277 = vmatprep.subr.mxu0 0.0
        %6278 = vmatpush2.msra.mxu0 0.0
        %6279 = vmatprep.subr.mxu0 0.0
        %6280 = vmatpush2.msra.mxu0 0.0
        %6281 = vmatprep.subr.mxu0 0.0
        %6282 = vmatpush2.msra.mxu0 0.0
        %6283 = vmatprep.subr.mxu0 0.0
        %6284 = vmatpush2.msra.mxu0 0.0
        %6285 = vmatprep.subr.mxu0 0.0
        %6286 = vmatpush2.msra.mxu0 0.0
        %6287 = vmatprep.subr.mxu0 0.0
        %6288 = vmatpush2.msra.mxu0 0.0
        %6289 = vmatprep.subr.mxu0 0.0
        %6290 = vmatpush2.msra.mxu0 0.0
        %6291 = vmatprep.subr.mxu0 0.0
        %6292 = vmatpush2.msra.mxu0 0.0
        %6293 = vmatprep.subr.mxu0 0.0
        %6294 = vmatpush2.msra.mxu0 0.0
        %6295 = vmatprep.subr.mxu0 0.0
        %6296 = vmatpush2.msra.mxu0 0.0
        %6297 = vmatprep.subr.mxu0 0.0
        %6298 = vmatpush2.msra.mxu0 0.0
        %6299 = vmatprep.subr.mxu0 0.0
        %6300 = vmatpush2.msra.mxu0 0.0
        %6301 = vmatprep.subr.mxu0 0.0
        %6302 = vmatpush2.msra.mxu0 0.0
        %6303 = vmatprep.subr.mxu0 0.0
        %6304 = vmatpush2.msra.mxu0 0.0
        %6305 = vmatprep.mubr.f32.mxu0 0.0
        %v6306 = vand.u32 %v5851, 4294901760
        %6307 = vmatmul.mubr.f32.gmra.mxu0 %v6306
        %v6308 = vpop.f32.mrf.mxu0
        %v6309 = vadd.f32 %v6236, %v6308
        %v6310 = vpop.f32.mrf.mxu0
        %6311 = vdwg.mxu0
        %6312 = vst [vmem:[%s501] sm:$0xff] %v6309
        %s6313 = sand.u32 %s295, 1
        %s6314 = scalar_lea.sflag [#allocation4], %s6313
        %s6315 = sand.u32 %s295, 1
        %s6316 = smul.addr %s6315, 8
        %s6317 = scalar_lea.vmem [#allocation14], %s6316
        // Predicated region
        $region97: #{tpu_custom_call.1} parent=67 // pred_check
          %p6318 = pneg %p305
        $region98: #{tpu_custom_call.1} parent=67 // pred_check_branch
          %6320 = sbr.rel (%p6318) target = $region100
        $region99: #{tpu_custom_call.1} parent=67 // pred_region
          %s6322 = ssub.s32 128, 128
          %6323 = vsyncadd %s6314, %s6322
          %s6324 = smul.addr %s30, 128
          %s6325 = scalar_lea.hbm %s12, %s6324
          %s6327 = sshll.u32 %s6317, 4
          %s6328 = int_to_ptr.vmem [resolvable:$true] %s6327
          %6330 = dma.vmem_to_hbm [thread:$0]  %s6328, 128, %s6325, %s6314
        $region100: #{tpu_custom_call.1} parent=67 // pred_fallthru
          _
      $region68: #{tpu_custom_call.1} parent=5 // pred_fallthru
        _
      %p6331 = scmp.le.s32.totalorder 2, %s25
      // Predicated region
      $region101: #{tpu_custom_call.1} parent=5 // pred_check
        %p6332 = pneg %p6331
      $region102: #{tpu_custom_call.1} parent=5 // pred_check_branch
        %6334 = sbr.rel (%p6332) target = $region104
      $region103: #{tpu_custom_call.1} parent=5 // pred_region
        %s6335 = ssub.s32 %s25, 2
        // Predicated region
        $region105: #{tpu_custom_call.1} parent=103 // pred_check
          %p6336 = pneg %p311
        $region106: #{tpu_custom_call.1} parent=103 // pred_check_branch
          %6338 = sbr.rel (%p6336) target = $region108
        $region107: #{tpu_custom_call.1} parent=103 // pred_region
          %s6339 = sand.u32 %s296, 1
          %s6340 = scalar_lea.sflag [#allocation4], %s6339
          %s6341 = sand.u32 %s296, 1
          %s6342 = smul.addr %s6341, 8
          %s6343 = scalar_lea.vmem [#allocation14], %s6342
          %6344 = dma.done %s6340, 128
        $region108: #{tpu_custom_call.1} parent=103 // pred_fallthru
          _
      $region104: #{tpu_custom_call.1} parent=5 // pred_fallthru
        _
    $region6: #{tpu_custom_call.1} parent=1 // loop_footer
      %s29 = sadd.s32 1, %s25
    $region7: #{tpu_custom_call.1} parent=1 // loop_footer_branch
      %24 = sbr.rel target = $region3
    $region8: #{tpu_custom_call.1} parent=1 // loop_exit
      _
    %6345 = vsyncpa [#allocation3], 1
    %s6346 = scalar_lea.sflag [#allocation3], 1
    %6347 = vsyncpa %s6346, 1
    %6348 = vsyncpa [#allocation6], 1
    %6349 = vsyncpa [#allocation9], 1
    %6350 = vsyncpa [#allocation12], 1
    %6351 = vsyncpa [#allocation4], 1
    %s6352 = scalar_lea.sflag [#allocation4], 1
    %6353 = vsyncpa %s6352, 1

</llo_original>
